<compile_context>
chip_gen: v7x
topology: tpu7x:2x2x1
jax: 0.10.0
libtpu: 0.0.40
codegen_flags: <defaults>
</compile_context>

<pallas_src>
import math

import jax
import jax.numpy as jnp
from jax.experimental import pallas as pl
from jax.experimental.pallas import tpu as pltpu

BN_EPS = 1e-5


# ----------------------------- Pallas kernels ------------------------------

def _conv_stage(x32, row, w_refs, s_ref, b_ref, *, kmax, dil, kernel_sizes):
    """One multi-branch causal dilated Conv1d stage + folded BatchNorm affine.

    x32   : (B*T, Cin) f32 value (VMEM resident)
    row   : (B*T, 1) int32 value, row index within each length-T sequence
    w_refs: per-branch weight refs; branch i (kernel size k) has shape (k*Cin, Cout//nb) bf16
            with rows stacked tap-major, OLDEST tap first (== PyTorch Conv1d weight index 0).
    Returns (B*T, Cout) f32 (pre-ReLU).
    """
    cin = x32.shape[-1]
    # Build the causal im2col in VMEM: tap j (j=0 oldest) is x shifted down by (kmax-1-j)*dil
    # rows; rows that would cross the sequence start (or a batch boundary after flattening)
    # are zeroed -> in-kernel causal left pad, no HBM pad/convert pass.
    taps = []
    for j in range(kmax):
        s = (kmax - 1 - j) * dil
        if s == 0:
            taps.append(x32.astype(jnp.bfloat16))
        else:
            shifted = pltpu.roll(x32, shift=s, axis=0)               # XLU sublane rotate
            masked = jnp.where(row >= s, shifted, jnp.zeros_like(shifted))
            taps.append(masked.astype(jnp.bfloat16))
    lhs_full = jnp.concatenate(taps, axis=-1)                        # (B*T, kmax*Cin) bf16
    # One deep-K matmul per branch with its exact K = k*Cin (no zero taps): a branch with
    # kernel size k uses the LAST k taps -> a lane-aligned trailing column slice.
    parts = []
    for k, w_ref in zip(kernel_sizes, w_refs):
        lhs = lhs_full[:, (kmax - k) * cin:]
        parts.append(jnp.dot(lhs, w_ref[...], preferred_element_type=jnp.float32))
    acc = jnp.concatenate(parts, axis=-1)                            # (B*T, Cout) f32
    return acc * s_ref[...] + b_ref[...]                             # folded BN (+conv bias)


def _make_layer_kernel(*, kernel_sizes, kmax, dil, downsample):
    """Fused MultibranchTemporalBlock: downsample + conv0 + conv1 + residual + ReLUs."""
    nb = len(kernel_sizes)

    def kernel(*refs):
        i = 0
        x_ref = refs[i]; i += 1
        row_ref = refs[i]; i += 1
        w0 = refs[i:i + nb]; i += nb
        s0_ref, b0_ref = refs[i], refs[i + 1]; i += 2
        w1 = refs[i:i + nb]; i += nb
        s1_ref, b1_ref = refs[i], refs[i + 1]; i += 2
        if downsample:
            dw_ref, db_ref = refs[i], refs[i + 1]; i += 2
        o_ref = refs[i]

        x32 = x_ref[...].astype(jnp.float32)    # in-kernel upcast (input is f32 or bf16)
        row = row_ref[...]

        # Residual path: 1x1 conv downsample (bf16 MXU operands, f32 accumulate) or identity.
        if downsample:
            res = jnp.dot(x32.astype(jnp.bfloat16), dw_ref[...],
                          preferred_element_type=jnp.float32) + db_ref[...]
        else:
            res = x32

        # Stage 0: multi-branch causal conv + folded BN + ReLU, kept VMEM-resident.
        h = _conv_stage(x32, row, w0, s0_ref, b0_ref,
                        kmax=kmax, dil=dil, kernel_sizes=kernel_sizes)
        h = jnp.maximum(h, 0.0)
        # TODO(synk): dropout0 / dropout1 are eval-mode identity (no RNG masking).

        # Stage 1 + residual add + final ReLU; single bf16 store of the layer output.
        y = _conv_stage(h, row, w1, s1_ref, b1_ref,
                        kmax=kmax, dil=dil, kernel_sizes=kernel_sizes)
        y = jnp.maximum(y, 0.0)
        o_ref[...] = jnp.maximum(y + res, 0.0).astype(o_ref.dtype)

    return kernel


def _proj_kernel(x_ref, w_ref, b_ref, o_ref):
    """hidden_proj: y = x @ W + b over the flattened (B*T) row axis."""
    x_bf = x_ref[...].astype(jnp.bfloat16)
    o_ref[...] = jnp.dot(x_bf, w_ref[...], preferred_element_type=jnp.float32) + b_ref[...]


# ----------------------------- Pallas wrappers ------------------------------

def layer_pallas(x2d, row_idx, layer, cfg):
    """x2d: (B*T, Cin) f32/bf16, row_idx: (B*T, 1) int32 -> (B*T, Cout) bf16."""
    bt = x2d.shape[0]
    cout = layer['s0'].shape[-1]
    args = [x2d, row_idx, *layer['w0'], layer['s0'], layer['b0'],
            *layer['w1'], layer['s1'], layer['b1']]
    if cfg['downsample']:
        args += [layer['dw'], layer['db']]
    kern = _make_layer_kernel(kernel_sizes=cfg['kernel_sizes'], kmax=cfg['kmax'],
                              dil=cfg['dilation'], downsample=cfg['downsample'])
    # Single grid step: the whole batch, all weights, the im2col buffers, out0 and the residual
    # live in VMEM (< 2 MiB total here) -> no HBM round trips inside a layer.  For larger B/T,
    # add a parallel batch-tile grid axis (keep the extent a multiple of 2 for v7x's two TCs).
    return pl.pallas_call(
        kern,
        out_shape=jax.ShapeDtypeStruct((bt, cout), jnp.bfloat16),
    )(*args)


def proj_pallas(x2d, w, b):
    """x2d: (B*T, C) bf16, w: (C, input_size) bf16, b: (1, input_size) f32 -> f32."""
    bt = x2d.shape[0]
    cout = w.shape[-1]
    return pl.pallas_call(
        _proj_kernel,
        out_shape=jax.ShapeDtypeStruct((bt, cout), jnp.float32),
    )(x2d, w, b)


# ----------------------------- Parameter construction ------------------------------

class KeyGen:
    def __init__(self, key):
        self.key = key

    def __call__(self):
        self.key, sub = jax.random.split(self.key)
        return sub


def _branch_conv_params(kg, cin, cout, kernel_sizes):
    """Per-branch conv weights + folded eval-mode BatchNorm affine.

    Branch i (kernel size k) owns output columns [i*cb, (i+1)*cb); its weight is stored as
    (k*cin, cb) rows stacked tap-major, OLDEST tap first, i.e. rows [m*cin:(m+1)*cin] hold
    PyTorch Conv1d weight index m transposed to (cin, cb).  Eval-mode BatchNorm1d (mean=0,
    var=1, gamma=1, beta=0) and the conv bias fold into a per-output-channel (scale, bias).
    When importing real checkpoints, fold the actual running stats through the same path.
    """
    nb = len(kernel_sizes)
    cb = cout // nb
    w_list, biases = [], []
    for k in kernel_sizes:
        std = math.sqrt(2.0 / (cin * k))
        w = jax.random.normal(kg(), (k, cin, cb), jnp.float32) * std
        w_list.append(w.reshape(k * cin, cb).astype(jnp.bfloat16))
        biases.append(jax.random.normal(kg(), (cb,), jnp.float32) * 0.01)
    conv_bias = jnp.concatenate(biases)
    scale = jnp.full((cout,), 1.0 / math.sqrt(1.0 + BN_EPS), jnp.float32)
    bias = conv_bias * scale
    return tuple(w_list), scale.reshape(1, cout), bias.reshape(1, cout)


def make_multiscale_tcn(input_size, num_channels, kernel_sizes, key):
    """Returns (params pytree of arrays, static per-layer config)."""
    kg = KeyGen(key)
    kmax = max(kernel_sizes)
    nb = len(kernel_sizes)
    layers, config = [], []
    cin = input_size
    for i, cout in enumerate(num_channels):
        assert cout % nb == 0, "num_channels must be divisible by number of kernels"
        dil = 2 ** i
        w0, s0, b0 = _branch_conv_params(kg, cin, cout, kernel_sizes)
        w1, s1, b1 = _branch_conv_params(kg, cout, cout, kernel_sizes)
        layer = {'w0': w0, 's0': s0, 'b0': b0, 'w1': w1, 's1': s1, 'b1': b1}
        # Reference MultibranchTemporalBlock downsample condition:
        #   nn.Conv1d(n_inputs, n_outputs, 1) if (n_inputs // num_kernels) != n_outputs else None
        has_down = (cin // nb) != cout
        if has_down:
            std = math.sqrt(2.0 / cin)
            layer['dw'] = (jax.random.normal(kg(), (cin, cout), jnp.float32) * std
                           ).astype(jnp.bfloat16)
            layer['db'] = jnp.zeros((1, cout), jnp.float32)
        else:
            assert cin == cout, "identity residual requires matching channel counts"
        layers.append(layer)
        config.append({'dilation': dil, 'kmax': kmax,
                       'kernel_sizes': tuple(kernel_sizes), 'downsample': has_down})
        cin = cout
    # hidden_proj: nn.Linear(num_channels[-1], input_size)
    std = 1.0 / math.sqrt(cin)
    params = {
        'layers': layers,
        'proj_w': (jax.random.normal(kg(), (cin, input_size), jnp.float32) * std
                   ).astype(jnp.bfloat16),
        'proj_b': jax.random.uniform(kg(), (1, input_size), jnp.float32,
                                     minval=-std, maxval=std),
    }
    return params, config


# ----------------------------- Forward pass ------------------------------

def multiscale_tcn_forward(params, x, lengths, batch_size, config):
    """x: (B, T, input_size).  PyTorch transposes to channel-first for Conv1d and back; here
    channels stay on the lane (last) axis and (B, T) is flattened into one M axis, which is
    semantically identical.  lengths / batch_size are unused (consensus_func is identity)."""
    del lengths, batch_size
    b, t, c = x.shape
    y = x.reshape(b * t, c)
    # Row index within each length-T sequence (constant under jit); kernels use it to zero the
    # causal-pad rows and to stop conv taps from crossing batch boundaries after flattening.
    row_idx = jnp.tile(jnp.arange(t, dtype=jnp.int32), b).reshape(b * t, 1)
    for layer, cfg in zip(params['layers'], config):
        y = layer_pallas(y, row_idx, layer, cfg)
    out = proj_pallas(y, params['proj_w'], params['proj_b'])
    return out.reshape(b, t, -1)


# ----------------------------- Main ------------------------------

if __name__ == "__main__":
    B, T = 2, 64
    INPUT_SIZE = 128
    NUM_CHANNELS = (256, 256)
    KERNEL_SIZES = (3, 5)

    key = jax.random.PRNGKey(0)
    kx, kp = jax.random.split(key)
    x = jax.random.normal(kx, (B, T, INPUT_SIZE), jnp.float32)
    lengths = jnp.full((B,), T, jnp.int32)

    params, config = make_multiscale_tcn(INPUT_SIZE, NUM_CHANNELS, KERNEL_SIZES, kp)

    fwd = jax.jit(lambda p, xx, ll: multiscale_tcn_forward(p, xx, ll, B, config))
    out = jax.block_until_ready(fwd(params, x, lengths))

    assert out.shape == (B, T, INPUT_SIZE), out.shape
    assert bool(jnp.all(jnp.isfinite(out)))
    print("KERNEL_OK")
</pallas_src>

<mosaic_0001>
module attributes {stable_mosaic.version = 11 : i64} {
  func.func @kernel(%arg0: memref<128x256xbf16, #tpu.memory_space<vmem>>, %arg1: memref<128x1xi32, #tpu.memory_space<vmem>>, %arg2: memref<768x128xbf16, #tpu.memory_space<vmem>>, %arg3: memref<1280x128xbf16, #tpu.memory_space<vmem>>, %arg4: memref<1x256xf32, #tpu.memory_space<vmem>>, %arg5: memref<1x256xf32, #tpu.memory_space<vmem>>, %arg6: memref<768x128xbf16, #tpu.memory_space<vmem>>, %arg7: memref<1280x128xbf16, #tpu.memory_space<vmem>>, %arg8: memref<1x256xf32, #tpu.memory_space<vmem>>, %arg9: memref<1x256xf32, #tpu.memory_space<vmem>>, %arg10: memref<256x256xbf16, #tpu.memory_space<vmem>>, %arg11: memref<1x256xf32, #tpu.memory_space<vmem>>, %arg12: memref<128x256xbf16, #tpu.memory_space<vmem>>) attributes {dimension_semantics = [], scalar_prefetch = 0 : i64, scratch_operands = 0 : i64, tpu.core_type = #tpu.core_type<tc>} {
    %c0 = arith.constant 0 : index
    %c0_0 = arith.constant 0 : index
    %0 = vector.load %arg0[%c0, %c0_0] : memref<128x256xbf16, #tpu.memory_space<vmem>>, vector<128x256xbf16>
    %1 = arith.extf %0 : vector<128x256xbf16> to vector<128x256xf32>
    %c0_1 = arith.constant 0 : index
    %c0_2 = arith.constant 0 : index
    %2 = vector.load %arg1[%c0_1, %c0_2] : memref<128x1xi32, #tpu.memory_space<vmem>>, vector<128x1xi32>
    %3 = arith.truncf %1 : vector<128x256xf32> to vector<128x256xbf16>
    %c0_3 = arith.constant 0 : index
    %c0_4 = arith.constant 0 : index
    %4 = vector.load %arg10[%c0_3, %c0_4] : memref<256x256xbf16, #tpu.memory_space<vmem>>, vector<256x256xbf16>
    %cst = arith.constant dense<0.000000e+00> : vector<128x256xf32>
    %5 = tpu.matmul %3, %4, %cst {dimension_numbers = #tpu.dot_dimension_numbers<[1], [0], [0], [1], [0, 0, 1, 1], [], []>} : vector<128x256xbf16>, vector<256x256xbf16>, vector<128x256xf32> -> vector<128x256xf32>
    %c0_5 = arith.constant 0 : index
    %c0_6 = arith.constant 0 : index
    %6 = vector.load %arg11[%c0_5, %c0_6] : memref<1x256xf32, #tpu.memory_space<vmem>>, vector<1x256xf32>
    %7 = vector.broadcast %6 : vector<1x256xf32> to vector<128x256xf32>
    %8 = arith.addf %5, %7 : vector<128x256xf32>
    %c8_i32 = arith.constant 8 : i32
    %9 = tpu.dynamic_rotate %1 by %c8_i32 dim 0 : vector<128x256xf32>, i32 -> vector<128x256xf32>
    %c8_i32_7 = arith.constant 8 : i32
    %10 = vector.broadcast %c8_i32_7 : i32 to vector<128x1xi32>
    %11 = arith.cmpi sge, %2, %10 : vector<128x1xi32>
    %cst_8 = arith.constant 0.000000e+00 : f32
    %12 = vector.broadcast %cst_8 : f32 to vector<128x256xf32>
    %13 = vector.shape_cast %11 : vector<128x1xi1> to vector<128x1xi1>
    %14 = vector.broadcast %13 : vector<128x1xi1> to vector<128x256xi1>
    %15 = arith.select %14, %9, %12 : vector<128x256xi1>, vector<128x256xf32>
    %16 = arith.truncf %15 : vector<128x256xf32> to vector<128x256xbf16>
    %c6_i32 = arith.constant 6 : i32
    %17 = tpu.dynamic_rotate %1 by %c6_i32 dim 0 : vector<128x256xf32>, i32 -> vector<128x256xf32>
    %c6_i32_9 = arith.constant 6 : i32
    %18 = vector.broadcast %c6_i32_9 : i32 to vector<128x1xi32>
    %19 = arith.cmpi sge, %2, %18 : vector<128x1xi32>
    %cst_10 = arith.constant 0.000000e+00 : f32
    %20 = vector.broadcast %cst_10 : f32 to vector<128x256xf32>
    %21 = vector.shape_cast %19 : vector<128x1xi1> to vector<128x1xi1>
    %22 = vector.broadcast %21 : vector<128x1xi1> to vector<128x256xi1>
    %23 = arith.select %22, %17, %20 : vector<128x256xi1>, vector<128x256xf32>
    %24 = arith.truncf %23 : vector<128x256xf32> to vector<128x256xbf16>
    %c4_i32 = arith.constant 4 : i32
    %25 = tpu.dynamic_rotate %1 by %c4_i32 dim 0 : vector<128x256xf32>, i32 -> vector<128x256xf32>
    %c4_i32_11 = arith.constant 4 : i32
    %26 = vector.broadcast %c4_i32_11 : i32 to vector<128x1xi32>
    %27 = arith.cmpi sge, %2, %26 : vector<128x1xi32>
    %cst_12 = arith.constant 0.000000e+00 : f32
    %28 = vector.broadcast %cst_12 : f32 to vector<128x256xf32>
    %29 = vector.shape_cast %27 : vector<128x1xi1> to vector<128x1xi1>
    %30 = vector.broadcast %29 : vector<128x1xi1> to vector<128x256xi1>
    %31 = arith.select %30, %25, %28 : vector<128x256xi1>, vector<128x256xf32>
    %32 = arith.truncf %31 : vector<128x256xf32> to vector<128x256xbf16>
    %c2_i32 = arith.constant 2 : i32
    %33 = tpu.dynamic_rotate %1 by %c2_i32 dim 0 : vector<128x256xf32>, i32 -> vector<128x256xf32>
    %c2_i32_13 = arith.constant 2 : i32
    %34 = vector.broadcast %c2_i32_13 : i32 to vector<128x1xi32>
    %35 = arith.cmpi sge, %2, %34 : vector<128x1xi32>
    %cst_14 = arith.constant 0.000000e+00 : f32
    %36 = vector.broadcast %cst_14 : f32 to vector<128x256xf32>
    %37 = vector.shape_cast %35 : vector<128x1xi1> to vector<128x1xi1>
    %38 = vector.broadcast %37 : vector<128x1xi1> to vector<128x256xi1>
    %39 = arith.select %38, %33, %36 : vector<128x256xi1>, vector<128x256xf32>
    %40 = arith.truncf %39 : vector<128x256xf32> to vector<128x256xbf16>
    %41 = arith.truncf %1 : vector<128x256xf32> to vector<128x256xbf16>
    %42 = tpu.concatenate %16, %24, %32, %40, %41 in 1 : vector<128x256xbf16>, vector<128x256xbf16>, vector<128x256xbf16>, vector<128x256xbf16>, vector<128x256xbf16> -> vector<128x1280xbf16>
    %43 = vector.extract_strided_slice %42 {offsets = [0, 512], sizes = [128, 768], strides = [1, 1]} : vector<128x1280xbf16> to vector<128x768xbf16>
    %c0_15 = arith.constant 0 : index
    %c0_16 = arith.constant 0 : index
    %44 = vector.load %arg2[%c0_15, %c0_16] : memref<768x128xbf16, #tpu.memory_space<vmem>>, vector<768x128xbf16>
    %cst_17 = arith.constant dense<0.000000e+00> : vector<128x128xf32>
    %45 = tpu.matmul %43, %44, %cst_17 {dimension_numbers = #tpu.dot_dimension_numbers<[1], [0], [0], [1], [0, 0, 1, 1], [], []>} : vector<128x768xbf16>, vector<768x128xbf16>, vector<128x128xf32> -> vector<128x128xf32>
    %c0_18 = arith.constant 0 : index
    %c0_19 = arith.constant 0 : index
    %46 = vector.load %arg3[%c0_18, %c0_19] : memref<1280x128xbf16, #tpu.memory_space<vmem>>, vector<1280x128xbf16>
    %cst_20 = arith.constant dense<0.000000e+00> : vector<128x128xf32>
    %47 = tpu.matmul %42, %46, %cst_20 {dimension_numbers = #tpu.dot_dimension_numbers<[1], [0], [0], [1], [0, 0, 1, 1], [], []>} : vector<128x1280xbf16>, vector<1280x128xbf16>, vector<128x128xf32> -> vector<128x128xf32>
    %48 = tpu.concatenate %45, %47 in 1 : vector<128x128xf32>, vector<128x128xf32> -> vector<128x256xf32>
    %c0_21 = arith.constant 0 : index
    %c0_22 = arith.constant 0 : index
    %49 = vector.load %arg4[%c0_21, %c0_22] : memref<1x256xf32, #tpu.memory_space<vmem>>, vector<1x256xf32>
    %50 = vector.broadcast %49 : vector<1x256xf32> to vector<128x256xf32>
    %51 = arith.mulf %48, %50 : vector<128x256xf32>
    %c0_23 = arith.constant 0 : index
    %c0_24 = arith.constant 0 : index
    %52 = vector.load %arg5[%c0_23, %c0_24] : memref<1x256xf32, #tpu.memory_space<vmem>>, vector<1x256xf32>
    %53 = vector.broadcast %52 : vector<1x256xf32> to vector<128x256xf32>
    %54 = arith.addf %51, %53 : vector<128x256xf32>
    %cst_25 = arith.constant 0.000000e+00 : f32
    %55 = vector.broadcast %cst_25 : f32 to vector<128x256xf32>
    %56 = arith.maximumf %54, %55 : vector<128x256xf32>
    %c8_i32_26 = arith.constant 8 : i32
    %57 = tpu.dynamic_rotate %56 by %c8_i32_26 dim 0 : vector<128x256xf32>, i32 -> vector<128x256xf32>
    %c8_i32_27 = arith.constant 8 : i32
    %58 = vector.broadcast %c8_i32_27 : i32 to vector<128x1xi32>
    %59 = arith.cmpi sge, %2, %58 : vector<128x1xi32>
    %cst_28 = arith.constant 0.000000e+00 : f32
    %60 = vector.broadcast %cst_28 : f32 to vector<128x256xf32>
    %61 = vector.shape_cast %59 : vector<128x1xi1> to vector<128x1xi1>
    %62 = vector.broadcast %61 : vector<128x1xi1> to vector<128x256xi1>
    %63 = arith.select %62, %57, %60 : vector<128x256xi1>, vector<128x256xf32>
    %64 = arith.truncf %63 : vector<128x256xf32> to vector<128x256xbf16>
    %c6_i32_29 = arith.constant 6 : i32
    %65 = tpu.dynamic_rotate %56 by %c6_i32_29 dim 0 : vector<128x256xf32>, i32 -> vector<128x256xf32>
    %c6_i32_30 = arith.constant 6 : i32
    %66 = vector.broadcast %c6_i32_30 : i32 to vector<128x1xi32>
    %67 = arith.cmpi sge, %2, %66 : vector<128x1xi32>
    %cst_31 = arith.constant 0.000000e+00 : f32
    %68 = vector.broadcast %cst_31 : f32 to vector<128x256xf32>
    %69 = vector.shape_cast %67 : vector<128x1xi1> to vector<128x1xi1>
    %70 = vector.broadcast %69 : vector<128x1xi1> to vector<128x256xi1>
    %71 = arith.select %70, %65, %68 : vector<128x256xi1>, vector<128x256xf32>
    %72 = arith.truncf %71 : vector<128x256xf32> to vector<128x256xbf16>
    %c4_i32_32 = arith.constant 4 : i32
    %73 = tpu.dynamic_rotate %56 by %c4_i32_32 dim 0 : vector<128x256xf32>, i32 -> vector<128x256xf32>
    %c4_i32_33 = arith.constant 4 : i32
    %74 = vector.broadcast %c4_i32_33 : i32 to vector<128x1xi32>
    %75 = arith.cmpi sge, %2, %74 : vector<128x1xi32>
    %cst_34 = arith.constant 0.000000e+00 : f32
    %76 = vector.broadcast %cst_34 : f32 to vector<128x256xf32>
    %77 = vector.shape_cast %75 : vector<128x1xi1> to vector<128x1xi1>
    %78 = vector.broadcast %77 : vector<128x1xi1> to vector<128x256xi1>
    %79 = arith.select %78, %73, %76 : vector<128x256xi1>, vector<128x256xf32>
    %80 = arith.truncf %79 : vector<128x256xf32> to vector<128x256xbf16>
    %c2_i32_35 = arith.constant 2 : i32
    %81 = tpu.dynamic_rotate %56 by %c2_i32_35 dim 0 : vector<128x256xf32>, i32 -> vector<128x256xf32>
    %c2_i32_36 = arith.constant 2 : i32
    %82 = vector.broadcast %c2_i32_36 : i32 to vector<128x1xi32>
    %83 = arith.cmpi sge, %2, %82 : vector<128x1xi32>
    %cst_37 = arith.constant 0.000000e+00 : f32
    %84 = vector.broadcast %cst_37 : f32 to vector<128x256xf32>
    %85 = vector.shape_cast %83 : vector<128x1xi1> to vector<128x1xi1>
    %86 = vector.broadcast %85 : vector<128x1xi1> to vector<128x256xi1>
    %87 = arith.select %86, %81, %84 : vector<128x256xi1>, vector<128x256xf32>
    %88 = arith.truncf %87 : vector<128x256xf32> to vector<128x256xbf16>
    %89 = arith.truncf %56 : vector<128x256xf32> to vector<128x256xbf16>
    %90 = tpu.concatenate %64, %72, %80, %88, %89 in 1 : vector<128x256xbf16>, vector<128x256xbf16>, vector<128x256xbf16>, vector<128x256xbf16>, vector<128x256xbf16> -> vector<128x1280xbf16>
    %91 = vector.extract_strided_slice %90 {offsets = [0, 512], sizes = [128, 768], strides = [1, 1]} : vector<128x1280xbf16> to vector<128x768xbf16>
    %c0_38 = arith.constant 0 : index
    %c0_39 = arith.constant 0 : index
    %92 = vector.load %arg6[%c0_38, %c0_39] : memref<768x128xbf16, #tpu.memory_space<vmem>>, vector<768x128xbf16>
    %cst_40 = arith.constant dense<0.000000e+00> : vector<128x128xf32>
    %93 = tpu.matmul %91, %92, %cst_40 {dimension_numbers = #tpu.dot_dimension_numbers<[1], [0], [0], [1], [0, 0, 1, 1], [], []>} : vector<128x768xbf16>, vector<768x128xbf16>, vector<128x128xf32> -> vector<128x128xf32>
    %c0_41 = arith.constant 0 : index
    %c0_42 = arith.constant 0 : index
    %94 = vector.load %arg7[%c0_41, %c0_42] : memref<1280x128xbf16, #tpu.memory_space<vmem>>, vector<1280x128xbf16>
    %cst_43 = arith.constant dense<0.000000e+00> : vector<128x128xf32>
    %95 = tpu.matmul %90, %94, %cst_43 {dimension_numbers = #tpu.dot_dimension_numbers<[1], [0], [0], [1], [0, 0, 1, 1], [], []>} : vector<128x1280xbf16>, vector<1280x128xbf16>, vector<128x128xf32> -> vector<128x128xf32>
    %96 = tpu.concatenate %93, %95 in 1 : vector<128x128xf32>, vector<128x128xf32> -> vector<128x256xf32>
    %c0_44 = arith.constant 0 : index
    %c0_45 = arith.constant 0 : index
    %97 = vector.load %arg8[%c0_44, %c0_45] : memref<1x256xf32, #tpu.memory_space<vmem>>, vector<1x256xf32>
    %98 = vector.broadcast %97 : vector<1x256xf32> to vector<128x256xf32>
    %99 = arith.mulf %96, %98 : vector<128x256xf32>
    %c0_46 = arith.constant 0 : index
    %c0_47 = arith.constant 0 : index
    %100 = vector.load %arg9[%c0_46, %c0_47] : memref<1x256xf32, #tpu.memory_space<vmem>>, vector<1x256xf32>
    %101 = vector.broadcast %100 : vector<1x256xf32> to vector<128x256xf32>
    %102 = arith.addf %99, %101 : vector<128x256xf32>
    %cst_48 = arith.constant 0.000000e+00 : f32
    %103 = vector.broadcast %cst_48 : f32 to vector<128x256xf32>
    %104 = arith.maximumf %102, %103 : vector<128x256xf32>
    %105 = arith.addf %104, %8 : vector<128x256xf32>
    %cst_49 = arith.constant 0.000000e+00 : f32
    %106 = vector.broadcast %cst_49 : f32 to vector<128x256xf32>
    %107 = arith.maximumf %105, %106 : vector<128x256xf32>
    %108 = arith.truncf %107 : vector<128x256xf32> to vector<128x256xbf16>
    %c0_50 = arith.constant 0 : index
    %c0_51 = arith.constant 0 : index
    %109 = vector.load %arg12[%c0_50, %c0_51] : memref<128x256xbf16, #tpu.memory_space<vmem>>, vector<128x256xbf16>
    tpu.vector_store %arg12[%c0_50, %c0_51], %108 {strides = array<i32>} : memref<128x256xbf16, #tpu.memory_space<vmem>>, vector<128x256xbf16>,
    return
  }
}

module attributes {stable_mosaic.version = 11 : i64} {
  func.func @kernel(%arg0: memref<128x128xf32, #tpu.memory_space<vmem>>, %arg1: memref<128x1xi32, #tpu.memory_space<vmem>>, %arg2: memref<384x128xbf16, #tpu.memory_space<vmem>>, %arg3: memref<640x128xbf16, #tpu.memory_space<vmem>>, %arg4: memref<1x256xf32, #tpu.memory_space<vmem>>, %arg5: memref<1x256xf32, #tpu.memory_space<vmem>>, %arg6: memref<768x128xbf16, #tpu.memory_space<vmem>>, %arg7: memref<1280x128xbf16, #tpu.memory_space<vmem>>, %arg8: memref<1x256xf32, #tpu.memory_space<vmem>>, %arg9: memref<1x256xf32, #tpu.memory_space<vmem>>, %arg10: memref<128x256xbf16, #tpu.memory_space<vmem>>, %arg11: memref<1x256xf32, #tpu.memory_space<vmem>>, %arg12: memref<128x256xbf16, #tpu.memory_space<vmem>>) attributes {dimension_semantics = [], scalar_prefetch = 0 : i64, scratch_operands = 0 : i64, tpu.core_type = #tpu.core_type<tc>} {
    %c0 = arith.constant 0 : index
    %c0_0 = arith.constant 0 : index
    %0 = vector.load %arg0[%c0, %c0_0] : memref<128x128xf32, #tpu.memory_space<vmem>>, vector<128x128xf32>
    %c0_1 = arith.constant 0 : index
    %c0_2 = arith.constant 0 : index
    %1 = vector.load %arg1[%c0_1, %c0_2] : memref<128x1xi32, #tpu.memory_space<vmem>>, vector<128x1xi32>
    %2 = arith.truncf %0 : vector<128x128xf32> to vector<128x128xbf16>
    %c0_3 = arith.constant 0 : index
    %c0_4 = arith.constant 0 : index
    %3 = vector.load %arg10[%c0_3, %c0_4] : memref<128x256xbf16, #tpu.memory_space<vmem>>, vector<128x256xbf16>
    %cst = arith.constant dense<0.000000e+00> : vector<128x256xf32>
    %4 = tpu.matmul %2, %3, %cst {dimension_numbers = #tpu.dot_dimension_numbers<[1], [0], [0], [1], [0, 0, 1, 1], [], []>} : vector<128x128xbf16>, vector<128x256xbf16>, vector<128x256xf32> -> vector<128x256xf32>
    %c0_5 = arith.constant 0 : index
    %c0_6 = arith.constant 0 : index
    %5 = vector.load %arg11[%c0_5, %c0_6] : memref<1x256xf32, #tpu.memory_space<vmem>>, vector<1x256xf32>
    %6 = vector.broadcast %5 : vector<1x256xf32> to vector<128x256xf32>
    %7 = arith.addf %4, %6 : vector<128x256xf32>
    %c4_i32 = arith.constant 4 : i32
    %8 = tpu.dynamic_rotate %0 by %c4_i32 dim 0 : vector<128x128xf32>, i32 -> vector<128x128xf32>
    %c4_i32_7 = arith.constant 4 : i32
    %9 = vector.broadcast %c4_i32_7 : i32 to vector<128x1xi32>
    %10 = arith.cmpi sge, %1, %9 : vector<128x1xi32>
    %cst_8 = arith.constant 0.000000e+00 : f32
    %11 = vector.broadcast %cst_8 : f32 to vector<128x128xf32>
    %12 = vector.shape_cast %10 : vector<128x1xi1> to vector<128x1xi1>
    %13 = vector.broadcast %12 : vector<128x1xi1> to vector<128x128xi1>
    %14 = arith.select %13, %8, %11 : vector<128x128xi1>, vector<128x128xf32>
    %15 = arith.truncf %14 : vector<128x128xf32> to vector<128x128xbf16>
    %c3_i32 = arith.constant 3 : i32
    %16 = tpu.dynamic_rotate %0 by %c3_i32 dim 0 : vector<128x128xf32>, i32 -> vector<128x128xf32>
    %c3_i32_9 = arith.constant 3 : i32
    %17 = vector.broadcast %c3_i32_9 : i32 to vector<128x1xi32>
    %18 = arith.cmpi sge, %1, %17 : vector<128x1xi32>
    %cst_10 = arith.constant 0.000000e+00 : f32
    %19 = vector.broadcast %cst_10 : f32 to vector<128x128xf32>
    %20 = vector.shape_cast %18 : vector<128x1xi1> to vector<128x1xi1>
    %21 = vector.broadcast %20 : vector<128x1xi1> to vector<128x128xi1>
    %22 = arith.select %21, %16, %19 : vector<128x128xi1>, vector<128x128xf32>
    %23 = arith.truncf %22 : vector<128x128xf32> to vector<128x128xbf16>
    %c2_i32 = arith.constant 2 : i32
    %24 = tpu.dynamic_rotate %0 by %c2_i32 dim 0 : vector<128x128xf32>, i32 -> vector<128x128xf32>
    %c2_i32_11 = arith.constant 2 : i32
    %25 = vector.broadcast %c2_i32_11 : i32 to vector<128x1xi32>
    %26 = arith.cmpi sge, %1, %25 : vector<128x1xi32>
    %cst_12 = arith.constant 0.000000e+00 : f32
    %27 = vector.broadcast %cst_12 : f32 to vector<128x128xf32>
    %28 = vector.shape_cast %26 : vector<128x1xi1> to vector<128x1xi1>
    %29 = vector.broadcast %28 : vector<128x1xi1> to vector<128x128xi1>
    %30 = arith.select %29, %24, %27 : vector<128x128xi1>, vector<128x128xf32>
    %31 = arith.truncf %30 : vector<128x128xf32> to vector<128x128xbf16>
    %c1_i32 = arith.constant 1 : i32
    %32 = tpu.dynamic_rotate %0 by %c1_i32 dim 0 : vector<128x128xf32>, i32 -> vector<128x128xf32>
    %c1_i32_13 = arith.constant 1 : i32
    %33 = vector.broadcast %c1_i32_13 : i32 to vector<128x1xi32>
    %34 = arith.cmpi sge, %1, %33 : vector<128x1xi32>
    %cst_14 = arith.constant 0.000000e+00 : f32
    %35 = vector.broadcast %cst_14 : f32 to vector<128x128xf32>
    %36 = vector.shape_cast %34 : vector<128x1xi1> to vector<128x1xi1>
    %37 = vector.broadcast %36 : vector<128x1xi1> to vector<128x128xi1>
    %38 = arith.select %37, %32, %35 : vector<128x128xi1>, vector<128x128xf32>
    %39 = arith.truncf %38 : vector<128x128xf32> to vector<128x128xbf16>
    %40 = arith.truncf %0 : vector<128x128xf32> to vector<128x128xbf16>
    %41 = tpu.concatenate %15, %23, %31, %39, %40 in 1 : vector<128x128xbf16>, vector<128x128xbf16>, vector<128x128xbf16>, vector<128x128xbf16>, vector<128x128xbf16> -> vector<128x640xbf16>
    %42 = vector.extract_strided_slice %41 {offsets = [0, 256], sizes = [128, 384], strides = [1, 1]} : vector<128x640xbf16> to vector<128x384xbf16>
    %c0_15 = arith.constant 0 : index
    %c0_16 = arith.constant 0 : index
    %43 = vector.load %arg2[%c0_15, %c0_16] : memref<384x128xbf16, #tpu.memory_space<vmem>>, vector<384x128xbf16>
    %cst_17 = arith.constant dense<0.000000e+00> : vector<128x128xf32>
    %44 = tpu.matmul %42, %43, %cst_17 {dimension_numbers = #tpu.dot_dimension_numbers<[1], [0], [0], [1], [0, 0, 1, 1], [], []>} : vector<128x384xbf16>, vector<384x128xbf16>, vector<128x128xf32> -> vector<128x128xf32>
    %c0_18 = arith.constant 0 : index
    %c0_19 = arith.constant 0 : index
    %45 = vector.load %arg3[%c0_18, %c0_19] : memref<640x128xbf16, #tpu.memory_space<vmem>>, vector<640x128xbf16>
    %cst_20 = arith.constant dense<0.000000e+00> : vector<128x128xf32>
    %46 = tpu.matmul %41, %45, %cst_20 {dimension_numbers = #tpu.dot_dimension_numbers<[1], [0], [0], [1], [0, 0, 1, 1], [], []>} : vector<128x640xbf16>, vector<640x128xbf16>, vector<128x128xf32> -> vector<128x128xf32>
    %47 = tpu.concatenate %44, %46 in 1 : vector<128x128xf32>, vector<128x128xf32> -> vector<128x256xf32>
    %c0_21 = arith.constant 0 : index
    %c0_22 = arith.constant 0 : index
    %48 = vector.load %arg4[%c0_21, %c0_22] : memref<1x256xf32, #tpu.memory_space<vmem>>, vector<1x256xf32>
    %49 = vector.broadcast %48 : vector<1x256xf32> to vector<128x256xf32>
    %50 = arith.mulf %47, %49 : vector<128x256xf32>
    %c0_23 = arith.constant 0 : index
    %c0_24 = arith.constant 0 : index
    %51 = vector.load %arg5[%c0_23, %c0_24] : memref<1x256xf32, #tpu.memory_space<vmem>>, vector<1x256xf32>
    %52 = vector.broadcast %51 : vector<1x256xf32> to vector<128x256xf32>
    %53 = arith.addf %50, %52 : vector<128x256xf32>
    %cst_25 = arith.constant 0.000000e+00 : f32
    %54 = vector.broadcast %cst_25 : f32 to vector<128x256xf32>
    %55 = arith.maximumf %53, %54 : vector<128x256xf32>
    %c4_i32_26 = arith.constant 4 : i32
    %56 = tpu.dynamic_rotate %55 by %c4_i32_26 dim 0 : vector<128x256xf32>, i32 -> vector<128x256xf32>
    %c4_i32_27 = arith.constant 4 : i32
    %57 = vector.broadcast %c4_i32_27 : i32 to vector<128x1xi32>
    %58 = arith.cmpi sge, %1, %57 : vector<128x1xi32>
    %cst_28 = arith.constant 0.000000e+00 : f32
    %59 = vector.broadcast %cst_28 : f32 to vector<128x256xf32>
    %60 = vector.shape_cast %58 : vector<128x1xi1> to vector<128x1xi1>
    %61 = vector.broadcast %60 : vector<128x1xi1> to vector<128x256xi1>
    %62 = arith.select %61, %56, %59 : vector<128x256xi1>, vector<128x256xf32>
    %63 = arith.truncf %62 : vector<128x256xf32> to vector<128x256xbf16>
    %c3_i32_29 = arith.constant 3 : i32
    %64 = tpu.dynamic_rotate %55 by %c3_i32_29 dim 0 : vector<128x256xf32>, i32 -> vector<128x256xf32>
    %c3_i32_30 = arith.constant 3 : i32
    %65 = vector.broadcast %c3_i32_30 : i32 to vector<128x1xi32>
    %66 = arith.cmpi sge, %1, %65 : vector<128x1xi32>
    %cst_31 = arith.constant 0.000000e+00 : f32
    %67 = vector.broadcast %cst_31 : f32 to vector<128x256xf32>
    %68 = vector.shape_cast %66 : vector<128x1xi1> to vector<128x1xi1>
    %69 = vector.broadcast %68 : vector<128x1xi1> to vector<128x256xi1>
    %70 = arith.select %69, %64, %67 : vector<128x256xi1>, vector<128x256xf32>
    %71 = arith.truncf %70 : vector<128x256xf32> to vector<128x256xbf16>
    %c2_i32_32 = arith.constant 2 : i32
    %72 = tpu.dynamic_rotate %55 by %c2_i32_32 dim 0 : vector<128x256xf32>, i32 -> vector<128x256xf32>
    %c2_i32_33 = arith.constant 2 : i32
    %73 = vector.broadcast %c2_i32_33 : i32 to vector<128x1xi32>
    %74 = arith.cmpi sge, %1, %73 : vector<128x1xi32>
    %cst_34 = arith.constant 0.000000e+00 : f32
    %75 = vector.broadcast %cst_34 : f32 to vector<128x256xf32>
    %76 = vector.shape_cast %74 : vector<128x1xi1> to vector<128x1xi1>
    %77 = vector.broadcast %76 : vector<128x1xi1> to vector<128x256xi1>
    %78 = arith.select %77, %72, %75 : vector<128x256xi1>, vector<128x256xf32>
    %79 = arith.truncf %78 : vector<128x256xf32> to vector<128x256xbf16>
    %c1_i32_35 = arith.constant 1 : i32
    %80 = tpu.dynamic_rotate %55 by %c1_i32_35 dim 0 : vector<128x256xf32>, i32 -> vector<128x256xf32>
    %c1_i32_36 = arith.constant 1 : i32
    %81 = vector.broadcast %c1_i32_36 : i32 to vector<128x1xi32>
    %82 = arith.cmpi sge, %1, %81 : vector<128x1xi32>
    %cst_37 = arith.constant 0.000000e+00 : f32
    %83 = vector.broadcast %cst_37 : f32 to vector<128x256xf32>
    %84 = vector.shape_cast %82 : vector<128x1xi1> to vector<128x1xi1>
    %85 = vector.broadcast %84 : vector<128x1xi1> to vector<128x256xi1>
    %86 = arith.select %85, %80, %83 : vector<128x256xi1>, vector<128x256xf32>
    %87 = arith.truncf %86 : vector<128x256xf32> to vector<128x256xbf16>
    %88 = arith.truncf %55 : vector<128x256xf32> to vector<128x256xbf16>
    %89 = tpu.concatenate %63, %71, %79, %87, %88 in 1 : vector<128x256xbf16>, vector<128x256xbf16>, vector<128x256xbf16>, vector<128x256xbf16>, vector<128x256xbf16> -> vector<128x1280xbf16>
    %90 = vector.extract_strided_slice %89 {offsets = [0, 512], sizes = [128, 768], strides = [1, 1]} : vector<128x1280xbf16> to vector<128x768xbf16>
    %c0_38 = arith.constant 0 : index
    %c0_39 = arith.constant 0 : index
    %91 = vector.load %arg6[%c0_38, %c0_39] : memref<768x128xbf16, #tpu.memory_space<vmem>>, vector<768x128xbf16>
    %cst_40 = arith.constant dense<0.000000e+00> : vector<128x128xf32>
    %92 = tpu.matmul %90, %91, %cst_40 {dimension_numbers = #tpu.dot_dimension_numbers<[1], [0], [0], [1], [0, 0, 1, 1], [], []>} : vector<128x768xbf16>, vector<768x128xbf16>, vector<128x128xf32> -> vector<128x128xf32>
    %c0_41 = arith.constant 0 : index
    %c0_42 = arith.constant 0 : index
    %93 = vector.load %arg7[%c0_41, %c0_42] : memref<1280x128xbf16, #tpu.memory_space<vmem>>, vector<1280x128xbf16>
    %cst_43 = arith.constant dense<0.000000e+00> : vector<128x128xf32>
    %94 = tpu.matmul %89, %93, %cst_43 {dimension_numbers = #tpu.dot_dimension_numbers<[1], [0], [0], [1], [0, 0, 1, 1], [], []>} : vector<128x1280xbf16>, vector<1280x128xbf16>, vector<128x128xf32> -> vector<128x128xf32>
    %95 = tpu.concatenate %92, %94 in 1 : vector<128x128xf32>, vector<128x128xf32> -> vector<128x256xf32>
    %c0_44 = arith.constant 0 : index
    %c0_45 = arith.constant 0 : index
    %96 = vector.load %arg8[%c0_44, %c0_45] : memref<1x256xf32, #tpu.memory_space<vmem>>, vector<1x256xf32>
    %97 = vector.broadcast %96 : vector<1x256xf32> to vector<128x256xf32>
    %98 = arith.mulf %95, %97 : vector<128x256xf32>
    %c0_46 = arith.constant 0 : index
    %c0_47 = arith.constant 0 : index
    %99 = vector.load %arg9[%c0_46, %c0_47] : memref<1x256xf32, #tpu.memory_space<vmem>>, vector<1x256xf32>
    %100 = vector.broadcast %99 : vector<1x256xf32> to vector<128x256xf32>
    %101 = arith.addf %98, %100 : vector<128x256xf32>
    %cst_48 = arith.constant 0.000000e+00 : f32
    %102 = vector.broadcast %cst_48 : f32 to vector<128x256xf32>
    %103 = arith.maximumf %101, %102 : vector<128x256xf32>
    %104 = arith.addf %103, %7 : vector<128x256xf32>
    %cst_49 = arith.constant 0.000000e+00 : f32
    %105 = vector.broadcast %cst_49 : f32 to vector<128x256xf32>
    %106 = arith.maximumf %104, %105 : vector<128x256xf32>
    %107 = arith.truncf %106 : vector<128x256xf32> to vector<128x256xbf16>
    %c0_50 = arith.constant 0 : index
    %c0_51 = arith.constant 0 : index
    %108 = vector.load %arg12[%c0_50, %c0_51] : memref<128x256xbf16, #tpu.memory_space<vmem>>, vector<128x256xbf16>
    tpu.vector_store %arg12[%c0_50, %c0_51], %107 {strides = array<i32>} : memref<128x256xbf16, #tpu.memory_space<vmem>>, vector<128x256xbf16>,
    return
  }
}

module attributes {stable_mosaic.version = 11 : i64} {
  func.func @_proj_kernel(%arg0: memref<128x256xbf16, #tpu.memory_space<vmem>>, %arg1: memref<256x128xbf16, #tpu.memory_space<vmem>>, %arg2: memref<1x128xf32, #tpu.memory_space<vmem>>, %arg3: memref<128x128xf32, #tpu.memory_space<vmem>>) attributes {dimension_semantics = [], scalar_prefetch = 0 : i64, scratch_operands = 0 : i64, tpu.core_type = #tpu.core_type<tc>} {
    %c0 = arith.constant 0 : index
    %c0_0 = arith.constant 0 : index
    %0 = vector.load %arg0[%c0, %c0_0] : memref<128x256xbf16, #tpu.memory_space<vmem>>, vector<128x256xbf16>
    %c0_1 = arith.constant 0 : index
    %c0_2 = arith.constant 0 : index
    %1 = vector.load %arg1[%c0_1, %c0_2] : memref<256x128xbf16, #tpu.memory_space<vmem>>, vector<256x128xbf16>
    %cst = arith.constant dense<0.000000e+00> : vector<128x128xf32>
    %2 = tpu.matmul %0, %1, %cst {dimension_numbers = #tpu.dot_dimension_numbers<[1], [0], [0], [1], [0, 0, 1, 1], [], []>} : vector<128x256xbf16>, vector<256x128xbf16>, vector<128x128xf32> -> vector<128x128xf32>
    %c0_3 = arith.constant 0 : index
    %c0_4 = arith.constant 0 : index
    %3 = vector.load %arg2[%c0_3, %c0_4] : memref<1x128xf32, #tpu.memory_space<vmem>>, vector<1x128xf32>
    %4 = vector.broadcast %3 : vector<1x128xf32> to vector<128x128xf32>
    %5 = arith.addf %2, %4 : vector<128x128xf32>
    %c0_5 = arith.constant 0 : index
    %c0_6 = arith.constant 0 : index
    %6 = vector.load %arg3[%c0_5, %c0_6] : memref<128x128xf32, #tpu.memory_space<vmem>>, vector<128x128xf32>
    tpu.vector_store %arg3[%c0_5, %c0_6], %5 {strides = array<i32>} : memref<128x128xf32, #tpu.memory_space<vmem>>, vector<128x128xf32>,
    return
  }
}

</mosaic_0001>

<llo_original>
// kernel: tile.0
$region0: #{tile.0}
  %s0 = inlined_call_operand.vmem [shape: s32[2,64], index: 0, kind: input, shape index: {}]
  %s1 = inlined_call_operand.vmem [shape: s32[128,1], index: 1, kind: output, shape index: {}]
  $region1: #{tile.0} parent=0
    #allocation0 [shape = 'u8[4096]{0}', space=vmem, size = 0x1000, scoped, tag = 'scoped mem for input reshape']
    %s3 = sshllo.u32 0, 2
    %v4 = vld [vmem:[%s0] sm:%s3]
    %5 = vst [vmem:[#allocation0] sm:%s3] %v4
    %v6 = vld [vmem:[#allocation0] sm:$0x3]
    %vm7 = vcmask 7168
    %8 = vst.msk [vmem:[%s1] sm:$0x1] %vm7, %v6
    %s9 = scalar_lea.vmem %s1, 63
    %10 = vst.msk [vmem:[%s9] sm:$0x2] %vm7, %v6
    %v11 = vld [vmem:[#allocation0] sm:$0x3]
    %12 = vrot.lane.b32.xlu0 %v11, 127
    %v13 = vpop.permute.xlu0 %12
    %vm14 = vcmask 7168
    %s15 = scalar_lea.vmem %s1, 1
    %16 = vst.msk [vmem:[%s15] sm:$0x1] %vm14, %v13
    %s17 = scalar_lea.vmem %s1, 64
    %18 = vst.msk [vmem:[%s17] sm:$0x2] %vm14, %v13
    %v19 = vld [vmem:[#allocation0] sm:$0x3]
    %20 = vrot.lane.b32.xlu0 %v19, 126
    %v21 = vpop.permute.xlu0 %20
    %vm22 = vcmask 7168
    %s23 = scalar_lea.vmem %s1, 2
    %24 = vst.msk [vmem:[%s23] sm:$0x1] %vm22, %v21
    %s25 = scalar_lea.vmem %s1, 65
    %26 = vst.msk [vmem:[%s25] sm:$0x2] %vm22, %v21
    %v27 = vld [vmem:[#allocation0] sm:$0x3]
    %28 = vrot.lane.b32.xlu0 %v27, 125
    %v29 = vpop.permute.xlu0 %28
    %vm30 = vcmask 7168
    %s31 = scalar_lea.vmem %s1, 3
    %32 = vst.msk [vmem:[%s31] sm:$0x1] %vm30, %v29
    %s33 = scalar_lea.vmem %s1, 66
    %34 = vst.msk [vmem:[%s33] sm:$0x2] %vm30, %v29
    %v35 = vld [vmem:[#allocation0] sm:$0x3]
    %36 = vrot.lane.b32.xlu0 %v35, 124
    %v37 = vpop.permute.xlu0 %36
    %vm38 = vcmask 7168
    %s39 = scalar_lea.vmem %s1, 4
    %40 = vst.msk [vmem:[%s39] sm:$0x1] %vm38, %v37
    %s41 = scalar_lea.vmem %s1, 67
    %42 = vst.msk [vmem:[%s41] sm:$0x2] %vm38, %v37
    %v43 = vld [vmem:[#allocation0] sm:$0x3]
    %44 = vrot.lane.b32.xlu0 %v43, 123
    %v45 = vpop.permute.xlu0 %44
    %vm46 = vcmask 7168
    %s47 = scalar_lea.vmem %s1, 5
    %48 = vst.msk [vmem:[%s47] sm:$0x1] %vm46, %v45
    %s49 = scalar_lea.vmem %s1, 68
    %50 = vst.msk [vmem:[%s49] sm:$0x2] %vm46, %v45
    %v51 = vld [vmem:[#allocation0] sm:$0x3]
    %52 = vrot.lane.b32.xlu0 %v51, 122
    %v53 = vpop.permute.xlu0 %52
    %vm54 = vcmask 7168
    %s55 = scalar_lea.vmem %s1, 6
    %56 = vst.msk [vmem:[%s55] sm:$0x1] %vm54, %v53
    %s57 = scalar_lea.vmem %s1, 69
    %58 = vst.msk [vmem:[%s57] sm:$0x2] %vm54, %v53
    %v59 = vld [vmem:[#allocation0] sm:$0x3]
    %60 = vrot.lane.b32.xlu0 %v59, 121
    %v61 = vpop.permute.xlu0 %60
    %vm62 = vcmask 7168
    %s63 = scalar_lea.vmem %s1, 7
    %64 = vst.msk [vmem:[%s63] sm:$0x1] %vm62, %v61
    %s65 = scalar_lea.vmem %s1, 70
    %66 = vst.msk [vmem:[%s65] sm:$0x2] %vm62, %v61
    %v67 = vld [vmem:[#allocation0] sm:$0x3]
    %68 = vrot.lane.b32.xlu0 %v67, 120
    %v69 = vpop.permute.xlu0 %68
    %vm70 = vcmask 7168
    %s71 = scalar_lea.vmem %s1, 8
    %72 = vst.msk [vmem:[%s71] sm:$0x1] %vm70, %v69
    %s73 = scalar_lea.vmem %s1, 71
    %74 = vst.msk [vmem:[%s73] sm:$0x2] %vm70, %v69
    %v75 = vld [vmem:[#allocation0] sm:$0x3]
    %76 = vrot.lane.b32.xlu0 %v75, 119
    %v77 = vpop.permute.xlu0 %76
    %vm78 = vcmask 7168
    %s79 = scalar_lea.vmem %s1, 9
    %80 = vst.msk [vmem:[%s79] sm:$0x1] %vm78, %v77
    %s81 = scalar_lea.vmem %s1, 72
    %82 = vst.msk [vmem:[%s81] sm:$0x2] %vm78, %v77
    %v83 = vld [vmem:[#allocation0] sm:$0x3]
    %84 = vrot.lane.b32.xlu0 %v83, 118
    %v85 = vpop.permute.xlu0 %84
    %vm86 = vcmask 7168
    %s87 = scalar_lea.vmem %s1, 10
    %88 = vst.msk [vmem:[%s87] sm:$0x1] %vm86, %v85
    %s89 = scalar_lea.vmem %s1, 73
    %90 = vst.msk [vmem:[%s89] sm:$0x2] %vm86, %v85
    %v91 = vld [vmem:[#allocation0] sm:$0x3]
    %92 = vrot.lane.b32.xlu0 %v91, 117
    %v93 = vpop.permute.xlu0 %92
    %vm94 = vcmask 7168
    %s95 = scalar_lea.vmem %s1, 11
    %96 = vst.msk [vmem:[%s95] sm:$0x1] %vm94, %v93
    %s97 = scalar_lea.vmem %s1, 74
    %98 = vst.msk [vmem:[%s97] sm:$0x2] %vm94, %v93
    %v99 = vld [vmem:[#allocation0] sm:$0x3]
    %100 = vrot.lane.b32.xlu0 %v99, 116
    %v101 = vpop.permute.xlu0 %100
    %vm102 = vcmask 7168
    %s103 = scalar_lea.vmem %s1, 12
    %104 = vst.msk [vmem:[%s103] sm:$0x1] %vm102, %v101
    %s105 = scalar_lea.vmem %s1, 75
    %106 = vst.msk [vmem:[%s105] sm:$0x2] %vm102, %v101
    %v107 = vld [vmem:[#allocation0] sm:$0x3]
    %108 = vrot.lane.b32.xlu0 %v107, 115
    %v109 = vpop.permute.xlu0 %108
    %vm110 = vcmask 7168
    %s111 = scalar_lea.vmem %s1, 13
    %112 = vst.msk [vmem:[%s111] sm:$0x1] %vm110, %v109
    %s113 = scalar_lea.vmem %s1, 76
    %114 = vst.msk [vmem:[%s113] sm:$0x2] %vm110, %v109
    %v115 = vld [vmem:[#allocation0] sm:$0x3]
    %116 = vrot.lane.b32.xlu0 %v115, 114
    %v117 = vpop.permute.xlu0 %116
    %vm118 = vcmask 7168
    %s119 = scalar_lea.vmem %s1, 14
    %120 = vst.msk [vmem:[%s119] sm:$0x1] %vm118, %v117
    %s121 = scalar_lea.vmem %s1, 77
    %122 = vst.msk [vmem:[%s121] sm:$0x2] %vm118, %v117
    %v123 = vld [vmem:[#allocation0] sm:$0x3]
    %124 = vrot.lane.b32.xlu0 %v123, 113
    %v125 = vpop.permute.xlu0 %124
    %vm126 = vcmask 7168
    %s127 = scalar_lea.vmem %s1, 15
    %128 = vst.msk [vmem:[%s127] sm:$0x1] %vm126, %v125
    %s129 = scalar_lea.vmem %s1, 78
    %130 = vst.msk [vmem:[%s129] sm:$0x2] %vm126, %v125
    %v131 = vld [vmem:[#allocation0] sm:$0x3]
    %132 = vrot.lane.b32.xlu0 %v131, 112
    %v133 = vpop.permute.xlu0 %132
    %vm134 = vcmask 7168
    %s135 = scalar_lea.vmem %s1, 16
    %136 = vst.msk [vmem:[%s135] sm:$0x1] %vm134, %v133
    %s137 = scalar_lea.vmem %s1, 79
    %138 = vst.msk [vmem:[%s137] sm:$0x2] %vm134, %v133
    %v139 = vld [vmem:[#allocation0] sm:$0x3]
    %140 = vrot.lane.b32.xlu0 %v139, 111
    %v141 = vpop.permute.xlu0 %140
    %vm142 = vcmask 7168
    %s143 = scalar_lea.vmem %s1, 17
    %144 = vst.msk [vmem:[%s143] sm:$0x1] %vm142, %v141
    %s145 = scalar_lea.vmem %s1, 80
    %146 = vst.msk [vmem:[%s145] sm:$0x2] %vm142, %v141
    %v147 = vld [vmem:[#allocation0] sm:$0x3]
    %148 = vrot.lane.b32.xlu0 %v147, 110
    %v149 = vpop.permute.xlu0 %148
    %vm150 = vcmask 7168
    %s151 = scalar_lea.vmem %s1, 18
    %152 = vst.msk [vmem:[%s151] sm:$0x1] %vm150, %v149
    %s153 = scalar_lea.vmem %s1, 81
    %154 = vst.msk [vmem:[%s153] sm:$0x2] %vm150, %v149
    %v155 = vld [vmem:[#allocation0] sm:$0x3]
    %156 = vrot.lane.b32.xlu0 %v155, 109
    %v157 = vpop.permute.xlu0 %156
    %vm158 = vcmask 7168
    %s159 = scalar_lea.vmem %s1, 19
    %160 = vst.msk [vmem:[%s159] sm:$0x1] %vm158, %v157
    %s161 = scalar_lea.vmem %s1, 82
    %162 = vst.msk [vmem:[%s161] sm:$0x2] %vm158, %v157
    %v163 = vld [vmem:[#allocation0] sm:$0x3]
    %164 = vrot.lane.b32.xlu0 %v163, 108
    %v165 = vpop.permute.xlu0 %164
    %vm166 = vcmask 7168
    %s167 = scalar_lea.vmem %s1, 20
    %168 = vst.msk [vmem:[%s167] sm:$0x1] %vm166, %v165
    %s169 = scalar_lea.vmem %s1, 83
    %170 = vst.msk [vmem:[%s169] sm:$0x2] %vm166, %v165
    %v171 = vld [vmem:[#allocation0] sm:$0x3]
    %172 = vrot.lane.b32.xlu0 %v171, 107
    %v173 = vpop.permute.xlu0 %172
    %vm174 = vcmask 7168
    %s175 = scalar_lea.vmem %s1, 21
    %176 = vst.msk [vmem:[%s175] sm:$0x1] %vm174, %v173
    %s177 = scalar_lea.vmem %s1, 84
    %178 = vst.msk [vmem:[%s177] sm:$0x2] %vm174, %v173
    %v179 = vld [vmem:[#allocation0] sm:$0x3]
    %180 = vrot.lane.b32.xlu0 %v179, 106
    %v181 = vpop.permute.xlu0 %180
    %vm182 = vcmask 7168
    %s183 = scalar_lea.vmem %s1, 22
    %184 = vst.msk [vmem:[%s183] sm:$0x1] %vm182, %v181
    %s185 = scalar_lea.vmem %s1, 85
    %186 = vst.msk [vmem:[%s185] sm:$0x2] %vm182, %v181
    %v187 = vld [vmem:[#allocation0] sm:$0x3]
    %188 = vrot.lane.b32.xlu0 %v187, 105
    %v189 = vpop.permute.xlu0 %188
    %vm190 = vcmask 7168
    %s191 = scalar_lea.vmem %s1, 23
    %192 = vst.msk [vmem:[%s191] sm:$0x1] %vm190, %v189
    %s193 = scalar_lea.vmem %s1, 86
    %194 = vst.msk [vmem:[%s193] sm:$0x2] %vm190, %v189
    %v195 = vld [vmem:[#allocation0] sm:$0x3]
    %196 = vrot.lane.b32.xlu0 %v195, 104
    %v197 = vpop.permute.xlu0 %196
    %vm198 = vcmask 7168
    %s199 = scalar_lea.vmem %s1, 24
    %200 = vst.msk [vmem:[%s199] sm:$0x1] %vm198, %v197
    %s201 = scalar_lea.vmem %s1, 87
    %202 = vst.msk [vmem:[%s201] sm:$0x2] %vm198, %v197
    %v203 = vld [vmem:[#allocation0] sm:$0x3]
    %204 = vrot.lane.b32.xlu0 %v203, 103
    %v205 = vpop.permute.xlu0 %204
    %vm206 = vcmask 7168
    %s207 = scalar_lea.vmem %s1, 25
    %208 = vst.msk [vmem:[%s207] sm:$0x1] %vm206, %v205
    %s209 = scalar_lea.vmem %s1, 88
    %210 = vst.msk [vmem:[%s209] sm:$0x2] %vm206, %v205
    %v211 = vld [vmem:[#allocation0] sm:$0x3]
    %212 = vrot.lane.b32.xlu0 %v211, 102
    %v213 = vpop.permute.xlu0 %212
    %vm214 = vcmask 7168
    %s215 = scalar_lea.vmem %s1, 26
    %216 = vst.msk [vmem:[%s215] sm:$0x1] %vm214, %v213
    %s217 = scalar_lea.vmem %s1, 89
    %218 = vst.msk [vmem:[%s217] sm:$0x2] %vm214, %v213
    %v219 = vld [vmem:[#allocation0] sm:$0x3]
    %220 = vrot.lane.b32.xlu0 %v219, 101
    %v221 = vpop.permute.xlu0 %220
    %vm222 = vcmask 7168
    %s223 = scalar_lea.vmem %s1, 27
    %224 = vst.msk [vmem:[%s223] sm:$0x1] %vm222, %v221
    %s225 = scalar_lea.vmem %s1, 90
    %226 = vst.msk [vmem:[%s225] sm:$0x2] %vm222, %v221
    %v227 = vld [vmem:[#allocation0] sm:$0x3]
    %228 = vrot.lane.b32.xlu0 %v227, 100
    %v229 = vpop.permute.xlu0 %228
    %vm230 = vcmask 7168
    %s231 = scalar_lea.vmem %s1, 28
    %232 = vst.msk [vmem:[%s231] sm:$0x1] %vm230, %v229
    %s233 = scalar_lea.vmem %s1, 91
    %234 = vst.msk [vmem:[%s233] sm:$0x2] %vm230, %v229
    %v235 = vld [vmem:[#allocation0] sm:$0x3]
    %236 = vrot.lane.b32.xlu0 %v235, 99
    %v237 = vpop.permute.xlu0 %236
    %vm238 = vcmask 7168
    %s239 = scalar_lea.vmem %s1, 29
    %240 = vst.msk [vmem:[%s239] sm:$0x1] %vm238, %v237
    %s241 = scalar_lea.vmem %s1, 92
    %242 = vst.msk [vmem:[%s241] sm:$0x2] %vm238, %v237
    %v243 = vld [vmem:[#allocation0] sm:$0x3]
    %244 = vrot.lane.b32.xlu0 %v243, 98
    %v245 = vpop.permute.xlu0 %244
    %vm246 = vcmask 7168
    %s247 = scalar_lea.vmem %s1, 30
    %248 = vst.msk [vmem:[%s247] sm:$0x1] %vm246, %v245
    %s249 = scalar_lea.vmem %s1, 93
    %250 = vst.msk [vmem:[%s249] sm:$0x2] %vm246, %v245
    %v251 = vld [vmem:[#allocation0] sm:$0x3]
    %252 = vrot.lane.b32.xlu0 %v251, 97
    %v253 = vpop.permute.xlu0 %252
    %vm254 = vcmask 7168
    %s255 = scalar_lea.vmem %s1, 31
    %256 = vst.msk [vmem:[%s255] sm:$0x1] %vm254, %v253
    %s257 = scalar_lea.vmem %s1, 94
    %258 = vst.msk [vmem:[%s257] sm:$0x2] %vm254, %v253
    %v259 = vld [vmem:[#allocation0] sm:$0x3]
    %260 = vrot.lane.b32.xlu0 %v259, 96
    %v261 = vpop.permute.xlu0 %260
    %vm262 = vcmask 7168
    %s263 = scalar_lea.vmem %s1, 32
    %264 = vst.msk [vmem:[%s263] sm:$0x1] %vm262, %v261
    %s265 = scalar_lea.vmem %s1, 95
    %266 = vst.msk [vmem:[%s265] sm:$0x2] %vm262, %v261
    %v267 = vld [vmem:[#allocation0] sm:$0x3]
    %268 = vrot.lane.b32.xlu0 %v267, 95
    %v269 = vpop.permute.xlu0 %268
    %vm270 = vcmask 7168
    %s271 = scalar_lea.vmem %s1, 33
    %272 = vst.msk [vmem:[%s271] sm:$0x1] %vm270, %v269
    %s273 = scalar_lea.vmem %s1, 96
    %274 = vst.msk [vmem:[%s273] sm:$0x2] %vm270, %v269
    %v275 = vld [vmem:[#allocation0] sm:$0x3]
    %276 = vrot.lane.b32.xlu0 %v275, 94
    %v277 = vpop.permute.xlu0 %276
    %vm278 = vcmask 7168
    %s279 = scalar_lea.vmem %s1, 34
    %280 = vst.msk [vmem:[%s279] sm:$0x1] %vm278, %v277
    %s281 = scalar_lea.vmem %s1, 97
    %282 = vst.msk [vmem:[%s281] sm:$0x2] %vm278, %v277
    %v283 = vld [vmem:[#allocation0] sm:$0x3]
    %284 = vrot.lane.b32.xlu0 %v283, 93
    %v285 = vpop.permute.xlu0 %284
    %vm286 = vcmask 7168
    %s287 = scalar_lea.vmem %s1, 35
    %288 = vst.msk [vmem:[%s287] sm:$0x1] %vm286, %v285
    %s289 = scalar_lea.vmem %s1, 98
    %290 = vst.msk [vmem:[%s289] sm:$0x2] %vm286, %v285
    %v291 = vld [vmem:[#allocation0] sm:$0x3]
    %292 = vrot.lane.b32.xlu0 %v291, 92
    %v293 = vpop.permute.xlu0 %292
    %vm294 = vcmask 7168
    %s295 = scalar_lea.vmem %s1, 36
    %296 = vst.msk [vmem:[%s295] sm:$0x1] %vm294, %v293
    %s297 = scalar_lea.vmem %s1, 99
    %298 = vst.msk [vmem:[%s297] sm:$0x2] %vm294, %v293
    %v299 = vld [vmem:[#allocation0] sm:$0x3]
    %300 = vrot.lane.b32.xlu0 %v299, 91
    %v301 = vpop.permute.xlu0 %300
    %vm302 = vcmask 7168
    %s303 = scalar_lea.vmem %s1, 37
    %304 = vst.msk [vmem:[%s303] sm:$0x1] %vm302, %v301
    %s305 = scalar_lea.vmem %s1, 100
    %306 = vst.msk [vmem:[%s305] sm:$0x2] %vm302, %v301
    %v307 = vld [vmem:[#allocation0] sm:$0x3]
    %308 = vrot.lane.b32.xlu0 %v307, 90
    %v309 = vpop.permute.xlu0 %308
    %vm310 = vcmask 7168
    %s311 = scalar_lea.vmem %s1, 38
    %312 = vst.msk [vmem:[%s311] sm:$0x1] %vm310, %v309
    %s313 = scalar_lea.vmem %s1, 101
    %314 = vst.msk [vmem:[%s313] sm:$0x2] %vm310, %v309
    %v315 = vld [vmem:[#allocation0] sm:$0x3]
    %316 = vrot.lane.b32.xlu0 %v315, 89
    %v317 = vpop.permute.xlu0 %316
    %vm318 = vcmask 7168
    %s319 = scalar_lea.vmem %s1, 39
    %320 = vst.msk [vmem:[%s319] sm:$0x1] %vm318, %v317
    %s321 = scalar_lea.vmem %s1, 102
    %322 = vst.msk [vmem:[%s321] sm:$0x2] %vm318, %v317
    %v323 = vld [vmem:[#allocation0] sm:$0x3]
    %324 = vrot.lane.b32.xlu0 %v323, 88
    %v325 = vpop.permute.xlu0 %324
    %vm326 = vcmask 7168
    %s327 = scalar_lea.vmem %s1, 40
    %328 = vst.msk [vmem:[%s327] sm:$0x1] %vm326, %v325
    %s329 = scalar_lea.vmem %s1, 103
    %330 = vst.msk [vmem:[%s329] sm:$0x2] %vm326, %v325
    %v331 = vld [vmem:[#allocation0] sm:$0x3]
    %332 = vrot.lane.b32.xlu0 %v331, 87
    %v333 = vpop.permute.xlu0 %332
    %vm334 = vcmask 7168
    %s335 = scalar_lea.vmem %s1, 41
    %336 = vst.msk [vmem:[%s335] sm:$0x1] %vm334, %v333
    %s337 = scalar_lea.vmem %s1, 104
    %338 = vst.msk [vmem:[%s337] sm:$0x2] %vm334, %v333
    %v339 = vld [vmem:[#allocation0] sm:$0x3]
    %340 = vrot.lane.b32.xlu0 %v339, 86
    %v341 = vpop.permute.xlu0 %340
    %vm342 = vcmask 7168
    %s343 = scalar_lea.vmem %s1, 42
    %344 = vst.msk [vmem:[%s343] sm:$0x1] %vm342, %v341
    %s345 = scalar_lea.vmem %s1, 105
    %346 = vst.msk [vmem:[%s345] sm:$0x2] %vm342, %v341
    %v347 = vld [vmem:[#allocation0] sm:$0x3]
    %348 = vrot.lane.b32.xlu0 %v347, 85
    %v349 = vpop.permute.xlu0 %348
    %vm350 = vcmask 7168
    %s351 = scalar_lea.vmem %s1, 43
    %352 = vst.msk [vmem:[%s351] sm:$0x1] %vm350, %v349
    %s353 = scalar_lea.vmem %s1, 106
    %354 = vst.msk [vmem:[%s353] sm:$0x2] %vm350, %v349
    %v355 = vld [vmem:[#allocation0] sm:$0x3]
    %356 = vrot.lane.b32.xlu0 %v355, 84
    %v357 = vpop.permute.xlu0 %356
    %vm358 = vcmask 7168
    %s359 = scalar_lea.vmem %s1, 44
    %360 = vst.msk [vmem:[%s359] sm:$0x1] %vm358, %v357
    %s361 = scalar_lea.vmem %s1, 107
    %362 = vst.msk [vmem:[%s361] sm:$0x2] %vm358, %v357
    %v363 = vld [vmem:[#allocation0] sm:$0x3]
    %364 = vrot.lane.b32.xlu0 %v363, 83
    %v365 = vpop.permute.xlu0 %364
    %vm366 = vcmask 7168
    %s367 = scalar_lea.vmem %s1, 45
    %368 = vst.msk [vmem:[%s367] sm:$0x1] %vm366, %v365
    %s369 = scalar_lea.vmem %s1, 108
    %370 = vst.msk [vmem:[%s369] sm:$0x2] %vm366, %v365
    %v371 = vld [vmem:[#allocation0] sm:$0x3]
    %372 = vrot.lane.b32.xlu0 %v371, 82
    %v373 = vpop.permute.xlu0 %372
    %vm374 = vcmask 7168
    %s375 = scalar_lea.vmem %s1, 46
    %376 = vst.msk [vmem:[%s375] sm:$0x1] %vm374, %v373
    %s377 = scalar_lea.vmem %s1, 109
    %378 = vst.msk [vmem:[%s377] sm:$0x2] %vm374, %v373
    %v379 = vld [vmem:[#allocation0] sm:$0x3]
    %380 = vrot.lane.b32.xlu0 %v379, 81
    %v381 = vpop.permute.xlu0 %380
    %vm382 = vcmask 7168
    %s383 = scalar_lea.vmem %s1, 47
    %384 = vst.msk [vmem:[%s383] sm:$0x1] %vm382, %v381
    %s385 = scalar_lea.vmem %s1, 110
    %386 = vst.msk [vmem:[%s385] sm:$0x2] %vm382, %v381
    %v387 = vld [vmem:[#allocation0] sm:$0x3]
    %388 = vrot.lane.b32.xlu0 %v387, 80
    %v389 = vpop.permute.xlu0 %388
    %vm390 = vcmask 7168
    %s391 = scalar_lea.vmem %s1, 48
    %392 = vst.msk [vmem:[%s391] sm:$0x1] %vm390, %v389
    %s393 = scalar_lea.vmem %s1, 111
    %394 = vst.msk [vmem:[%s393] sm:$0x2] %vm390, %v389
    %v395 = vld [vmem:[#allocation0] sm:$0x3]
    %396 = vrot.lane.b32.xlu0 %v395, 79
    %v397 = vpop.permute.xlu0 %396
    %vm398 = vcmask 7168
    %s399 = scalar_lea.vmem %s1, 49
    %400 = vst.msk [vmem:[%s399] sm:$0x1] %vm398, %v397
    %s401 = scalar_lea.vmem %s1, 112
    %402 = vst.msk [vmem:[%s401] sm:$0x2] %vm398, %v397
    %v403 = vld [vmem:[#allocation0] sm:$0x3]
    %404 = vrot.lane.b32.xlu0 %v403, 78
    %v405 = vpop.permute.xlu0 %404
    %vm406 = vcmask 7168
    %s407 = scalar_lea.vmem %s1, 50
    %408 = vst.msk [vmem:[%s407] sm:$0x1] %vm406, %v405
    %s409 = scalar_lea.vmem %s1, 113
    %410 = vst.msk [vmem:[%s409] sm:$0x2] %vm406, %v405
    %v411 = vld [vmem:[#allocation0] sm:$0x3]
    %412 = vrot.lane.b32.xlu0 %v411, 77
    %v413 = vpop.permute.xlu0 %412
    %vm414 = vcmask 7168
    %s415 = scalar_lea.vmem %s1, 51
    %416 = vst.msk [vmem:[%s415] sm:$0x1] %vm414, %v413
    %s417 = scalar_lea.vmem %s1, 114
    %418 = vst.msk [vmem:[%s417] sm:$0x2] %vm414, %v413
    %v419 = vld [vmem:[#allocation0] sm:$0x3]
    %420 = vrot.lane.b32.xlu0 %v419, 76
    %v421 = vpop.permute.xlu0 %420
    %vm422 = vcmask 7168
    %s423 = scalar_lea.vmem %s1, 52
    %424 = vst.msk [vmem:[%s423] sm:$0x1] %vm422, %v421
    %s425 = scalar_lea.vmem %s1, 115
    %426 = vst.msk [vmem:[%s425] sm:$0x2] %vm422, %v421
    %v427 = vld [vmem:[#allocation0] sm:$0x3]
    %428 = vrot.lane.b32.xlu0 %v427, 75
    %v429 = vpop.permute.xlu0 %428
    %vm430 = vcmask 7168
    %s431 = scalar_lea.vmem %s1, 53
    %432 = vst.msk [vmem:[%s431] sm:$0x1] %vm430, %v429
    %s433 = scalar_lea.vmem %s1, 116
    %434 = vst.msk [vmem:[%s433] sm:$0x2] %vm430, %v429
    %v435 = vld [vmem:[#allocation0] sm:$0x3]
    %436 = vrot.lane.b32.xlu0 %v435, 74
    %v437 = vpop.permute.xlu0 %436
    %vm438 = vcmask 7168
    %s439 = scalar_lea.vmem %s1, 54
    %440 = vst.msk [vmem:[%s439] sm:$0x1] %vm438, %v437
    %s441 = scalar_lea.vmem %s1, 117
    %442 = vst.msk [vmem:[%s441] sm:$0x2] %vm438, %v437
    %v443 = vld [vmem:[#allocation0] sm:$0x3]
    %444 = vrot.lane.b32.xlu0 %v443, 73
    %v445 = vpop.permute.xlu0 %444
    %vm446 = vcmask 7168
    %s447 = scalar_lea.vmem %s1, 55
    %448 = vst.msk [vmem:[%s447] sm:$0x1] %vm446, %v445
    %s449 = scalar_lea.vmem %s1, 118
    %450 = vst.msk [vmem:[%s449] sm:$0x2] %vm446, %v445
    %v451 = vld [vmem:[#allocation0] sm:$0x3]
    %452 = vrot.lane.b32.xlu0 %v451, 72
    %v453 = vpop.permute.xlu0 %452
    %vm454 = vcmask 7168
    %s455 = scalar_lea.vmem %s1, 56
    %456 = vst.msk [vmem:[%s455] sm:$0x1] %vm454, %v453
    %s457 = scalar_lea.vmem %s1, 119
    %458 = vst.msk [vmem:[%s457] sm:$0x2] %vm454, %v453
    %v459 = vld [vmem:[#allocation0] sm:$0x3]
    %460 = vrot.lane.b32.xlu0 %v459, 71
    %v461 = vpop.permute.xlu0 %460
    %vm462 = vcmask 7168
    %s463 = scalar_lea.vmem %s1, 57
    %464 = vst.msk [vmem:[%s463] sm:$0x1] %vm462, %v461
    %s465 = scalar_lea.vmem %s1, 120
    %466 = vst.msk [vmem:[%s465] sm:$0x2] %vm462, %v461
    %v467 = vld [vmem:[#allocation0] sm:$0x3]
    %468 = vrot.lane.b32.xlu0 %v467, 70
    %v469 = vpop.permute.xlu0 %468
    %vm470 = vcmask 7168
    %s471 = scalar_lea.vmem %s1, 58
    %472 = vst.msk [vmem:[%s471] sm:$0x1] %vm470, %v469
    %s473 = scalar_lea.vmem %s1, 121
    %474 = vst.msk [vmem:[%s473] sm:$0x2] %vm470, %v469
    %v475 = vld [vmem:[#allocation0] sm:$0x3]
    %476 = vrot.lane.b32.xlu0 %v475, 69
    %v477 = vpop.permute.xlu0 %476
    %vm478 = vcmask 7168
    %s479 = scalar_lea.vmem %s1, 59
    %480 = vst.msk [vmem:[%s479] sm:$0x1] %vm478, %v477
    %s481 = scalar_lea.vmem %s1, 122
    %482 = vst.msk [vmem:[%s481] sm:$0x2] %vm478, %v477
    %v483 = vld [vmem:[#allocation0] sm:$0x3]
    %484 = vrot.lane.b32.xlu0 %v483, 68
    %v485 = vpop.permute.xlu0 %484
    %vm486 = vcmask 7168
    %s487 = scalar_lea.vmem %s1, 60
    %488 = vst.msk [vmem:[%s487] sm:$0x1] %vm486, %v485
    %s489 = scalar_lea.vmem %s1, 123
    %490 = vst.msk [vmem:[%s489] sm:$0x2] %vm486, %v485
    %v491 = vld [vmem:[#allocation0] sm:$0x3]
    %492 = vrot.lane.b32.xlu0 %v491, 67
    %v493 = vpop.permute.xlu0 %492
    %vm494 = vcmask 7168
    %s495 = scalar_lea.vmem %s1, 61
    %496 = vst.msk [vmem:[%s495] sm:$0x1] %vm494, %v493
    %s497 = scalar_lea.vmem %s1, 124
    %498 = vst.msk [vmem:[%s497] sm:$0x2] %vm494, %v493
    %v499 = vld [vmem:[#allocation0] sm:$0x3]
    %500 = vrot.lane.b32.xlu0 %v499, 66
    %v501 = vpop.permute.xlu0 %500
    %vm502 = vcmask 7168
    %s503 = scalar_lea.vmem %s1, 62
    %504 = vst.msk [vmem:[%s503] sm:$0x1] %vm502, %v501
    %s505 = scalar_lea.vmem %s1, 125
    %506 = vst.msk [vmem:[%s505] sm:$0x2] %vm502, %v501
    %v507 = vld [vmem:[#allocation0] sm:$0x3]
    %508 = vrot.lane.b32.xlu0 %v507, 65
    %v509 = vpop.permute.xlu0 %508
    %vm510 = vcmask 7168
    %s511 = scalar_lea.vmem %s1, 63
    %512 = vst.msk [vmem:[%s511] sm:$0x1] %vm510, %v509
    %s513 = scalar_lea.vmem %s1, 126
    %514 = vst.msk [vmem:[%s513] sm:$0x2] %vm510, %v509

// kernel: _lambda_.5
$region0: #{_lambda_.5}
  #allocation0 [shape = 'u32[]', space=smem, size = 0x4, offset = 0x4, fixed_abs, tag = 'smem constant byte address 0x4 - core index']
  #allocation1 [shape = 'u32[144,128]{1,0:T(1,128)}', space=vmem, size = 0x12000, scoped, tag = 'internal scratch']
  %s0 = inlined_call_operand.vmem [shape: bf16[128,256], index: 0, kind: input, shape index: {}]
  %s1 = inlined_call_operand.vmem [shape: bf16[256,128], index: 1, kind: input, shape index: {}]
  %s2 = inlined_call_operand.vmem [shape: f32[1,128], index: 2, kind: input, shape index: {}]
  %s3 = inlined_call_operand.hbm [shape: f32[128,128], index: 3, kind: output, shape index: {}]
  %s4 = sld [smem:[#allocation0]]
  $region22: #{_lambda_.5} parent=0
    _
  %s6 = ssub.s32 1, %s4
  %s7 = scalar_select 0, %s6, %s4
  $region1: #{_lambda_.5} parent=0
    #allocation2 [shape = 'u8[65536]{0}', space=vmem, size = 0x10000, scoped, tag = 'output window, operand 0, single buffered']
    #allocation3 [shape = 's32[1]{0}', space=sflag, size = 0x4, scoped, tag = 'scoped memory for _lambda_.5']
    %8 = vsyncpa [#allocation3], 0
    // Predicated region
    $region2: #{_lambda_.5} parent=1 // pred_check
      _
    $region3: #{_lambda_.5} parent=1 // pred_check_branch
      %10 = sbr.rel (0) target = $region5
    $region4: #{_lambda_.5} parent=1 // pred_region
      _
    $region5: #{_lambda_.5} parent=1 // pred_fallthru
      _
    // Predicated region
    $region6: #{_lambda_.5} parent=1 // pred_check
      _
    $region7: #{_lambda_.5} parent=1 // pred_check_branch
      %12 = sbr.rel (0) target = $region9
    $region8: #{_lambda_.5} parent=1 // pred_region
      _
    $region9: #{_lambda_.5} parent=1 // pred_fallthru
      _
    // Predicated region
    $region10: #{_lambda_.5} parent=1 // pred_check
      _
    $region11: #{_lambda_.5} parent=1 // pred_check_branch
      %14 = sbr.rel (0) target = $region13
    $region12: #{_lambda_.5} parent=1 // pred_region
      _
    $region13: #{_lambda_.5} parent=1 // pred_fallthru
      _
    %v16 = vld [vmem:[%s0] sm:$0xff]
    %v17 = vld [vmem:[%s0 + $0x8] sm:$0xff]
    %v18 = vld [vmem:[%s0 + $0x10] sm:$0xff]
    %v19 = vld [vmem:[%s0 + $0x18] sm:$0xff]
    %v20 = vld [vmem:[%s0 + $0x20] sm:$0xff]
    %v21 = vld [vmem:[%s0 + $0x28] sm:$0xff]
    %v22 = vld [vmem:[%s0 + $0x30] sm:$0xff]
    %v23 = vld [vmem:[%s0 + $0x38] sm:$0xff]
    %v24 = vld [vmem:[%s0 + $0x40] sm:$0xff]
    %v25 = vld [vmem:[%s0 + $0x48] sm:$0xff]
    %v26 = vld [vmem:[%s0 + $0x50] sm:$0xff]
    %v27 = vld [vmem:[%s0 + $0x58] sm:$0xff]
    %v28 = vld [vmem:[%s0 + $0x60] sm:$0xff]
    %v29 = vld [vmem:[%s0 + $0x68] sm:$0xff]
    %v30 = vld [vmem:[%s0 + $0x70] sm:$0xff]
    %v31 = vld [vmem:[%s0 + $0x78] sm:$0xff]
    %v32 = vld [vmem:[%s1] sm:$0xf]
    %v33 = vld [vmem:[%s1 + $0x4] sm:$0xf]
    %v34 = vld [vmem:[%s1 + $0x8] sm:$0xf]
    %v35 = vld [vmem:[%s1 + $0xc] sm:$0xf]
    %v36 = vld [vmem:[%s1 + $0x10] sm:$0xf]
    %v37 = vld [vmem:[%s1 + $0x14] sm:$0xf]
    %v38 = vld [vmem:[%s1 + $0x18] sm:$0xf]
    %v39 = vld [vmem:[%s1 + $0x1c] sm:$0xf]
    %v40 = vld [vmem:[%s1 + $0x20] sm:$0xf]
    %v41 = vld [vmem:[%s1 + $0x24] sm:$0xf]
    %v42 = vld [vmem:[%s1 + $0x28] sm:$0xf]
    %v43 = vld [vmem:[%s1 + $0x2c] sm:$0xf]
    %v44 = vld [vmem:[%s1 + $0x30] sm:$0xf]
    %v45 = vld [vmem:[%s1 + $0x34] sm:$0xf]
    %v46 = vld [vmem:[%s1 + $0x38] sm:$0xf]
    %v47 = vld [vmem:[%s1 + $0x3c] sm:$0xf]
    %v48 = vld [vmem:[%s1 + $0x40] sm:$0xf]
    %v49 = vld [vmem:[%s1 + $0x44] sm:$0xf]
    %v50 = vld [vmem:[%s1 + $0x48] sm:$0xf]
    %v51 = vld [vmem:[%s1 + $0x4c] sm:$0xf]
    %v52 = vld [vmem:[%s1 + $0x50] sm:$0xf]
    %v53 = vld [vmem:[%s1 + $0x54] sm:$0xf]
    %v54 = vld [vmem:[%s1 + $0x58] sm:$0xf]
    %v55 = vld [vmem:[%s1 + $0x5c] sm:$0xf]
    %v56 = vld [vmem:[%s1 + $0x60] sm:$0xf]
    %v57 = vld [vmem:[%s1 + $0x64] sm:$0xf]
    %v58 = vld [vmem:[%s1 + $0x68] sm:$0xf]
    %v59 = vld [vmem:[%s1 + $0x6c] sm:$0xf]
    %v60 = vld [vmem:[%s1 + $0x70] sm:$0xf]
    %v61 = vld [vmem:[%s1 + $0x74] sm:$0xf]
    %v62 = vld [vmem:[%s1 + $0x78] sm:$0xf]
    %v63 = vld [vmem:[%s1 + $0x7c] sm:$0xf]
    %v64 = vld [vmem:[%s2] sm:$0x1]
    %v66 = vlaneseq
    %v67 = vshrl.u32 %v66, 7
    %v68 = vsub.s32 0, %v67
    %v69 = vrot.slane %v64, %v68
    %v87 = vunpack.c.l.b16 %v16
    %v88 = vunpack.c.h.b16 %v16
    %v89 = vunpack.c.l.b16 %v17
    %v90 = vunpack.c.h.b16 %v17
    %v91 = vunpack.c.l.b16 %v18
    %v92 = vunpack.c.h.b16 %v18
    %v93 = vunpack.c.l.b16 %v19
    %v94 = vunpack.c.h.b16 %v19
    %v95 = vunpack.c.l.b16 %v20
    %v96 = vunpack.c.h.b16 %v20
    %v97 = vunpack.c.l.b16 %v21
    %v98 = vunpack.c.h.b16 %v21
    %v99 = vunpack.c.l.b16 %v22
    %v100 = vunpack.c.h.b16 %v22
    %v101 = vunpack.c.l.b16 %v23
    %v102 = vunpack.c.h.b16 %v23
    %v103 = vunpack.c.l.b16 %v24
    %v104 = vunpack.c.h.b16 %v24
    %v105 = vunpack.c.l.b16 %v25
    %v106 = vunpack.c.h.b16 %v25
    %v107 = vunpack.c.l.b16 %v26
    %v108 = vunpack.c.h.b16 %v26
    %v109 = vunpack.c.l.b16 %v27
    %v110 = vunpack.c.h.b16 %v27
    %v111 = vunpack.c.l.b16 %v28
    %v112 = vunpack.c.h.b16 %v28
    %v113 = vunpack.c.l.b16 %v29
    %v114 = vunpack.c.h.b16 %v29
    %v115 = vunpack.c.l.b16 %v30
    %v116 = vunpack.c.h.b16 %v30
    %v117 = vunpack.c.l.b16 %v31
    %v118 = vunpack.c.h.b16 %v31
    %v119 = vpack.c.b16 %v89, %v87
    %v120 = vpack.c.b16 %v90, %v88
    %v121 = vpack.c.b16 %v93, %v91
    %v122 = vpack.c.b16 %v94, %v92
    %v123 = vpack.c.b16 %v97, %v95
    %v124 = vpack.c.b16 %v98, %v96
    %v125 = vpack.c.b16 %v101, %v99
    %v126 = vpack.c.b16 %v102, %v100
    %v127 = vpack.c.b16 %v105, %v103
    %v128 = vpack.c.b16 %v106, %v104
    %v129 = vpack.c.b16 %v109, %v107
    %v130 = vpack.c.b16 %v110, %v108
    %v131 = vpack.c.b16 %v113, %v111
    %v132 = vpack.c.b16 %v114, %v112
    %v133 = vpack.c.b16 %v117, %v115
    %v134 = vpack.c.b16 %v118, %v116
    %v183 = vunpack.c.l.b16 %v32
    %v184 = vunpack.c.l.b16 %v33
    %v185 = vunpack.c.l.b16 %v34
    %v186 = vunpack.c.l.b16 %v35
    %v187 = vunpack.c.l.b16 %v36
    %v188 = vunpack.c.l.b16 %v37
    %v189 = vunpack.c.l.b16 %v38
    %v190 = vunpack.c.l.b16 %v39
    %v191 = vunpack.c.l.b16 %v40
    %v192 = vunpack.c.l.b16 %v41
    %v193 = vunpack.c.l.b16 %v42
    %v194 = vunpack.c.l.b16 %v43
    %v195 = vunpack.c.l.b16 %v44
    %v196 = vunpack.c.l.b16 %v45
    %v197 = vunpack.c.l.b16 %v46
    %v198 = vunpack.c.l.b16 %v47
    %v199 = vunpack.c.l.b16 %v48
    %v200 = vunpack.c.l.b16 %v49
    %v201 = vunpack.c.l.b16 %v50
    %v202 = vunpack.c.l.b16 %v51
    %v203 = vunpack.c.l.b16 %v52
    %v204 = vunpack.c.l.b16 %v53
    %v205 = vunpack.c.l.b16 %v54
    %v206 = vunpack.c.l.b16 %v55
    %v207 = vunpack.c.l.b16 %v56
    %v208 = vunpack.c.l.b16 %v57
    %v209 = vunpack.c.l.b16 %v58
    %v210 = vunpack.c.l.b16 %v59
    %v211 = vunpack.c.l.b16 %v60
    %v212 = vunpack.c.l.b16 %v61
    %v213 = vunpack.c.l.b16 %v62
    %v214 = vunpack.c.l.b16 %v63
    %v215 = vpack.c.b16 %v184, %v183
    %v216 = vpack.c.b16 %v186, %v185
    %v217 = vpack.c.b16 %v188, %v187
    %v218 = vpack.c.b16 %v190, %v189
    %v219 = vpack.c.b16 %v192, %v191
    %v220 = vpack.c.b16 %v194, %v193
    %v221 = vpack.c.b16 %v196, %v195
    %v222 = vpack.c.b16 %v198, %v197
    %v223 = vpack.c.b16 %v200, %v199
    %v224 = vpack.c.b16 %v202, %v201
    %v225 = vpack.c.b16 %v204, %v203
    %v226 = vpack.c.b16 %v206, %v205
    %v227 = vpack.c.b16 %v208, %v207
    %v228 = vpack.c.b16 %v210, %v209
    %v229 = vpack.c.b16 %v212, %v211
    %v230 = vpack.c.b16 %v214, %v213
    %247 = vmatprep.subr.bf16.mxu0 0
    %248 = vmatpush1.bf16.msra.mxu0 %v215
    %249 = vmatprep.subr.bf16.mxu0 0
    %250 = vmatpush1.bf16.msra.mxu0 %v216
    %251 = vmatprep.subr.bf16.mxu0 0
    %252 = vmatpush1.bf16.msra.mxu0 %v217
    %253 = vmatprep.subr.bf16.mxu0 0
    %254 = vmatpush1.bf16.msra.mxu0 %v218
    %255 = vmatprep.subr.bf16.mxu0 0
    %256 = vmatpush1.bf16.msra.mxu0 %v219
    %257 = vmatprep.subr.bf16.mxu0 0
    %258 = vmatpush1.bf16.msra.mxu0 %v220
    %259 = vmatprep.subr.bf16.mxu0 0
    %260 = vmatpush1.bf16.msra.mxu0 %v221
    %261 = vmatprep.subr.bf16.mxu0 0
    %262 = vmatpush1.bf16.msra.mxu0 %v222
    %263 = vmatprep.subr.bf16.mxu0 0
    %264 = vmatpush1.bf16.msra.mxu0 %v223
    %265 = vmatprep.subr.bf16.mxu0 0
    %266 = vmatpush1.bf16.msra.mxu0 %v224
    %267 = vmatprep.subr.bf16.mxu0 0
    %268 = vmatpush1.bf16.msra.mxu0 %v225
    %269 = vmatprep.subr.bf16.mxu0 0
    %270 = vmatpush1.bf16.msra.mxu0 %v226
    %271 = vmatprep.subr.bf16.mxu0 0
    %272 = vmatpush1.bf16.msra.mxu0 %v227
    %273 = vmatprep.subr.bf16.mxu0 0
    %274 = vmatpush1.bf16.msra.mxu0 %v228
    %275 = vmatprep.subr.bf16.mxu0 0
    %276 = vmatpush1.bf16.msra.mxu0 %v229
    %277 = vmatprep.subr.bf16.mxu0 0
    %278 = vmatpush1.bf16.msra.mxu0 %v230
    %279 = vmatprep.mubr.bf16.mxu0 %v120
    %280 = vmatmul.mubr.bf16.gmra.mrb[0].mxu0 %v119
    %v281 = vpop.f32.mrb[0].mxu0
    %v282 = vadd.f32 %v69, %v281
    %v283 = vpop.f32.mrb[0].mxu0
    %v284 = vpop.f32.mrb[0].mxu0
    %v285 = vadd.f32 %v69, %v284
    %v286 = vpop.f32.mrb[0].mxu0
    %287 = vmatprep.mubr.bf16.mxu0 %v122
    %288 = vmatmul.mubr.bf16.gmra.mrb[0].mxu0 %v121
    %v289 = vpop.f32.mrb[0].mxu0
    %v290 = vadd.f32 %v69, %v289
    %v291 = vpop.f32.mrb[0].mxu0
    %v292 = vpop.f32.mrb[0].mxu0
    %v293 = vadd.f32 %v69, %v292
    %v294 = vpop.f32.mrb[0].mxu0
    %295 = vmatprep.mubr.bf16.mxu0 %v124
    %296 = vmatmul.mubr.bf16.gmra.mrb[0].mxu0 %v123
    %v297 = vpop.f32.mrb[0].mxu0
    %v298 = vadd.f32 %v69, %v297
    %v299 = vpop.f32.mrb[0].mxu0
    %v300 = vpop.f32.mrb[0].mxu0
    %v301 = vadd.f32 %v69, %v300
    %v302 = vpop.f32.mrb[0].mxu0
    %303 = vmatprep.mubr.bf16.mxu0 %v126
    %304 = vmatmul.mubr.bf16.gmra.mrb[0].mxu0 %v125
    %v305 = vpop.f32.mrb[0].mxu0
    %v306 = vadd.f32 %v69, %v305
    %v307 = vpop.f32.mrb[0].mxu0
    %v308 = vpop.f32.mrb[0].mxu0
    %v309 = vadd.f32 %v69, %v308
    %v310 = vpop.f32.mrb[0].mxu0
    %311 = vmatprep.mubr.bf16.mxu0 %v128
    %312 = vmatmul.mubr.bf16.gmra.mrb[0].mxu0 %v127
    %v313 = vpop.f32.mrb[0].mxu0
    %v314 = vadd.f32 %v69, %v313
    %v315 = vpop.f32.mrb[0].mxu0
    %v316 = vpop.f32.mrb[0].mxu0
    %v317 = vadd.f32 %v69, %v316
    %v318 = vpop.f32.mrb[0].mxu0
    %319 = vmatprep.mubr.bf16.mxu0 %v130
    %320 = vmatmul.mubr.bf16.gmra.mrb[0].mxu0 %v129
    %v321 = vpop.f32.mrb[0].mxu0
    %v322 = vadd.f32 %v69, %v321
    %v323 = vpop.f32.mrb[0].mxu0
    %v324 = vpop.f32.mrb[0].mxu0
    %v325 = vadd.f32 %v69, %v324
    %v326 = vpop.f32.mrb[0].mxu0
    %327 = vmatprep.mubr.bf16.mxu0 %v132
    %328 = vmatmul.mubr.bf16.gmra.mrb[0].mxu0 %v131
    %v329 = vpop.f32.mrb[0].mxu0
    %v330 = vadd.f32 %v69, %v329
    %v331 = vpop.f32.mrb[0].mxu0
    %v332 = vpop.f32.mrb[0].mxu0
    %v333 = vadd.f32 %v69, %v332
    %v334 = vpop.f32.mrb[0].mxu0
    %335 = vmatprep.mubr.bf16.mxu0 %v134
    %336 = vmatmul.mubr.bf16.gmra.mrb[0].mxu0 %v133
    %v337 = vpop.f32.mrb[0].mxu0
    %v338 = vadd.f32 %v69, %v337
    %v339 = vpop.f32.mrb[0].mxu0
    %v340 = vpop.f32.mrb[0].mxu0
    %v341 = vadd.f32 %v69, %v340
    %v342 = vpop.f32.mrb[0].mxu0
    %343 = vdwg.mxu0
    %344 = vst [vmem:[#allocation2] sm:$0xff] %v282
    %345 = vst [vmem:[#allocation2 + $0x8] sm:$0xff] %v285
    %346 = vst [vmem:[#allocation2 + $0x10] sm:$0xff] %v290
    %347 = vst [vmem:[#allocation2 + $0x18] sm:$0xff] %v293
    %348 = vst [vmem:[#allocation2 + $0x20] sm:$0xff] %v298
    %349 = vst [vmem:[#allocation2 + $0x28] sm:$0xff] %v301
    %350 = vst [vmem:[#allocation2 + $0x30] sm:$0xff] %v306
    %351 = vst [vmem:[#allocation2 + $0x38] sm:$0xff] %v309
    %352 = vst [vmem:[#allocation2 + $0x40] sm:$0xff] %v314
    %353 = vst [vmem:[#allocation2 + $0x48] sm:$0xff] %v317
    %354 = vst [vmem:[#allocation2 + $0x50] sm:$0xff] %v322
    %355 = vst [vmem:[#allocation2 + $0x58] sm:$0xff] %v325
    %356 = vst [vmem:[#allocation2 + $0x60] sm:$0xff] %v330
    %357 = vst [vmem:[#allocation2 + $0x68] sm:$0xff] %v333
    %358 = vst [vmem:[#allocation2 + $0x70] sm:$0xff] %v338
    %359 = vst [vmem:[#allocation2 + $0x78] sm:$0xff] %v341
    // Predicated region
    $region14: #{_lambda_.5} parent=1 // pred_check
      _
    $region15: #{_lambda_.5} parent=1 // pred_check_branch
      %361 = sbr.rel (0) target = $region17
    $region16: #{_lambda_.5} parent=1 // pred_region
      %s363 = ssub.s32 2048, 2048
      %364 = vsyncadd [#allocation3], %s363
      %s365 = sshll.u32 [#allocation2], 4
      %s366 = int_to_ptr.vmem [resolvable:$true] %s365
      %371 = dma.vmem_to_hbm [thread:$0]  %s366, 2048, %s3, [#allocation3], 128, 128, 8
    $region17: #{_lambda_.5} parent=1 // pred_fallthru
      _
    // Predicated region
    $region18: #{_lambda_.5} parent=1 // pred_check
      _
    $region19: #{_lambda_.5} parent=1 // pred_check_branch
      %373 = sbr.rel (0) target = $region21
    $region20: #{_lambda_.5} parent=1 // pred_region
      %374 = dma.done [#allocation3], 2048
    $region21: #{_lambda_.5} parent=1 // pred_fallthru
      _
    %375 = vsyncpa [#allocation3], 1

// kernel: _lambda_.3
$region0: #{_lambda_.3}
  #allocation0 [shape = 'u32[]', space=smem, size = 0x4, offset = 0x4, fixed_abs, tag = 'smem constant byte address 0x4 - core index']
  #allocation1 [shape = 'u32[144,128]{1,0:T(1,128)}', space=vmem, size = 0x12000, scoped, tag = 'internal scratch']
  %s0 = inlined_call_operand.vmem [shape: f32[128,128], index: 0, kind: input, shape index: {}]
  %s1 = inlined_call_operand.vmem [shape: s32[128,1], index: 1, kind: input, shape index: {}]
  %s2 = inlined_call_operand.hbm [shape: bf16[384,128], index: 2, kind: input, shape index: {}]
  %s3 = inlined_call_operand.hbm [shape: bf16[640,128], index: 3, kind: input, shape index: {}]
  %s4 = inlined_call_operand.vmem [shape: f32[1,256], index: 4, kind: input, shape index: {}]
  %s5 = inlined_call_operand.vmem [shape: f32[1,256], index: 5, kind: input, shape index: {}]
  %s6 = inlined_call_operand.hbm [shape: bf16[768,128], index: 6, kind: input, shape index: {}]
  %s7 = inlined_call_operand.hbm [shape: bf16[1280,128], index: 7, kind: input, shape index: {}]
  %s8 = inlined_call_operand.vmem [shape: f32[1,256], index: 8, kind: input, shape index: {}]
  %s9 = inlined_call_operand.vmem [shape: f32[1,256], index: 9, kind: input, shape index: {}]
  %s10 = inlined_call_operand.hbm [shape: bf16[128,256], index: 10, kind: input, shape index: {}]
  %s11 = inlined_call_operand.vmem [shape: f32[1,256], index: 11, kind: input, shape index: {}]
  %s12 = inlined_call_operand.vmem [shape: bf16[128,256], index: 12, kind: output, shape index: {}]
  %s13 = sld [smem:[#allocation0]]
  $region78: #{_lambda_.3} parent=0
    _
  %s15 = ssub.s32 1, %s13
  %s16 = scalar_select 0, %s15, %s13
  $region1: #{_lambda_.3} parent=0
    #allocation2 [shape = 'u8[98304]{0}', space=vmem, size = 0x18000, scoped, tag = 'input window, operand 2, single buffered']
    #allocation3 [shape = 's32[1]{0}', space=sflag, size = 0x4, scoped, tag = 'scoped memory for _lambda_.3']
    #allocation4 [shape = 'u8[163840]{0}', space=vmem, size = 0x28000, scoped, tag = 'input window, operand 3, single buffered']
    #allocation5 [shape = 's32[1]{0}', space=sflag, size = 0x4, scoped, tag = 'scoped memory for _lambda_.3']
    #allocation6 [shape = 'u8[196608]{0}', space=vmem, size = 0x30000, scoped, tag = 'input window, operand 6, single buffered']
    #allocation7 [shape = 'u8[327680]{0}', space=vmem, size = 0x50000, scoped, tag = 'input window, operand 7, single buffered']
    #allocation8 [shape = 's32[1]{0}', space=sflag, size = 0x4, scoped, tag = 'scoped memory for _lambda_.3']
    #allocation9 [shape = 'u8[65536]{0}', space=vmem, size = 0x10000, scoped, tag = 'input window, operand 10, single buffered']
    %17 = vsyncpa [#allocation3], 0
    %18 = vsyncpa [#allocation5], 0
    %19 = vsyncpa [#allocation8], 0
    // Predicated region
    $region2: #{_lambda_.3} parent=1 // pred_check
      _
    $region3: #{_lambda_.3} parent=1 // pred_check_branch
      %21 = sbr.rel (0) target = $region5
    $region4: #{_lambda_.3} parent=1 // pred_region
      _
    $region5: #{_lambda_.3} parent=1 // pred_fallthru
      _
    // Predicated region
    $region6: #{_lambda_.3} parent=1 // pred_check
      _
    $region7: #{_lambda_.3} parent=1 // pred_check_branch
      %23 = sbr.rel (0) target = $region9
    $region8: #{_lambda_.3} parent=1 // pred_region
      _
    $region9: #{_lambda_.3} parent=1 // pred_fallthru
      _
    // Predicated region
    $region10: #{_lambda_.3} parent=1 // pred_check
      _
    $region11: #{_lambda_.3} parent=1 // pred_check_branch
      %25 = sbr.rel (0) target = $region13
    $region12: #{_lambda_.3} parent=1 // pred_region
      %s27 = ssub.s32 3072, 3072
      %28 = vsyncadd [#allocation3], %s27
      %s29 = sshll.u32 [#allocation2], 4
      %s30 = int_to_ptr.vmem [resolvable:$true] %s29
      %35 = dma.hbm_to_vmem [thread:$0]  %s2, 3072, %s30, [#allocation3], 64, 64, 4
    $region13: #{_lambda_.3} parent=1 // pred_fallthru
      _
    // Predicated region
    $region14: #{_lambda_.3} parent=1 // pred_check
      _
    $region15: #{_lambda_.3} parent=1 // pred_check_branch
      %37 = sbr.rel (0) target = $region17
    $region16: #{_lambda_.3} parent=1 // pred_region
      %s39 = ssub.s32 5120, 5120
      %40 = vsyncadd [#allocation5], %s39
      %s41 = sshll.u32 [#allocation4], 4
      %s42 = int_to_ptr.vmem [resolvable:$true] %s41
      %47 = dma.hbm_to_vmem [thread:$0]  %s3, 5120, %s42, [#allocation5], 64, 64, 4
    $region17: #{_lambda_.3} parent=1 // pred_fallthru
      _
    // Predicated region
    $region18: #{_lambda_.3} parent=1 // pred_check
      _
    $region19: #{_lambda_.3} parent=1 // pred_check_branch
      %49 = sbr.rel (0) target = $region21
    $region20: #{_lambda_.3} parent=1 // pred_region
      _
    $region21: #{_lambda_.3} parent=1 // pred_fallthru
      _
    // Predicated region
    $region22: #{_lambda_.3} parent=1 // pred_check
      _
    $region23: #{_lambda_.3} parent=1 // pred_check_branch
      %51 = sbr.rel (0) target = $region25
    $region24: #{_lambda_.3} parent=1 // pred_region
      _
    $region25: #{_lambda_.3} parent=1 // pred_fallthru
      _
    // Predicated region
    $region26: #{_lambda_.3} parent=1 // pred_check
      _
    $region27: #{_lambda_.3} parent=1 // pred_check_branch
      %53 = sbr.rel (0) target = $region29
    $region28: #{_lambda_.3} parent=1 // pred_region
      %s55 = ssub.s32 6144, 6144
      %56 = vsyncadd [#allocation5], %s55
      %s57 = sshll.u32 [#allocation6], 4
      %s58 = int_to_ptr.vmem [resolvable:$true] %s57
      %63 = dma.hbm_to_vmem [thread:$0]  %s6, 6144, %s58, [#allocation5], 64, 64, 4
    $region29: #{_lambda_.3} parent=1 // pred_fallthru
      _
    // Predicated region
    $region30: #{_lambda_.3} parent=1 // pred_check
      _
    $region31: #{_lambda_.3} parent=1 // pred_check_branch
      %65 = sbr.rel (0) target = $region33
    $region32: #{_lambda_.3} parent=1 // pred_region
      %s67 = ssub.s32 10240, 10240
      %68 = vsyncadd [#allocation8], %s67
      %s69 = sshll.u32 [#allocation7], 4
      %s70 = int_to_ptr.vmem [resolvable:$true] %s69
      %75 = dma.hbm_to_vmem [thread:$0]  %s7, 10240, %s70, [#allocation8], 64, 64, 4
    $region33: #{_lambda_.3} parent=1 // pred_fallthru
      _
    // Predicated region
    $region34: #{_lambda_.3} parent=1 // pred_check
      _
    $region35: #{_lambda_.3} parent=1 // pred_check_branch
      %77 = sbr.rel (0) target = $region37
    $region36: #{_lambda_.3} parent=1 // pred_region
      _
    $region37: #{_lambda_.3} parent=1 // pred_fallthru
      _
    // Predicated region
    $region38: #{_lambda_.3} parent=1 // pred_check
      _
    $region39: #{_lambda_.3} parent=1 // pred_check_branch
      %79 = sbr.rel (0) target = $region41
    $region40: #{_lambda_.3} parent=1 // pred_region
      _
    $region41: #{_lambda_.3} parent=1 // pred_fallthru
      _
    // Predicated region
    $region42: #{_lambda_.3} parent=1 // pred_check
      _
    $region43: #{_lambda_.3} parent=1 // pred_check_branch
      %81 = sbr.rel (0) target = $region45
    $region44: #{_lambda_.3} parent=1 // pred_region
      %s83 = ssub.s32 2048, 2048
      %84 = vsyncadd [#allocation8], %s83
      %s85 = sshll.u32 [#allocation9], 4
      %s86 = int_to_ptr.vmem [resolvable:$true] %s85
      %91 = dma.hbm_to_vmem [thread:$0]  %s10, 2048, %s86, [#allocation8], 128, 128, 8
    $region45: #{_lambda_.3} parent=1 // pred_fallthru
      _
    // Predicated region
    $region46: #{_lambda_.3} parent=1 // pred_check
      _
    $region47: #{_lambda_.3} parent=1 // pred_check_branch
      %93 = sbr.rel (0) target = $region49
    $region48: #{_lambda_.3} parent=1 // pred_region
      _
    $region49: #{_lambda_.3} parent=1 // pred_fallthru
      _
    // Predicated region
    $region50: #{_lambda_.3} parent=1 // pred_check
      _
    $region51: #{_lambda_.3} parent=1 // pred_check_branch
      %95 = sbr.rel (0) target = $region53
    $region52: #{_lambda_.3} parent=1 // pred_region
      %96 = dma.done [#allocation3], 3072
    $region53: #{_lambda_.3} parent=1 // pred_fallthru
      _
    // Predicated region
    $region54: #{_lambda_.3} parent=1 // pred_check
      _
    $region55: #{_lambda_.3} parent=1 // pred_check_branch
      %98 = sbr.rel (0) target = $region57
    $region56: #{_lambda_.3} parent=1 // pred_region
      %99 = dma.done [#allocation5], 5120
    $region57: #{_lambda_.3} parent=1 // pred_fallthru
      _
    // Predicated region
    $region58: #{_lambda_.3} parent=1 // pred_check
      _
    $region59: #{_lambda_.3} parent=1 // pred_check_branch
      %101 = sbr.rel (0) target = $region61
    $region60: #{_lambda_.3} parent=1 // pred_region
      %102 = dma.done [#allocation5], 6144
    $region61: #{_lambda_.3} parent=1 // pred_fallthru
      _
    // Predicated region
    $region62: #{_lambda_.3} parent=1 // pred_check
      _
    $region63: #{_lambda_.3} parent=1 // pred_check_branch
      %104 = sbr.rel (0) target = $region65
    $region64: #{_lambda_.3} parent=1 // pred_region
      %105 = dma.done [#allocation8], 10240
    $region65: #{_lambda_.3} parent=1 // pred_fallthru
      _
    // Predicated region
    $region66: #{_lambda_.3} parent=1 // pred_check
      _
    $region67: #{_lambda_.3} parent=1 // pred_check_branch
      %107 = sbr.rel (0) target = $region69
    $region68: #{_lambda_.3} parent=1 // pred_region
      %108 = dma.done [#allocation8], 2048
    $region69: #{_lambda_.3} parent=1 // pred_fallthru
      _
    %v110 = vld [vmem:[%s0] sm:$0xff]
    %v111 = vld [vmem:[%s0 + $0x8] sm:$0xff]
    %v112 = vld [vmem:[%s0 + $0x10] sm:$0xff]
    %v113 = vld [vmem:[%s0 + $0x18] sm:$0xff]
    %v114 = vld [vmem:[%s0 + $0x20] sm:$0xff]
    %v115 = vld [vmem:[%s0 + $0x28] sm:$0xff]
    %v116 = vld [vmem:[%s0 + $0x30] sm:$0xff]
    %v117 = vld [vmem:[%s0 + $0x38] sm:$0xff]
    %v118 = vld [vmem:[%s0 + $0x40] sm:$0xff]
    %v119 = vld [vmem:[%s0 + $0x48] sm:$0xff]
    %v120 = vld [vmem:[%s0 + $0x50] sm:$0xff]
    %v121 = vld [vmem:[%s0 + $0x58] sm:$0xff]
    %v122 = vld [vmem:[%s0 + $0x60] sm:$0xff]
    %v123 = vld [vmem:[%s0 + $0x68] sm:$0xff]
    %v124 = vld [vmem:[%s0 + $0x70] sm:$0xff]
    %v125 = vld [vmem:[%s0 + $0x78] sm:$0xff]
    %v126 = vld [vmem:[%s1] sm:$0xff]
    %v127 = vld [vmem:[%s1 + $0x8] sm:$0xff]
    %v128 = vld [vmem:[%s1 + $0x10] sm:$0xff]
    %v129 = vld [vmem:[%s1 + $0x18] sm:$0xff]
    %v130 = vld [vmem:[%s1 + $0x20] sm:$0xff]
    %v131 = vld [vmem:[%s1 + $0x28] sm:$0xff]
    %v132 = vld [vmem:[%s1 + $0x30] sm:$0xff]
    %v133 = vld [vmem:[%s1 + $0x38] sm:$0xff]
    %v134 = vld [vmem:[%s1 + $0x40] sm:$0xff]
    %v135 = vld [vmem:[%s1 + $0x48] sm:$0xff]
    %v136 = vld [vmem:[%s1 + $0x50] sm:$0xff]
    %v137 = vld [vmem:[%s1 + $0x58] sm:$0xff]
    %v138 = vld [vmem:[%s1 + $0x60] sm:$0xff]
    %v139 = vld [vmem:[%s1 + $0x68] sm:$0xff]
    %v140 = vld [vmem:[%s1 + $0x70] sm:$0xff]
    %v141 = vld [vmem:[%s1 + $0x78] sm:$0xff]
    %v142 = vpack.c.bf16 %v111, %v110
    %v143 = vpack.c.bf16 %v113, %v112
    %v144 = vpack.c.bf16 %v115, %v114
    %v145 = vpack.c.bf16 %v117, %v116
    %v146 = vpack.c.bf16 %v119, %v118
    %v147 = vpack.c.bf16 %v121, %v120
    %v148 = vpack.c.bf16 %v123, %v122
    %v149 = vpack.c.bf16 %v125, %v124
    %v150 = vld [vmem:[#allocation9] sm:$0xff]
    %v151 = vld [vmem:[#allocation9 + $0x8] sm:$0xff]
    %v152 = vld [vmem:[#allocation9 + $0x10] sm:$0xff]
    %v153 = vld [vmem:[#allocation9 + $0x18] sm:$0xff]
    %v154 = vld [vmem:[#allocation9 + $0x20] sm:$0xff]
    %v155 = vld [vmem:[#allocation9 + $0x28] sm:$0xff]
    %v156 = vld [vmem:[#allocation9 + $0x30] sm:$0xff]
    %v157 = vld [vmem:[#allocation9 + $0x38] sm:$0xff]
    %v158 = vld [vmem:[#allocation9 + $0x40] sm:$0xff]
    %v159 = vld [vmem:[#allocation9 + $0x48] sm:$0xff]
    %v160 = vld [vmem:[#allocation9 + $0x50] sm:$0xff]
    %v161 = vld [vmem:[#allocation9 + $0x58] sm:$0xff]
    %v162 = vld [vmem:[#allocation9 + $0x60] sm:$0xff]
    %v163 = vld [vmem:[#allocation9 + $0x68] sm:$0xff]
    %v164 = vld [vmem:[#allocation9 + $0x70] sm:$0xff]
    %v165 = vld [vmem:[#allocation9 + $0x78] sm:$0xff]
    %v166 = vld [vmem:[%s11] sm:$0x3]
    %v168 = vlaneseq
    %v169 = vshrl.u32 %v168, 7
    %v170 = vsub.s32 0, %v169
    %v171 = vrot.slane %v166, %v170
    %v172 = vlaneseq
    %v173 = vshrl.u32 %v172, 7
    %v174 = vsub.s32 1, %v173
    %v175 = vrot.slane %v166, %v174
    %v194 = vunpack.c.l.b16 %v150
    %v195 = vunpack.c.h.b16 %v150
    %v196 = vunpack.c.l.b16 %v151
    %v197 = vunpack.c.h.b16 %v151
    %v198 = vunpack.c.l.b16 %v152
    %v199 = vunpack.c.h.b16 %v152
    %v200 = vunpack.c.l.b16 %v153
    %v201 = vunpack.c.h.b16 %v153
    %v202 = vunpack.c.l.b16 %v154
    %v203 = vunpack.c.h.b16 %v154
    %v204 = vunpack.c.l.b16 %v155
    %v205 = vunpack.c.h.b16 %v155
    %v206 = vunpack.c.l.b16 %v156
    %v207 = vunpack.c.h.b16 %v156
    %v208 = vunpack.c.l.b16 %v157
    %v209 = vunpack.c.h.b16 %v157
    %v210 = vunpack.c.l.b16 %v158
    %v211 = vunpack.c.h.b16 %v158
    %v212 = vunpack.c.l.b16 %v159
    %v213 = vunpack.c.h.b16 %v159
    %v214 = vunpack.c.l.b16 %v160
    %v215 = vunpack.c.h.b16 %v160
    %v216 = vunpack.c.l.b16 %v161
    %v217 = vunpack.c.h.b16 %v161
    %v218 = vunpack.c.l.b16 %v162
    %v219 = vunpack.c.h.b16 %v162
    %v220 = vunpack.c.l.b16 %v163
    %v221 = vunpack.c.h.b16 %v163
    %v222 = vunpack.c.l.b16 %v164
    %v223 = vunpack.c.h.b16 %v164
    %v224 = vunpack.c.l.b16 %v165
    %v225 = vunpack.c.h.b16 %v165
    %v226 = vpack.c.b16 %v196, %v194
    %v227 = vpack.c.b16 %v197, %v195
    %v228 = vpack.c.b16 %v200, %v198
    %v229 = vpack.c.b16 %v201, %v199
    %v230 = vpack.c.b16 %v204, %v202
    %v231 = vpack.c.b16 %v205, %v203
    %v232 = vpack.c.b16 %v208, %v206
    %v233 = vpack.c.b16 %v209, %v207
    %v234 = vpack.c.b16 %v212, %v210
    %v235 = vpack.c.b16 %v213, %v211
    %v236 = vpack.c.b16 %v216, %v214
    %v237 = vpack.c.b16 %v217, %v215
    %v238 = vpack.c.b16 %v220, %v218
    %v239 = vpack.c.b16 %v221, %v219
    %v240 = vpack.c.b16 %v224, %v222
    %v241 = vpack.c.b16 %v225, %v223
    %258 = vmatprep.subr.bf16.mxu0 %v227
    %259 = vmatpush1.bf16.msra.mxu0 %v226
    %260 = vmatprep.subr.bf16.mxu0 %v229
    %261 = vmatpush1.bf16.msra.mxu0 %v228
    %262 = vmatprep.subr.bf16.mxu0 %v231
    %263 = vmatpush1.bf16.msra.mxu0 %v230
    %264 = vmatprep.subr.bf16.mxu0 %v233
    %265 = vmatpush1.bf16.msra.mxu0 %v232
    %266 = vmatprep.subr.bf16.mxu0 %v235
    %267 = vmatpush1.bf16.msra.mxu0 %v234
    %268 = vmatprep.subr.bf16.mxu0 %v237
    %269 = vmatpush1.bf16.msra.mxu0 %v236
    %270 = vmatprep.subr.bf16.mxu0 %v239
    %271 = vmatpush1.bf16.msra.mxu0 %v238
    %272 = vmatprep.subr.bf16.mxu0 %v241
    %273 = vmatpush1.bf16.msra.mxu0 %v240
    %274 = vmatprep.subr.bf16.mxu0 0
    %275 = vmatpush1.bf16.msra.mxu0 0
    %276 = vmatprep.subr.bf16.mxu0 0
    %277 = vmatpush1.bf16.msra.mxu0 0
    %278 = vmatprep.subr.bf16.mxu0 0
    %279 = vmatpush1.bf16.msra.mxu0 0
    %280 = vmatprep.subr.bf16.mxu0 0
    %281 = vmatpush1.bf16.msra.mxu0 0
    %282 = vmatprep.subr.bf16.mxu0 0
    %283 = vmatpush1.bf16.msra.mxu0 0
    %284 = vmatprep.subr.bf16.mxu0 0
    %285 = vmatpush1.bf16.msra.mxu0 0
    %286 = vmatprep.subr.bf16.mxu0 0
    %287 = vmatpush1.bf16.msra.mxu0 0
    %288 = vmatprep.subr.bf16.mxu0 0
    %289 = vmatpush1.bf16.msra.mxu0 0
    %290 = vmatprep.mubr.bf16.mxu0 0
    %291 = vmatmul.mubr.bf16.gmra.mrb[0].mxu0 %v142
    %v292 = vpop.f32.mrb[0].mxu0
    %v293 = vadd.f32 %v171, %v292
    %v294 = vpop.f32.mrb[0].mxu0
    %v295 = vadd.f32 %v175, %v294
    %v296 = vpop.f32.mrb[0].mxu0
    %v297 = vadd.f32 %v171, %v296
    %v298 = vpop.f32.mrb[0].mxu0
    %v299 = vadd.f32 %v175, %v298
    %300 = vmatprep.mubr.bf16.mxu0 0
    %301 = vmatmul.mubr.bf16.gmra.mrb[0].mxu0 %v143
    %v302 = vpop.f32.mrb[0].mxu0
    %v303 = vadd.f32 %v171, %v302
    %v304 = vpop.f32.mrb[0].mxu0
    %v305 = vadd.f32 %v175, %v304
    %v306 = vpop.f32.mrb[0].mxu0
    %v307 = vadd.f32 %v171, %v306
    %v308 = vpop.f32.mrb[0].mxu0
    %v309 = vadd.f32 %v175, %v308
    %310 = vmatprep.mubr.bf16.mxu0 0
    %311 = vmatmul.mubr.bf16.gmra.mrb[0].mxu0 %v144
    %v312 = vpop.f32.mrb[0].mxu0
    %v313 = vadd.f32 %v171, %v312
    %v314 = vpop.f32.mrb[0].mxu0
    %v315 = vadd.f32 %v175, %v314
    %v316 = vpop.f32.mrb[0].mxu0
    %v317 = vadd.f32 %v171, %v316
    %v318 = vpop.f32.mrb[0].mxu0
    %v319 = vadd.f32 %v175, %v318
    %320 = vmatprep.mubr.bf16.mxu0 0
    %321 = vmatmul.mubr.bf16.gmra.mrb[0].mxu0 %v145
    %v322 = vpop.f32.mrb[0].mxu0
    %v323 = vadd.f32 %v171, %v322
    %v324 = vpop.f32.mrb[0].mxu0
    %v325 = vadd.f32 %v175, %v324
    %v326 = vpop.f32.mrb[0].mxu0
    %v327 = vadd.f32 %v171, %v326
    %v328 = vpop.f32.mrb[0].mxu0
    %v329 = vadd.f32 %v175, %v328
    %330 = vmatprep.mubr.bf16.mxu0 0
    %331 = vmatmul.mubr.bf16.gmra.mrb[0].mxu0 %v146
    %v332 = vpop.f32.mrb[0].mxu0
    %v333 = vadd.f32 %v171, %v332
    %v334 = vpop.f32.mrb[0].mxu0
    %v335 = vadd.f32 %v175, %v334
    %v336 = vpop.f32.mrb[0].mxu0
    %v337 = vadd.f32 %v171, %v336
    %v338 = vpop.f32.mrb[0].mxu0
    %v339 = vadd.f32 %v175, %v338
    %340 = vmatprep.mubr.bf16.mxu0 0
    %341 = vmatmul.mubr.bf16.gmra.mrb[0].mxu0 %v147
    %v342 = vpop.f32.mrb[0].mxu0
    %v343 = vadd.f32 %v171, %v342
    %v344 = vpop.f32.mrb[0].mxu0
    %v345 = vadd.f32 %v175, %v344
    %v346 = vpop.f32.mrb[0].mxu0
    %v347 = vadd.f32 %v171, %v346
    %v348 = vpop.f32.mrb[0].mxu0
    %v349 = vadd.f32 %v175, %v348
    %350 = vmatprep.mubr.bf16.mxu0 0
    %351 = vmatmul.mubr.bf16.gmra.mrb[0].mxu0 %v148
    %v352 = vpop.f32.mrb[0].mxu0
    %v353 = vadd.f32 %v171, %v352
    %v354 = vpop.f32.mrb[0].mxu0
    %v355 = vadd.f32 %v175, %v354
    %v356 = vpop.f32.mrb[0].mxu0
    %v357 = vadd.f32 %v171, %v356
    %v358 = vpop.f32.mrb[0].mxu0
    %v359 = vadd.f32 %v175, %v358
    %360 = vmatprep.mubr.bf16.mxu0 0
    %361 = vmatmul.mubr.bf16.gmra.mrb[0].mxu0 %v149
    %v362 = vpop.f32.mrb[0].mxu0
    %v363 = vadd.f32 %v171, %v362
    %v364 = vpop.f32.mrb[0].mxu0
    %v365 = vadd.f32 %v175, %v364
    %v366 = vpop.f32.mrb[0].mxu0
    %v367 = vadd.f32 %v171, %v366
    %v368 = vpop.f32.mrb[0].mxu0
    %v369 = vadd.f32 %v175, %v368
    %370 = vdwg.mxu0
    %v371 = vrot.slane %v110, 4
    %v372 = vrot.slane %v111, 4
    %v373 = vrot.slane %v112, 4
    %v374 = vrot.slane %v113, 4
    %v375 = vrot.slane %v114, 4
    %v376 = vrot.slane %v115, 4
    %v377 = vrot.slane %v116, 4
    %v378 = vrot.slane %v117, 4
    %v379 = vrot.slane %v118, 4
    %v380 = vrot.slane %v119, 4
    %v381 = vrot.slane %v120, 4
    %v382 = vrot.slane %v121, 4
    %v383 = vrot.slane %v122, 4
    %v384 = vrot.slane %v123, 4
    %v385 = vrot.slane %v124, 4
    %v386 = vrot.slane %v125, 4
    %v387 = vlaneseq
    %v388 = vshrl.u32 %v387, 7
    %vm389 = vcmp.lt.s32.totalorder %v388, 4
    %v390 = vsel %vm389, %v385, %v386
    %v391 = vsel %vm389, %v384, %v385
    %v392 = vsel %vm389, %v383, %v384
    %v393 = vsel %vm389, %v382, %v383
    %v394 = vsel %vm389, %v381, %v382
    %v395 = vsel %vm389, %v380, %v381
    %v396 = vsel %vm389, %v379, %v380
    %v397 = vsel %vm389, %v378, %v379
    %v398 = vsel %vm389, %v377, %v378
    %v399 = vsel %vm389, %v376, %v377
    %v400 = vsel %vm389, %v375, %v376
    %v401 = vsel %vm389, %v374, %v375
    %v402 = vsel %vm389, %v373, %v374
    %v403 = vsel %vm389, %v372, %v373
    %v404 = vsel %vm389, %v371, %v372
    %v405 = vsel %vm389, %v386, %v371
    %vm406 = vcmp.ge.s32.totalorder %v126, 4
    %vm407 = vcmp.ge.s32.totalorder %v127, 4
    %vm408 = vcmp.ge.s32.totalorder %v128, 4
    %vm409 = vcmp.ge.s32.totalorder %v129, 4
    %vm410 = vcmp.ge.s32.totalorder %v130, 4
    %vm411 = vcmp.ge.s32.totalorder %v131, 4
    %vm412 = vcmp.ge.s32.totalorder %v132, 4
    %vm413 = vcmp.ge.s32.totalorder %v133, 4
    %vm414 = vcmp.ge.s32.totalorder %v134, 4
    %vm415 = vcmp.ge.s32.totalorder %v135, 4
    %vm416 = vcmp.ge.s32.totalorder %v136, 4
    %vm417 = vcmp.ge.s32.totalorder %v137, 4
    %vm418 = vcmp.ge.s32.totalorder %v138, 4
    %vm419 = vcmp.ge.s32.totalorder %v139, 4
    %vm420 = vcmp.ge.s32.totalorder %v140, 4
    %vm421 = vcmp.ge.s32.totalorder %v141, 4
    %v422 = vsel %vm406, 1, 0
    %v423 = vsel %vm407, 1, 0
    %v424 = vsel %vm408, 1, 0
    %v425 = vsel %vm409, 1, 0
    %v426 = vsel %vm410, 1, 0
    %v427 = vsel %vm411, 1, 0
    %v428 = vsel %vm412, 1, 0
    %v429 = vsel %vm413, 1, 0
    %v430 = vsel %vm414, 1, 0
    %v431 = vsel %vm415, 1, 0
    %v432 = vsel %vm416, 1, 0
    %v433 = vsel %vm417, 1, 0
    %v434 = vsel %vm418, 1, 0
    %v435 = vsel %vm419, 1, 0
    %v436 = vsel %vm420, 1, 0
    %v437 = vsel %vm421, 1, 0
    %438 = vset.pattern.permute.xlu0 0
    %439 = vperm.xlu0 %438, %v422
    %v440 = vpop.permute.xlu0 %439
    %441 = vset.pattern.permute.xlu0 0
    %442 = vperm.xlu0 %441, %v423
    %v443 = vpop.permute.xlu0 %442
    %444 = vset.pattern.permute.xlu0 0
    %445 = vperm.xlu0 %444, %v424
    %v446 = vpop.permute.xlu0 %445
    %447 = vset.pattern.permute.xlu0 0
    %448 = vperm.xlu0 %447, %v425
    %v449 = vpop.permute.xlu0 %448
    %450 = vset.pattern.permute.xlu0 0
    %451 = vperm.xlu0 %450, %v426
    %v452 = vpop.permute.xlu0 %451
    %453 = vset.pattern.permute.xlu0 0
    %454 = vperm.xlu0 %453, %v427
    %v455 = vpop.permute.xlu0 %454
    %456 = vset.pattern.permute.xlu0 0
    %457 = vperm.xlu0 %456, %v428
    %v458 = vpop.permute.xlu0 %457
    %459 = vset.pattern.permute.xlu0 0
    %460 = vperm.xlu0 %459, %v429
    %v461 = vpop.permute.xlu0 %460
    %462 = vset.pattern.permute.xlu0 0
    %463 = vperm.xlu0 %462, %v430
    %v464 = vpop.permute.xlu0 %463
    %465 = vset.pattern.permute.xlu0 0
    %466 = vperm.xlu0 %465, %v431
    %v467 = vpop.permute.xlu0 %466
    %468 = vset.pattern.permute.xlu0 0
    %469 = vperm.xlu0 %468, %v432
    %v470 = vpop.permute.xlu0 %469
    %471 = vset.pattern.permute.xlu0 0
    %472 = vperm.xlu0 %471, %v433
    %v473 = vpop.permute.xlu0 %472
    %474 = vset.pattern.permute.xlu0 0
    %475 = vperm.xlu0 %474, %v434
    %v476 = vpop.permute.xlu0 %475
    %477 = vset.pattern.permute.xlu0 0
    %478 = vperm.xlu0 %477, %v435
    %v479 = vpop.permute.xlu0 %478
    %480 = vset.pattern.permute.xlu0 0
    %481 = vperm.xlu0 %480, %v436
    %v482 = vpop.permute.xlu0 %481
    %483 = vset.pattern.permute.xlu0 0
    %484 = vperm.xlu0 %483, %v437
    %v485 = vpop.permute.xlu0 %484
    %vm486 = vcmp.eq.s32.totalorder %v440, 1
    %vm487 = vcmp.eq.s32.totalorder %v443, 1
    %vm488 = vcmp.eq.s32.totalorder %v446, 1
    %vm489 = vcmp.eq.s32.totalorder %v449, 1
    %vm490 = vcmp.eq.s32.totalorder %v452, 1
    %vm491 = vcmp.eq.s32.totalorder %v455, 1
    %vm492 = vcmp.eq.s32.totalorder %v458, 1
    %vm493 = vcmp.eq.s32.totalorder %v461, 1
    %vm494 = vcmp.eq.s32.totalorder %v464, 1
    %vm495 = vcmp.eq.s32.totalorder %v467, 1
    %vm496 = vcmp.eq.s32.totalorder %v470, 1
    %vm497 = vcmp.eq.s32.totalorder %v473, 1
    %vm498 = vcmp.eq.s32.totalorder %v476, 1
    %vm499 = vcmp.eq.s32.totalorder %v479, 1
    %vm500 = vcmp.eq.s32.totalorder %v482, 1
    %vm501 = vcmp.eq.s32.totalorder %v485, 1
    %v502 = vsel %vm486, %v405, 0.0
    %v503 = vsel %vm487, %v404, 0.0
    %v504 = vsel %vm488, %v403, 0.0
    %v505 = vsel %vm489, %v402, 0.0
    %v506 = vsel %vm490, %v401, 0.0
    %v507 = vsel %vm491, %v400, 0.0
    %v508 = vsel %vm492, %v399, 0.0
    %v509 = vsel %vm493, %v398, 0.0
    %v510 = vsel %vm494, %v397, 0.0
    %v511 = vsel %vm495, %v396, 0.0
    %v512 = vsel %vm496, %v395, 0.0
    %v513 = vsel %vm497, %v394, 0.0
    %v514 = vsel %vm498, %v393, 0.0
    %v515 = vsel %vm499, %v392, 0.0
    %v516 = vsel %vm500, %v391, 0.0
    %v517 = vsel %vm501, %v390, 0.0
    %v518 = vpack.c.bf16 %v503, %v502
    %v519 = vpack.c.bf16 %v505, %v504
    %v520 = vpack.c.bf16 %v507, %v506
    %v521 = vpack.c.bf16 %v509, %v508
    %v522 = vpack.c.bf16 %v511, %v510
    %v523 = vpack.c.bf16 %v513, %v512
    %v524 = vpack.c.bf16 %v515, %v514
    %v525 = vpack.c.bf16 %v517, %v516
    %v526 = vrot.slane %v110, 5
    %v527 = vrot.slane %v111, 5
    %v528 = vrot.slane %v112, 5
    %v529 = vrot.slane %v113, 5
    %v530 = vrot.slane %v114, 5
    %v531 = vrot.slane %v115, 5
    %v532 = vrot.slane %v116, 5
    %v533 = vrot.slane %v117, 5
    %v534 = vrot.slane %v118, 5
    %v535 = vrot.slane %v119, 5
    %v536 = vrot.slane %v120, 5
    %v537 = vrot.slane %v121, 5
    %v538 = vrot.slane %v122, 5
    %v539 = vrot.slane %v123, 5
    %v540 = vrot.slane %v124, 5
    %v541 = vrot.slane %v125, 5
    %vm542 = vcmp.lt.s32.totalorder %v388, 3
    %v543 = vsel %vm542, %v540, %v541
    %v544 = vsel %vm542, %v539, %v540
    %v545 = vsel %vm542, %v538, %v539
    %v546 = vsel %vm542, %v537, %v538
    %v547 = vsel %vm542, %v536, %v537
    %v548 = vsel %vm542, %v535, %v536
    %v549 = vsel %vm542, %v534, %v535
    %v550 = vsel %vm542, %v533, %v534
    %v551 = vsel %vm542, %v532, %v533
    %v552 = vsel %vm542, %v531, %v532
    %v553 = vsel %vm542, %v530, %v531
    %v554 = vsel %vm542, %v529, %v530
    %v555 = vsel %vm542, %v528, %v529
    %v556 = vsel %vm542, %v527, %v528
    %v557 = vsel %vm542, %v526, %v527
    %v558 = vsel %vm542, %v541, %v526
    %vm559 = vcmp.ge.s32.totalorder %v126, 3
    %vm560 = vcmp.ge.s32.totalorder %v127, 3
    %vm561 = vcmp.ge.s32.totalorder %v128, 3
    %vm562 = vcmp.ge.s32.totalorder %v129, 3
    %vm563 = vcmp.ge.s32.totalorder %v130, 3
    %vm564 = vcmp.ge.s32.totalorder %v131, 3
    %vm565 = vcmp.ge.s32.totalorder %v132, 3
    %vm566 = vcmp.ge.s32.totalorder %v133, 3
    %vm567 = vcmp.ge.s32.totalorder %v134, 3
    %vm568 = vcmp.ge.s32.totalorder %v135, 3
    %vm569 = vcmp.ge.s32.totalorder %v136, 3
    %vm570 = vcmp.ge.s32.totalorder %v137, 3
    %vm571 = vcmp.ge.s32.totalorder %v138, 3
    %vm572 = vcmp.ge.s32.totalorder %v139, 3
    %vm573 = vcmp.ge.s32.totalorder %v140, 3
    %vm574 = vcmp.ge.s32.totalorder %v141, 3
    %v575 = vsel %vm559, 1, 0
    %v576 = vsel %vm560, 1, 0
    %v577 = vsel %vm561, 1, 0
    %v578 = vsel %vm562, 1, 0
    %v579 = vsel %vm563, 1, 0
    %v580 = vsel %vm564, 1, 0
    %v581 = vsel %vm565, 1, 0
    %v582 = vsel %vm566, 1, 0
    %v583 = vsel %vm567, 1, 0
    %v584 = vsel %vm568, 1, 0
    %v585 = vsel %vm569, 1, 0
    %v586 = vsel %vm570, 1, 0
    %v587 = vsel %vm571, 1, 0
    %v588 = vsel %vm572, 1, 0
    %v589 = vsel %vm573, 1, 0
    %v590 = vsel %vm574, 1, 0
    %591 = vset.pattern.permute.xlu0 0
    %592 = vperm.xlu0 %591, %v575
    %v593 = vpop.permute.xlu0 %592
    %594 = vset.pattern.permute.xlu0 0
    %595 = vperm.xlu0 %594, %v576
    %v596 = vpop.permute.xlu0 %595
    %597 = vset.pattern.permute.xlu0 0
    %598 = vperm.xlu0 %597, %v577
    %v599 = vpop.permute.xlu0 %598
    %600 = vset.pattern.permute.xlu0 0
    %601 = vperm.xlu0 %600, %v578
    %v602 = vpop.permute.xlu0 %601
    %603 = vset.pattern.permute.xlu0 0
    %604 = vperm.xlu0 %603, %v579
    %v605 = vpop.permute.xlu0 %604
    %606 = vset.pattern.permute.xlu0 0
    %607 = vperm.xlu0 %606, %v580
    %v608 = vpop.permute.xlu0 %607
    %609 = vset.pattern.permute.xlu0 0
    %610 = vperm.xlu0 %609, %v581
    %v611 = vpop.permute.xlu0 %610
    %612 = vset.pattern.permute.xlu0 0
    %613 = vperm.xlu0 %612, %v582
    %v614 = vpop.permute.xlu0 %613
    %615 = vset.pattern.permute.xlu0 0
    %616 = vperm.xlu0 %615, %v583
    %v617 = vpop.permute.xlu0 %616
    %618 = vset.pattern.permute.xlu0 0
    %619 = vperm.xlu0 %618, %v584
    %v620 = vpop.permute.xlu0 %619
    %621 = vset.pattern.permute.xlu0 0
    %622 = vperm.xlu0 %621, %v585
    %v623 = vpop.permute.xlu0 %622
    %624 = vset.pattern.permute.xlu0 0
    %625 = vperm.xlu0 %624, %v586
    %v626 = vpop.permute.xlu0 %625
    %627 = vset.pattern.permute.xlu0 0
    %628 = vperm.xlu0 %627, %v587
    %v629 = vpop.permute.xlu0 %628
    %630 = vset.pattern.permute.xlu0 0
    %631 = vperm.xlu0 %630, %v588
    %v632 = vpop.permute.xlu0 %631
    %633 = vset.pattern.permute.xlu0 0
    %634 = vperm.xlu0 %633, %v589
    %v635 = vpop.permute.xlu0 %634
    %636 = vset.pattern.permute.xlu0 0
    %637 = vperm.xlu0 %636, %v590
    %v638 = vpop.permute.xlu0 %637
    %vm639 = vcmp.eq.s32.totalorder %v593, 1
    %vm640 = vcmp.eq.s32.totalorder %v596, 1
    %vm641 = vcmp.eq.s32.totalorder %v599, 1
    %vm642 = vcmp.eq.s32.totalorder %v602, 1
    %vm643 = vcmp.eq.s32.totalorder %v605, 1
    %vm644 = vcmp.eq.s32.totalorder %v608, 1
    %vm645 = vcmp.eq.s32.totalorder %v611, 1
    %vm646 = vcmp.eq.s32.totalorder %v614, 1
    %vm647 = vcmp.eq.s32.totalorder %v617, 1
    %vm648 = vcmp.eq.s32.totalorder %v620, 1
    %vm649 = vcmp.eq.s32.totalorder %v623, 1
    %vm650 = vcmp.eq.s32.totalorder %v626, 1
    %vm651 = vcmp.eq.s32.totalorder %v629, 1
    %vm652 = vcmp.eq.s32.totalorder %v632, 1
    %vm653 = vcmp.eq.s32.totalorder %v635, 1
    %vm654 = vcmp.eq.s32.totalorder %v638, 1
    %v655 = vsel %vm639, %v558, 0.0
    %v656 = vsel %vm640, %v557, 0.0
    %v657 = vsel %vm641, %v556, 0.0
    %v658 = vsel %vm642, %v555, 0.0
    %v659 = vsel %vm643, %v554, 0.0
    %v660 = vsel %vm644, %v553, 0.0
    %v661 = vsel %vm645, %v552, 0.0
    %v662 = vsel %vm646, %v551, 0.0
    %v663 = vsel %vm647, %v550, 0.0
    %v664 = vsel %vm648, %v549, 0.0
    %v665 = vsel %vm649, %v548, 0.0
    %v666 = vsel %vm650, %v547, 0.0
    %v667 = vsel %vm651, %v546, 0.0
    %v668 = vsel %vm652, %v545, 0.0
    %v669 = vsel %vm653, %v544, 0.0
    %v670 = vsel %vm654, %v543, 0.0
    %v671 = vpack.c.bf16 %v656, %v655
    %v672 = vpack.c.bf16 %v658, %v657
    %v673 = vpack.c.bf16 %v660, %v659
    %v674 = vpack.c.bf16 %v662, %v661
    %v675 = vpack.c.bf16 %v664, %v663
    %v676 = vpack.c.bf16 %v666, %v665
    %v677 = vpack.c.bf16 %v668, %v667
    %v678 = vpack.c.bf16 %v670, %v669
    %v679 = vrot.slane %v110, 6
    %v680 = vrot.slane %v111, 6
    %v681 = vrot.slane %v112, 6
    %v682 = vrot.slane %v113, 6
    %v683 = vrot.slane %v114, 6
    %v684 = vrot.slane %v115, 6
    %v685 = vrot.slane %v116, 6
    %v686 = vrot.slane %v117, 6
    %v687 = vrot.slane %v118, 6
    %v688 = vrot.slane %v119, 6
    %v689 = vrot.slane %v120, 6
    %v690 = vrot.slane %v121, 6
    %v691 = vrot.slane %v122, 6
    %v692 = vrot.slane %v123, 6
    %v693 = vrot.slane %v124, 6
    %v694 = vrot.slane %v125, 6
    %vm695 = vcmp.lt.s32.totalorder %v388, 2
    %v696 = vsel %vm695, %v693, %v694
    %v697 = vsel %vm695, %v692, %v693
    %v698 = vsel %vm695, %v691, %v692
    %v699 = vsel %vm695, %v690, %v691
    %v700 = vsel %vm695, %v689, %v690
    %v701 = vsel %vm695, %v688, %v689
    %v702 = vsel %vm695, %v687, %v688
    %v703 = vsel %vm695, %v686, %v687
    %v704 = vsel %vm695, %v685, %v686
    %v705 = vsel %vm695, %v684, %v685
    %v706 = vsel %vm695, %v683, %v684
    %v707 = vsel %vm695, %v682, %v683
    %v708 = vsel %vm695, %v681, %v682
    %v709 = vsel %vm695, %v680, %v681
    %v710 = vsel %vm695, %v679, %v680
    %v711 = vsel %vm695, %v694, %v679
    %vm712 = vcmp.ge.s32.totalorder %v126, 2
    %vm713 = vcmp.ge.s32.totalorder %v127, 2
    %vm714 = vcmp.ge.s32.totalorder %v128, 2
    %vm715 = vcmp.ge.s32.totalorder %v129, 2
    %vm716 = vcmp.ge.s32.totalorder %v130, 2
    %vm717 = vcmp.ge.s32.totalorder %v131, 2
    %vm718 = vcmp.ge.s32.totalorder %v132, 2
    %vm719 = vcmp.ge.s32.totalorder %v133, 2
    %vm720 = vcmp.ge.s32.totalorder %v134, 2
    %vm721 = vcmp.ge.s32.totalorder %v135, 2
    %vm722 = vcmp.ge.s32.totalorder %v136, 2
    %vm723 = vcmp.ge.s32.totalorder %v137, 2
    %vm724 = vcmp.ge.s32.totalorder %v138, 2
    %vm725 = vcmp.ge.s32.totalorder %v139, 2
    %vm726 = vcmp.ge.s32.totalorder %v140, 2
    %vm727 = vcmp.ge.s32.totalorder %v141, 2
    %v728 = vsel %vm712, 1, 0
    %v729 = vsel %vm713, 1, 0
    %v730 = vsel %vm714, 1, 0
    %v731 = vsel %vm715, 1, 0
    %v732 = vsel %vm716, 1, 0
    %v733 = vsel %vm717, 1, 0
    %v734 = vsel %vm718, 1, 0
    %v735 = vsel %vm719, 1, 0
    %v736 = vsel %vm720, 1, 0
    %v737 = vsel %vm721, 1, 0
    %v738 = vsel %vm722, 1, 0
    %v739 = vsel %vm723, 1, 0
    %v740 = vsel %vm724, 1, 0
    %v741 = vsel %vm725, 1, 0
    %v742 = vsel %vm726, 1, 0
    %v743 = vsel %vm727, 1, 0
    %744 = vset.pattern.permute.xlu0 0
    %745 = vperm.xlu0 %744, %v728
    %v746 = vpop.permute.xlu0 %745
    %747 = vset.pattern.permute.xlu0 0
    %748 = vperm.xlu0 %747, %v729
    %v749 = vpop.permute.xlu0 %748
    %750 = vset.pattern.permute.xlu0 0
    %751 = vperm.xlu0 %750, %v730
    %v752 = vpop.permute.xlu0 %751
    %753 = vset.pattern.permute.xlu0 0
    %754 = vperm.xlu0 %753, %v731
    %v755 = vpop.permute.xlu0 %754
    %756 = vset.pattern.permute.xlu0 0
    %757 = vperm.xlu0 %756, %v732
    %v758 = vpop.permute.xlu0 %757
    %759 = vset.pattern.permute.xlu0 0
    %760 = vperm.xlu0 %759, %v733
    %v761 = vpop.permute.xlu0 %760
    %762 = vset.pattern.permute.xlu0 0
    %763 = vperm.xlu0 %762, %v734
    %v764 = vpop.permute.xlu0 %763
    %765 = vset.pattern.permute.xlu0 0
    %766 = vperm.xlu0 %765, %v735
    %v767 = vpop.permute.xlu0 %766
    %768 = vset.pattern.permute.xlu0 0
    %769 = vperm.xlu0 %768, %v736
    %v770 = vpop.permute.xlu0 %769
    %771 = vset.pattern.permute.xlu0 0
    %772 = vperm.xlu0 %771, %v737
    %v773 = vpop.permute.xlu0 %772
    %774 = vset.pattern.permute.xlu0 0
    %775 = vperm.xlu0 %774, %v738
    %v776 = vpop.permute.xlu0 %775
    %777 = vset.pattern.permute.xlu0 0
    %778 = vperm.xlu0 %777, %v739
    %v779 = vpop.permute.xlu0 %778
    %780 = vset.pattern.permute.xlu0 0
    %781 = vperm.xlu0 %780, %v740
    %v782 = vpop.permute.xlu0 %781
    %783 = vset.pattern.permute.xlu0 0
    %784 = vperm.xlu0 %783, %v741
    %v785 = vpop.permute.xlu0 %784
    %786 = vset.pattern.permute.xlu0 0
    %787 = vperm.xlu0 %786, %v742
    %v788 = vpop.permute.xlu0 %787
    %789 = vset.pattern.permute.xlu0 0
    %790 = vperm.xlu0 %789, %v743
    %v791 = vpop.permute.xlu0 %790
    %vm792 = vcmp.eq.s32.totalorder %v746, 1
    %vm793 = vcmp.eq.s32.totalorder %v749, 1
    %vm794 = vcmp.eq.s32.totalorder %v752, 1
    %vm795 = vcmp.eq.s32.totalorder %v755, 1
    %vm796 = vcmp.eq.s32.totalorder %v758, 1
    %vm797 = vcmp.eq.s32.totalorder %v761, 1
    %vm798 = vcmp.eq.s32.totalorder %v764, 1
    %vm799 = vcmp.eq.s32.totalorder %v767, 1
    %vm800 = vcmp.eq.s32.totalorder %v770, 1
    %vm801 = vcmp.eq.s32.totalorder %v773, 1
    %vm802 = vcmp.eq.s32.totalorder %v776, 1
    %vm803 = vcmp.eq.s32.totalorder %v779, 1
    %vm804 = vcmp.eq.s32.totalorder %v782, 1
    %vm805 = vcmp.eq.s32.totalorder %v785, 1
    %vm806 = vcmp.eq.s32.totalorder %v788, 1
    %vm807 = vcmp.eq.s32.totalorder %v791, 1
    %v808 = vsel %vm792, %v711, 0.0
    %v809 = vsel %vm793, %v710, 0.0
    %v810 = vsel %vm794, %v709, 0.0
    %v811 = vsel %vm795, %v708, 0.0
    %v812 = vsel %vm796, %v707, 0.0
    %v813 = vsel %vm797, %v706, 0.0
    %v814 = vsel %vm798, %v705, 0.0
    %v815 = vsel %vm799, %v704, 0.0
    %v816 = vsel %vm800, %v703, 0.0
    %v817 = vsel %vm801, %v702, 0.0
    %v818 = vsel %vm802, %v701, 0.0
    %v819 = vsel %vm803, %v700, 0.0
    %v820 = vsel %vm804, %v699, 0.0
    %v821 = vsel %vm805, %v698, 0.0
    %v822 = vsel %vm806, %v697, 0.0
    %v823 = vsel %vm807, %v696, 0.0
    %v824 = vpack.c.bf16 %v809, %v808
    %v825 = vpack.c.bf16 %v811, %v810
    %v826 = vpack.c.bf16 %v813, %v812
    %v827 = vpack.c.bf16 %v815, %v814
    %v828 = vpack.c.bf16 %v817, %v816
    %v829 = vpack.c.bf16 %v819, %v818
    %v830 = vpack.c.bf16 %v821, %v820
    %v831 = vpack.c.bf16 %v823, %v822
    %v832 = vrot.slane %v110, 7
    %v833 = vrot.slane %v111, 7
    %v834 = vrot.slane %v112, 7
    %v835 = vrot.slane %v113, 7
    %v836 = vrot.slane %v114, 7
    %v837 = vrot.slane %v115, 7
    %v838 = vrot.slane %v116, 7
    %v839 = vrot.slane %v117, 7
    %v840 = vrot.slane %v118, 7
    %v841 = vrot.slane %v119, 7
    %v842 = vrot.slane %v120, 7
    %v843 = vrot.slane %v121, 7
    %v844 = vrot.slane %v122, 7
    %v845 = vrot.slane %v123, 7
    %v846 = vrot.slane %v124, 7
    %v847 = vrot.slane %v125, 7
    %vm848 = vcmp.lt.s32.totalorder %v388, 1
    %v849 = vsel %vm848, %v846, %v847
    %v850 = vsel %vm848, %v845, %v846
    %v851 = vsel %vm848, %v844, %v845
    %v852 = vsel %vm848, %v843, %v844
    %v853 = vsel %vm848, %v842, %v843
    %v854 = vsel %vm848, %v841, %v842
    %v855 = vsel %vm848, %v840, %v841
    %v856 = vsel %vm848, %v839, %v840
    %v857 = vsel %vm848, %v838, %v839
    %v858 = vsel %vm848, %v837, %v838
    %v859 = vsel %vm848, %v836, %v837
    %v860 = vsel %vm848, %v835, %v836
    %v861 = vsel %vm848, %v834, %v835
    %v862 = vsel %vm848, %v833, %v834
    %v863 = vsel %vm848, %v832, %v833
    %v864 = vsel %vm848, %v847, %v832
    %vm865 = vcmp.ge.s32.totalorder %v126, 1
    %vm866 = vcmp.ge.s32.totalorder %v127, 1
    %vm867 = vcmp.ge.s32.totalorder %v128, 1
    %vm868 = vcmp.ge.s32.totalorder %v129, 1
    %vm869 = vcmp.ge.s32.totalorder %v130, 1
    %vm870 = vcmp.ge.s32.totalorder %v131, 1
    %vm871 = vcmp.ge.s32.totalorder %v132, 1
    %vm872 = vcmp.ge.s32.totalorder %v133, 1
    %vm873 = vcmp.ge.s32.totalorder %v134, 1
    %vm874 = vcmp.ge.s32.totalorder %v135, 1
    %vm875 = vcmp.ge.s32.totalorder %v136, 1
    %vm876 = vcmp.ge.s32.totalorder %v137, 1
    %vm877 = vcmp.ge.s32.totalorder %v138, 1
    %vm878 = vcmp.ge.s32.totalorder %v139, 1
    %vm879 = vcmp.ge.s32.totalorder %v140, 1
    %vm880 = vcmp.ge.s32.totalorder %v141, 1
    %v881 = vsel %vm865, 1, 0
    %v882 = vsel %vm866, 1, 0
    %v883 = vsel %vm867, 1, 0
    %v884 = vsel %vm868, 1, 0
    %v885 = vsel %vm869, 1, 0
    %v886 = vsel %vm870, 1, 0
    %v887 = vsel %vm871, 1, 0
    %v888 = vsel %vm872, 1, 0
    %v889 = vsel %vm873, 1, 0
    %v890 = vsel %vm874, 1, 0
    %v891 = vsel %vm875, 1, 0
    %v892 = vsel %vm876, 1, 0
    %v893 = vsel %vm877, 1, 0
    %v894 = vsel %vm878, 1, 0
    %v895 = vsel %vm879, 1, 0
    %v896 = vsel %vm880, 1, 0
    %897 = vset.pattern.permute.xlu0 0
    %898 = vperm.xlu0 %897, %v881
    %v899 = vpop.permute.xlu0 %898
    %900 = vset.pattern.permute.xlu0 0
    %901 = vperm.xlu0 %900, %v882
    %v902 = vpop.permute.xlu0 %901
    %903 = vset.pattern.permute.xlu0 0
    %904 = vperm.xlu0 %903, %v883
    %v905 = vpop.permute.xlu0 %904
    %906 = vset.pattern.permute.xlu0 0
    %907 = vperm.xlu0 %906, %v884
    %v908 = vpop.permute.xlu0 %907
    %909 = vset.pattern.permute.xlu0 0
    %910 = vperm.xlu0 %909, %v885
    %v911 = vpop.permute.xlu0 %910
    %912 = vset.pattern.permute.xlu0 0
    %913 = vperm.xlu0 %912, %v886
    %v914 = vpop.permute.xlu0 %913
    %915 = vset.pattern.permute.xlu0 0
    %916 = vperm.xlu0 %915, %v887
    %v917 = vpop.permute.xlu0 %916
    %918 = vset.pattern.permute.xlu0 0
    %919 = vperm.xlu0 %918, %v888
    %v920 = vpop.permute.xlu0 %919
    %921 = vset.pattern.permute.xlu0 0
    %922 = vperm.xlu0 %921, %v889
    %v923 = vpop.permute.xlu0 %922
    %924 = vset.pattern.permute.xlu0 0
    %925 = vperm.xlu0 %924, %v890
    %v926 = vpop.permute.xlu0 %925
    %927 = vset.pattern.permute.xlu0 0
    %928 = vperm.xlu0 %927, %v891
    %v929 = vpop.permute.xlu0 %928
    %930 = vset.pattern.permute.xlu0 0
    %931 = vperm.xlu0 %930, %v892
    %v932 = vpop.permute.xlu0 %931
    %933 = vset.pattern.permute.xlu0 0
    %934 = vperm.xlu0 %933, %v893
    %v935 = vpop.permute.xlu0 %934
    %936 = vset.pattern.permute.xlu0 0
    %937 = vperm.xlu0 %936, %v894
    %v938 = vpop.permute.xlu0 %937
    %939 = vset.pattern.permute.xlu0 0
    %940 = vperm.xlu0 %939, %v895
    %v941 = vpop.permute.xlu0 %940
    %942 = vset.pattern.permute.xlu0 0
    %943 = vperm.xlu0 %942, %v896
    %v944 = vpop.permute.xlu0 %943
    %vm945 = vcmp.eq.s32.totalorder %v899, 1
    %vm946 = vcmp.eq.s32.totalorder %v902, 1
    %vm947 = vcmp.eq.s32.totalorder %v905, 1
    %vm948 = vcmp.eq.s32.totalorder %v908, 1
    %vm949 = vcmp.eq.s32.totalorder %v911, 1
    %vm950 = vcmp.eq.s32.totalorder %v914, 1
    %vm951 = vcmp.eq.s32.totalorder %v917, 1
    %vm952 = vcmp.eq.s32.totalorder %v920, 1
    %vm953 = vcmp.eq.s32.totalorder %v923, 1
    %vm954 = vcmp.eq.s32.totalorder %v926, 1
    %vm955 = vcmp.eq.s32.totalorder %v929, 1
    %vm956 = vcmp.eq.s32.totalorder %v932, 1
    %vm957 = vcmp.eq.s32.totalorder %v935, 1
    %vm958 = vcmp.eq.s32.totalorder %v938, 1
    %vm959 = vcmp.eq.s32.totalorder %v941, 1
    %vm960 = vcmp.eq.s32.totalorder %v944, 1
    %v961 = vsel %vm945, %v864, 0.0
    %v962 = vsel %vm946, %v863, 0.0
    %v963 = vsel %vm947, %v862, 0.0
    %v964 = vsel %vm948, %v861, 0.0
    %v965 = vsel %vm949, %v860, 0.0
    %v966 = vsel %vm950, %v859, 0.0
    %v967 = vsel %vm951, %v858, 0.0
    %v968 = vsel %vm952, %v857, 0.0
    %v969 = vsel %vm953, %v856, 0.0
    %v970 = vsel %vm954, %v855, 0.0
    %v971 = vsel %vm955, %v854, 0.0
    %v972 = vsel %vm956, %v853, 0.0
    %v973 = vsel %vm957, %v852, 0.0
    %v974 = vsel %vm958, %v851, 0.0
    %v975 = vsel %vm959, %v850, 0.0
    %v976 = vsel %vm960, %v849, 0.0
    %v977 = vpack.c.bf16 %v962, %v961
    %v978 = vpack.c.bf16 %v964, %v963
    %v979 = vpack.c.bf16 %v966, %v965
    %v980 = vpack.c.bf16 %v968, %v967
    %v981 = vpack.c.bf16 %v970, %v969
    %v982 = vpack.c.bf16 %v972, %v971
    %v983 = vpack.c.bf16 %v974, %v973
    %v984 = vpack.c.bf16 %v976, %v975
    %v985 = vld [vmem:[#allocation2] sm:$0xf]
    %v986 = vld [vmem:[#allocation2 + $0x4] sm:$0xf]
    %v987 = vld [vmem:[#allocation2 + $0x8] sm:$0xf]
    %v988 = vld [vmem:[#allocation2 + $0xc] sm:$0xf]
    %v989 = vld [vmem:[#allocation2 + $0x10] sm:$0xf]
    %v990 = vld [vmem:[#allocation2 + $0x14] sm:$0xf]
    %v991 = vld [vmem:[#allocation2 + $0x18] sm:$0xf]
    %v992 = vld [vmem:[#allocation2 + $0x1c] sm:$0xf]
    %v993 = vld [vmem:[#allocation2 + $0x20] sm:$0xf]
    %v994 = vld [vmem:[#allocation2 + $0x24] sm:$0xf]
    %v995 = vld [vmem:[#allocation2 + $0x28] sm:$0xf]
    %v996 = vld [vmem:[#allocation2 + $0x2c] sm:$0xf]
    %v997 = vld [vmem:[#allocation2 + $0x30] sm:$0xf]
    %v998 = vld [vmem:[#allocation2 + $0x34] sm:$0xf]
    %v999 = vld [vmem:[#allocation2 + $0x38] sm:$0xf]
    %v1000 = vld [vmem:[#allocation2 + $0x3c] sm:$0xf]
    %v1001 = vld [vmem:[#allocation2 + $0x40] sm:$0xf]
    %v1002 = vld [vmem:[#allocation2 + $0x44] sm:$0xf]
    %v1003 = vld [vmem:[#allocation2 + $0x48] sm:$0xf]
    %v1004 = vld [vmem:[#allocation2 + $0x4c] sm:$0xf]
    %v1005 = vld [vmem:[#allocation2 + $0x50] sm:$0xf]
    %v1006 = vld [vmem:[#allocation2 + $0x54] sm:$0xf]
    %v1007 = vld [vmem:[#allocation2 + $0x58] sm:$0xf]
    %v1008 = vld [vmem:[#allocation2 + $0x5c] sm:$0xf]
    %v1009 = vld [vmem:[#allocation2 + $0x60] sm:$0xf]
    %v1010 = vld [vmem:[#allocation2 + $0x64] sm:$0xf]
    %v1011 = vld [vmem:[#allocation2 + $0x68] sm:$0xf]
    %v1012 = vld [vmem:[#allocation2 + $0x6c] sm:$0xf]
    %v1013 = vld [vmem:[#allocation2 + $0x70] sm:$0xf]
    %v1014 = vld [vmem:[#allocation2 + $0x74] sm:$0xf]
    %v1015 = vld [vmem:[#allocation2 + $0x78] sm:$0xf]
    %v1016 = vld [vmem:[#allocation2 + $0x7c] sm:$0xf]
    %v1017 = vld [vmem:[#allocation2 + $0x80] sm:$0xf]
    %v1018 = vld [vmem:[#allocation2 + $0x84] sm:$0xf]
    %v1019 = vld [vmem:[#allocation2 + $0x88] sm:$0xf]
    %v1020 = vld [vmem:[#allocation2 + $0x8c] sm:$0xf]
    %v1021 = vld [vmem:[#allocation2 + $0x90] sm:$0xf]
    %v1022 = vld [vmem:[#allocation2 + $0x94] sm:$0xf]
    %v1023 = vld [vmem:[#allocation2 + $0x98] sm:$0xf]
    %v1024 = vld [vmem:[#allocation2 + $0x9c] sm:$0xf]
    %v1025 = vld [vmem:[#allocation2 + $0xa0] sm:$0xf]
    %v1026 = vld [vmem:[#allocation2 + $0xa4] sm:$0xf]
    %v1027 = vld [vmem:[#allocation2 + $0xa8] sm:$0xf]
    %v1028 = vld [vmem:[#allocation2 + $0xac] sm:$0xf]
    %v1029 = vld [vmem:[#allocation2 + $0xb0] sm:$0xf]
    %v1030 = vld [vmem:[#allocation2 + $0xb4] sm:$0xf]
    %v1031 = vld [vmem:[#allocation2 + $0xb8] sm:$0xf]
    %v1032 = vld [vmem:[#allocation2 + $0xbc] sm:$0xf]
    %v1081 = vunpack.c.l.b16 %v985
    %v1082 = vunpack.c.l.b16 %v986
    %v1083 = vunpack.c.l.b16 %v987
    %v1084 = vunpack.c.l.b16 %v988
    %v1085 = vunpack.c.l.b16 %v989
    %v1086 = vunpack.c.l.b16 %v990
    %v1087 = vunpack.c.l.b16 %v991
    %v1088 = vunpack.c.l.b16 %v992
    %v1089 = vunpack.c.l.b16 %v993
    %v1090 = vunpack.c.l.b16 %v994
    %v1091 = vunpack.c.l.b16 %v995
    %v1092 = vunpack.c.l.b16 %v996
    %v1093 = vunpack.c.l.b16 %v997
    %v1094 = vunpack.c.l.b16 %v998
    %v1095 = vunpack.c.l.b16 %v999
    %v1096 = vunpack.c.l.b16 %v1000
    %v1097 = vunpack.c.l.b16 %v1001
    %v1098 = vunpack.c.l.b16 %v1002
    %v1099 = vunpack.c.l.b16 %v1003
    %v1100 = vunpack.c.l.b16 %v1004
    %v1101 = vunpack.c.l.b16 %v1005
    %v1102 = vunpack.c.l.b16 %v1006
    %v1103 = vunpack.c.l.b16 %v1007
    %v1104 = vunpack.c.l.b16 %v1008
    %v1105 = vunpack.c.l.b16 %v1009
    %v1106 = vunpack.c.l.b16 %v1010
    %v1107 = vunpack.c.l.b16 %v1011
    %v1108 = vunpack.c.l.b16 %v1012
    %v1109 = vunpack.c.l.b16 %v1013
    %v1110 = vunpack.c.l.b16 %v1014
    %v1111 = vunpack.c.l.b16 %v1015
    %v1112 = vunpack.c.l.b16 %v1016
    %v1113 = vunpack.c.l.b16 %v1017
    %v1114 = vunpack.c.l.b16 %v1018
    %v1115 = vunpack.c.l.b16 %v1019
    %v1116 = vunpack.c.l.b16 %v1020
    %v1117 = vunpack.c.l.b16 %v1021
    %v1118 = vunpack.c.l.b16 %v1022
    %v1119 = vunpack.c.l.b16 %v1023
    %v1120 = vunpack.c.l.b16 %v1024
    %v1121 = vunpack.c.l.b16 %v1025
    %v1122 = vunpack.c.l.b16 %v1026
    %v1123 = vunpack.c.l.b16 %v1027
    %v1124 = vunpack.c.l.b16 %v1028
    %v1125 = vunpack.c.l.b16 %v1029
    %v1126 = vunpack.c.l.b16 %v1030
    %v1127 = vunpack.c.l.b16 %v1031
    %v1128 = vunpack.c.l.b16 %v1032
    %v1129 = vpack.c.b16 %v1082, %v1081
    %v1130 = vpack.c.b16 %v1084, %v1083
    %v1131 = vpack.c.b16 %v1086, %v1085
    %v1132 = vpack.c.b16 %v1088, %v1087
    %v1133 = vpack.c.b16 %v1090, %v1089
    %v1134 = vpack.c.b16 %v1092, %v1091
    %v1135 = vpack.c.b16 %v1094, %v1093
    %v1136 = vpack.c.b16 %v1096, %v1095
    %v1137 = vpack.c.b16 %v1098, %v1097
    %v1138 = vpack.c.b16 %v1100, %v1099
    %v1139 = vpack.c.b16 %v1102, %v1101
    %v1140 = vpack.c.b16 %v1104, %v1103
    %v1141 = vpack.c.b16 %v1106, %v1105
    %v1142 = vpack.c.b16 %v1108, %v1107
    %v1143 = vpack.c.b16 %v1110, %v1109
    %v1144 = vpack.c.b16 %v1112, %v1111
    %v1145 = vpack.c.b16 %v1114, %v1113
    %v1146 = vpack.c.b16 %v1116, %v1115
    %v1147 = vpack.c.b16 %v1118, %v1117
    %v1148 = vpack.c.b16 %v1120, %v1119
    %v1149 = vpack.c.b16 %v1122, %v1121
    %v1150 = vpack.c.b16 %v1124, %v1123
    %v1151 = vpack.c.b16 %v1126, %v1125
    %v1152 = vpack.c.b16 %v1128, %v1127
    %1177 = vmatprep.subr.bf16.mxu0 0
    %1178 = vmatpush1.bf16.msra.mxu0 %v1129
    %1179 = vmatprep.subr.bf16.mxu0 0
    %1180 = vmatpush1.bf16.msra.mxu0 %v1130
    %1181 = vmatprep.subr.bf16.mxu0 0
    %1182 = vmatpush1.bf16.msra.mxu0 %v1131
    %1183 = vmatprep.subr.bf16.mxu0 0
    %1184 = vmatpush1.bf16.msra.mxu0 %v1132
    %1185 = vmatprep.subr.bf16.mxu0 0
    %1186 = vmatpush1.bf16.msra.mxu0 %v1133
    %1187 = vmatprep.subr.bf16.mxu0 0
    %1188 = vmatpush1.bf16.msra.mxu0 %v1134
    %1189 = vmatprep.subr.bf16.mxu0 0
    %1190 = vmatpush1.bf16.msra.mxu0 %v1135
    %1191 = vmatprep.subr.bf16.mxu0 0
    %1192 = vmatpush1.bf16.msra.mxu0 %v1136
    %1193 = vmatprep.subr.bf16.mxu0 0
    %1194 = vmatpush1.bf16.msra.mxu0 %v1137
    %1195 = vmatprep.subr.bf16.mxu0 0
    %1196 = vmatpush1.bf16.msra.mxu0 %v1138
    %1197 = vmatprep.subr.bf16.mxu0 0
    %1198 = vmatpush1.bf16.msra.mxu0 %v1139
    %1199 = vmatprep.subr.bf16.mxu0 0
    %1200 = vmatpush1.bf16.msra.mxu0 %v1140
    %1201 = vmatprep.subr.bf16.mxu0 0
    %1202 = vmatpush1.bf16.msra.mxu0 %v1141
    %1203 = vmatprep.subr.bf16.mxu0 0
    %1204 = vmatpush1.bf16.msra.mxu0 %v1142
    %1205 = vmatprep.subr.bf16.mxu0 0
    %1206 = vmatpush1.bf16.msra.mxu0 %v1143
    %1207 = vmatprep.subr.bf16.mxu0 0
    %1208 = vmatpush1.bf16.msra.mxu0 %v1144
    %1209 = vmatprep.mubr.bf16.mxu0 %v977
    %1210 = vmatmul.mubr.bf16.gmra.mrb[0].mxu0 %v824
    %v1211 = vpop.f32.mrb[0].mxu0
    %v1212 = vadd.f32 0.0, %v1211
    %v1213 = vpop.f32.mrb[0].mxu0
    %v1214 = vpop.f32.mrb[0].mxu0
    %v1215 = vadd.f32 0.0, %v1214
    %v1216 = vpop.f32.mrb[0].mxu0
    %1217 = vmatprep.mubr.bf16.mxu0 %v978
    %1218 = vmatmul.mubr.bf16.gmra.mrb[0].mxu0 %v825
    %v1219 = vpop.f32.mrb[0].mxu0
    %v1220 = vadd.f32 0.0, %v1219
    %v1221 = vpop.f32.mrb[0].mxu0
    %v1222 = vpop.f32.mrb[0].mxu0
    %v1223 = vadd.f32 0.0, %v1222
    %v1224 = vpop.f32.mrb[0].mxu0
    %1225 = vmatprep.mubr.bf16.mxu0 %v979
    %1226 = vmatmul.mubr.bf16.gmra.mrb[0].mxu0 %v826
    %v1227 = vpop.f32.mrb[0].mxu0
    %v1228 = vadd.f32 0.0, %v1227
    %v1229 = vpop.f32.mrb[0].mxu0
    %v1230 = vpop.f32.mrb[0].mxu0
    %v1231 = vadd.f32 0.0, %v1230
    %v1232 = vpop.f32.mrb[0].mxu0
    %1233 = vmatprep.mubr.bf16.mxu0 %v980
    %1234 = vmatmul.mubr.bf16.gmra.mrb[0].mxu0 %v827
    %v1235 = vpop.f32.mrb[0].mxu0
    %v1236 = vadd.f32 0.0, %v1235
    %v1237 = vpop.f32.mrb[0].mxu0
    %v1238 = vpop.f32.mrb[0].mxu0
    %v1239 = vadd.f32 0.0, %v1238
    %v1240 = vpop.f32.mrb[0].mxu0
    %1241 = vmatprep.mubr.bf16.mxu0 %v981
    %1242 = vmatmul.mubr.bf16.gmra.mrb[0].mxu0 %v828
    %v1243 = vpop.f32.mrb[0].mxu0
    %v1244 = vadd.f32 0.0, %v1243
    %v1245 = vpop.f32.mrb[0].mxu0
    %v1246 = vpop.f32.mrb[0].mxu0
    %v1247 = vadd.f32 0.0, %v1246
    %v1248 = vpop.f32.mrb[0].mxu0
    %1249 = vmatprep.mubr.bf16.mxu0 %v982
    %1250 = vmatmul.mubr.bf16.gmra.mrb[0].mxu0 %v829
    %v1251 = vpop.f32.mrb[0].mxu0
    %v1252 = vadd.f32 0.0, %v1251
    %v1253 = vpop.f32.mrb[0].mxu0
    %v1254 = vpop.f32.mrb[0].mxu0
    %v1255 = vadd.f32 0.0, %v1254
    %v1256 = vpop.f32.mrb[0].mxu0
    %1257 = vmatprep.mubr.bf16.mxu0 %v983
    %1258 = vmatmul.mubr.bf16.gmra.mrb[0].mxu0 %v830
    %v1259 = vpop.f32.mrb[0].mxu0
    %v1260 = vadd.f32 0.0, %v1259
    %v1261 = vpop.f32.mrb[0].mxu0
    %v1262 = vpop.f32.mrb[0].mxu0
    %v1263 = vadd.f32 0.0, %v1262
    %v1264 = vpop.f32.mrb[0].mxu0
    %1265 = vmatprep.mubr.bf16.mxu0 %v984
    %1266 = vmatmul.mubr.bf16.gmra.mrb[0].mxu0 %v831
    %v1267 = vpop.f32.mrb[0].mxu0
    %v1268 = vadd.f32 0.0, %v1267
    %v1269 = vpop.f32.mrb[0].mxu0
    %v1270 = vpop.f32.mrb[0].mxu0
    %v1271 = vadd.f32 0.0, %v1270
    %v1272 = vpop.f32.mrb[0].mxu0
    %1273 = vdwg.mxu0
    %1274 = vmatprep.subr.bf16.mxu0 0
    %1275 = vmatpush1.bf16.msra.mxu0 %v1145
    %1276 = vmatprep.subr.bf16.mxu0 0
    %1277 = vmatpush1.bf16.msra.mxu0 %v1146
    %1278 = vmatprep.subr.bf16.mxu0 0
    %1279 = vmatpush1.bf16.msra.mxu0 %v1147
    %1280 = vmatprep.subr.bf16.mxu0 0
    %1281 = vmatpush1.bf16.msra.mxu0 %v1148
    %1282 = vmatprep.subr.bf16.mxu0 0
    %1283 = vmatpush1.bf16.msra.mxu0 %v1149
    %1284 = vmatprep.subr.bf16.mxu0 0
    %1285 = vmatpush1.bf16.msra.mxu0 %v1150
    %1286 = vmatprep.subr.bf16.mxu0 0
    %1287 = vmatpush1.bf16.msra.mxu0 %v1151
    %1288 = vmatprep.subr.bf16.mxu0 0
    %1289 = vmatpush1.bf16.msra.mxu0 %v1152
    %1290 = vmatprep.subr.bf16.mxu0 0
    %1291 = vmatpush1.bf16.msra.mxu0 0
    %1292 = vmatprep.subr.bf16.mxu0 0
    %1293 = vmatpush1.bf16.msra.mxu0 0
    %1294 = vmatprep.subr.bf16.mxu0 0
    %1295 = vmatpush1.bf16.msra.mxu0 0
    %1296 = vmatprep.subr.bf16.mxu0 0
    %1297 = vmatpush1.bf16.msra.mxu0 0
    %1298 = vmatprep.subr.bf16.mxu0 0
    %1299 = vmatpush1.bf16.msra.mxu0 0
    %1300 = vmatprep.subr.bf16.mxu0 0
    %1301 = vmatpush1.bf16.msra.mxu0 0
    %1302 = vmatprep.subr.bf16.mxu0 0
    %1303 = vmatpush1.bf16.msra.mxu0 0
    %1304 = vmatprep.subr.bf16.mxu0 0
    %1305 = vmatpush1.bf16.msra.mxu0 0
    %1306 = vmatprep.mubr.bf16.mxu0 0
    %1307 = vmatmul.mubr.bf16.gmra.mrb[0].mxu0 %v142
    %v1308 = vpop.f32.mrb[0].mxu0
    %v1309 = vadd.f32 %v1212, %v1308
    %v1310 = vpop.f32.mrb[0].mxu0
    %v1311 = vpop.f32.mrb[0].mxu0
    %v1312 = vadd.f32 %v1215, %v1311
    %v1313 = vpop.f32.mrb[0].mxu0
    %1314 = vmatprep.mubr.bf16.mxu0 0
    %1315 = vmatmul.mubr.bf16.gmra.mrb[0].mxu0 %v143
    %v1316 = vpop.f32.mrb[0].mxu0
    %v1317 = vadd.f32 %v1220, %v1316
    %v1318 = vpop.f32.mrb[0].mxu0
    %v1319 = vpop.f32.mrb[0].mxu0
    %v1320 = vadd.f32 %v1223, %v1319
    %v1321 = vpop.f32.mrb[0].mxu0
    %1322 = vmatprep.mubr.bf16.mxu0 0
    %1323 = vmatmul.mubr.bf16.gmra.mrb[0].mxu0 %v144
    %v1324 = vpop.f32.mrb[0].mxu0
    %v1325 = vadd.f32 %v1228, %v1324
    %v1326 = vpop.f32.mrb[0].mxu0
    %v1327 = vpop.f32.mrb[0].mxu0
    %v1328 = vadd.f32 %v1231, %v1327
    %v1329 = vpop.f32.mrb[0].mxu0
    %1330 = vmatprep.mubr.bf16.mxu0 0
    %1331 = vmatmul.mubr.bf16.gmra.mrb[0].mxu0 %v145
    %v1332 = vpop.f32.mrb[0].mxu0
    %v1333 = vadd.f32 %v1236, %v1332
    %v1334 = vpop.f32.mrb[0].mxu0
    %v1335 = vpop.f32.mrb[0].mxu0
    %v1336 = vadd.f32 %v1239, %v1335
    %v1337 = vpop.f32.mrb[0].mxu0
    %1338 = vmatprep.mubr.bf16.mxu0 0
    %1339 = vmatmul.mubr.bf16.gmra.mrb[0].mxu0 %v146
    %v1340 = vpop.f32.mrb[0].mxu0
    %v1341 = vadd.f32 %v1244, %v1340
    %v1342 = vpop.f32.mrb[0].mxu0
    %v1343 = vpop.f32.mrb[0].mxu0
    %v1344 = vadd.f32 %v1247, %v1343
    %v1345 = vpop.f32.mrb[0].mxu0
    %1346 = vmatprep.mubr.bf16.mxu0 0
    %1347 = vmatmul.mubr.bf16.gmra.mrb[0].mxu0 %v147
    %v1348 = vpop.f32.mrb[0].mxu0
    %v1349 = vadd.f32 %v1252, %v1348
    %v1350 = vpop.f32.mrb[0].mxu0
    %v1351 = vpop.f32.mrb[0].mxu0
    %v1352 = vadd.f32 %v1255, %v1351
    %v1353 = vpop.f32.mrb[0].mxu0
    %1354 = vmatprep.mubr.bf16.mxu0 0
    %1355 = vmatmul.mubr.bf16.gmra.mrb[0].mxu0 %v148
    %v1356 = vpop.f32.mrb[0].mxu0
    %v1357 = vadd.f32 %v1260, %v1356
    %v1358 = vpop.f32.mrb[0].mxu0
    %v1359 = vpop.f32.mrb[0].mxu0
    %v1360 = vadd.f32 %v1263, %v1359
    %v1361 = vpop.f32.mrb[0].mxu0
    %1362 = vmatprep.mubr.bf16.mxu0 0
    %1363 = vmatmul.mubr.bf16.gmra.mrb[0].mxu0 %v149
    %v1364 = vpop.f32.mrb[0].mxu0
    %v1365 = vadd.f32 %v1268, %v1364
    %v1366 = vpop.f32.mrb[0].mxu0
    %v1367 = vpop.f32.mrb[0].mxu0
    %v1368 = vadd.f32 %v1271, %v1367
    %v1369 = vpop.f32.mrb[0].mxu0
    %1370 = vdwg.mxu0
    %v1371 = vld [vmem:[#allocation4] sm:$0xf]
    %v1372 = vld [vmem:[#allocation4 + $0x4] sm:$0xf]
    %v1373 = vld [vmem:[#allocation4 + $0x8] sm:$0xf]
    %v1374 = vld [vmem:[#allocation4 + $0xc] sm:$0xf]
    %v1375 = vld [vmem:[#allocation4 + $0x10] sm:$0xf]
    %v1376 = vld [vmem:[#allocation4 + $0x14] sm:$0xf]
    %v1377 = vld [vmem:[#allocation4 + $0x18] sm:$0xf]
    %v1378 = vld [vmem:[#allocation4 + $0x1c] sm:$0xf]
    %v1379 = vld [vmem:[#allocation4 + $0x20] sm:$0xf]
    %v1380 = vld [vmem:[#allocation4 + $0x24] sm:$0xf]
    %v1381 = vld [vmem:[#allocation4 + $0x28] sm:$0xf]
    %v1382 = vld [vmem:[#allocation4 + $0x2c] sm:$0xf]
    %v1383 = vld [vmem:[#allocation4 + $0x30] sm:$0xf]
    %v1384 = vld [vmem:[#allocation4 + $0x34] sm:$0xf]
    %v1385 = vld [vmem:[#allocation4 + $0x38] sm:$0xf]
    %v1386 = vld [vmem:[#allocation4 + $0x3c] sm:$0xf]
    %v1387 = vld [vmem:[#allocation4 + $0x40] sm:$0xf]
    %v1388 = vld [vmem:[#allocation4 + $0x44] sm:$0xf]
    %v1389 = vld [vmem:[#allocation4 + $0x48] sm:$0xf]
    %v1390 = vld [vmem:[#allocation4 + $0x4c] sm:$0xf]
    %v1391 = vld [vmem:[#allocation4 + $0x50] sm:$0xf]
    %v1392 = vld [vmem:[#allocation4 + $0x54] sm:$0xf]
    %v1393 = vld [vmem:[#allocation4 + $0x58] sm:$0xf]
    %v1394 = vld [vmem:[#allocation4 + $0x5c] sm:$0xf]
    %v1395 = vld [vmem:[#allocation4 + $0x60] sm:$0xf]
    %v1396 = vld [vmem:[#allocation4 + $0x64] sm:$0xf]
    %v1397 = vld [vmem:[#allocation4 + $0x68] sm:$0xf]
    %v1398 = vld [vmem:[#allocation4 + $0x6c] sm:$0xf]
    %v1399 = vld [vmem:[#allocation4 + $0x70] sm:$0xf]
    %v1400 = vld [vmem:[#allocation4 + $0x74] sm:$0xf]
    %v1401 = vld [vmem:[#allocation4 + $0x78] sm:$0xf]
    %v1402 = vld [vmem:[#allocation4 + $0x7c] sm:$0xf]
    %v1403 = vld [vmem:[#allocation4 + $0x80] sm:$0xf]
    %v1404 = vld [vmem:[#allocation4 + $0x84] sm:$0xf]
    %v1405 = vld [vmem:[#allocation4 + $0x88] sm:$0xf]
    %v1406 = vld [vmem:[#allocation4 + $0x8c] sm:$0xf]
    %v1407 = vld [vmem:[#allocation4 + $0x90] sm:$0xf]
    %v1408 = vld [vmem:[#allocation4 + $0x94] sm:$0xf]
    %v1409 = vld [vmem:[#allocation4 + $0x98] sm:$0xf]
    %v1410 = vld [vmem:[#allocation4 + $0x9c] sm:$0xf]
    %v1411 = vld [vmem:[#allocation4 + $0xa0] sm:$0xf]
    %v1412 = vld [vmem:[#allocation4 + $0xa4] sm:$0xf]
    %v1413 = vld [vmem:[#allocation4 + $0xa8] sm:$0xf]
    %v1414 = vld [vmem:[#allocation4 + $0xac] sm:$0xf]
    %v1415 = vld [vmem:[#allocation4 + $0xb0] sm:$0xf]
    %v1416 = vld [vmem:[#allocation4 + $0xb4] sm:$0xf]
    %v1417 = vld [vmem:[#allocation4 + $0xb8] sm:$0xf]
    %v1418 = vld [vmem:[#allocation4 + $0xbc] sm:$0xf]
    %v1419 = vld [vmem:[#allocation4 + $0xc0] sm:$0xf]
    %v1420 = vld [vmem:[#allocation4 + $0xc4] sm:$0xf]
    %v1421 = vld [vmem:[#allocation4 + $0xc8] sm:$0xf]
    %v1422 = vld [vmem:[#allocation4 + $0xcc] sm:$0xf]
    %v1423 = vld [vmem:[#allocation4 + $0xd0] sm:$0xf]
    %v1424 = vld [vmem:[#allocation4 + $0xd4] sm:$0xf]
    %v1425 = vld [vmem:[#allocation4 + $0xd8] sm:$0xf]
    %v1426 = vld [vmem:[#allocation4 + $0xdc] sm:$0xf]
    %v1427 = vld [vmem:[#allocation4 + $0xe0] sm:$0xf]
    %v1428 = vld [vmem:[#allocation4 + $0xe4] sm:$0xf]
    %v1429 = vld [vmem:[#allocation4 + $0xe8] sm:$0xf]
    %v1430 = vld [vmem:[#allocation4 + $0xec] sm:$0xf]
    %v1431 = vld [vmem:[#allocation4 + $0xf0] sm:$0xf]
    %v1432 = vld [vmem:[#allocation4 + $0xf4] sm:$0xf]
    %v1433 = vld [vmem:[#allocation4 + $0xf8] sm:$0xf]
    %v1434 = vld [vmem:[#allocation4 + $0xfc] sm:$0xf]
    %v1435 = vld [vmem:[#allocation4 + $0x100] sm:$0xf]
    %v1436 = vld [vmem:[#allocation4 + $0x104] sm:$0xf]
    %v1437 = vld [vmem:[#allocation4 + $0x108] sm:$0xf]
    %v1438 = vld [vmem:[#allocation4 + $0x10c] sm:$0xf]
    %v1439 = vld [vmem:[#allocation4 + $0x110] sm:$0xf]
    %v1440 = vld [vmem:[#allocation4 + $0x114] sm:$0xf]
    %v1441 = vld [vmem:[#allocation4 + $0x118] sm:$0xf]
    %v1442 = vld [vmem:[#allocation4 + $0x11c] sm:$0xf]
    %v1443 = vld [vmem:[#allocation4 + $0x120] sm:$0xf]
    %v1444 = vld [vmem:[#allocation4 + $0x124] sm:$0xf]
    %v1445 = vld [vmem:[#allocation4 + $0x128] sm:$0xf]
    %v1446 = vld [vmem:[#allocation4 + $0x12c] sm:$0xf]
    %v1447 = vld [vmem:[#allocation4 + $0x130] sm:$0xf]
    %v1448 = vld [vmem:[#allocation4 + $0x134] sm:$0xf]
    %v1449 = vld [vmem:[#allocation4 + $0x138] sm:$0xf]
    %v1450 = vld [vmem:[#allocation4 + $0x13c] sm:$0xf]
    %v1531 = vunpack.c.l.b16 %v1371
    %v1532 = vunpack.c.l.b16 %v1372
    %v1533 = vunpack.c.l.b16 %v1373
    %v1534 = vunpack.c.l.b16 %v1374
    %v1535 = vunpack.c.l.b16 %v1375
    %v1536 = vunpack.c.l.b16 %v1376
    %v1537 = vunpack.c.l.b16 %v1377
    %v1538 = vunpack.c.l.b16 %v1378
    %v1539 = vunpack.c.l.b16 %v1379
    %v1540 = vunpack.c.l.b16 %v1380
    %v1541 = vunpack.c.l.b16 %v1381
    %v1542 = vunpack.c.l.b16 %v1382
    %v1543 = vunpack.c.l.b16 %v1383
    %v1544 = vunpack.c.l.b16 %v1384
    %v1545 = vunpack.c.l.b16 %v1385
    %v1546 = vunpack.c.l.b16 %v1386
    %v1547 = vunpack.c.l.b16 %v1387
    %v1548 = vunpack.c.l.b16 %v1388
    %v1549 = vunpack.c.l.b16 %v1389
    %v1550 = vunpack.c.l.b16 %v1390
    %v1551 = vunpack.c.l.b16 %v1391
    %v1552 = vunpack.c.l.b16 %v1392
    %v1553 = vunpack.c.l.b16 %v1393
    %v1554 = vunpack.c.l.b16 %v1394
    %v1555 = vunpack.c.l.b16 %v1395
    %v1556 = vunpack.c.l.b16 %v1396
    %v1557 = vunpack.c.l.b16 %v1397
    %v1558 = vunpack.c.l.b16 %v1398
    %v1559 = vunpack.c.l.b16 %v1399
    %v1560 = vunpack.c.l.b16 %v1400
    %v1561 = vunpack.c.l.b16 %v1401
    %v1562 = vunpack.c.l.b16 %v1402
    %v1563 = vunpack.c.l.b16 %v1403
    %v1564 = vunpack.c.l.b16 %v1404
    %v1565 = vunpack.c.l.b16 %v1405
    %v1566 = vunpack.c.l.b16 %v1406
    %v1567 = vunpack.c.l.b16 %v1407
    %v1568 = vunpack.c.l.b16 %v1408
    %v1569 = vunpack.c.l.b16 %v1409
    %v1570 = vunpack.c.l.b16 %v1410
    %v1571 = vunpack.c.l.b16 %v1411
    %v1572 = vunpack.c.l.b16 %v1412
    %v1573 = vunpack.c.l.b16 %v1413
    %v1574 = vunpack.c.l.b16 %v1414
    %v1575 = vunpack.c.l.b16 %v1415
    %v1576 = vunpack.c.l.b16 %v1416
    %v1577 = vunpack.c.l.b16 %v1417
    %v1578 = vunpack.c.l.b16 %v1418
    %v1579 = vunpack.c.l.b16 %v1419
    %v1580 = vunpack.c.l.b16 %v1420
    %v1581 = vunpack.c.l.b16 %v1421
    %v1582 = vunpack.c.l.b16 %v1422
    %v1583 = vunpack.c.l.b16 %v1423
    %v1584 = vunpack.c.l.b16 %v1424
    %v1585 = vunpack.c.l.b16 %v1425
    %v1586 = vunpack.c.l.b16 %v1426
    %v1587 = vunpack.c.l.b16 %v1427
    %v1588 = vunpack.c.l.b16 %v1428
    %v1589 = vunpack.c.l.b16 %v1429
    %v1590 = vunpack.c.l.b16 %v1430
    %v1591 = vunpack.c.l.b16 %v1431
    %v1592 = vunpack.c.l.b16 %v1432
    %v1593 = vunpack.c.l.b16 %v1433
    %v1594 = vunpack.c.l.b16 %v1434
    %v1595 = vunpack.c.l.b16 %v1435
    %v1596 = vunpack.c.l.b16 %v1436
    %v1597 = vunpack.c.l.b16 %v1437
    %v1598 = vunpack.c.l.b16 %v1438
    %v1599 = vunpack.c.l.b16 %v1439
    %v1600 = vunpack.c.l.b16 %v1440
    %v1601 = vunpack.c.l.b16 %v1441
    %v1602 = vunpack.c.l.b16 %v1442
    %v1603 = vunpack.c.l.b16 %v1443
    %v1604 = vunpack.c.l.b16 %v1444
    %v1605 = vunpack.c.l.b16 %v1445
    %v1606 = vunpack.c.l.b16 %v1446
    %v1607 = vunpack.c.l.b16 %v1447
    %v1608 = vunpack.c.l.b16 %v1448
    %v1609 = vunpack.c.l.b16 %v1449
    %v1610 = vunpack.c.l.b16 %v1450
    %v1611 = vpack.c.b16 %v1532, %v1531
    %v1612 = vpack.c.b16 %v1534, %v1533
    %v1613 = vpack.c.b16 %v1536, %v1535
    %v1614 = vpack.c.b16 %v1538, %v1537
    %v1615 = vpack.c.b16 %v1540, %v1539
    %v1616 = vpack.c.b16 %v1542, %v1541
    %v1617 = vpack.c.b16 %v1544, %v1543
    %v1618 = vpack.c.b16 %v1546, %v1545
    %v1619 = vpack.c.b16 %v1548, %v1547
    %v1620 = vpack.c.b16 %v1550, %v1549
    %v1621 = vpack.c.b16 %v1552, %v1551
    %v1622 = vpack.c.b16 %v1554, %v1553
    %v1623 = vpack.c.b16 %v1556, %v1555
    %v1624 = vpack.c.b16 %v1558, %v1557
    %v1625 = vpack.c.b16 %v1560, %v1559
    %v1626 = vpack.c.b16 %v1562, %v1561
    %v1627 = vpack.c.b16 %v1564, %v1563
    %v1628 = vpack.c.b16 %v1566, %v1565
    %v1629 = vpack.c.b16 %v1568, %v1567
    %v1630 = vpack.c.b16 %v1570, %v1569
    %v1631 = vpack.c.b16 %v1572, %v1571
    %v1632 = vpack.c.b16 %v1574, %v1573
    %v1633 = vpack.c.b16 %v1576, %v1575
    %v1634 = vpack.c.b16 %v1578, %v1577
    %v1635 = vpack.c.b16 %v1580, %v1579
    %v1636 = vpack.c.b16 %v1582, %v1581
    %v1637 = vpack.c.b16 %v1584, %v1583
    %v1638 = vpack.c.b16 %v1586, %v1585
    %v1639 = vpack.c.b16 %v1588, %v1587
    %v1640 = vpack.c.b16 %v1590, %v1589
    %v1641 = vpack.c.b16 %v1592, %v1591
    %v1642 = vpack.c.b16 %v1594, %v1593
    %v1643 = vpack.c.b16 %v1596, %v1595
    %v1644 = vpack.c.b16 %v1598, %v1597
    %v1645 = vpack.c.b16 %v1600, %v1599
    %v1646 = vpack.c.b16 %v1602, %v1601
    %v1647 = vpack.c.b16 %v1604, %v1603
    %v1648 = vpack.c.b16 %v1606, %v1605
    %v1649 = vpack.c.b16 %v1608, %v1607
    %v1650 = vpack.c.b16 %v1610, %v1609
    %1691 = vmatprep.subr.bf16.mxu0 0
    %1692 = vmatpush1.bf16.msra.mxu0 %v1611
    %1693 = vmatprep.subr.bf16.mxu0 0
    %1694 = vmatpush1.bf16.msra.mxu0 %v1612
    %1695 = vmatprep.subr.bf16.mxu0 0
    %1696 = vmatpush1.bf16.msra.mxu0 %v1613
    %1697 = vmatprep.subr.bf16.mxu0 0
    %1698 = vmatpush1.bf16.msra.mxu0 %v1614
    %1699 = vmatprep.subr.bf16.mxu0 0
    %1700 = vmatpush1.bf16.msra.mxu0 %v1615
    %1701 = vmatprep.subr.bf16.mxu0 0
    %1702 = vmatpush1.bf16.msra.mxu0 %v1616
    %1703 = vmatprep.subr.bf16.mxu0 0
    %1704 = vmatpush1.bf16.msra.mxu0 %v1617
    %1705 = vmatprep.subr.bf16.mxu0 0
    %1706 = vmatpush1.bf16.msra.mxu0 %v1618
    %1707 = vmatprep.subr.bf16.mxu0 0
    %1708 = vmatpush1.bf16.msra.mxu0 %v1619
    %1709 = vmatprep.subr.bf16.mxu0 0
    %1710 = vmatpush1.bf16.msra.mxu0 %v1620
    %1711 = vmatprep.subr.bf16.mxu0 0
    %1712 = vmatpush1.bf16.msra.mxu0 %v1621
    %1713 = vmatprep.subr.bf16.mxu0 0
    %1714 = vmatpush1.bf16.msra.mxu0 %v1622
    %1715 = vmatprep.subr.bf16.mxu0 0
    %1716 = vmatpush1.bf16.msra.mxu0 %v1623
    %1717 = vmatprep.subr.bf16.mxu0 0
    %1718 = vmatpush1.bf16.msra.mxu0 %v1624
    %1719 = vmatprep.subr.bf16.mxu0 0
    %1720 = vmatpush1.bf16.msra.mxu0 %v1625
    %1721 = vmatprep.subr.bf16.mxu0 0
    %1722 = vmatpush1.bf16.msra.mxu0 %v1626
    %1723 = vmatprep.mubr.bf16.mxu0 %v671
    %1724 = vmatmul.mubr.bf16.gmra.mrb[0].mxu0 %v518
    %v1725 = vpop.f32.mrb[0].mxu0
    %v1726 = vadd.f32 0.0, %v1725
    %v1727 = vpop.f32.mrb[0].mxu0
    %v1728 = vpop.f32.mrb[0].mxu0
    %v1729 = vadd.f32 0.0, %v1728
    %v1730 = vpop.f32.mrb[0].mxu0
    %1731 = vmatprep.mubr.bf16.mxu0 %v672
    %1732 = vmatmul.mubr.bf16.gmra.mrb[0].mxu0 %v519
    %v1733 = vpop.f32.mrb[0].mxu0
    %v1734 = vadd.f32 0.0, %v1733
    %v1735 = vpop.f32.mrb[0].mxu0
    %v1736 = vpop.f32.mrb[0].mxu0
    %v1737 = vadd.f32 0.0, %v1736
    %v1738 = vpop.f32.mrb[0].mxu0
    %1739 = vmatprep.mubr.bf16.mxu0 %v673
    %1740 = vmatmul.mubr.bf16.gmra.mrb[0].mxu0 %v520
    %v1741 = vpop.f32.mrb[0].mxu0
    %v1742 = vadd.f32 0.0, %v1741
    %v1743 = vpop.f32.mrb[0].mxu0
    %v1744 = vpop.f32.mrb[0].mxu0
    %v1745 = vadd.f32 0.0, %v1744
    %v1746 = vpop.f32.mrb[0].mxu0
    %1747 = vmatprep.mubr.bf16.mxu0 %v674
    %1748 = vmatmul.mubr.bf16.gmra.mrb[0].mxu0 %v521
    %v1749 = vpop.f32.mrb[0].mxu0
    %v1750 = vadd.f32 0.0, %v1749
    %v1751 = vpop.f32.mrb[0].mxu0
    %v1752 = vpop.f32.mrb[0].mxu0
    %v1753 = vadd.f32 0.0, %v1752
    %v1754 = vpop.f32.mrb[0].mxu0
    %1755 = vmatprep.mubr.bf16.mxu0 %v675
    %1756 = vmatmul.mubr.bf16.gmra.mrb[0].mxu0 %v522
    %v1757 = vpop.f32.mrb[0].mxu0
    %v1758 = vadd.f32 0.0, %v1757
    %v1759 = vpop.f32.mrb[0].mxu0
    %v1760 = vpop.f32.mrb[0].mxu0
    %v1761 = vadd.f32 0.0, %v1760
    %v1762 = vpop.f32.mrb[0].mxu0
    %1763 = vmatprep.mubr.bf16.mxu0 %v676
    %1764 = vmatmul.mubr.bf16.gmra.mrb[0].mxu0 %v523
    %v1765 = vpop.f32.mrb[0].mxu0
    %v1766 = vadd.f32 0.0, %v1765
    %v1767 = vpop.f32.mrb[0].mxu0
    %v1768 = vpop.f32.mrb[0].mxu0
    %v1769 = vadd.f32 0.0, %v1768
    %v1770 = vpop.f32.mrb[0].mxu0
    %1771 = vmatprep.mubr.bf16.mxu0 %v677
    %1772 = vmatmul.mubr.bf16.gmra.mrb[0].mxu0 %v524
    %v1773 = vpop.f32.mrb[0].mxu0
    %v1774 = vadd.f32 0.0, %v1773
    %v1775 = vpop.f32.mrb[0].mxu0
    %v1776 = vpop.f32.mrb[0].mxu0
    %v1777 = vadd.f32 0.0, %v1776
    %v1778 = vpop.f32.mrb[0].mxu0
    %1779 = vmatprep.mubr.bf16.mxu0 %v678
    %1780 = vmatmul.mubr.bf16.gmra.mrb[0].mxu0 %v525
    %v1781 = vpop.f32.mrb[0].mxu0
    %v1782 = vadd.f32 0.0, %v1781
    %v1783 = vpop.f32.mrb[0].mxu0
    %v1784 = vpop.f32.mrb[0].mxu0
    %v1785 = vadd.f32 0.0, %v1784
    %v1786 = vpop.f32.mrb[0].mxu0
    %1787 = vdwg.mxu0
    %1788 = vmatprep.subr.bf16.mxu0 0
    %1789 = vmatpush1.bf16.msra.mxu0 %v1627
    %1790 = vmatprep.subr.bf16.mxu0 0
    %1791 = vmatpush1.bf16.msra.mxu0 %v1628
    %1792 = vmatprep.subr.bf16.mxu0 0
    %1793 = vmatpush1.bf16.msra.mxu0 %v1629
    %1794 = vmatprep.subr.bf16.mxu0 0
    %1795 = vmatpush1.bf16.msra.mxu0 %v1630
    %1796 = vmatprep.subr.bf16.mxu0 0
    %1797 = vmatpush1.bf16.msra.mxu0 %v1631
    %1798 = vmatprep.subr.bf16.mxu0 0
    %1799 = vmatpush1.bf16.msra.mxu0 %v1632
    %1800 = vmatprep.subr.bf16.mxu0 0
    %1801 = vmatpush1.bf16.msra.mxu0 %v1633
    %1802 = vmatprep.subr.bf16.mxu0 0
    %1803 = vmatpush1.bf16.msra.mxu0 %v1634
    %1804 = vmatprep.subr.bf16.mxu0 0
    %1805 = vmatpush1.bf16.msra.mxu0 %v1635
    %1806 = vmatprep.subr.bf16.mxu0 0
    %1807 = vmatpush1.bf16.msra.mxu0 %v1636
    %1808 = vmatprep.subr.bf16.mxu0 0
    %1809 = vmatpush1.bf16.msra.mxu0 %v1637
    %1810 = vmatprep.subr.bf16.mxu0 0
    %1811 = vmatpush1.bf16.msra.mxu0 %v1638
    %1812 = vmatprep.subr.bf16.mxu0 0
    %1813 = vmatpush1.bf16.msra.mxu0 %v1639
    %1814 = vmatprep.subr.bf16.mxu0 0
    %1815 = vmatpush1.bf16.msra.mxu0 %v1640
    %1816 = vmatprep.subr.bf16.mxu0 0
    %1817 = vmatpush1.bf16.msra.mxu0 %v1641
    %1818 = vmatprep.subr.bf16.mxu0 0
    %1819 = vmatpush1.bf16.msra.mxu0 %v1642
    %1820 = vmatprep.mubr.bf16.mxu0 %v977
    %1821 = vmatmul.mubr.bf16.gmra.mrb[0].mxu0 %v824
    %v1822 = vpop.f32.mrb[0].mxu0
    %v1823 = vadd.f32 %v1726, %v1822
    %v1824 = vpop.f32.mrb[0].mxu0
    %v1825 = vpop.f32.mrb[0].mxu0
    %v1826 = vadd.f32 %v1729, %v1825
    %v1827 = vpop.f32.mrb[0].mxu0
    %1828 = vmatprep.mubr.bf16.mxu0 %v978
    %1829 = vmatmul.mubr.bf16.gmra.mrb[0].mxu0 %v825
    %v1830 = vpop.f32.mrb[0].mxu0
    %v1831 = vadd.f32 %v1734, %v1830
    %v1832 = vpop.f32.mrb[0].mxu0
    %v1833 = vpop.f32.mrb[0].mxu0
    %v1834 = vadd.f32 %v1737, %v1833
    %v1835 = vpop.f32.mrb[0].mxu0
    %1836 = vmatprep.mubr.bf16.mxu0 %v979
    %1837 = vmatmul.mubr.bf16.gmra.mrb[0].mxu0 %v826
    %v1838 = vpop.f32.mrb[0].mxu0
    %v1839 = vadd.f32 %v1742, %v1838
    %v1840 = vpop.f32.mrb[0].mxu0
    %v1841 = vpop.f32.mrb[0].mxu0
    %v1842 = vadd.f32 %v1745, %v1841
    %v1843 = vpop.f32.mrb[0].mxu0
    %1844 = vmatprep.mubr.bf16.mxu0 %v980
    %1845 = vmatmul.mubr.bf16.gmra.mrb[0].mxu0 %v827
    %v1846 = vpop.f32.mrb[0].mxu0
    %v1847 = vadd.f32 %v1750, %v1846
    %v1848 = vpop.f32.mrb[0].mxu0
    %v1849 = vpop.f32.mrb[0].mxu0
    %v1850 = vadd.f32 %v1753, %v1849
    %v1851 = vpop.f32.mrb[0].mxu0
    %1852 = vmatprep.mubr.bf16.mxu0 %v981
    %1853 = vmatmul.mubr.bf16.gmra.mrb[0].mxu0 %v828
    %v1854 = vpop.f32.mrb[0].mxu0
    %v1855 = vadd.f32 %v1758, %v1854
    %v1856 = vpop.f32.mrb[0].mxu0
    %v1857 = vpop.f32.mrb[0].mxu0
    %v1858 = vadd.f32 %v1761, %v1857
    %v1859 = vpop.f32.mrb[0].mxu0
    %1860 = vmatprep.mubr.bf16.mxu0 %v982
    %1861 = vmatmul.mubr.bf16.gmra.mrb[0].mxu0 %v829
    %v1862 = vpop.f32.mrb[0].mxu0
    %v1863 = vadd.f32 %v1766, %v1862
    %v1864 = vpop.f32.mrb[0].mxu0
    %v1865 = vpop.f32.mrb[0].mxu0
    %v1866 = vadd.f32 %v1769, %v1865
    %v1867 = vpop.f32.mrb[0].mxu0
    %1868 = vmatprep.mubr.bf16.mxu0 %v983
    %1869 = vmatmul.mubr.bf16.gmra.mrb[0].mxu0 %v830
    %v1870 = vpop.f32.mrb[0].mxu0
    %v1871 = vadd.f32 %v1774, %v1870
    %v1872 = vpop.f32.mrb[0].mxu0
    %v1873 = vpop.f32.mrb[0].mxu0
    %v1874 = vadd.f32 %v1777, %v1873
    %v1875 = vpop.f32.mrb[0].mxu0
    %1876 = vmatprep.mubr.bf16.mxu0 %v984
    %1877 = vmatmul.mubr.bf16.gmra.mrb[0].mxu0 %v831
    %v1878 = vpop.f32.mrb[0].mxu0
    %v1879 = vadd.f32 %v1782, %v1878
    %v1880 = vpop.f32.mrb[0].mxu0
    %v1881 = vpop.f32.mrb[0].mxu0
    %v1882 = vadd.f32 %v1785, %v1881
    %v1883 = vpop.f32.mrb[0].mxu0
    %1884 = vdwg.mxu0
    %1885 = vmatprep.subr.bf16.mxu0 0
    %1886 = vmatpush1.bf16.msra.mxu0 %v1643
    %1887 = vmatprep.subr.bf16.mxu0 0
    %1888 = vmatpush1.bf16.msra.mxu0 %v1644
    %1889 = vmatprep.subr.bf16.mxu0 0
    %1890 = vmatpush1.bf16.msra.mxu0 %v1645
    %1891 = vmatprep.subr.bf16.mxu0 0
    %1892 = vmatpush1.bf16.msra.mxu0 %v1646
    %1893 = vmatprep.subr.bf16.mxu0 0
    %1894 = vmatpush1.bf16.msra.mxu0 %v1647
    %1895 = vmatprep.subr.bf16.mxu0 0
    %1896 = vmatpush1.bf16.msra.mxu0 %v1648
    %1897 = vmatprep.subr.bf16.mxu0 0
    %1898 = vmatpush1.bf16.msra.mxu0 %v1649
    %1899 = vmatprep.subr.bf16.mxu0 0
    %1900 = vmatpush1.bf16.msra.mxu0 %v1650
    %1901 = vmatprep.subr.bf16.mxu0 0
    %1902 = vmatpush1.bf16.msra.mxu0 0
    %1903 = vmatprep.subr.bf16.mxu0 0
    %1904 = vmatpush1.bf16.msra.mxu0 0
    %1905 = vmatprep.subr.bf16.mxu0 0
    %1906 = vmatpush1.bf16.msra.mxu0 0
    %1907 = vmatprep.subr.bf16.mxu0 0
    %1908 = vmatpush1.bf16.msra.mxu0 0
    %1909 = vmatprep.subr.bf16.mxu0 0
    %1910 = vmatpush1.bf16.msra.mxu0 0
    %1911 = vmatprep.subr.bf16.mxu0 0
    %1912 = vmatpush1.bf16.msra.mxu0 0
    %1913 = vmatprep.subr.bf16.mxu0 0
    %1914 = vmatpush1.bf16.msra.mxu0 0
    %1915 = vmatprep.subr.bf16.mxu0 0
    %1916 = vmatpush1.bf16.msra.mxu0 0
    %1917 = vmatprep.mubr.bf16.mxu0 0
    %1918 = vmatmul.mubr.bf16.gmra.mrb[0].mxu0 %v142
    %v1919 = vpop.f32.mrb[0].mxu0
    %v1920 = vadd.f32 %v1823, %v1919
    %v1921 = vpop.f32.mrb[0].mxu0
    %v1922 = vpop.f32.mrb[0].mxu0
    %v1923 = vadd.f32 %v1826, %v1922
    %v1924 = vpop.f32.mrb[0].mxu0
    %1925 = vmatprep.mubr.bf16.mxu0 0
    %1926 = vmatmul.mubr.bf16.gmra.mrb[0].mxu0 %v143
    %v1927 = vpop.f32.mrb[0].mxu0
    %v1928 = vadd.f32 %v1831, %v1927
    %v1929 = vpop.f32.mrb[0].mxu0
    %v1930 = vpop.f32.mrb[0].mxu0
    %v1931 = vadd.f32 %v1834, %v1930
    %v1932 = vpop.f32.mrb[0].mxu0
    %1933 = vmatprep.mubr.bf16.mxu0 0
    %1934 = vmatmul.mubr.bf16.gmra.mrb[0].mxu0 %v144
    %v1935 = vpop.f32.mrb[0].mxu0
    %v1936 = vadd.f32 %v1839, %v1935
    %v1937 = vpop.f32.mrb[0].mxu0
    %v1938 = vpop.f32.mrb[0].mxu0
    %v1939 = vadd.f32 %v1842, %v1938
    %v1940 = vpop.f32.mrb[0].mxu0
    %1941 = vmatprep.mubr.bf16.mxu0 0
    %1942 = vmatmul.mubr.bf16.gmra.mrb[0].mxu0 %v145
    %v1943 = vpop.f32.mrb[0].mxu0
    %v1944 = vadd.f32 %v1847, %v1943
    %v1945 = vpop.f32.mrb[0].mxu0
    %v1946 = vpop.f32.mrb[0].mxu0
    %v1947 = vadd.f32 %v1850, %v1946
    %v1948 = vpop.f32.mrb[0].mxu0
    %1949 = vmatprep.mubr.bf16.mxu0 0
    %1950 = vmatmul.mubr.bf16.gmra.mrb[0].mxu0 %v146
    %v1951 = vpop.f32.mrb[0].mxu0
    %v1952 = vadd.f32 %v1855, %v1951
    %v1953 = vpop.f32.mrb[0].mxu0
    %v1954 = vpop.f32.mrb[0].mxu0
    %v1955 = vadd.f32 %v1858, %v1954
    %v1956 = vpop.f32.mrb[0].mxu0
    %1957 = vmatprep.mubr.bf16.mxu0 0
    %1958 = vmatmul.mubr.bf16.gmra.mrb[0].mxu0 %v147
    %v1959 = vpop.f32.mrb[0].mxu0
    %v1960 = vadd.f32 %v1863, %v1959
    %v1961 = vpop.f32.mrb[0].mxu0
    %v1962 = vpop.f32.mrb[0].mxu0
    %v1963 = vadd.f32 %v1866, %v1962
    %v1964 = vpop.f32.mrb[0].mxu0
    %1965 = vmatprep.mubr.bf16.mxu0 0
    %1966 = vmatmul.mubr.bf16.gmra.mrb[0].mxu0 %v148
    %v1967 = vpop.f32.mrb[0].mxu0
    %v1968 = vadd.f32 %v1871, %v1967
    %v1969 = vpop.f32.mrb[0].mxu0
    %v1970 = vpop.f32.mrb[0].mxu0
    %v1971 = vadd.f32 %v1874, %v1970
    %v1972 = vpop.f32.mrb[0].mxu0
    %1973 = vmatprep.mubr.bf16.mxu0 0
    %1974 = vmatmul.mubr.bf16.gmra.mrb[0].mxu0 %v149
    %v1975 = vpop.f32.mrb[0].mxu0
    %v1976 = vadd.f32 %v1879, %v1975
    %v1977 = vpop.f32.mrb[0].mxu0
    %v1978 = vpop.f32.mrb[0].mxu0
    %v1979 = vadd.f32 %v1882, %v1978
    %v1980 = vpop.f32.mrb[0].mxu0
    %1981 = vdwg.mxu0
    %v1982 = vld [vmem:[%s4] sm:$0x3]
    %v1984 = vlaneseq
    %v1985 = vshrl.u32 %v1984, 7
    %v1986 = vsub.s32 0, %v1985
    %v1987 = vrot.slane %v1982, %v1986
    %v1988 = vlaneseq
    %v1989 = vshrl.u32 %v1988, 7
    %v1990 = vsub.s32 1, %v1989
    %v1991 = vrot.slane %v1982, %v1990
    %v1994 = vmul.f32 %v1309, %v1987
    %v1995 = vmul.f32 %v1920, %v1991
    %v1996 = vmul.f32 %v1312, %v1987
    %v1997 = vmul.f32 %v1923, %v1991
    %v1998 = vmul.f32 %v1317, %v1987
    %v1999 = vmul.f32 %v1928, %v1991
    %v2000 = vmul.f32 %v1320, %v1987
    %v2001 = vmul.f32 %v1931, %v1991
    %v2002 = vmul.f32 %v1325, %v1987
    %v2003 = vmul.f32 %v1936, %v1991
    %v2004 = vmul.f32 %v1328, %v1987
    %v2005 = vmul.f32 %v1939, %v1991
    %v2006 = vmul.f32 %v1333, %v1987
    %v2007 = vmul.f32 %v1944, %v1991
    %v2008 = vmul.f32 %v1336, %v1987
    %v2009 = vmul.f32 %v1947, %v1991
    %v2010 = vmul.f32 %v1341, %v1987
    %v2011 = vmul.f32 %v1952, %v1991
    %v2012 = vmul.f32 %v1344, %v1987
    %v2013 = vmul.f32 %v1955, %v1991
    %v2014 = vmul.f32 %v1349, %v1987
    %v2015 = vmul.f32 %v1960, %v1991
    %v2016 = vmul.f32 %v1352, %v1987
    %v2017 = vmul.f32 %v1963, %v1991
    %v2018 = vmul.f32 %v1357, %v1987
    %v2019 = vmul.f32 %v1968, %v1991
    %v2020 = vmul.f32 %v1360, %v1987
    %v2021 = vmul.f32 %v1971, %v1991
    %v2022 = vmul.f32 %v1365, %v1987
    %v2023 = vmul.f32 %v1976, %v1991
    %v2024 = vmul.f32 %v1368, %v1987
    %v2025 = vmul.f32 %v1979, %v1991
    %v2026 = vld [vmem:[%s5] sm:$0x3]
    %v2028 = vlaneseq
    %v2029 = vshrl.u32 %v2028, 7
    %v2030 = vsub.s32 0, %v2029
    %v2031 = vrot.slane %v2026, %v2030
    %v2032 = vlaneseq
    %v2033 = vshrl.u32 %v2032, 7
    %v2034 = vsub.s32 1, %v2033
    %v2035 = vrot.slane %v2026, %v2034
    %v2038 = vadd.f32 %v1994, %v2031
    %v2039 = vadd.f32 %v1995, %v2035
    %v2040 = vadd.f32 %v1996, %v2031
    %v2041 = vadd.f32 %v1997, %v2035
    %v2042 = vadd.f32 %v1998, %v2031
    %v2043 = vadd.f32 %v1999, %v2035
    %v2044 = vadd.f32 %v2000, %v2031
    %v2045 = vadd.f32 %v2001, %v2035
    %v2046 = vadd.f32 %v2002, %v2031
    %v2047 = vadd.f32 %v2003, %v2035
    %v2048 = vadd.f32 %v2004, %v2031
    %v2049 = vadd.f32 %v2005, %v2035
    %v2050 = vadd.f32 %v2006, %v2031
    %v2051 = vadd.f32 %v2007, %v2035
    %v2052 = vadd.f32 %v2008, %v2031
    %v2053 = vadd.f32 %v2009, %v2035
    %v2054 = vadd.f32 %v2010, %v2031
    %v2055 = vadd.f32 %v2011, %v2035
    %v2056 = vadd.f32 %v2012, %v2031
    %v2057 = vadd.f32 %v2013, %v2035
    %v2058 = vadd.f32 %v2014, %v2031
    %v2059 = vadd.f32 %v2015, %v2035
    %v2060 = vadd.f32 %v2016, %v2031
    %v2061 = vadd.f32 %v2017, %v2035
    %v2062 = vadd.f32 %v2018, %v2031
    %v2063 = vadd.f32 %v2019, %v2035
    %v2064 = vadd.f32 %v2020, %v2031
    %v2065 = vadd.f32 %v2021, %v2035
    %v2066 = vadd.f32 %v2022, %v2031
    %v2067 = vadd.f32 %v2023, %v2035
    %v2068 = vadd.f32 %v2024, %v2031
    %v2069 = vadd.f32 %v2025, %v2035
    %v2070 = vmax.f32 %v2038, 0.0
    %v2071 = vmax.f32 %v2039, 0.0
    %v2072 = vmax.f32 %v2040, 0.0
    %v2073 = vmax.f32 %v2041, 0.0
    %v2074 = vmax.f32 %v2042, 0.0
    %v2075 = vmax.f32 %v2043, 0.0
    %v2076 = vmax.f32 %v2044, 0.0
    %v2077 = vmax.f32 %v2045, 0.0
    %v2078 = vmax.f32 %v2046, 0.0
    %v2079 = vmax.f32 %v2047, 0.0
    %v2080 = vmax.f32 %v2048, 0.0
    %v2081 = vmax.f32 %v2049, 0.0
    %v2082 = vmax.f32 %v2050, 0.0
    %v2083 = vmax.f32 %v2051, 0.0
    %v2084 = vmax.f32 %v2052, 0.0
    %v2085 = vmax.f32 %v2053, 0.0
    %v2086 = vmax.f32 %v2054, 0.0
    %v2087 = vmax.f32 %v2055, 0.0
    %v2088 = vmax.f32 %v2056, 0.0
    %v2089 = vmax.f32 %v2057, 0.0
    %v2090 = vmax.f32 %v2058, 0.0
    %v2091 = vmax.f32 %v2059, 0.0
    %v2092 = vmax.f32 %v2060, 0.0
    %v2093 = vmax.f32 %v2061, 0.0
    %v2094 = vmax.f32 %v2062, 0.0
    %v2095 = vmax.f32 %v2063, 0.0
    %v2096 = vmax.f32 %v2064, 0.0
    %v2097 = vmax.f32 %v2065, 0.0
    %v2098 = vmax.f32 %v2066, 0.0
    %v2099 = vmax.f32 %v2067, 0.0
    %v2100 = vmax.f32 %v2068, 0.0
    %v2101 = vmax.f32 %v2069, 0.0
    %v2102 = vrot.slane %v2070, 4
    %v2103 = vrot.slane %v2071, 4
    %v2104 = vrot.slane %v2072, 4
    %v2105 = vrot.slane %v2073, 4
    %v2106 = vrot.slane %v2074, 4
    %v2107 = vrot.slane %v2075, 4
    %v2108 = vrot.slane %v2076, 4
    %v2109 = vrot.slane %v2077, 4
    %v2110 = vrot.slane %v2078, 4
    %v2111 = vrot.slane %v2079, 4
    %v2112 = vrot.slane %v2080, 4
    %v2113 = vrot.slane %v2081, 4
    %v2114 = vrot.slane %v2082, 4
    %v2115 = vrot.slane %v2083, 4
    %v2116 = vrot.slane %v2084, 4
    %v2117 = vrot.slane %v2085, 4
    %v2118 = vrot.slane %v2086, 4
    %v2119 = vrot.slane %v2087, 4
    %v2120 = vrot.slane %v2088, 4
    %v2121 = vrot.slane %v2089, 4
    %v2122 = vrot.slane %v2090, 4
    %v2123 = vrot.slane %v2091, 4
    %v2124 = vrot.slane %v2092, 4
    %v2125 = vrot.slane %v2093, 4
    %v2126 = vrot.slane %v2094, 4
    %v2127 = vrot.slane %v2095, 4
    %v2128 = vrot.slane %v2096, 4
    %v2129 = vrot.slane %v2097, 4
    %v2130 = vrot.slane %v2098, 4
    %v2131 = vrot.slane %v2099, 4
    %v2132 = vrot.slane %v2100, 4
    %v2133 = vrot.slane %v2101, 4
    %v2134 = vsel %vm389, %v2130, %v2132
    %v2135 = vsel %vm389, %v2131, %v2133
    %v2136 = vsel %vm389, %v2128, %v2130
    %v2137 = vsel %vm389, %v2129, %v2131
    %v2138 = vsel %vm389, %v2126, %v2128
    %v2139 = vsel %vm389, %v2127, %v2129
    %v2140 = vsel %vm389, %v2124, %v2126
    %v2141 = vsel %vm389, %v2125, %v2127
    %v2142 = vsel %vm389, %v2122, %v2124
    %v2143 = vsel %vm389, %v2123, %v2125
    %v2144 = vsel %vm389, %v2120, %v2122
    %v2145 = vsel %vm389, %v2121, %v2123
    %v2146 = vsel %vm389, %v2118, %v2120
    %v2147 = vsel %vm389, %v2119, %v2121
    %v2148 = vsel %vm389, %v2116, %v2118
    %v2149 = vsel %vm389, %v2117, %v2119
    %v2150 = vsel %vm389, %v2114, %v2116
    %v2151 = vsel %vm389, %v2115, %v2117
    %v2152 = vsel %vm389, %v2112, %v2114
    %v2153 = vsel %vm389, %v2113, %v2115
    %v2154 = vsel %vm389, %v2110, %v2112
    %v2155 = vsel %vm389, %v2111, %v2113
    %v2156 = vsel %vm389, %v2108, %v2110
    %v2157 = vsel %vm389, %v2109, %v2111
    %v2158 = vsel %vm389, %v2106, %v2108
    %v2159 = vsel %vm389, %v2107, %v2109
    %v2160 = vsel %vm389, %v2104, %v2106
    %v2161 = vsel %vm389, %v2105, %v2107
    %v2162 = vsel %vm389, %v2102, %v2104
    %v2163 = vsel %vm389, %v2103, %v2105
    %v2164 = vsel %vm389, %v2132, %v2102
    %v2165 = vsel %vm389, %v2133, %v2103
    %v2166 = vsel %vm486, %v2164, 0.0
    %v2167 = vsel %vm486, %v2165, 0.0
    %v2168 = vsel %vm487, %v2162, 0.0
    %v2169 = vsel %vm487, %v2163, 0.0
    %v2170 = vsel %vm488, %v2160, 0.0
    %v2171 = vsel %vm488, %v2161, 0.0
    %v2172 = vsel %vm489, %v2158, 0.0
    %v2173 = vsel %vm489, %v2159, 0.0
    %v2174 = vsel %vm490, %v2156, 0.0
    %v2175 = vsel %vm490, %v2157, 0.0
    %v2176 = vsel %vm491, %v2154, 0.0
    %v2177 = vsel %vm491, %v2155, 0.0
    %v2178 = vsel %vm492, %v2152, 0.0
    %v2179 = vsel %vm492, %v2153, 0.0
    %v2180 = vsel %vm493, %v2150, 0.0
    %v2181 = vsel %vm493, %v2151, 0.0
    %v2182 = vsel %vm494, %v2148, 0.0
    %v2183 = vsel %vm494, %v2149, 0.0
    %v2184 = vsel %vm495, %v2146, 0.0
    %v2185 = vsel %vm495, %v2147, 0.0
    %v2186 = vsel %vm496, %v2144, 0.0
    %v2187 = vsel %vm496, %v2145, 0.0
    %v2188 = vsel %vm497, %v2142, 0.0
    %v2189 = vsel %vm497, %v2143, 0.0
    %v2190 = vsel %vm498, %v2140, 0.0
    %v2191 = vsel %vm498, %v2141, 0.0
    %v2192 = vsel %vm499, %v2138, 0.0
    %v2193 = vsel %vm499, %v2139, 0.0
    %v2194 = vsel %vm500, %v2136, 0.0
    %v2195 = vsel %vm500, %v2137, 0.0
    %v2196 = vsel %vm501, %v2134, 0.0
    %v2197 = vsel %vm501, %v2135, 0.0
    %v2198 = vpack.c.bf16 %v2168, %v2166
    %v2199 = vpack.c.bf16 %v2169, %v2167
    %v2200 = vpack.c.bf16 %v2172, %v2170
    %v2201 = vpack.c.bf16 %v2173, %v2171
    %v2202 = vpack.c.bf16 %v2176, %v2174
    %v2203 = vpack.c.bf16 %v2177, %v2175
    %v2204 = vpack.c.bf16 %v2180, %v2178
    %v2205 = vpack.c.bf16 %v2181, %v2179
    %v2206 = vpack.c.bf16 %v2184, %v2182
    %v2207 = vpack.c.bf16 %v2185, %v2183
    %v2208 = vpack.c.bf16 %v2188, %v2186
    %v2209 = vpack.c.bf16 %v2189, %v2187
    %v2210 = vpack.c.bf16 %v2192, %v2190
    %v2211 = vpack.c.bf16 %v2193, %v2191
    %v2212 = vpack.c.bf16 %v2196, %v2194
    %v2213 = vpack.c.bf16 %v2197, %v2195
    %v2214 = vrot.slane %v2070, 5
    %v2215 = vrot.slane %v2071, 5
    %v2216 = vrot.slane %v2072, 5
    %v2217 = vrot.slane %v2073, 5
    %v2218 = vrot.slane %v2074, 5
    %v2219 = vrot.slane %v2075, 5
    %v2220 = vrot.slane %v2076, 5
    %v2221 = vrot.slane %v2077, 5
    %v2222 = vrot.slane %v2078, 5
    %v2223 = vrot.slane %v2079, 5
    %v2224 = vrot.slane %v2080, 5
    %v2225 = vrot.slane %v2081, 5
    %v2226 = vrot.slane %v2082, 5
    %v2227 = vrot.slane %v2083, 5
    %v2228 = vrot.slane %v2084, 5
    %v2229 = vrot.slane %v2085, 5
    %v2230 = vrot.slane %v2086, 5
    %v2231 = vrot.slane %v2087, 5
    %v2232 = vrot.slane %v2088, 5
    %v2233 = vrot.slane %v2089, 5
    %v2234 = vrot.slane %v2090, 5
    %v2235 = vrot.slane %v2091, 5
    %v2236 = vrot.slane %v2092, 5
    %v2237 = vrot.slane %v2093, 5
    %v2238 = vrot.slane %v2094, 5
    %v2239 = vrot.slane %v2095, 5
    %v2240 = vrot.slane %v2096, 5
    %v2241 = vrot.slane %v2097, 5
    %v2242 = vrot.slane %v2098, 5
    %v2243 = vrot.slane %v2099, 5
    %v2244 = vrot.slane %v2100, 5
    %v2245 = vrot.slane %v2101, 5
    %v2246 = vsel %vm542, %v2242, %v2244
    %v2247 = vsel %vm542, %v2243, %v2245
    %v2248 = vsel %vm542, %v2240, %v2242
    %v2249 = vsel %vm542, %v2241, %v2243
    %v2250 = vsel %vm542, %v2238, %v2240
    %v2251 = vsel %vm542, %v2239, %v2241
    %v2252 = vsel %vm542, %v2236, %v2238
    %v2253 = vsel %vm542, %v2237, %v2239
    %v2254 = vsel %vm542, %v2234, %v2236
    %v2255 = vsel %vm542, %v2235, %v2237
    %v2256 = vsel %vm542, %v2232, %v2234
    %v2257 = vsel %vm542, %v2233, %v2235
    %v2258 = vsel %vm542, %v2230, %v2232
    %v2259 = vsel %vm542, %v2231, %v2233
    %v2260 = vsel %vm542, %v2228, %v2230
    %v2261 = vsel %vm542, %v2229, %v2231
    %v2262 = vsel %vm542, %v2226, %v2228
    %v2263 = vsel %vm542, %v2227, %v2229
    %v2264 = vsel %vm542, %v2224, %v2226
    %v2265 = vsel %vm542, %v2225, %v2227
    %v2266 = vsel %vm542, %v2222, %v2224
    %v2267 = vsel %vm542, %v2223, %v2225
    %v2268 = vsel %vm542, %v2220, %v2222
    %v2269 = vsel %vm542, %v2221, %v2223
    %v2270 = vsel %vm542, %v2218, %v2220
    %v2271 = vsel %vm542, %v2219, %v2221
    %v2272 = vsel %vm542, %v2216, %v2218
    %v2273 = vsel %vm542, %v2217, %v2219
    %v2274 = vsel %vm542, %v2214, %v2216
    %v2275 = vsel %vm542, %v2215, %v2217
    %v2276 = vsel %vm542, %v2244, %v2214
    %v2277 = vsel %vm542, %v2245, %v2215
    %v2278 = vsel %vm639, %v2276, 0.0
    %v2279 = vsel %vm639, %v2277, 0.0
    %v2280 = vsel %vm640, %v2274, 0.0
    %v2281 = vsel %vm640, %v2275, 0.0
    %v2282 = vsel %vm641, %v2272, 0.0
    %v2283 = vsel %vm641, %v2273, 0.0
    %v2284 = vsel %vm642, %v2270, 0.0
    %v2285 = vsel %vm642, %v2271, 0.0
    %v2286 = vsel %vm643, %v2268, 0.0
    %v2287 = vsel %vm643, %v2269, 0.0
    %v2288 = vsel %vm644, %v2266, 0.0
    %v2289 = vsel %vm644, %v2267, 0.0
    %v2290 = vsel %vm645, %v2264, 0.0
    %v2291 = vsel %vm645, %v2265, 0.0
    %v2292 = vsel %vm646, %v2262, 0.0
    %v2293 = vsel %vm646, %v2263, 0.0
    %v2294 = vsel %vm647, %v2260, 0.0
    %v2295 = vsel %vm647, %v2261, 0.0
    %v2296 = vsel %vm648, %v2258, 0.0
    %v2297 = vsel %vm648, %v2259, 0.0
    %v2298 = vsel %vm649, %v2256, 0.0
    %v2299 = vsel %vm649, %v2257, 0.0
    %v2300 = vsel %vm650, %v2254, 0.0
    %v2301 = vsel %vm650, %v2255, 0.0
    %v2302 = vsel %vm651, %v2252, 0.0
    %v2303 = vsel %vm651, %v2253, 0.0
    %v2304 = vsel %vm652, %v2250, 0.0
    %v2305 = vsel %vm652, %v2251, 0.0
    %v2306 = vsel %vm653, %v2248, 0.0
    %v2307 = vsel %vm653, %v2249, 0.0
    %v2308 = vsel %vm654, %v2246, 0.0
    %v2309 = vsel %vm654, %v2247, 0.0
    %v2310 = vpack.c.bf16 %v2280, %v2278
    %v2311 = vpack.c.bf16 %v2281, %v2279
    %v2312 = vpack.c.bf16 %v2284, %v2282
    %v2313 = vpack.c.bf16 %v2285, %v2283
    %v2314 = vpack.c.bf16 %v2288, %v2286
    %v2315 = vpack.c.bf16 %v2289, %v2287
    %v2316 = vpack.c.bf16 %v2292, %v2290
    %v2317 = vpack.c.bf16 %v2293, %v2291
    %v2318 = vpack.c.bf16 %v2296, %v2294
    %v2319 = vpack.c.bf16 %v2297, %v2295
    %v2320 = vpack.c.bf16 %v2300, %v2298
    %v2321 = vpack.c.bf16 %v2301, %v2299
    %v2322 = vpack.c.bf16 %v2304, %v2302
    %v2323 = vpack.c.bf16 %v2305, %v2303
    %v2324 = vpack.c.bf16 %v2308, %v2306
    %v2325 = vpack.c.bf16 %v2309, %v2307
    %v2326 = vrot.slane %v2070, 6
    %v2327 = vrot.slane %v2071, 6
    %v2328 = vrot.slane %v2072, 6
    %v2329 = vrot.slane %v2073, 6
    %v2330 = vrot.slane %v2074, 6
    %v2331 = vrot.slane %v2075, 6
    %v2332 = vrot.slane %v2076, 6
    %v2333 = vrot.slane %v2077, 6
    %v2334 = vrot.slane %v2078, 6
    %v2335 = vrot.slane %v2079, 6
    %v2336 = vrot.slane %v2080, 6
    %v2337 = vrot.slane %v2081, 6
    %v2338 = vrot.slane %v2082, 6
    %v2339 = vrot.slane %v2083, 6
    %v2340 = vrot.slane %v2084, 6
    %v2341 = vrot.slane %v2085, 6
    %v2342 = vrot.slane %v2086, 6
    %v2343 = vrot.slane %v2087, 6
    %v2344 = vrot.slane %v2088, 6
    %v2345 = vrot.slane %v2089, 6
    %v2346 = vrot.slane %v2090, 6
    %v2347 = vrot.slane %v2091, 6
    %v2348 = vrot.slane %v2092, 6
    %v2349 = vrot.slane %v2093, 6
    %v2350 = vrot.slane %v2094, 6
    %v2351 = vrot.slane %v2095, 6
    %v2352 = vrot.slane %v2096, 6
    %v2353 = vrot.slane %v2097, 6
    %v2354 = vrot.slane %v2098, 6
    %v2355 = vrot.slane %v2099, 6
    %v2356 = vrot.slane %v2100, 6
    %v2357 = vrot.slane %v2101, 6
    %v2358 = vsel %vm695, %v2354, %v2356
    %v2359 = vsel %vm695, %v2355, %v2357
    %v2360 = vsel %vm695, %v2352, %v2354
    %v2361 = vsel %vm695, %v2353, %v2355
    %v2362 = vsel %vm695, %v2350, %v2352
    %v2363 = vsel %vm695, %v2351, %v2353
    %v2364 = vsel %vm695, %v2348, %v2350
    %v2365 = vsel %vm695, %v2349, %v2351
    %v2366 = vsel %vm695, %v2346, %v2348
    %v2367 = vsel %vm695, %v2347, %v2349
    %v2368 = vsel %vm695, %v2344, %v2346
    %v2369 = vsel %vm695, %v2345, %v2347
    %v2370 = vsel %vm695, %v2342, %v2344
    %v2371 = vsel %vm695, %v2343, %v2345
    %v2372 = vsel %vm695, %v2340, %v2342
    %v2373 = vsel %vm695, %v2341, %v2343
    %v2374 = vsel %vm695, %v2338, %v2340
    %v2375 = vsel %vm695, %v2339, %v2341
    %v2376 = vsel %vm695, %v2336, %v2338
    %v2377 = vsel %vm695, %v2337, %v2339
    %v2378 = vsel %vm695, %v2334, %v2336
    %v2379 = vsel %vm695, %v2335, %v2337
    %v2380 = vsel %vm695, %v2332, %v2334
    %v2381 = vsel %vm695, %v2333, %v2335
    %v2382 = vsel %vm695, %v2330, %v2332
    %v2383 = vsel %vm695, %v2331, %v2333
    %v2384 = vsel %vm695, %v2328, %v2330
    %v2385 = vsel %vm695, %v2329, %v2331
    %v2386 = vsel %vm695, %v2326, %v2328
    %v2387 = vsel %vm695, %v2327, %v2329
    %v2388 = vsel %vm695, %v2356, %v2326
    %v2389 = vsel %vm695, %v2357, %v2327
    %v2390 = vsel %vm792, %v2388, 0.0
    %v2391 = vsel %vm792, %v2389, 0.0
    %v2392 = vsel %vm793, %v2386, 0.0
    %v2393 = vsel %vm793, %v2387, 0.0
    %v2394 = vsel %vm794, %v2384, 0.0
    %v2395 = vsel %vm794, %v2385, 0.0
    %v2396 = vsel %vm795, %v2382, 0.0
    %v2397 = vsel %vm795, %v2383, 0.0
    %v2398 = vsel %vm796, %v2380, 0.0
    %v2399 = vsel %vm796, %v2381, 0.0
    %v2400 = vsel %vm797, %v2378, 0.0
    %v2401 = vsel %vm797, %v2379, 0.0
    %v2402 = vsel %vm798, %v2376, 0.0
    %v2403 = vsel %vm798, %v2377, 0.0
    %v2404 = vsel %vm799, %v2374, 0.0
    %v2405 = vsel %vm799, %v2375, 0.0
    %v2406 = vsel %vm800, %v2372, 0.0
    %v2407 = vsel %vm800, %v2373, 0.0
    %v2408 = vsel %vm801, %v2370, 0.0
    %v2409 = vsel %vm801, %v2371, 0.0
    %v2410 = vsel %vm802, %v2368, 0.0
    %v2411 = vsel %vm802, %v2369, 0.0
    %v2412 = vsel %vm803, %v2366, 0.0
    %v2413 = vsel %vm803, %v2367, 0.0
    %v2414 = vsel %vm804, %v2364, 0.0
    %v2415 = vsel %vm804, %v2365, 0.0
    %v2416 = vsel %vm805, %v2362, 0.0
    %v2417 = vsel %vm805, %v2363, 0.0
    %v2418 = vsel %vm806, %v2360, 0.0
    %v2419 = vsel %vm806, %v2361, 0.0
    %v2420 = vsel %vm807, %v2358, 0.0
    %v2421 = vsel %vm807, %v2359, 0.0
    %v2422 = vpack.c.bf16 %v2392, %v2390
    %v2423 = vpack.c.bf16 %v2393, %v2391
    %v2424 = vpack.c.bf16 %v2396, %v2394
    %v2425 = vpack.c.bf16 %v2397, %v2395
    %v2426 = vpack.c.bf16 %v2400, %v2398
    %v2427 = vpack.c.bf16 %v2401, %v2399
    %v2428 = vpack.c.bf16 %v2404, %v2402
    %v2429 = vpack.c.bf16 %v2405, %v2403
    %v2430 = vpack.c.bf16 %v2408, %v2406
    %v2431 = vpack.c.bf16 %v2409, %v2407
    %v2432 = vpack.c.bf16 %v2412, %v2410
    %v2433 = vpack.c.bf16 %v2413, %v2411
    %v2434 = vpack.c.bf16 %v2416, %v2414
    %v2435 = vpack.c.bf16 %v2417, %v2415
    %v2436 = vpack.c.bf16 %v2420, %v2418
    %v2437 = vpack.c.bf16 %v2421, %v2419
    %v2438 = vrot.slane %v2070, 7
    %v2439 = vrot.slane %v2071, 7
    %v2440 = vrot.slane %v2072, 7
    %v2441 = vrot.slane %v2073, 7
    %v2442 = vrot.slane %v2074, 7
    %v2443 = vrot.slane %v2075, 7
    %v2444 = vrot.slane %v2076, 7
    %v2445 = vrot.slane %v2077, 7
    %v2446 = vrot.slane %v2078, 7
    %v2447 = vrot.slane %v2079, 7
    %v2448 = vrot.slane %v2080, 7
    %v2449 = vrot.slane %v2081, 7
    %v2450 = vrot.slane %v2082, 7
    %v2451 = vrot.slane %v2083, 7
    %v2452 = vrot.slane %v2084, 7
    %v2453 = vrot.slane %v2085, 7
    %v2454 = vrot.slane %v2086, 7
    %v2455 = vrot.slane %v2087, 7
    %v2456 = vrot.slane %v2088, 7
    %v2457 = vrot.slane %v2089, 7
    %v2458 = vrot.slane %v2090, 7
    %v2459 = vrot.slane %v2091, 7
    %v2460 = vrot.slane %v2092, 7
    %v2461 = vrot.slane %v2093, 7
    %v2462 = vrot.slane %v2094, 7
    %v2463 = vrot.slane %v2095, 7
    %v2464 = vrot.slane %v2096, 7
    %v2465 = vrot.slane %v2097, 7
    %v2466 = vrot.slane %v2098, 7
    %v2467 = vrot.slane %v2099, 7
    %v2468 = vrot.slane %v2100, 7
    %v2469 = vrot.slane %v2101, 7
    %v2470 = vsel %vm848, %v2466, %v2468
    %v2471 = vsel %vm848, %v2467, %v2469
    %v2472 = vsel %vm848, %v2464, %v2466
    %v2473 = vsel %vm848, %v2465, %v2467
    %v2474 = vsel %vm848, %v2462, %v2464
    %v2475 = vsel %vm848, %v2463, %v2465
    %v2476 = vsel %vm848, %v2460, %v2462
    %v2477 = vsel %vm848, %v2461, %v2463
    %v2478 = vsel %vm848, %v2458, %v2460
    %v2479 = vsel %vm848, %v2459, %v2461
    %v2480 = vsel %vm848, %v2456, %v2458
    %v2481 = vsel %vm848, %v2457, %v2459
    %v2482 = vsel %vm848, %v2454, %v2456
    %v2483 = vsel %vm848, %v2455, %v2457
    %v2484 = vsel %vm848, %v2452, %v2454
    %v2485 = vsel %vm848, %v2453, %v2455
    %v2486 = vsel %vm848, %v2450, %v2452
    %v2487 = vsel %vm848, %v2451, %v2453
    %v2488 = vsel %vm848, %v2448, %v2450
    %v2489 = vsel %vm848, %v2449, %v2451
    %v2490 = vsel %vm848, %v2446, %v2448
    %v2491 = vsel %vm848, %v2447, %v2449
    %v2492 = vsel %vm848, %v2444, %v2446
    %v2493 = vsel %vm848, %v2445, %v2447
    %v2494 = vsel %vm848, %v2442, %v2444
    %v2495 = vsel %vm848, %v2443, %v2445
    %v2496 = vsel %vm848, %v2440, %v2442
    %v2497 = vsel %vm848, %v2441, %v2443
    %v2498 = vsel %vm848, %v2438, %v2440
    %v2499 = vsel %vm848, %v2439, %v2441
    %v2500 = vsel %vm848, %v2468, %v2438
    %v2501 = vsel %vm848, %v2469, %v2439
    %v2502 = vsel %vm945, %v2500, 0.0
    %v2503 = vsel %vm945, %v2501, 0.0
    %v2504 = vsel %vm946, %v2498, 0.0
    %v2505 = vsel %vm946, %v2499, 0.0
    %v2506 = vsel %vm947, %v2496, 0.0
    %v2507 = vsel %vm947, %v2497, 0.0
    %v2508 = vsel %vm948, %v2494, 0.0
    %v2509 = vsel %vm948, %v2495, 0.0
    %v2510 = vsel %vm949, %v2492, 0.0
    %v2511 = vsel %vm949, %v2493, 0.0
    %v2512 = vsel %vm950, %v2490, 0.0
    %v2513 = vsel %vm950, %v2491, 0.0
    %v2514 = vsel %vm951, %v2488, 0.0
    %v2515 = vsel %vm951, %v2489, 0.0
    %v2516 = vsel %vm952, %v2486, 0.0
    %v2517 = vsel %vm952, %v2487, 0.0
    %v2518 = vsel %vm953, %v2484, 0.0
    %v2519 = vsel %vm953, %v2485, 0.0
    %v2520 = vsel %vm954, %v2482, 0.0
    %v2521 = vsel %vm954, %v2483, 0.0
    %v2522 = vsel %vm955, %v2480, 0.0
    %v2523 = vsel %vm955, %v2481, 0.0
    %v2524 = vsel %vm956, %v2478, 0.0
    %v2525 = vsel %vm956, %v2479, 0.0
    %v2526 = vsel %vm957, %v2476, 0.0
    %v2527 = vsel %vm957, %v2477, 0.0
    %v2528 = vsel %vm958, %v2474, 0.0
    %v2529 = vsel %vm958, %v2475, 0.0
    %v2530 = vsel %vm959, %v2472, 0.0
    %v2531 = vsel %vm959, %v2473, 0.0
    %v2532 = vsel %vm960, %v2470, 0.0
    %v2533 = vsel %vm960, %v2471, 0.0
    %v2534 = vpack.c.bf16 %v2504, %v2502
    %v2535 = vpack.c.bf16 %v2505, %v2503
    %v2536 = vpack.c.bf16 %v2508, %v2506
    %v2537 = vpack.c.bf16 %v2509, %v2507
    %v2538 = vpack.c.bf16 %v2512, %v2510
    %v2539 = vpack.c.bf16 %v2513, %v2511
    %v2540 = vpack.c.bf16 %v2516, %v2514
    %v2541 = vpack.c.bf16 %v2517, %v2515
    %v2542 = vpack.c.bf16 %v2520, %v2518
    %v2543 = vpack.c.bf16 %v2521, %v2519
    %v2544 = vpack.c.bf16 %v2524, %v2522
    %v2545 = vpack.c.bf16 %v2525, %v2523
    %v2546 = vpack.c.bf16 %v2528, %v2526
    %v2547 = vpack.c.bf16 %v2529, %v2527
    %v2548 = vpack.c.bf16 %v2532, %v2530
    %v2549 = vpack.c.bf16 %v2533, %v2531
    %v2550 = vpack.c.bf16 %v2072, %v2070
    %v2551 = vpack.c.bf16 %v2073, %v2071
    %v2552 = vpack.c.bf16 %v2076, %v2074
    %v2553 = vpack.c.bf16 %v2077, %v2075
    %v2554 = vpack.c.bf16 %v2080, %v2078
    %v2555 = vpack.c.bf16 %v2081, %v2079
    %v2556 = vpack.c.bf16 %v2084, %v2082
    %v2557 = vpack.c.bf16 %v2085, %v2083
    %v2558 = vpack.c.bf16 %v2088, %v2086
    %v2559 = vpack.c.bf16 %v2089, %v2087
    %v2560 = vpack.c.bf16 %v2092, %v2090
    %v2561 = vpack.c.bf16 %v2093, %v2091
    %v2562 = vpack.c.bf16 %v2096, %v2094
    %v2563 = vpack.c.bf16 %v2097, %v2095
    %v2564 = vpack.c.bf16 %v2100, %v2098
    %v2565 = vpack.c.bf16 %v2101, %v2099
    %v2566 = vld [vmem:[#allocation6] sm:$0xf]
    %v2567 = vld [vmem:[#allocation6 + $0x4] sm:$0xf]
    %v2568 = vld [vmem:[#allocation6 + $0x8] sm:$0xf]
    %v2569 = vld [vmem:[#allocation6 + $0xc] sm:$0xf]
    %v2570 = vld [vmem:[#allocation6 + $0x10] sm:$0xf]
    %v2571 = vld [vmem:[#allocation6 + $0x14] sm:$0xf]
    %v2572 = vld [vmem:[#allocation6 + $0x18] sm:$0xf]
    %v2573 = vld [vmem:[#allocation6 + $0x1c] sm:$0xf]
    %v2574 = vld [vmem:[#allocation6 + $0x20] sm:$0xf]
    %v2575 = vld [vmem:[#allocation6 + $0x24] sm:$0xf]
    %v2576 = vld [vmem:[#allocation6 + $0x28] sm:$0xf]
    %v2577 = vld [vmem:[#allocation6 + $0x2c] sm:$0xf]
    %v2578 = vld [vmem:[#allocation6 + $0x30] sm:$0xf]
    %v2579 = vld [vmem:[#allocation6 + $0x34] sm:$0xf]
    %v2580 = vld [vmem:[#allocation6 + $0x38] sm:$0xf]
    %v2581 = vld [vmem:[#allocation6 + $0x3c] sm:$0xf]
    %v2582 = vld [vmem:[#allocation6 + $0x40] sm:$0xf]
    %v2583 = vld [vmem:[#allocation6 + $0x44] sm:$0xf]
    %v2584 = vld [vmem:[#allocation6 + $0x48] sm:$0xf]
    %v2585 = vld [vmem:[#allocation6 + $0x4c] sm:$0xf]
    %v2586 = vld [vmem:[#allocation6 + $0x50] sm:$0xf]
    %v2587 = vld [vmem:[#allocation6 + $0x54] sm:$0xf]
    %v2588 = vld [vmem:[#allocation6 + $0x58] sm:$0xf]
    %v2589 = vld [vmem:[#allocation6 + $0x5c] sm:$0xf]
    %v2590 = vld [vmem:[#allocation6 + $0x60] sm:$0xf]
    %v2591 = vld [vmem:[#allocation6 + $0x64] sm:$0xf]
    %v2592 = vld [vmem:[#allocation6 + $0x68] sm:$0xf]
    %v2593 = vld [vmem:[#allocation6 + $0x6c] sm:$0xf]
    %v2594 = vld [vmem:[#allocation6 + $0x70] sm:$0xf]
    %v2595 = vld [vmem:[#allocation6 + $0x74] sm:$0xf]
    %v2596 = vld [vmem:[#allocation6 + $0x78] sm:$0xf]
    %v2597 = vld [vmem:[#allocation6 + $0x7c] sm:$0xf]
    %v2598 = vld [vmem:[#allocation6 + $0x80] sm:$0xf]
    %v2599 = vld [vmem:[#allocation6 + $0x84] sm:$0xf]
    %v2600 = vld [vmem:[#allocation6 + $0x88] sm:$0xf]
    %v2601 = vld [vmem:[#allocation6 + $0x8c] sm:$0xf]
    %v2602 = vld [vmem:[#allocation6 + $0x90] sm:$0xf]
    %v2603 = vld [vmem:[#allocation6 + $0x94] sm:$0xf]
    %v2604 = vld [vmem:[#allocation6 + $0x98] sm:$0xf]
    %v2605 = vld [vmem:[#allocation6 + $0x9c] sm:$0xf]
    %v2606 = vld [vmem:[#allocation6 + $0xa0] sm:$0xf]
    %v2607 = vld [vmem:[#allocation6 + $0xa4] sm:$0xf]
    %v2608 = vld [vmem:[#allocation6 + $0xa8] sm:$0xf]
    %v2609 = vld [vmem:[#allocation6 + $0xac] sm:$0xf]
    %v2610 = vld [vmem:[#allocation6 + $0xb0] sm:$0xf]
    %v2611 = vld [vmem:[#allocation6 + $0xb4] sm:$0xf]
    %v2612 = vld [vmem:[#allocation6 + $0xb8] sm:$0xf]
    %v2613 = vld [vmem:[#allocation6 + $0xbc] sm:$0xf]
    %v2614 = vld [vmem:[#allocation6 + $0xc0] sm:$0xf]
    %v2615 = vld [vmem:[#allocation6 + $0xc4] sm:$0xf]
    %v2616 = vld [vmem:[#allocation6 + $0xc8] sm:$0xf]
    %v2617 = vld [vmem:[#allocation6 + $0xcc] sm:$0xf]
    %v2618 = vld [vmem:[#allocation6 + $0xd0] sm:$0xf]
    %v2619 = vld [vmem:[#allocation6 + $0xd4] sm:$0xf]
    %v2620 = vld [vmem:[#allocation6 + $0xd8] sm:$0xf]
    %v2621 = vld [vmem:[#allocation6 + $0xdc] sm:$0xf]
    %v2622 = vld [vmem:[#allocation6 + $0xe0] sm:$0xf]
    %v2623 = vld [vmem:[#allocation6 + $0xe4] sm:$0xf]
    %v2624 = vld [vmem:[#allocation6 + $0xe8] sm:$0xf]
    %v2625 = vld [vmem:[#allocation6 + $0xec] sm:$0xf]
    %v2626 = vld [vmem:[#allocation6 + $0xf0] sm:$0xf]
    %v2627 = vld [vmem:[#allocation6 + $0xf4] sm:$0xf]
    %v2628 = vld [vmem:[#allocation6 + $0xf8] sm:$0xf]
    %v2629 = vld [vmem:[#allocation6 + $0xfc] sm:$0xf]
    %v2630 = vld [vmem:[#allocation6 + $0x100] sm:$0xf]
    %v2631 = vld [vmem:[#allocation6 + $0x104] sm:$0xf]
    %v2632 = vld [vmem:[#allocation6 + $0x108] sm:$0xf]
    %v2633 = vld [vmem:[#allocation6 + $0x10c] sm:$0xf]
    %v2634 = vld [vmem:[#allocation6 + $0x110] sm:$0xf]
    %v2635 = vld [vmem:[#allocation6 + $0x114] sm:$0xf]
    %v2636 = vld [vmem:[#allocation6 + $0x118] sm:$0xf]
    %v2637 = vld [vmem:[#allocation6 + $0x11c] sm:$0xf]
    %v2638 = vld [vmem:[#allocation6 + $0x120] sm:$0xf]
    %v2639 = vld [vmem:[#allocation6 + $0x124] sm:$0xf]
    %v2640 = vld [vmem:[#allocation6 + $0x128] sm:$0xf]
    %v2641 = vld [vmem:[#allocation6 + $0x12c] sm:$0xf]
    %v2642 = vld [vmem:[#allocation6 + $0x130] sm:$0xf]
    %v2643 = vld [vmem:[#allocation6 + $0x134] sm:$0xf]
    %v2644 = vld [vmem:[#allocation6 + $0x138] sm:$0xf]
    %v2645 = vld [vmem:[#allocation6 + $0x13c] sm:$0xf]
    %v2646 = vld [vmem:[#allocation6 + $0x140] sm:$0xf]
    %v2647 = vld [vmem:[#allocation6 + $0x144] sm:$0xf]
    %v2648 = vld [vmem:[#allocation6 + $0x148] sm:$0xf]
    %v2649 = vld [vmem:[#allocation6 + $0x14c] sm:$0xf]
    %v2650 = vld [vmem:[#allocation6 + $0x150] sm:$0xf]
    %v2651 = vld [vmem:[#allocation6 + $0x154] sm:$0xf]
    %v2652 = vld [vmem:[#allocation6 + $0x158] sm:$0xf]
    %v2653 = vld [vmem:[#allocation6 + $0x15c] sm:$0xf]
    %v2654 = vld [vmem:[#allocation6 + $0x160] sm:$0xf]
    %v2655 = vld [vmem:[#allocation6 + $0x164] sm:$0xf]
    %v2656 = vld [vmem:[#allocation6 + $0x168] sm:$0xf]
    %v2657 = vld [vmem:[#allocation6 + $0x16c] sm:$0xf]
    %v2658 = vld [vmem:[#allocation6 + $0x170] sm:$0xf]
    %v2659 = vld [vmem:[#allocation6 + $0x174] sm:$0xf]
    %v2660 = vld [vmem:[#allocation6 + $0x178] sm:$0xf]
    %v2661 = vld [vmem:[#allocation6 + $0x17c] sm:$0xf]
    %v2758 = vunpack.c.l.b16 %v2566
    %v2759 = vunpack.c.l.b16 %v2567
    %v2760 = vunpack.c.l.b16 %v2568
    %v2761 = vunpack.c.l.b16 %v2569
    %v2762 = vunpack.c.l.b16 %v2570
    %v2763 = vunpack.c.l.b16 %v2571
    %v2764 = vunpack.c.l.b16 %v2572
    %v2765 = vunpack.c.l.b16 %v2573
    %v2766 = vunpack.c.l.b16 %v2574
    %v2767 = vunpack.c.l.b16 %v2575
    %v2768 = vunpack.c.l.b16 %v2576
    %v2769 = vunpack.c.l.b16 %v2577
    %v2770 = vunpack.c.l.b16 %v2578
    %v2771 = vunpack.c.l.b16 %v2579
    %v2772 = vunpack.c.l.b16 %v2580
    %v2773 = vunpack.c.l.b16 %v2581
    %v2774 = vunpack.c.l.b16 %v2582
    %v2775 = vunpack.c.l.b16 %v2583
    %v2776 = vunpack.c.l.b16 %v2584
    %v2777 = vunpack.c.l.b16 %v2585
    %v2778 = vunpack.c.l.b16 %v2586
    %v2779 = vunpack.c.l.b16 %v2587
    %v2780 = vunpack.c.l.b16 %v2588
    %v2781 = vunpack.c.l.b16 %v2589
    %v2782 = vunpack.c.l.b16 %v2590
    %v2783 = vunpack.c.l.b16 %v2591
    %v2784 = vunpack.c.l.b16 %v2592
    %v2785 = vunpack.c.l.b16 %v2593
    %v2786 = vunpack.c.l.b16 %v2594
    %v2787 = vunpack.c.l.b16 %v2595
    %v2788 = vunpack.c.l.b16 %v2596
    %v2789 = vunpack.c.l.b16 %v2597
    %v2790 = vunpack.c.l.b16 %v2598
    %v2791 = vunpack.c.l.b16 %v2599
    %v2792 = vunpack.c.l.b16 %v2600
    %v2793 = vunpack.c.l.b16 %v2601
    %v2794 = vunpack.c.l.b16 %v2602
    %v2795 = vunpack.c.l.b16 %v2603
    %v2796 = vunpack.c.l.b16 %v2604
    %v2797 = vunpack.c.l.b16 %v2605
    %v2798 = vunpack.c.l.b16 %v2606
    %v2799 = vunpack.c.l.b16 %v2607
    %v2800 = vunpack.c.l.b16 %v2608
    %v2801 = vunpack.c.l.b16 %v2609
    %v2802 = vunpack.c.l.b16 %v2610
    %v2803 = vunpack.c.l.b16 %v2611
    %v2804 = vunpack.c.l.b16 %v2612
    %v2805 = vunpack.c.l.b16 %v2613
    %v2806 = vunpack.c.l.b16 %v2614
    %v2807 = vunpack.c.l.b16 %v2615
    %v2808 = vunpack.c.l.b16 %v2616
    %v2809 = vunpack.c.l.b16 %v2617
    %v2810 = vunpack.c.l.b16 %v2618
    %v2811 = vunpack.c.l.b16 %v2619
    %v2812 = vunpack.c.l.b16 %v2620
    %v2813 = vunpack.c.l.b16 %v2621
    %v2814 = vunpack.c.l.b16 %v2622
    %v2815 = vunpack.c.l.b16 %v2623
    %v2816 = vunpack.c.l.b16 %v2624
    %v2817 = vunpack.c.l.b16 %v2625
    %v2818 = vunpack.c.l.b16 %v2626
    %v2819 = vunpack.c.l.b16 %v2627
    %v2820 = vunpack.c.l.b16 %v2628
    %v2821 = vunpack.c.l.b16 %v2629
    %v2822 = vunpack.c.l.b16 %v2630
    %v2823 = vunpack.c.l.b16 %v2631
    %v2824 = vunpack.c.l.b16 %v2632
    %v2825 = vunpack.c.l.b16 %v2633
    %v2826 = vunpack.c.l.b16 %v2634
    %v2827 = vunpack.c.l.b16 %v2635
    %v2828 = vunpack.c.l.b16 %v2636
    %v2829 = vunpack.c.l.b16 %v2637
    %v2830 = vunpack.c.l.b16 %v2638
    %v2831 = vunpack.c.l.b16 %v2639
    %v2832 = vunpack.c.l.b16 %v2640
    %v2833 = vunpack.c.l.b16 %v2641
    %v2834 = vunpack.c.l.b16 %v2642
    %v2835 = vunpack.c.l.b16 %v2643
    %v2836 = vunpack.c.l.b16 %v2644
    %v2837 = vunpack.c.l.b16 %v2645
    %v2838 = vunpack.c.l.b16 %v2646
    %v2839 = vunpack.c.l.b16 %v2647
    %v2840 = vunpack.c.l.b16 %v2648
    %v2841 = vunpack.c.l.b16 %v2649
    %v2842 = vunpack.c.l.b16 %v2650
    %v2843 = vunpack.c.l.b16 %v2651
    %v2844 = vunpack.c.l.b16 %v2652
    %v2845 = vunpack.c.l.b16 %v2653
    %v2846 = vunpack.c.l.b16 %v2654
    %v2847 = vunpack.c.l.b16 %v2655
    %v2848 = vunpack.c.l.b16 %v2656
    %v2849 = vunpack.c.l.b16 %v2657
    %v2850 = vunpack.c.l.b16 %v2658
    %v2851 = vunpack.c.l.b16 %v2659
    %v2852 = vunpack.c.l.b16 %v2660
    %v2853 = vunpack.c.l.b16 %v2661
    %v2854 = vpack.c.b16 %v2759, %v2758
    %v2855 = vpack.c.b16 %v2761, %v2760
    %v2856 = vpack.c.b16 %v2763, %v2762
    %v2857 = vpack.c.b16 %v2765, %v2764
    %v2858 = vpack.c.b16 %v2767, %v2766
    %v2859 = vpack.c.b16 %v2769, %v2768
    %v2860 = vpack.c.b16 %v2771, %v2770
    %v2861 = vpack.c.b16 %v2773, %v2772
    %v2862 = vpack.c.b16 %v2775, %v2774
    %v2863 = vpack.c.b16 %v2777, %v2776
    %v2864 = vpack.c.b16 %v2779, %v2778
    %v2865 = vpack.c.b16 %v2781, %v2780
    %v2866 = vpack.c.b16 %v2783, %v2782
    %v2867 = vpack.c.b16 %v2785, %v2784
    %v2868 = vpack.c.b16 %v2787, %v2786
    %v2869 = vpack.c.b16 %v2789, %v2788
    %v2870 = vpack.c.b16 %v2791, %v2790
    %v2871 = vpack.c.b16 %v2793, %v2792
    %v2872 = vpack.c.b16 %v2795, %v2794
    %v2873 = vpack.c.b16 %v2797, %v2796
    %v2874 = vpack.c.b16 %v2799, %v2798
    %v2875 = vpack.c.b16 %v2801, %v2800
    %v2876 = vpack.c.b16 %v2803, %v2802
    %v2877 = vpack.c.b16 %v2805, %v2804
    %v2878 = vpack.c.b16 %v2807, %v2806
    %v2879 = vpack.c.b16 %v2809, %v2808
    %v2880 = vpack.c.b16 %v2811, %v2810
    %v2881 = vpack.c.b16 %v2813, %v2812
    %v2882 = vpack.c.b16 %v2815, %v2814
    %v2883 = vpack.c.b16 %v2817, %v2816
    %v2884 = vpack.c.b16 %v2819, %v2818
    %v2885 = vpack.c.b16 %v2821, %v2820
    %v2886 = vpack.c.b16 %v2823, %v2822
    %v2887 = vpack.c.b16 %v2825, %v2824
    %v2888 = vpack.c.b16 %v2827, %v2826
    %v2889 = vpack.c.b16 %v2829, %v2828
    %v2890 = vpack.c.b16 %v2831, %v2830
    %v2891 = vpack.c.b16 %v2833, %v2832
    %v2892 = vpack.c.b16 %v2835, %v2834
    %v2893 = vpack.c.b16 %v2837, %v2836
    %v2894 = vpack.c.b16 %v2839, %v2838
    %v2895 = vpack.c.b16 %v2841, %v2840
    %v2896 = vpack.c.b16 %v2843, %v2842
    %v2897 = vpack.c.b16 %v2845, %v2844
    %v2898 = vpack.c.b16 %v2847, %v2846
    %v2899 = vpack.c.b16 %v2849, %v2848
    %v2900 = vpack.c.b16 %v2851, %v2850
    %v2901 = vpack.c.b16 %v2853, %v2852
    %2950 = vmatprep.subr.bf16.mxu0 0
    %2951 = vmatpush1.bf16.msra.mxu0 %v2854
    %2952 = vmatprep.subr.bf16.mxu0 0
    %2953 = vmatpush1.bf16.msra.mxu0 %v2855
    %2954 = vmatprep.subr.bf16.mxu0 0
    %2955 = vmatpush1.bf16.msra.mxu0 %v2856
    %2956 = vmatprep.subr.bf16.mxu0 0
    %2957 = vmatpush1.bf16.msra.mxu0 %v2857
    %2958 = vmatprep.subr.bf16.mxu0 0
    %2959 = vmatpush1.bf16.msra.mxu0 %v2858
    %2960 = vmatprep.subr.bf16.mxu0 0
    %2961 = vmatpush1.bf16.msra.mxu0 %v2859
    %2962 = vmatprep.subr.bf16.mxu0 0
    %2963 = vmatpush1.bf16.msra.mxu0 %v2860
    %2964 = vmatprep.subr.bf16.mxu0 0
    %2965 = vmatpush1.bf16.msra.mxu0 %v2861
    %2966 = vmatprep.subr.bf16.mxu0 0
    %2967 = vmatpush1.bf16.msra.mxu0 %v2862
    %2968 = vmatprep.subr.bf16.mxu0 0
    %2969 = vmatpush1.bf16.msra.mxu0 %v2863
    %2970 = vmatprep.subr.bf16.mxu0 0
    %2971 = vmatpush1.bf16.msra.mxu0 %v2864
    %2972 = vmatprep.subr.bf16.mxu0 0
    %2973 = vmatpush1.bf16.msra.mxu0 %v2865
    %2974 = vmatprep.subr.bf16.mxu0 0
    %2975 = vmatpush1.bf16.msra.mxu0 %v2866
    %2976 = vmatprep.subr.bf16.mxu0 0
    %2977 = vmatpush1.bf16.msra.mxu0 %v2867
    %2978 = vmatprep.subr.bf16.mxu0 0
    %2979 = vmatpush1.bf16.msra.mxu0 %v2868
    %2980 = vmatprep.subr.bf16.mxu0 0
    %2981 = vmatpush1.bf16.msra.mxu0 %v2869
    %2982 = vmatprep.mubr.bf16.mxu0 %v2423
    %2983 = vmatmul.mubr.bf16.gmra.mrb[0].mxu0 %v2422
    %v2984 = vpop.f32.mrb[0].mxu0
    %v2985 = vadd.f32 0.0, %v2984
    %v2986 = vpop.f32.mrb[0].mxu0
    %v2987 = vpop.f32.mrb[0].mxu0
    %v2988 = vadd.f32 0.0, %v2987
    %v2989 = vpop.f32.mrb[0].mxu0
    %2990 = vmatprep.mubr.bf16.mxu0 %v2425
    %2991 = vmatmul.mubr.bf16.gmra.mrb[0].mxu0 %v2424
    %v2992 = vpop.f32.mrb[0].mxu0
    %v2993 = vadd.f32 0.0, %v2992
    %v2994 = vpop.f32.mrb[0].mxu0
    %v2995 = vpop.f32.mrb[0].mxu0
    %v2996 = vadd.f32 0.0, %v2995
    %v2997 = vpop.f32.mrb[0].mxu0
    %2998 = vmatprep.mubr.bf16.mxu0 %v2427
    %2999 = vmatmul.mubr.bf16.gmra.mrb[0].mxu0 %v2426
    %v3000 = vpop.f32.mrb[0].mxu0
    %v3001 = vadd.f32 0.0, %v3000
    %v3002 = vpop.f32.mrb[0].mxu0
    %v3003 = vpop.f32.mrb[0].mxu0
    %v3004 = vadd.f32 0.0, %v3003
    %v3005 = vpop.f32.mrb[0].mxu0
    %3006 = vmatprep.mubr.bf16.mxu0 %v2429
    %3007 = vmatmul.mubr.bf16.gmra.mrb[0].mxu0 %v2428
    %v3008 = vpop.f32.mrb[0].mxu0
    %v3009 = vadd.f32 0.0, %v3008
    %v3010 = vpop.f32.mrb[0].mxu0
    %v3011 = vpop.f32.mrb[0].mxu0
    %v3012 = vadd.f32 0.0, %v3011
    %v3013 = vpop.f32.mrb[0].mxu0
    %3014 = vmatprep.mubr.bf16.mxu0 %v2431
    %3015 = vmatmul.mubr.bf16.gmra.mrb[0].mxu0 %v2430
    %v3016 = vpop.f32.mrb[0].mxu0
    %v3017 = vadd.f32 0.0, %v3016
    %v3018 = vpop.f32.mrb[0].mxu0
    %v3019 = vpop.f32.mrb[0].mxu0
    %v3020 = vadd.f32 0.0, %v3019
    %v3021 = vpop.f32.mrb[0].mxu0
    %3022 = vmatprep.mubr.bf16.mxu0 %v2433
    %3023 = vmatmul.mubr.bf16.gmra.mrb[0].mxu0 %v2432
    %v3024 = vpop.f32.mrb[0].mxu0
    %v3025 = vadd.f32 0.0, %v3024
    %v3026 = vpop.f32.mrb[0].mxu0
    %v3027 = vpop.f32.mrb[0].mxu0
    %v3028 = vadd.f32 0.0, %v3027
    %v3029 = vpop.f32.mrb[0].mxu0
    %3030 = vmatprep.mubr.bf16.mxu0 %v2435
    %3031 = vmatmul.mubr.bf16.gmra.mrb[0].mxu0 %v2434
    %v3032 = vpop.f32.mrb[0].mxu0
    %v3033 = vadd.f32 0.0, %v3032
    %v3034 = vpop.f32.mrb[0].mxu0
    %v3035 = vpop.f32.mrb[0].mxu0
    %v3036 = vadd.f32 0.0, %v3035
    %v3037 = vpop.f32.mrb[0].mxu0
    %3038 = vmatprep.mubr.bf16.mxu0 %v2437
    %3039 = vmatmul.mubr.bf16.gmra.mrb[0].mxu0 %v2436
    %v3040 = vpop.f32.mrb[0].mxu0
    %v3041 = vadd.f32 0.0, %v3040
    %v3042 = vpop.f32.mrb[0].mxu0
    %v3043 = vpop.f32.mrb[0].mxu0
    %v3044 = vadd.f32 0.0, %v3043
    %v3045 = vpop.f32.mrb[0].mxu0
    %3046 = vdwg.mxu0
    %3047 = vmatprep.subr.bf16.mxu0 0
    %3048 = vmatpush1.bf16.msra.mxu0 %v2870
    %3049 = vmatprep.subr.bf16.mxu0 0
    %3050 = vmatpush1.bf16.msra.mxu0 %v2871
    %3051 = vmatprep.subr.bf16.mxu0 0
    %3052 = vmatpush1.bf16.msra.mxu0 %v2872
    %3053 = vmatprep.subr.bf16.mxu0 0
    %3054 = vmatpush1.bf16.msra.mxu0 %v2873
    %3055 = vmatprep.subr.bf16.mxu0 0
    %3056 = vmatpush1.bf16.msra.mxu0 %v2874
    %3057 = vmatprep.subr.bf16.mxu0 0
    %3058 = vmatpush1.bf16.msra.mxu0 %v2875
    %3059 = vmatprep.subr.bf16.mxu0 0
    %3060 = vmatpush1.bf16.msra.mxu0 %v2876
    %3061 = vmatprep.subr.bf16.mxu0 0
    %3062 = vmatpush1.bf16.msra.mxu0 %v2877
    %3063 = vmatprep.subr.bf16.mxu0 0
    %3064 = vmatpush1.bf16.msra.mxu0 %v2878
    %3065 = vmatprep.subr.bf16.mxu0 0
    %3066 = vmatpush1.bf16.msra.mxu0 %v2879
    %3067 = vmatprep.subr.bf16.mxu0 0
    %3068 = vmatpush1.bf16.msra.mxu0 %v2880
    %3069 = vmatprep.subr.bf16.mxu0 0
    %3070 = vmatpush1.bf16.msra.mxu0 %v2881
    %3071 = vmatprep.subr.bf16.mxu0 0
    %3072 = vmatpush1.bf16.msra.mxu0 %v2882
    %3073 = vmatprep.subr.bf16.mxu0 0
    %3074 = vmatpush1.bf16.msra.mxu0 %v2883
    %3075 = vmatprep.subr.bf16.mxu0 0
    %3076 = vmatpush1.bf16.msra.mxu0 %v2884
    %3077 = vmatprep.subr.bf16.mxu0 0
    %3078 = vmatpush1.bf16.msra.mxu0 %v2885
    %3079 = vmatprep.mubr.bf16.mxu0 %v2535
    %3080 = vmatmul.mubr.bf16.gmra.mrb[0].mxu0 %v2534
    %v3081 = vpop.f32.mrb[0].mxu0
    %v3082 = vadd.f32 %v2985, %v3081
    %v3083 = vpop.f32.mrb[0].mxu0
    %v3084 = vpop.f32.mrb[0].mxu0
    %v3085 = vadd.f32 %v2988, %v3084
    %v3086 = vpop.f32.mrb[0].mxu0
    %3087 = vmatprep.mubr.bf16.mxu0 %v2537
    %3088 = vmatmul.mubr.bf16.gmra.mrb[0].mxu0 %v2536
    %v3089 = vpop.f32.mrb[0].mxu0
    %v3090 = vadd.f32 %v2993, %v3089
    %v3091 = vpop.f32.mrb[0].mxu0
    %v3092 = vpop.f32.mrb[0].mxu0
    %v3093 = vadd.f32 %v2996, %v3092
    %v3094 = vpop.f32.mrb[0].mxu0
    %3095 = vmatprep.mubr.bf16.mxu0 %v2539
    %3096 = vmatmul.mubr.bf16.gmra.mrb[0].mxu0 %v2538
    %v3097 = vpop.f32.mrb[0].mxu0
    %v3098 = vadd.f32 %v3001, %v3097
    %v3099 = vpop.f32.mrb[0].mxu0
    %v3100 = vpop.f32.mrb[0].mxu0
    %v3101 = vadd.f32 %v3004, %v3100
    %v3102 = vpop.f32.mrb[0].mxu0
    %3103 = vmatprep.mubr.bf16.mxu0 %v2541
    %3104 = vmatmul.mubr.bf16.gmra.mrb[0].mxu0 %v2540
    %v3105 = vpop.f32.mrb[0].mxu0
    %v3106 = vadd.f32 %v3009, %v3105
    %v3107 = vpop.f32.mrb[0].mxu0
    %v3108 = vpop.f32.mrb[0].mxu0
    %v3109 = vadd.f32 %v3012, %v3108
    %v3110 = vpop.f32.mrb[0].mxu0
    %3111 = vmatprep.mubr.bf16.mxu0 %v2543
    %3112 = vmatmul.mubr.bf16.gmra.mrb[0].mxu0 %v2542
    %v3113 = vpop.f32.mrb[0].mxu0
    %v3114 = vadd.f32 %v3017, %v3113
    %v3115 = vpop.f32.mrb[0].mxu0
    %v3116 = vpop.f32.mrb[0].mxu0
    %v3117 = vadd.f32 %v3020, %v3116
    %v3118 = vpop.f32.mrb[0].mxu0
    %3119 = vmatprep.mubr.bf16.mxu0 %v2545
    %3120 = vmatmul.mubr.bf16.gmra.mrb[0].mxu0 %v2544
    %v3121 = vpop.f32.mrb[0].mxu0
    %v3122 = vadd.f32 %v3025, %v3121
    %v3123 = vpop.f32.mrb[0].mxu0
    %v3124 = vpop.f32.mrb[0].mxu0
    %v3125 = vadd.f32 %v3028, %v3124
    %v3126 = vpop.f32.mrb[0].mxu0
    %3127 = vmatprep.mubr.bf16.mxu0 %v2547
    %3128 = vmatmul.mubr.bf16.gmra.mrb[0].mxu0 %v2546
    %v3129 = vpop.f32.mrb[0].mxu0
    %v3130 = vadd.f32 %v3033, %v3129
    %v3131 = vpop.f32.mrb[0].mxu0
    %v3132 = vpop.f32.mrb[0].mxu0
    %v3133 = vadd.f32 %v3036, %v3132
    %v3134 = vpop.f32.mrb[0].mxu0
    %3135 = vmatprep.mubr.bf16.mxu0 %v2549
    %3136 = vmatmul.mubr.bf16.gmra.mrb[0].mxu0 %v2548
    %v3137 = vpop.f32.mrb[0].mxu0
    %v3138 = vadd.f32 %v3041, %v3137
    %v3139 = vpop.f32.mrb[0].mxu0
    %v3140 = vpop.f32.mrb[0].mxu0
    %v3141 = vadd.f32 %v3044, %v3140
    %v3142 = vpop.f32.mrb[0].mxu0
    %3143 = vdwg.mxu0
    %3144 = vmatprep.subr.bf16.mxu0 0
    %3145 = vmatpush1.bf16.msra.mxu0 %v2886
    %3146 = vmatprep.subr.bf16.mxu0 0
    %3147 = vmatpush1.bf16.msra.mxu0 %v2887
    %3148 = vmatprep.subr.bf16.mxu0 0
    %3149 = vmatpush1.bf16.msra.mxu0 %v2888
    %3150 = vmatprep.subr.bf16.mxu0 0
    %3151 = vmatpush1.bf16.msra.mxu0 %v2889
    %3152 = vmatprep.subr.bf16.mxu0 0
    %3153 = vmatpush1.bf16.msra.mxu0 %v2890
    %3154 = vmatprep.subr.bf16.mxu0 0
    %3155 = vmatpush1.bf16.msra.mxu0 %v2891
    %3156 = vmatprep.subr.bf16.mxu0 0
    %3157 = vmatpush1.bf16.msra.mxu0 %v2892
    %3158 = vmatprep.subr.bf16.mxu0 0
    %3159 = vmatpush1.bf16.msra.mxu0 %v2893
    %3160 = vmatprep.subr.bf16.mxu0 0
    %3161 = vmatpush1.bf16.msra.mxu0 %v2894
    %3162 = vmatprep.subr.bf16.mxu0 0
    %3163 = vmatpush1.bf16.msra.mxu0 %v2895
    %3164 = vmatprep.subr.bf16.mxu0 0
    %3165 = vmatpush1.bf16.msra.mxu0 %v2896
    %3166 = vmatprep.subr.bf16.mxu0 0
    %3167 = vmatpush1.bf16.msra.mxu0 %v2897
    %3168 = vmatprep.subr.bf16.mxu0 0
    %3169 = vmatpush1.bf16.msra.mxu0 %v2898
    %3170 = vmatprep.subr.bf16.mxu0 0
    %3171 = vmatpush1.bf16.msra.mxu0 %v2899
    %3172 = vmatprep.subr.bf16.mxu0 0
    %3173 = vmatpush1.bf16.msra.mxu0 %v2900
    %3174 = vmatprep.subr.bf16.mxu0 0
    %3175 = vmatpush1.bf16.msra.mxu0 %v2901
    %3176 = vmatprep.mubr.bf16.mxu0 %v2551
    %3177 = vmatmul.mubr.bf16.gmra.mrb[0].mxu0 %v2550
    %v3178 = vpop.f32.mrb[0].mxu0
    %v3179 = vadd.f32 %v3082, %v3178
    %v3180 = vpop.f32.mrb[0].mxu0
    %v3181 = vpop.f32.mrb[0].mxu0
    %v3182 = vadd.f32 %v3085, %v3181
    %v3183 = vpop.f32.mrb[0].mxu0
    %3184 = vmatprep.mubr.bf16.mxu0 %v2553
    %3185 = vmatmul.mubr.bf16.gmra.mrb[0].mxu0 %v2552
    %v3186 = vpop.f32.mrb[0].mxu0
    %v3187 = vadd.f32 %v3090, %v3186
    %v3188 = vpop.f32.mrb[0].mxu0
    %v3189 = vpop.f32.mrb[0].mxu0
    %v3190 = vadd.f32 %v3093, %v3189
    %v3191 = vpop.f32.mrb[0].mxu0
    %3192 = vmatprep.mubr.bf16.mxu0 %v2555
    %3193 = vmatmul.mubr.bf16.gmra.mrb[0].mxu0 %v2554
    %v3194 = vpop.f32.mrb[0].mxu0
    %v3195 = vadd.f32 %v3098, %v3194
    %v3196 = vpop.f32.mrb[0].mxu0
    %v3197 = vpop.f32.mrb[0].mxu0
    %v3198 = vadd.f32 %v3101, %v3197
    %v3199 = vpop.f32.mrb[0].mxu0
    %3200 = vmatprep.mubr.bf16.mxu0 %v2557
    %3201 = vmatmul.mubr.bf16.gmra.mrb[0].mxu0 %v2556
    %v3202 = vpop.f32.mrb[0].mxu0
    %v3203 = vadd.f32 %v3106, %v3202
    %v3204 = vpop.f32.mrb[0].mxu0
    %v3205 = vpop.f32.mrb[0].mxu0
    %v3206 = vadd.f32 %v3109, %v3205
    %v3207 = vpop.f32.mrb[0].mxu0
    %3208 = vmatprep.mubr.bf16.mxu0 %v2559
    %3209 = vmatmul.mubr.bf16.gmra.mrb[0].mxu0 %v2558
    %v3210 = vpop.f32.mrb[0].mxu0
    %v3211 = vadd.f32 %v3114, %v3210
    %v3212 = vpop.f32.mrb[0].mxu0
    %v3213 = vpop.f32.mrb[0].mxu0
    %v3214 = vadd.f32 %v3117, %v3213
    %v3215 = vpop.f32.mrb[0].mxu0
    %3216 = vmatprep.mubr.bf16.mxu0 %v2561
    %3217 = vmatmul.mubr.bf16.gmra.mrb[0].mxu0 %v2560
    %v3218 = vpop.f32.mrb[0].mxu0
    %v3219 = vadd.f32 %v3122, %v3218
    %v3220 = vpop.f32.mrb[0].mxu0
    %v3221 = vpop.f32.mrb[0].mxu0
    %v3222 = vadd.f32 %v3125, %v3221
    %v3223 = vpop.f32.mrb[0].mxu0
    %3224 = vmatprep.mubr.bf16.mxu0 %v2563
    %3225 = vmatmul.mubr.bf16.gmra.mrb[0].mxu0 %v2562
    %v3226 = vpop.f32.mrb[0].mxu0
    %v3227 = vadd.f32 %v3130, %v3226
    %v3228 = vpop.f32.mrb[0].mxu0
    %v3229 = vpop.f32.mrb[0].mxu0
    %v3230 = vadd.f32 %v3133, %v3229
    %v3231 = vpop.f32.mrb[0].mxu0
    %3232 = vmatprep.mubr.bf16.mxu0 %v2565
    %3233 = vmatmul.mubr.bf16.gmra.mrb[0].mxu0 %v2564
    %v3234 = vpop.f32.mrb[0].mxu0
    %v3235 = vadd.f32 %v3138, %v3234
    %v3236 = vpop.f32.mrb[0].mxu0
    %v3237 = vpop.f32.mrb[0].mxu0
    %v3238 = vadd.f32 %v3141, %v3237
    %v3239 = vpop.f32.mrb[0].mxu0
    %3240 = vdwg.mxu0
    %v3241 = vld [vmem:[#allocation7] sm:$0xf]
    %v3242 = vld [vmem:[#allocation7 + $0x4] sm:$0xf]
    %v3243 = vld [vmem:[#allocation7 + $0x8] sm:$0xf]
    %v3244 = vld [vmem:[#allocation7 + $0xc] sm:$0xf]
    %v3245 = vld [vmem:[#allocation7 + $0x10] sm:$0xf]
    %v3246 = vld [vmem:[#allocation7 + $0x14] sm:$0xf]
    %v3247 = vld [vmem:[#allocation7 + $0x18] sm:$0xf]
    %v3248 = vld [vmem:[#allocation7 + $0x1c] sm:$0xf]
    %v3249 = vld [vmem:[#allocation7 + $0x20] sm:$0xf]
    %v3250 = vld [vmem:[#allocation7 + $0x24] sm:$0xf]
    %v3251 = vld [vmem:[#allocation7 + $0x28] sm:$0xf]
    %v3252 = vld [vmem:[#allocation7 + $0x2c] sm:$0xf]
    %v3253 = vld [vmem:[#allocation7 + $0x30] sm:$0xf]
    %v3254 = vld [vmem:[#allocation7 + $0x34] sm:$0xf]
    %v3255 = vld [vmem:[#allocation7 + $0x38] sm:$0xf]
    %v3256 = vld [vmem:[#allocation7 + $0x3c] sm:$0xf]
    %v3257 = vld [vmem:[#allocation7 + $0x40] sm:$0xf]
    %v3258 = vld [vmem:[#allocation7 + $0x44] sm:$0xf]
    %v3259 = vld [vmem:[#allocation7 + $0x48] sm:$0xf]
    %v3260 = vld [vmem:[#allocation7 + $0x4c] sm:$0xf]
    %v3261 = vld [vmem:[#allocation7 + $0x50] sm:$0xf]
    %v3262 = vld [vmem:[#allocation7 + $0x54] sm:$0xf]
    %v3263 = vld [vmem:[#allocation7 + $0x58] sm:$0xf]
    %v3264 = vld [vmem:[#allocation7 + $0x5c] sm:$0xf]
    %v3265 = vld [vmem:[#allocation7 + $0x60] sm:$0xf]
    %v3266 = vld [vmem:[#allocation7 + $0x64] sm:$0xf]
    %v3267 = vld [vmem:[#allocation7 + $0x68] sm:$0xf]
    %v3268 = vld [vmem:[#allocation7 + $0x6c] sm:$0xf]
    %v3269 = vld [vmem:[#allocation7 + $0x70] sm:$0xf]
    %v3270 = vld [vmem:[#allocation7 + $0x74] sm:$0xf]
    %v3271 = vld [vmem:[#allocation7 + $0x78] sm:$0xf]
    %v3272 = vld [vmem:[#allocation7 + $0x7c] sm:$0xf]
    %v3273 = vld [vmem:[#allocation7 + $0x80] sm:$0xf]
    %v3274 = vld [vmem:[#allocation7 + $0x84] sm:$0xf]
    %v3275 = vld [vmem:[#allocation7 + $0x88] sm:$0xf]
    %v3276 = vld [vmem:[#allocation7 + $0x8c] sm:$0xf]
    %v3277 = vld [vmem:[#allocation7 + $0x90] sm:$0xf]
    %v3278 = vld [vmem:[#allocation7 + $0x94] sm:$0xf]
    %v3279 = vld [vmem:[#allocation7 + $0x98] sm:$0xf]
    %v3280 = vld [vmem:[#allocation7 + $0x9c] sm:$0xf]
    %v3281 = vld [vmem:[#allocation7 + $0xa0] sm:$0xf]
    %v3282 = vld [vmem:[#allocation7 + $0xa4] sm:$0xf]
    %v3283 = vld [vmem:[#allocation7 + $0xa8] sm:$0xf]
    %v3284 = vld [vmem:[#allocation7 + $0xac] sm:$0xf]
    %v3285 = vld [vmem:[#allocation7 + $0xb0] sm:$0xf]
    %v3286 = vld [vmem:[#allocation7 + $0xb4] sm:$0xf]
    %v3287 = vld [vmem:[#allocation7 + $0xb8] sm:$0xf]
    %v3288 = vld [vmem:[#allocation7 + $0xbc] sm:$0xf]
    %v3289 = vld [vmem:[#allocation7 + $0xc0] sm:$0xf]
    %v3290 = vld [vmem:[#allocation7 + $0xc4] sm:$0xf]
    %v3291 = vld [vmem:[#allocation7 + $0xc8] sm:$0xf]
    %v3292 = vld [vmem:[#allocation7 + $0xcc] sm:$0xf]
    %v3293 = vld [vmem:[#allocation7 + $0xd0] sm:$0xf]
    %v3294 = vld [vmem:[#allocation7 + $0xd4] sm:$0xf]
    %v3295 = vld [vmem:[#allocation7 + $0xd8] sm:$0xf]
    %v3296 = vld [vmem:[#allocation7 + $0xdc] sm:$0xf]
    %v3297 = vld [vmem:[#allocation7 + $0xe0] sm:$0xf]
    %v3298 = vld [vmem:[#allocation7 + $0xe4] sm:$0xf]
    %v3299 = vld [vmem:[#allocation7 + $0xe8] sm:$0xf]
    %v3300 = vld [vmem:[#allocation7 + $0xec] sm:$0xf]
    %v3301 = vld [vmem:[#allocation7 + $0xf0] sm:$0xf]
    %v3302 = vld [vmem:[#allocation7 + $0xf4] sm:$0xf]
    %v3303 = vld [vmem:[#allocation7 + $0xf8] sm:$0xf]
    %v3304 = vld [vmem:[#allocation7 + $0xfc] sm:$0xf]
    %v3305 = vld [vmem:[#allocation7 + $0x100] sm:$0xf]
    %v3306 = vld [vmem:[#allocation7 + $0x104] sm:$0xf]
    %v3307 = vld [vmem:[#allocation7 + $0x108] sm:$0xf]
    %v3308 = vld [vmem:[#allocation7 + $0x10c] sm:$0xf]
    %v3309 = vld [vmem:[#allocation7 + $0x110] sm:$0xf]
    %v3310 = vld [vmem:[#allocation7 + $0x114] sm:$0xf]
    %v3311 = vld [vmem:[#allocation7 + $0x118] sm:$0xf]
    %v3312 = vld [vmem:[#allocation7 + $0x11c] sm:$0xf]
    %v3313 = vld [vmem:[#allocation7 + $0x120] sm:$0xf]
    %v3314 = vld [vmem:[#allocation7 + $0x124] sm:$0xf]
    %v3315 = vld [vmem:[#allocation7 + $0x128] sm:$0xf]
    %v3316 = vld [vmem:[#allocation7 + $0x12c] sm:$0xf]
    %v3317 = vld [vmem:[#allocation7 + $0x130] sm:$0xf]
    %v3318 = vld [vmem:[#allocation7 + $0x134] sm:$0xf]
    %v3319 = vld [vmem:[#allocation7 + $0x138] sm:$0xf]
    %v3320 = vld [vmem:[#allocation7 + $0x13c] sm:$0xf]
    %v3321 = vld [vmem:[#allocation7 + $0x140] sm:$0xf]
    %v3322 = vld [vmem:[#allocation7 + $0x144] sm:$0xf]
    %v3323 = vld [vmem:[#allocation7 + $0x148] sm:$0xf]
    %v3324 = vld [vmem:[#allocation7 + $0x14c] sm:$0xf]
    %v3325 = vld [vmem:[#allocation7 + $0x150] sm:$0xf]
    %v3326 = vld [vmem:[#allocation7 + $0x154] sm:$0xf]
    %v3327 = vld [vmem:[#allocation7 + $0x158] sm:$0xf]
    %v3328 = vld [vmem:[#allocation7 + $0x15c] sm:$0xf]
    %v3329 = vld [vmem:[#allocation7 + $0x160] sm:$0xf]
    %v3330 = vld [vmem:[#allocation7 + $0x164] sm:$0xf]
    %v3331 = vld [vmem:[#allocation7 + $0x168] sm:$0xf]
    %v3332 = vld [vmem:[#allocation7 + $0x16c] sm:$0xf]
    %v3333 = vld [vmem:[#allocation7 + $0x170] sm:$0xf]
    %v3334 = vld [vmem:[#allocation7 + $0x174] sm:$0xf]
    %v3335 = vld [vmem:[#allocation7 + $0x178] sm:$0xf]
    %v3336 = vld [vmem:[#allocation7 + $0x17c] sm:$0xf]
    %v3337 = vld [vmem:[#allocation7 + $0x180] sm:$0xf]
    %v3338 = vld [vmem:[#allocation7 + $0x184] sm:$0xf]
    %v3339 = vld [vmem:[#allocation7 + $0x188] sm:$0xf]
    %v3340 = vld [vmem:[#allocation7 + $0x18c] sm:$0xf]
    %v3341 = vld [vmem:[#allocation7 + $0x190] sm:$0xf]
    %v3342 = vld [vmem:[#allocation7 + $0x194] sm:$0xf]
    %v3343 = vld [vmem:[#allocation7 + $0x198] sm:$0xf]
    %v3344 = vld [vmem:[#allocation7 + $0x19c] sm:$0xf]
    %v3345 = vld [vmem:[#allocation7 + $0x1a0] sm:$0xf]
    %v3346 = vld [vmem:[#allocation7 + $0x1a4] sm:$0xf]
    %v3347 = vld [vmem:[#allocation7 + $0x1a8] sm:$0xf]
    %v3348 = vld [vmem:[#allocation7 + $0x1ac] sm:$0xf]
    %v3349 = vld [vmem:[#allocation7 + $0x1b0] sm:$0xf]
    %v3350 = vld [vmem:[#allocation7 + $0x1b4] sm:$0xf]
    %v3351 = vld [vmem:[#allocation7 + $0x1b8] sm:$0xf]
    %v3352 = vld [vmem:[#allocation7 + $0x1bc] sm:$0xf]
    %v3353 = vld [vmem:[#allocation7 + $0x1c0] sm:$0xf]
    %v3354 = vld [vmem:[#allocation7 + $0x1c4] sm:$0xf]
    %v3355 = vld [vmem:[#allocation7 + $0x1c8] sm:$0xf]
    %v3356 = vld [vmem:[#allocation7 + $0x1cc] sm:$0xf]
    %v3357 = vld [vmem:[#allocation7 + $0x1d0] sm:$0xf]
    %v3358 = vld [vmem:[#allocation7 + $0x1d4] sm:$0xf]
    %v3359 = vld [vmem:[#allocation7 + $0x1d8] sm:$0xf]
    %v3360 = vld [vmem:[#allocation7 + $0x1dc] sm:$0xf]
    %v3361 = vld [vmem:[#allocation7 + $0x1e0] sm:$0xf]
    %v3362 = vld [vmem:[#allocation7 + $0x1e4] sm:$0xf]
    %v3363 = vld [vmem:[#allocation7 + $0x1e8] sm:$0xf]
    %v3364 = vld [vmem:[#allocation7 + $0x1ec] sm:$0xf]
    %v3365 = vld [vmem:[#allocation7 + $0x1f0] sm:$0xf]
    %v3366 = vld [vmem:[#allocation7 + $0x1f4] sm:$0xf]
    %v3367 = vld [vmem:[#allocation7 + $0x1f8] sm:$0xf]
    %v3368 = vld [vmem:[#allocation7 + $0x1fc] sm:$0xf]
    %v3369 = vld [vmem:[#allocation7 + $0x200] sm:$0xf]
    %v3370 = vld [vmem:[#allocation7 + $0x204] sm:$0xf]
    %v3371 = vld [vmem:[#allocation7 + $0x208] sm:$0xf]
    %v3372 = vld [vmem:[#allocation7 + $0x20c] sm:$0xf]
    %v3373 = vld [vmem:[#allocation7 + $0x210] sm:$0xf]
    %v3374 = vld [vmem:[#allocation7 + $0x214] sm:$0xf]
    %v3375 = vld [vmem:[#allocation7 + $0x218] sm:$0xf]
    %v3376 = vld [vmem:[#allocation7 + $0x21c] sm:$0xf]
    %v3377 = vld [vmem:[#allocation7 + $0x220] sm:$0xf]
    %v3378 = vld [vmem:[#allocation7 + $0x224] sm:$0xf]
    %v3379 = vld [vmem:[#allocation7 + $0x228] sm:$0xf]
    %v3380 = vld [vmem:[#allocation7 + $0x22c] sm:$0xf]
    %v3381 = vld [vmem:[#allocation7 + $0x230] sm:$0xf]
    %v3382 = vld [vmem:[#allocation7 + $0x234] sm:$0xf]
    %v3383 = vld [vmem:[#allocation7 + $0x238] sm:$0xf]
    %v3384 = vld [vmem:[#allocation7 + $0x23c] sm:$0xf]
    %v3385 = vld [vmem:[#allocation7 + $0x240] sm:$0xf]
    %v3386 = vld [vmem:[#allocation7 + $0x244] sm:$0xf]
    %v3387 = vld [vmem:[#allocation7 + $0x248] sm:$0xf]
    %v3388 = vld [vmem:[#allocation7 + $0x24c] sm:$0xf]
    %v3389 = vld [vmem:[#allocation7 + $0x250] sm:$0xf]
    %v3390 = vld [vmem:[#allocation7 + $0x254] sm:$0xf]
    %v3391 = vld [vmem:[#allocation7 + $0x258] sm:$0xf]
    %v3392 = vld [vmem:[#allocation7 + $0x25c] sm:$0xf]
    %v3393 = vld [vmem:[#allocation7 + $0x260] sm:$0xf]
    %v3394 = vld [vmem:[#allocation7 + $0x264] sm:$0xf]
    %v3395 = vld [vmem:[#allocation7 + $0x268] sm:$0xf]
    %v3396 = vld [vmem:[#allocation7 + $0x26c] sm:$0xf]
    %v3397 = vld [vmem:[#allocation7 + $0x270] sm:$0xf]
    %v3398 = vld [vmem:[#allocation7 + $0x274] sm:$0xf]
    %v3399 = vld [vmem:[#allocation7 + $0x278] sm:$0xf]
    %v3400 = vld [vmem:[#allocation7 + $0x27c] sm:$0xf]
    %v3561 = vunpack.c.l.b16 %v3241
    %v3562 = vunpack.c.l.b16 %v3242
    %v3563 = vunpack.c.l.b16 %v3243
    %v3564 = vunpack.c.l.b16 %v3244
    %v3565 = vunpack.c.l.b16 %v3245
    %v3566 = vunpack.c.l.b16 %v3246
    %v3567 = vunpack.c.l.b16 %v3247
    %v3568 = vunpack.c.l.b16 %v3248
    %v3569 = vunpack.c.l.b16 %v3249
    %v3570 = vunpack.c.l.b16 %v3250
    %v3571 = vunpack.c.l.b16 %v3251
    %v3572 = vunpack.c.l.b16 %v3252
    %v3573 = vunpack.c.l.b16 %v3253
    %v3574 = vunpack.c.l.b16 %v3254
    %v3575 = vunpack.c.l.b16 %v3255
    %v3576 = vunpack.c.l.b16 %v3256
    %v3577 = vunpack.c.l.b16 %v3257
    %v3578 = vunpack.c.l.b16 %v3258
    %v3579 = vunpack.c.l.b16 %v3259
    %v3580 = vunpack.c.l.b16 %v3260
    %v3581 = vunpack.c.l.b16 %v3261
    %v3582 = vunpack.c.l.b16 %v3262
    %v3583 = vunpack.c.l.b16 %v3263
    %v3584 = vunpack.c.l.b16 %v3264
    %v3585 = vunpack.c.l.b16 %v3265
    %v3586 = vunpack.c.l.b16 %v3266
    %v3587 = vunpack.c.l.b16 %v3267
    %v3588 = vunpack.c.l.b16 %v3268
    %v3589 = vunpack.c.l.b16 %v3269
    %v3590 = vunpack.c.l.b16 %v3270
    %v3591 = vunpack.c.l.b16 %v3271
    %v3592 = vunpack.c.l.b16 %v3272
    %v3593 = vunpack.c.l.b16 %v3273
    %v3594 = vunpack.c.l.b16 %v3274
    %v3595 = vunpack.c.l.b16 %v3275
    %v3596 = vunpack.c.l.b16 %v3276
    %v3597 = vunpack.c.l.b16 %v3277
    %v3598 = vunpack.c.l.b16 %v3278
    %v3599 = vunpack.c.l.b16 %v3279
    %v3600 = vunpack.c.l.b16 %v3280
    %v3601 = vunpack.c.l.b16 %v3281
    %v3602 = vunpack.c.l.b16 %v3282
    %v3603 = vunpack.c.l.b16 %v3283
    %v3604 = vunpack.c.l.b16 %v3284
    %v3605 = vunpack.c.l.b16 %v3285
    %v3606 = vunpack.c.l.b16 %v3286
    %v3607 = vunpack.c.l.b16 %v3287
    %v3608 = vunpack.c.l.b16 %v3288
    %v3609 = vunpack.c.l.b16 %v3289
    %v3610 = vunpack.c.l.b16 %v3290
    %v3611 = vunpack.c.l.b16 %v3291
    %v3612 = vunpack.c.l.b16 %v3292
    %v3613 = vunpack.c.l.b16 %v3293
    %v3614 = vunpack.c.l.b16 %v3294
    %v3615 = vunpack.c.l.b16 %v3295
    %v3616 = vunpack.c.l.b16 %v3296
    %v3617 = vunpack.c.l.b16 %v3297
    %v3618 = vunpack.c.l.b16 %v3298
    %v3619 = vunpack.c.l.b16 %v3299
    %v3620 = vunpack.c.l.b16 %v3300
    %v3621 = vunpack.c.l.b16 %v3301
    %v3622 = vunpack.c.l.b16 %v3302
    %v3623 = vunpack.c.l.b16 %v3303
    %v3624 = vunpack.c.l.b16 %v3304
    %v3625 = vunpack.c.l.b16 %v3305
    %v3626 = vunpack.c.l.b16 %v3306
    %v3627 = vunpack.c.l.b16 %v3307
    %v3628 = vunpack.c.l.b16 %v3308
    %v3629 = vunpack.c.l.b16 %v3309
    %v3630 = vunpack.c.l.b16 %v3310
    %v3631 = vunpack.c.l.b16 %v3311
    %v3632 = vunpack.c.l.b16 %v3312
    %v3633 = vunpack.c.l.b16 %v3313
    %v3634 = vunpack.c.l.b16 %v3314
    %v3635 = vunpack.c.l.b16 %v3315
    %v3636 = vunpack.c.l.b16 %v3316
    %v3637 = vunpack.c.l.b16 %v3317
    %v3638 = vunpack.c.l.b16 %v3318
    %v3639 = vunpack.c.l.b16 %v3319
    %v3640 = vunpack.c.l.b16 %v3320
    %v3641 = vunpack.c.l.b16 %v3321
    %v3642 = vunpack.c.l.b16 %v3322
    %v3643 = vunpack.c.l.b16 %v3323
    %v3644 = vunpack.c.l.b16 %v3324
    %v3645 = vunpack.c.l.b16 %v3325
    %v3646 = vunpack.c.l.b16 %v3326
    %v3647 = vunpack.c.l.b16 %v3327
    %v3648 = vunpack.c.l.b16 %v3328
    %v3649 = vunpack.c.l.b16 %v3329
    %v3650 = vunpack.c.l.b16 %v3330
    %v3651 = vunpack.c.l.b16 %v3331
    %v3652 = vunpack.c.l.b16 %v3332
    %v3653 = vunpack.c.l.b16 %v3333
    %v3654 = vunpack.c.l.b16 %v3334
    %v3655 = vunpack.c.l.b16 %v3335
    %v3656 = vunpack.c.l.b16 %v3336
    %v3657 = vunpack.c.l.b16 %v3337
    %v3658 = vunpack.c.l.b16 %v3338
    %v3659 = vunpack.c.l.b16 %v3339
    %v3660 = vunpack.c.l.b16 %v3340
    %v3661 = vunpack.c.l.b16 %v3341
    %v3662 = vunpack.c.l.b16 %v3342
    %v3663 = vunpack.c.l.b16 %v3343
    %v3664 = vunpack.c.l.b16 %v3344
    %v3665 = vunpack.c.l.b16 %v3345
    %v3666 = vunpack.c.l.b16 %v3346
    %v3667 = vunpack.c.l.b16 %v3347
    %v3668 = vunpack.c.l.b16 %v3348
    %v3669 = vunpack.c.l.b16 %v3349
    %v3670 = vunpack.c.l.b16 %v3350
    %v3671 = vunpack.c.l.b16 %v3351
    %v3672 = vunpack.c.l.b16 %v3352
    %v3673 = vunpack.c.l.b16 %v3353
    %v3674 = vunpack.c.l.b16 %v3354
    %v3675 = vunpack.c.l.b16 %v3355
    %v3676 = vunpack.c.l.b16 %v3356
    %v3677 = vunpack.c.l.b16 %v3357
    %v3678 = vunpack.c.l.b16 %v3358
    %v3679 = vunpack.c.l.b16 %v3359
    %v3680 = vunpack.c.l.b16 %v3360
    %v3681 = vunpack.c.l.b16 %v3361
    %v3682 = vunpack.c.l.b16 %v3362
    %v3683 = vunpack.c.l.b16 %v3363
    %v3684 = vunpack.c.l.b16 %v3364
    %v3685 = vunpack.c.l.b16 %v3365
    %v3686 = vunpack.c.l.b16 %v3366
    %v3687 = vunpack.c.l.b16 %v3367
    %v3688 = vunpack.c.l.b16 %v3368
    %v3689 = vunpack.c.l.b16 %v3369
    %v3690 = vunpack.c.l.b16 %v3370
    %v3691 = vunpack.c.l.b16 %v3371
    %v3692 = vunpack.c.l.b16 %v3372
    %v3693 = vunpack.c.l.b16 %v3373
    %v3694 = vunpack.c.l.b16 %v3374
    %v3695 = vunpack.c.l.b16 %v3375
    %v3696 = vunpack.c.l.b16 %v3376
    %v3697 = vunpack.c.l.b16 %v3377
    %v3698 = vunpack.c.l.b16 %v3378
    %v3699 = vunpack.c.l.b16 %v3379
    %v3700 = vunpack.c.l.b16 %v3380
    %v3701 = vunpack.c.l.b16 %v3381
    %v3702 = vunpack.c.l.b16 %v3382
    %v3703 = vunpack.c.l.b16 %v3383
    %v3704 = vunpack.c.l.b16 %v3384
    %v3705 = vunpack.c.l.b16 %v3385
    %v3706 = vunpack.c.l.b16 %v3386
    %v3707 = vunpack.c.l.b16 %v3387
    %v3708 = vunpack.c.l.b16 %v3388
    %v3709 = vunpack.c.l.b16 %v3389
    %v3710 = vunpack.c.l.b16 %v3390
    %v3711 = vunpack.c.l.b16 %v3391
    %v3712 = vunpack.c.l.b16 %v3392
    %v3713 = vunpack.c.l.b16 %v3393
    %v3714 = vunpack.c.l.b16 %v3394
    %v3715 = vunpack.c.l.b16 %v3395
    %v3716 = vunpack.c.l.b16 %v3396
    %v3717 = vunpack.c.l.b16 %v3397
    %v3718 = vunpack.c.l.b16 %v3398
    %v3719 = vunpack.c.l.b16 %v3399
    %v3720 = vunpack.c.l.b16 %v3400
    %v3721 = vpack.c.b16 %v3562, %v3561
    %v3722 = vpack.c.b16 %v3564, %v3563
    %v3723 = vpack.c.b16 %v3566, %v3565
    %v3724 = vpack.c.b16 %v3568, %v3567
    %v3725 = vpack.c.b16 %v3570, %v3569
    %v3726 = vpack.c.b16 %v3572, %v3571
    %v3727 = vpack.c.b16 %v3574, %v3573
    %v3728 = vpack.c.b16 %v3576, %v3575
    %v3729 = vpack.c.b16 %v3578, %v3577
    %v3730 = vpack.c.b16 %v3580, %v3579
    %v3731 = vpack.c.b16 %v3582, %v3581
    %v3732 = vpack.c.b16 %v3584, %v3583
    %v3733 = vpack.c.b16 %v3586, %v3585
    %v3734 = vpack.c.b16 %v3588, %v3587
    %v3735 = vpack.c.b16 %v3590, %v3589
    %v3736 = vpack.c.b16 %v3592, %v3591
    %v3737 = vpack.c.b16 %v3594, %v3593
    %v3738 = vpack.c.b16 %v3596, %v3595
    %v3739 = vpack.c.b16 %v3598, %v3597
    %v3740 = vpack.c.b16 %v3600, %v3599
    %v3741 = vpack.c.b16 %v3602, %v3601
    %v3742 = vpack.c.b16 %v3604, %v3603
    %v3743 = vpack.c.b16 %v3606, %v3605
    %v3744 = vpack.c.b16 %v3608, %v3607
    %v3745 = vpack.c.b16 %v3610, %v3609
    %v3746 = vpack.c.b16 %v3612, %v3611
    %v3747 = vpack.c.b16 %v3614, %v3613
    %v3748 = vpack.c.b16 %v3616, %v3615
    %v3749 = vpack.c.b16 %v3618, %v3617
    %v3750 = vpack.c.b16 %v3620, %v3619
    %v3751 = vpack.c.b16 %v3622, %v3621
    %v3752 = vpack.c.b16 %v3624, %v3623
    %v3753 = vpack.c.b16 %v3626, %v3625
    %v3754 = vpack.c.b16 %v3628, %v3627
    %v3755 = vpack.c.b16 %v3630, %v3629
    %v3756 = vpack.c.b16 %v3632, %v3631
    %v3757 = vpack.c.b16 %v3634, %v3633
    %v3758 = vpack.c.b16 %v3636, %v3635
    %v3759 = vpack.c.b16 %v3638, %v3637
    %v3760 = vpack.c.b16 %v3640, %v3639
    %v3761 = vpack.c.b16 %v3642, %v3641
    %v3762 = vpack.c.b16 %v3644, %v3643
    %v3763 = vpack.c.b16 %v3646, %v3645
    %v3764 = vpack.c.b16 %v3648, %v3647
    %v3765 = vpack.c.b16 %v3650, %v3649
    %v3766 = vpack.c.b16 %v3652, %v3651
    %v3767 = vpack.c.b16 %v3654, %v3653
    %v3768 = vpack.c.b16 %v3656, %v3655
    %v3769 = vpack.c.b16 %v3658, %v3657
    %v3770 = vpack.c.b16 %v3660, %v3659
    %v3771 = vpack.c.b16 %v3662, %v3661
    %v3772 = vpack.c.b16 %v3664, %v3663
    %v3773 = vpack.c.b16 %v3666, %v3665
    %v3774 = vpack.c.b16 %v3668, %v3667
    %v3775 = vpack.c.b16 %v3670, %v3669
    %v3776 = vpack.c.b16 %v3672, %v3671
    %v3777 = vpack.c.b16 %v3674, %v3673
    %v3778 = vpack.c.b16 %v3676, %v3675
    %v3779 = vpack.c.b16 %v3678, %v3677
    %v3780 = vpack.c.b16 %v3680, %v3679
    %v3781 = vpack.c.b16 %v3682, %v3681
    %v3782 = vpack.c.b16 %v3684, %v3683
    %v3783 = vpack.c.b16 %v3686, %v3685
    %v3784 = vpack.c.b16 %v3688, %v3687
    %v3785 = vpack.c.b16 %v3690, %v3689
    %v3786 = vpack.c.b16 %v3692, %v3691
    %v3787 = vpack.c.b16 %v3694, %v3693
    %v3788 = vpack.c.b16 %v3696, %v3695
    %v3789 = vpack.c.b16 %v3698, %v3697
    %v3790 = vpack.c.b16 %v3700, %v3699
    %v3791 = vpack.c.b16 %v3702, %v3701
    %v3792 = vpack.c.b16 %v3704, %v3703
    %v3793 = vpack.c.b16 %v3706, %v3705
    %v3794 = vpack.c.b16 %v3708, %v3707
    %v3795 = vpack.c.b16 %v3710, %v3709
    %v3796 = vpack.c.b16 %v3712, %v3711
    %v3797 = vpack.c.b16 %v3714, %v3713
    %v3798 = vpack.c.b16 %v3716, %v3715
    %v3799 = vpack.c.b16 %v3718, %v3717
    %v3800 = vpack.c.b16 %v3720, %v3719
    %3881 = vmatprep.subr.bf16.mxu0 0
    %3882 = vmatpush1.bf16.msra.mxu0 %v3721
    %3883 = vmatprep.subr.bf16.mxu0 0
    %3884 = vmatpush1.bf16.msra.mxu0 %v3722
    %3885 = vmatprep.subr.bf16.mxu0 0
    %3886 = vmatpush1.bf16.msra.mxu0 %v3723
    %3887 = vmatprep.subr.bf16.mxu0 0
    %3888 = vmatpush1.bf16.msra.mxu0 %v3724
    %3889 = vmatprep.subr.bf16.mxu0 0
    %3890 = vmatpush1.bf16.msra.mxu0 %v3725
    %3891 = vmatprep.subr.bf16.mxu0 0
    %3892 = vmatpush1.bf16.msra.mxu0 %v3726
    %3893 = vmatprep.subr.bf16.mxu0 0
    %3894 = vmatpush1.bf16.msra.mxu0 %v3727
    %3895 = vmatprep.subr.bf16.mxu0 0
    %3896 = vmatpush1.bf16.msra.mxu0 %v3728
    %3897 = vmatprep.subr.bf16.mxu0 0
    %3898 = vmatpush1.bf16.msra.mxu0 %v3729
    %3899 = vmatprep.subr.bf16.mxu0 0
    %3900 = vmatpush1.bf16.msra.mxu0 %v3730
    %3901 = vmatprep.subr.bf16.mxu0 0
    %3902 = vmatpush1.bf16.msra.mxu0 %v3731
    %3903 = vmatprep.subr.bf16.mxu0 0
    %3904 = vmatpush1.bf16.msra.mxu0 %v3732
    %3905 = vmatprep.subr.bf16.mxu0 0
    %3906 = vmatpush1.bf16.msra.mxu0 %v3733
    %3907 = vmatprep.subr.bf16.mxu0 0
    %3908 = vmatpush1.bf16.msra.mxu0 %v3734
    %3909 = vmatprep.subr.bf16.mxu0 0
    %3910 = vmatpush1.bf16.msra.mxu0 %v3735
    %3911 = vmatprep.subr.bf16.mxu0 0
    %3912 = vmatpush1.bf16.msra.mxu0 %v3736
    %3913 = vmatprep.mubr.bf16.mxu0 %v2199
    %3914 = vmatmul.mubr.bf16.gmra.mrb[0].mxu0 %v2198
    %v3915 = vpop.f32.mrb[0].mxu0
    %v3916 = vadd.f32 0.0, %v3915
    %v3917 = vpop.f32.mrb[0].mxu0
    %v3918 = vpop.f32.mrb[0].mxu0
    %v3919 = vadd.f32 0.0, %v3918
    %v3920 = vpop.f32.mrb[0].mxu0
    %3921 = vmatprep.mubr.bf16.mxu0 %v2201
    %3922 = vmatmul.mubr.bf16.gmra.mrb[0].mxu0 %v2200
    %v3923 = vpop.f32.mrb[0].mxu0
    %v3924 = vadd.f32 0.0, %v3923
    %v3925 = vpop.f32.mrb[0].mxu0
    %v3926 = vpop.f32.mrb[0].mxu0
    %v3927 = vadd.f32 0.0, %v3926
    %v3928 = vpop.f32.mrb[0].mxu0
    %3929 = vmatprep.mubr.bf16.mxu0 %v2203
    %3930 = vmatmul.mubr.bf16.gmra.mrb[0].mxu0 %v2202
    %v3931 = vpop.f32.mrb[0].mxu0
    %v3932 = vadd.f32 0.0, %v3931
    %v3933 = vpop.f32.mrb[0].mxu0
    %v3934 = vpop.f32.mrb[0].mxu0
    %v3935 = vadd.f32 0.0, %v3934
    %v3936 = vpop.f32.mrb[0].mxu0
    %3937 = vmatprep.mubr.bf16.mxu0 %v2205
    %3938 = vmatmul.mubr.bf16.gmra.mrb[0].mxu0 %v2204
    %v3939 = vpop.f32.mrb[0].mxu0
    %v3940 = vadd.f32 0.0, %v3939
    %v3941 = vpop.f32.mrb[0].mxu0
    %v3942 = vpop.f32.mrb[0].mxu0
    %v3943 = vadd.f32 0.0, %v3942
    %v3944 = vpop.f32.mrb[0].mxu0
    %3945 = vmatprep.mubr.bf16.mxu0 %v2207
    %3946 = vmatmul.mubr.bf16.gmra.mrb[0].mxu0 %v2206
    %v3947 = vpop.f32.mrb[0].mxu0
    %v3948 = vadd.f32 0.0, %v3947
    %v3949 = vpop.f32.mrb[0].mxu0
    %v3950 = vpop.f32.mrb[0].mxu0
    %v3951 = vadd.f32 0.0, %v3950
    %v3952 = vpop.f32.mrb[0].mxu0
    %3953 = vmatprep.mubr.bf16.mxu0 %v2209
    %3954 = vmatmul.mubr.bf16.gmra.mrb[0].mxu0 %v2208
    %v3955 = vpop.f32.mrb[0].mxu0
    %v3956 = vadd.f32 0.0, %v3955
    %v3957 = vpop.f32.mrb[0].mxu0
    %v3958 = vpop.f32.mrb[0].mxu0
    %v3959 = vadd.f32 0.0, %v3958
    %v3960 = vpop.f32.mrb[0].mxu0
    %3961 = vmatprep.mubr.bf16.mxu0 %v2211
    %3962 = vmatmul.mubr.bf16.gmra.mrb[0].mxu0 %v2210
    %v3963 = vpop.f32.mrb[0].mxu0
    %v3964 = vadd.f32 0.0, %v3963
    %v3965 = vpop.f32.mrb[0].mxu0
    %v3966 = vpop.f32.mrb[0].mxu0
    %v3967 = vadd.f32 0.0, %v3966
    %v3968 = vpop.f32.mrb[0].mxu0
    %3969 = vmatprep.mubr.bf16.mxu0 %v2213
    %3970 = vmatmul.mubr.bf16.gmra.mrb[0].mxu0 %v2212
    %v3971 = vpop.f32.mrb[0].mxu0
    %v3972 = vadd.f32 0.0, %v3971
    %v3973 = vpop.f32.mrb[0].mxu0
    %v3974 = vpop.f32.mrb[0].mxu0
    %v3975 = vadd.f32 0.0, %v3974
    %v3976 = vpop.f32.mrb[0].mxu0
    %3977 = vdwg.mxu0
    %3978 = vmatprep.subr.bf16.mxu0 0
    %3979 = vmatpush1.bf16.msra.mxu0 %v3737
    %3980 = vmatprep.subr.bf16.mxu0 0
    %3981 = vmatpush1.bf16.msra.mxu0 %v3738
    %3982 = vmatprep.subr.bf16.mxu0 0
    %3983 = vmatpush1.bf16.msra.mxu0 %v3739
    %3984 = vmatprep.subr.bf16.mxu0 0
    %3985 = vmatpush1.bf16.msra.mxu0 %v3740
    %3986 = vmatprep.subr.bf16.mxu0 0
    %3987 = vmatpush1.bf16.msra.mxu0 %v3741
    %3988 = vmatprep.subr.bf16.mxu0 0
    %3989 = vmatpush1.bf16.msra.mxu0 %v3742
    %3990 = vmatprep.subr.bf16.mxu0 0
    %3991 = vmatpush1.bf16.msra.mxu0 %v3743
    %3992 = vmatprep.subr.bf16.mxu0 0
    %3993 = vmatpush1.bf16.msra.mxu0 %v3744
    %3994 = vmatprep.subr.bf16.mxu0 0
    %3995 = vmatpush1.bf16.msra.mxu0 %v3745
    %3996 = vmatprep.subr.bf16.mxu0 0
    %3997 = vmatpush1.bf16.msra.mxu0 %v3746
    %3998 = vmatprep.subr.bf16.mxu0 0
    %3999 = vmatpush1.bf16.msra.mxu0 %v3747
    %4000 = vmatprep.subr.bf16.mxu0 0
    %4001 = vmatpush1.bf16.msra.mxu0 %v3748
    %4002 = vmatprep.subr.bf16.mxu0 0
    %4003 = vmatpush1.bf16.msra.mxu0 %v3749
    %4004 = vmatprep.subr.bf16.mxu0 0
    %4005 = vmatpush1.bf16.msra.mxu0 %v3750
    %4006 = vmatprep.subr.bf16.mxu0 0
    %4007 = vmatpush1.bf16.msra.mxu0 %v3751
    %4008 = vmatprep.subr.bf16.mxu0 0
    %4009 = vmatpush1.bf16.msra.mxu0 %v3752
    %4010 = vmatprep.mubr.bf16.mxu0 %v2311
    %4011 = vmatmul.mubr.bf16.gmra.mrb[0].mxu0 %v2310
    %v4012 = vpop.f32.mrb[0].mxu0
    %v4013 = vadd.f32 %v3916, %v4012
    %v4014 = vpop.f32.mrb[0].mxu0
    %v4015 = vpop.f32.mrb[0].mxu0
    %v4016 = vadd.f32 %v3919, %v4015
    %v4017 = vpop.f32.mrb[0].mxu0
    %4018 = vmatprep.mubr.bf16.mxu0 %v2313
    %4019 = vmatmul.mubr.bf16.gmra.mrb[0].mxu0 %v2312
    %v4020 = vpop.f32.mrb[0].mxu0
    %v4021 = vadd.f32 %v3924, %v4020
    %v4022 = vpop.f32.mrb[0].mxu0
    %v4023 = vpop.f32.mrb[0].mxu0
    %v4024 = vadd.f32 %v3927, %v4023
    %v4025 = vpop.f32.mrb[0].mxu0
    %4026 = vmatprep.mubr.bf16.mxu0 %v2315
    %4027 = vmatmul.mubr.bf16.gmra.mrb[0].mxu0 %v2314
    %v4028 = vpop.f32.mrb[0].mxu0
    %v4029 = vadd.f32 %v3932, %v4028
    %v4030 = vpop.f32.mrb[0].mxu0
    %v4031 = vpop.f32.mrb[0].mxu0
    %v4032 = vadd.f32 %v3935, %v4031
    %v4033 = vpop.f32.mrb[0].mxu0
    %4034 = vmatprep.mubr.bf16.mxu0 %v2317
    %4035 = vmatmul.mubr.bf16.gmra.mrb[0].mxu0 %v2316
    %v4036 = vpop.f32.mrb[0].mxu0
    %v4037 = vadd.f32 %v3940, %v4036
    %v4038 = vpop.f32.mrb[0].mxu0
    %v4039 = vpop.f32.mrb[0].mxu0
    %v4040 = vadd.f32 %v3943, %v4039
    %v4041 = vpop.f32.mrb[0].mxu0
    %4042 = vmatprep.mubr.bf16.mxu0 %v2319
    %4043 = vmatmul.mubr.bf16.gmra.mrb[0].mxu0 %v2318
    %v4044 = vpop.f32.mrb[0].mxu0
    %v4045 = vadd.f32 %v3948, %v4044
    %v4046 = vpop.f32.mrb[0].mxu0
    %v4047 = vpop.f32.mrb[0].mxu0
    %v4048 = vadd.f32 %v3951, %v4047
    %v4049 = vpop.f32.mrb[0].mxu0
    %4050 = vmatprep.mubr.bf16.mxu0 %v2321
    %4051 = vmatmul.mubr.bf16.gmra.mrb[0].mxu0 %v2320
    %v4052 = vpop.f32.mrb[0].mxu0
    %v4053 = vadd.f32 %v3956, %v4052
    %v4054 = vpop.f32.mrb[0].mxu0
    %v4055 = vpop.f32.mrb[0].mxu0
    %v4056 = vadd.f32 %v3959, %v4055
    %v4057 = vpop.f32.mrb[0].mxu0
    %4058 = vmatprep.mubr.bf16.mxu0 %v2323
    %4059 = vmatmul.mubr.bf16.gmra.mrb[0].mxu0 %v2322
    %v4060 = vpop.f32.mrb[0].mxu0
    %v4061 = vadd.f32 %v3964, %v4060
    %v4062 = vpop.f32.mrb[0].mxu0
    %v4063 = vpop.f32.mrb[0].mxu0
    %v4064 = vadd.f32 %v3967, %v4063
    %v4065 = vpop.f32.mrb[0].mxu0
    %4066 = vmatprep.mubr.bf16.mxu0 %v2325
    %4067 = vmatmul.mubr.bf16.gmra.mrb[0].mxu0 %v2324
    %v4068 = vpop.f32.mrb[0].mxu0
    %v4069 = vadd.f32 %v3972, %v4068
    %v4070 = vpop.f32.mrb[0].mxu0
    %v4071 = vpop.f32.mrb[0].mxu0
    %v4072 = vadd.f32 %v3975, %v4071
    %v4073 = vpop.f32.mrb[0].mxu0
    %4074 = vdwg.mxu0
    %4075 = vmatprep.subr.bf16.mxu0 0
    %4076 = vmatpush1.bf16.msra.mxu0 %v3753
    %4077 = vmatprep.subr.bf16.mxu0 0
    %4078 = vmatpush1.bf16.msra.mxu0 %v3754
    %4079 = vmatprep.subr.bf16.mxu0 0
    %4080 = vmatpush1.bf16.msra.mxu0 %v3755
    %4081 = vmatprep.subr.bf16.mxu0 0
    %4082 = vmatpush1.bf16.msra.mxu0 %v3756
    %4083 = vmatprep.subr.bf16.mxu0 0
    %4084 = vmatpush1.bf16.msra.mxu0 %v3757
    %4085 = vmatprep.subr.bf16.mxu0 0
    %4086 = vmatpush1.bf16.msra.mxu0 %v3758
    %4087 = vmatprep.subr.bf16.mxu0 0
    %4088 = vmatpush1.bf16.msra.mxu0 %v3759
    %4089 = vmatprep.subr.bf16.mxu0 0
    %4090 = vmatpush1.bf16.msra.mxu0 %v3760
    %4091 = vmatprep.subr.bf16.mxu0 0
    %4092 = vmatpush1.bf16.msra.mxu0 %v3761
    %4093 = vmatprep.subr.bf16.mxu0 0
    %4094 = vmatpush1.bf16.msra.mxu0 %v3762
    %4095 = vmatprep.subr.bf16.mxu0 0
    %4096 = vmatpush1.bf16.msra.mxu0 %v3763
    %4097 = vmatprep.subr.bf16.mxu0 0
    %4098 = vmatpush1.bf16.msra.mxu0 %v3764
    %4099 = vmatprep.subr.bf16.mxu0 0
    %4100 = vmatpush1.bf16.msra.mxu0 %v3765
    %4101 = vmatprep.subr.bf16.mxu0 0
    %4102 = vmatpush1.bf16.msra.mxu0 %v3766
    %4103 = vmatprep.subr.bf16.mxu0 0
    %4104 = vmatpush1.bf16.msra.mxu0 %v3767
    %4105 = vmatprep.subr.bf16.mxu0 0
    %4106 = vmatpush1.bf16.msra.mxu0 %v3768
    %4107 = vmatprep.mubr.bf16.mxu0 %v2423
    %4108 = vmatmul.mubr.bf16.gmra.mrb[0].mxu0 %v2422
    %v4109 = vpop.f32.mrb[0].mxu0
    %v4110 = vadd.f32 %v4013, %v4109
    %v4111 = vpop.f32.mrb[0].mxu0
    %v4112 = vpop.f32.mrb[0].mxu0
    %v4113 = vadd.f32 %v4016, %v4112
    %v4114 = vpop.f32.mrb[0].mxu0
    %4115 = vmatprep.mubr.bf16.mxu0 %v2425
    %4116 = vmatmul.mubr.bf16.gmra.mrb[0].mxu0 %v2424
    %v4117 = vpop.f32.mrb[0].mxu0
    %v4118 = vadd.f32 %v4021, %v4117
    %v4119 = vpop.f32.mrb[0].mxu0
    %v4120 = vpop.f32.mrb[0].mxu0
    %v4121 = vadd.f32 %v4024, %v4120
    %v4122 = vpop.f32.mrb[0].mxu0
    %4123 = vmatprep.mubr.bf16.mxu0 %v2427
    %4124 = vmatmul.mubr.bf16.gmra.mrb[0].mxu0 %v2426
    %v4125 = vpop.f32.mrb[0].mxu0
    %v4126 = vadd.f32 %v4029, %v4125
    %v4127 = vpop.f32.mrb[0].mxu0
    %v4128 = vpop.f32.mrb[0].mxu0
    %v4129 = vadd.f32 %v4032, %v4128
    %v4130 = vpop.f32.mrb[0].mxu0
    %4131 = vmatprep.mubr.bf16.mxu0 %v2429
    %4132 = vmatmul.mubr.bf16.gmra.mrb[0].mxu0 %v2428
    %v4133 = vpop.f32.mrb[0].mxu0
    %v4134 = vadd.f32 %v4037, %v4133
    %v4135 = vpop.f32.mrb[0].mxu0
    %v4136 = vpop.f32.mrb[0].mxu0
    %v4137 = vadd.f32 %v4040, %v4136
    %v4138 = vpop.f32.mrb[0].mxu0
    %4139 = vmatprep.mubr.bf16.mxu0 %v2431
    %4140 = vmatmul.mubr.bf16.gmra.mrb[0].mxu0 %v2430
    %v4141 = vpop.f32.mrb[0].mxu0
    %v4142 = vadd.f32 %v4045, %v4141
    %v4143 = vpop.f32.mrb[0].mxu0
    %v4144 = vpop.f32.mrb[0].mxu0
    %v4145 = vadd.f32 %v4048, %v4144
    %v4146 = vpop.f32.mrb[0].mxu0
    %4147 = vmatprep.mubr.bf16.mxu0 %v2433
    %4148 = vmatmul.mubr.bf16.gmra.mrb[0].mxu0 %v2432
    %v4149 = vpop.f32.mrb[0].mxu0
    %v4150 = vadd.f32 %v4053, %v4149
    %v4151 = vpop.f32.mrb[0].mxu0
    %v4152 = vpop.f32.mrb[0].mxu0
    %v4153 = vadd.f32 %v4056, %v4152
    %v4154 = vpop.f32.mrb[0].mxu0
    %4155 = vmatprep.mubr.bf16.mxu0 %v2435
    %4156 = vmatmul.mubr.bf16.gmra.mrb[0].mxu0 %v2434
    %v4157 = vpop.f32.mrb[0].mxu0
    %v4158 = vadd.f32 %v4061, %v4157
    %v4159 = vpop.f32.mrb[0].mxu0
    %v4160 = vpop.f32.mrb[0].mxu0
    %v4161 = vadd.f32 %v4064, %v4160
    %v4162 = vpop.f32.mrb[0].mxu0
    %4163 = vmatprep.mubr.bf16.mxu0 %v2437
    %4164 = vmatmul.mubr.bf16.gmra.mrb[0].mxu0 %v2436
    %v4165 = vpop.f32.mrb[0].mxu0
    %v4166 = vadd.f32 %v4069, %v4165
    %v4167 = vpop.f32.mrb[0].mxu0
    %v4168 = vpop.f32.mrb[0].mxu0
    %v4169 = vadd.f32 %v4072, %v4168
    %v4170 = vpop.f32.mrb[0].mxu0
    %4171 = vdwg.mxu0
    %4172 = vmatprep.subr.bf16.mxu0 0
    %4173 = vmatpush1.bf16.msra.mxu0 %v3769
    %4174 = vmatprep.subr.bf16.mxu0 0
    %4175 = vmatpush1.bf16.msra.mxu0 %v3770
    %4176 = vmatprep.subr.bf16.mxu0 0
    %4177 = vmatpush1.bf16.msra.mxu0 %v3771
    %4178 = vmatprep.subr.bf16.mxu0 0
    %4179 = vmatpush1.bf16.msra.mxu0 %v3772
    %4180 = vmatprep.subr.bf16.mxu0 0
    %4181 = vmatpush1.bf16.msra.mxu0 %v3773
    %4182 = vmatprep.subr.bf16.mxu0 0
    %4183 = vmatpush1.bf16.msra.mxu0 %v3774
    %4184 = vmatprep.subr.bf16.mxu0 0
    %4185 = vmatpush1.bf16.msra.mxu0 %v3775
    %4186 = vmatprep.subr.bf16.mxu0 0
    %4187 = vmatpush1.bf16.msra.mxu0 %v3776
    %4188 = vmatprep.subr.bf16.mxu0 0
    %4189 = vmatpush1.bf16.msra.mxu0 %v3777
    %4190 = vmatprep.subr.bf16.mxu0 0
    %4191 = vmatpush1.bf16.msra.mxu0 %v3778
    %4192 = vmatprep.subr.bf16.mxu0 0
    %4193 = vmatpush1.bf16.msra.mxu0 %v3779
    %4194 = vmatprep.subr.bf16.mxu0 0
    %4195 = vmatpush1.bf16.msra.mxu0 %v3780
    %4196 = vmatprep.subr.bf16.mxu0 0
    %4197 = vmatpush1.bf16.msra.mxu0 %v3781
    %4198 = vmatprep.subr.bf16.mxu0 0
    %4199 = vmatpush1.bf16.msra.mxu0 %v3782
    %4200 = vmatprep.subr.bf16.mxu0 0
    %4201 = vmatpush1.bf16.msra.mxu0 %v3783
    %4202 = vmatprep.subr.bf16.mxu0 0
    %4203 = vmatpush1.bf16.msra.mxu0 %v3784
    %4204 = vmatprep.mubr.bf16.mxu0 %v2535
    %4205 = vmatmul.mubr.bf16.gmra.mrb[0].mxu0 %v2534
    %v4206 = vpop.f32.mrb[0].mxu0
    %v4207 = vadd.f32 %v4110, %v4206
    %v4208 = vpop.f32.mrb[0].mxu0
    %v4209 = vpop.f32.mrb[0].mxu0
    %v4210 = vadd.f32 %v4113, %v4209
    %v4211 = vpop.f32.mrb[0].mxu0
    %4212 = vmatprep.mubr.bf16.mxu0 %v2537
    %4213 = vmatmul.mubr.bf16.gmra.mrb[0].mxu0 %v2536
    %v4214 = vpop.f32.mrb[0].mxu0
    %v4215 = vadd.f32 %v4118, %v4214
    %v4216 = vpop.f32.mrb[0].mxu0
    %v4217 = vpop.f32.mrb[0].mxu0
    %v4218 = vadd.f32 %v4121, %v4217
    %v4219 = vpop.f32.mrb[0].mxu0
    %4220 = vmatprep.mubr.bf16.mxu0 %v2539
    %4221 = vmatmul.mubr.bf16.gmra.mrb[0].mxu0 %v2538
    %v4222 = vpop.f32.mrb[0].mxu0
    %v4223 = vadd.f32 %v4126, %v4222
    %v4224 = vpop.f32.mrb[0].mxu0
    %v4225 = vpop.f32.mrb[0].mxu0
    %v4226 = vadd.f32 %v4129, %v4225
    %v4227 = vpop.f32.mrb[0].mxu0
    %4228 = vmatprep.mubr.bf16.mxu0 %v2541
    %4229 = vmatmul.mubr.bf16.gmra.mrb[0].mxu0 %v2540
    %v4230 = vpop.f32.mrb[0].mxu0
    %v4231 = vadd.f32 %v4134, %v4230
    %v4232 = vpop.f32.mrb[0].mxu0
    %v4233 = vpop.f32.mrb[0].mxu0
    %v4234 = vadd.f32 %v4137, %v4233
    %v4235 = vpop.f32.mrb[0].mxu0
    %4236 = vmatprep.mubr.bf16.mxu0 %v2543
    %4237 = vmatmul.mubr.bf16.gmra.mrb[0].mxu0 %v2542
    %v4238 = vpop.f32.mrb[0].mxu0
    %v4239 = vadd.f32 %v4142, %v4238
    %v4240 = vpop.f32.mrb[0].mxu0
    %v4241 = vpop.f32.mrb[0].mxu0
    %v4242 = vadd.f32 %v4145, %v4241
    %v4243 = vpop.f32.mrb[0].mxu0
    %4244 = vmatprep.mubr.bf16.mxu0 %v2545
    %4245 = vmatmul.mubr.bf16.gmra.mrb[0].mxu0 %v2544
    %v4246 = vpop.f32.mrb[0].mxu0
    %v4247 = vadd.f32 %v4150, %v4246
    %v4248 = vpop.f32.mrb[0].mxu0
    %v4249 = vpop.f32.mrb[0].mxu0
    %v4250 = vadd.f32 %v4153, %v4249
    %v4251 = vpop.f32.mrb[0].mxu0
    %4252 = vmatprep.mubr.bf16.mxu0 %v2547
    %4253 = vmatmul.mubr.bf16.gmra.mrb[0].mxu0 %v2546
    %v4254 = vpop.f32.mrb[0].mxu0
    %v4255 = vadd.f32 %v4158, %v4254
    %v4256 = vpop.f32.mrb[0].mxu0
    %v4257 = vpop.f32.mrb[0].mxu0
    %v4258 = vadd.f32 %v4161, %v4257
    %v4259 = vpop.f32.mrb[0].mxu0
    %4260 = vmatprep.mubr.bf16.mxu0 %v2549
    %4261 = vmatmul.mubr.bf16.gmra.mrb[0].mxu0 %v2548
    %v4262 = vpop.f32.mrb[0].mxu0
    %v4263 = vadd.f32 %v4166, %v4262
    %v4264 = vpop.f32.mrb[0].mxu0
    %v4265 = vpop.f32.mrb[0].mxu0
    %v4266 = vadd.f32 %v4169, %v4265
    %v4267 = vpop.f32.mrb[0].mxu0
    %4268 = vdwg.mxu0
    %4269 = vmatprep.subr.bf16.mxu0 0
    %4270 = vmatpush1.bf16.msra.mxu0 %v3785
    %4271 = vmatprep.subr.bf16.mxu0 0
    %4272 = vmatpush1.bf16.msra.mxu0 %v3786
    %4273 = vmatprep.subr.bf16.mxu0 0
    %4274 = vmatpush1.bf16.msra.mxu0 %v3787
    %4275 = vmatprep.subr.bf16.mxu0 0
    %4276 = vmatpush1.bf16.msra.mxu0 %v3788
    %4277 = vmatprep.subr.bf16.mxu0 0
    %4278 = vmatpush1.bf16.msra.mxu0 %v3789
    %4279 = vmatprep.subr.bf16.mxu0 0
    %4280 = vmatpush1.bf16.msra.mxu0 %v3790
    %4281 = vmatprep.subr.bf16.mxu0 0
    %4282 = vmatpush1.bf16.msra.mxu0 %v3791
    %4283 = vmatprep.subr.bf16.mxu0 0
    %4284 = vmatpush1.bf16.msra.mxu0 %v3792
    %4285 = vmatprep.subr.bf16.mxu0 0
    %4286 = vmatpush1.bf16.msra.mxu0 %v3793
    %4287 = vmatprep.subr.bf16.mxu0 0
    %4288 = vmatpush1.bf16.msra.mxu0 %v3794
    %4289 = vmatprep.subr.bf16.mxu0 0
    %4290 = vmatpush1.bf16.msra.mxu0 %v3795
    %4291 = vmatprep.subr.bf16.mxu0 0
    %4292 = vmatpush1.bf16.msra.mxu0 %v3796
    %4293 = vmatprep.subr.bf16.mxu0 0
    %4294 = vmatpush1.bf16.msra.mxu0 %v3797
    %4295 = vmatprep.subr.bf16.mxu0 0
    %4296 = vmatpush1.bf16.msra.mxu0 %v3798
    %4297 = vmatprep.subr.bf16.mxu0 0
    %4298 = vmatpush1.bf16.msra.mxu0 %v3799
    %4299 = vmatprep.subr.bf16.mxu0 0
    %4300 = vmatpush1.bf16.msra.mxu0 %v3800
    %4301 = vmatprep.mubr.bf16.mxu0 %v2551
    %4302 = vmatmul.mubr.bf16.gmra.mrb[0].mxu0 %v2550
    %v4303 = vpop.f32.mrb[0].mxu0
    %v4304 = vadd.f32 %v4207, %v4303
    %v4305 = vpop.f32.mrb[0].mxu0
    %v4306 = vpop.f32.mrb[0].mxu0
    %v4307 = vadd.f32 %v4210, %v4306
    %v4308 = vpop.f32.mrb[0].mxu0
    %4309 = vmatprep.mubr.bf16.mxu0 %v2553
    %4310 = vmatmul.mubr.bf16.gmra.mrb[0].mxu0 %v2552
    %v4311 = vpop.f32.mrb[0].mxu0
    %v4312 = vadd.f32 %v4215, %v4311
    %v4313 = vpop.f32.mrb[0].mxu0
    %v4314 = vpop.f32.mrb[0].mxu0
    %v4315 = vadd.f32 %v4218, %v4314
    %v4316 = vpop.f32.mrb[0].mxu0
    %4317 = vmatprep.mubr.bf16.mxu0 %v2555
    %4318 = vmatmul.mubr.bf16.gmra.mrb[0].mxu0 %v2554
    %v4319 = vpop.f32.mrb[0].mxu0
    %v4320 = vadd.f32 %v4223, %v4319
    %v4321 = vpop.f32.mrb[0].mxu0
    %v4322 = vpop.f32.mrb[0].mxu0
    %v4323 = vadd.f32 %v4226, %v4322
    %v4324 = vpop.f32.mrb[0].mxu0
    %4325 = vmatprep.mubr.bf16.mxu0 %v2557
    %4326 = vmatmul.mubr.bf16.gmra.mrb[0].mxu0 %v2556
    %v4327 = vpop.f32.mrb[0].mxu0
    %v4328 = vadd.f32 %v4231, %v4327
    %v4329 = vpop.f32.mrb[0].mxu0
    %v4330 = vpop.f32.mrb[0].mxu0
    %v4331 = vadd.f32 %v4234, %v4330
    %v4332 = vpop.f32.mrb[0].mxu0
    %4333 = vmatprep.mubr.bf16.mxu0 %v2559
    %4334 = vmatmul.mubr.bf16.gmra.mrb[0].mxu0 %v2558
    %v4335 = vpop.f32.mrb[0].mxu0
    %v4336 = vadd.f32 %v4239, %v4335
    %v4337 = vpop.f32.mrb[0].mxu0
    %v4338 = vpop.f32.mrb[0].mxu0
    %v4339 = vadd.f32 %v4242, %v4338
    %v4340 = vpop.f32.mrb[0].mxu0
    %4341 = vmatprep.mubr.bf16.mxu0 %v2561
    %4342 = vmatmul.mubr.bf16.gmra.mrb[0].mxu0 %v2560
    %v4343 = vpop.f32.mrb[0].mxu0
    %v4344 = vadd.f32 %v4247, %v4343
    %v4345 = vpop.f32.mrb[0].mxu0
    %v4346 = vpop.f32.mrb[0].mxu0
    %v4347 = vadd.f32 %v4250, %v4346
    %v4348 = vpop.f32.mrb[0].mxu0
    %4349 = vmatprep.mubr.bf16.mxu0 %v2563
    %4350 = vmatmul.mubr.bf16.gmra.mrb[0].mxu0 %v2562
    %v4351 = vpop.f32.mrb[0].mxu0
    %v4352 = vadd.f32 %v4255, %v4351
    %v4353 = vpop.f32.mrb[0].mxu0
    %v4354 = vpop.f32.mrb[0].mxu0
    %v4355 = vadd.f32 %v4258, %v4354
    %v4356 = vpop.f32.mrb[0].mxu0
    %4357 = vmatprep.mubr.bf16.mxu0 %v2565
    %4358 = vmatmul.mubr.bf16.gmra.mrb[0].mxu0 %v2564
    %v4359 = vpop.f32.mrb[0].mxu0
    %v4360 = vadd.f32 %v4263, %v4359
    %v4361 = vpop.f32.mrb[0].mxu0
    %v4362 = vpop.f32.mrb[0].mxu0
    %v4363 = vadd.f32 %v4266, %v4362
    %v4364 = vpop.f32.mrb[0].mxu0
    %4365 = vdwg.mxu0
    %v4366 = vld [vmem:[%s8] sm:$0x3]
    %v4368 = vlaneseq
    %v4369 = vshrl.u32 %v4368, 7
    %v4370 = vsub.s32 0, %v4369
    %v4371 = vrot.slane %v4366, %v4370
    %v4372 = vlaneseq
    %v4373 = vshrl.u32 %v4372, 7
    %v4374 = vsub.s32 1, %v4373
    %v4375 = vrot.slane %v4366, %v4374
    %v4378 = vmul.f32 %v3179, %v4371
    %v4379 = vmul.f32 %v4304, %v4375
    %v4380 = vmul.f32 %v3182, %v4371
    %v4381 = vmul.f32 %v4307, %v4375
    %v4382 = vmul.f32 %v3187, %v4371
    %v4383 = vmul.f32 %v4312, %v4375
    %v4384 = vmul.f32 %v3190, %v4371
    %v4385 = vmul.f32 %v4315, %v4375
    %v4386 = vmul.f32 %v3195, %v4371
    %v4387 = vmul.f32 %v4320, %v4375
    %v4388 = vmul.f32 %v3198, %v4371
    %v4389 = vmul.f32 %v4323, %v4375
    %v4390 = vmul.f32 %v3203, %v4371
    %v4391 = vmul.f32 %v4328, %v4375
    %v4392 = vmul.f32 %v3206, %v4371
    %v4393 = vmul.f32 %v4331, %v4375
    %v4394 = vmul.f32 %v3211, %v4371
    %v4395 = vmul.f32 %v4336, %v4375
    %v4396 = vmul.f32 %v3214, %v4371
    %v4397 = vmul.f32 %v4339, %v4375
    %v4398 = vmul.f32 %v3219, %v4371
    %v4399 = vmul.f32 %v4344, %v4375
    %v4400 = vmul.f32 %v3222, %v4371
    %v4401 = vmul.f32 %v4347, %v4375
    %v4402 = vmul.f32 %v3227, %v4371
    %v4403 = vmul.f32 %v4352, %v4375
    %v4404 = vmul.f32 %v3230, %v4371
    %v4405 = vmul.f32 %v4355, %v4375
    %v4406 = vmul.f32 %v3235, %v4371
    %v4407 = vmul.f32 %v4360, %v4375
    %v4408 = vmul.f32 %v3238, %v4371
    %v4409 = vmul.f32 %v4363, %v4375
    %v4410 = vld [vmem:[%s9] sm:$0x3]
    %v4412 = vlaneseq
    %v4413 = vshrl.u32 %v4412, 7
    %v4414 = vsub.s32 0, %v4413
    %v4415 = vrot.slane %v4410, %v4414
    %v4416 = vlaneseq
    %v4417 = vshrl.u32 %v4416, 7
    %v4418 = vsub.s32 1, %v4417
    %v4419 = vrot.slane %v4410, %v4418
    %v4422 = vadd.f32 %v4378, %v4415
    %v4423 = vadd.f32 %v4379, %v4419
    %v4424 = vadd.f32 %v4380, %v4415
    %v4425 = vadd.f32 %v4381, %v4419
    %v4426 = vadd.f32 %v4382, %v4415
    %v4427 = vadd.f32 %v4383, %v4419
    %v4428 = vadd.f32 %v4384, %v4415
    %v4429 = vadd.f32 %v4385, %v4419
    %v4430 = vadd.f32 %v4386, %v4415
    %v4431 = vadd.f32 %v4387, %v4419
    %v4432 = vadd.f32 %v4388, %v4415
    %v4433 = vadd.f32 %v4389, %v4419
    %v4434 = vadd.f32 %v4390, %v4415
    %v4435 = vadd.f32 %v4391, %v4419
    %v4436 = vadd.f32 %v4392, %v4415
    %v4437 = vadd.f32 %v4393, %v4419
    %v4438 = vadd.f32 %v4394, %v4415
    %v4439 = vadd.f32 %v4395, %v4419
    %v4440 = vadd.f32 %v4396, %v4415
    %v4441 = vadd.f32 %v4397, %v4419
    %v4442 = vadd.f32 %v4398, %v4415
    %v4443 = vadd.f32 %v4399, %v4419
    %v4444 = vadd.f32 %v4400, %v4415
    %v4445 = vadd.f32 %v4401, %v4419
    %v4446 = vadd.f32 %v4402, %v4415
    %v4447 = vadd.f32 %v4403, %v4419
    %v4448 = vadd.f32 %v4404, %v4415
    %v4449 = vadd.f32 %v4405, %v4419
    %v4450 = vadd.f32 %v4406, %v4415
    %v4451 = vadd.f32 %v4407, %v4419
    %v4452 = vadd.f32 %v4408, %v4415
    %v4453 = vadd.f32 %v4409, %v4419
    %v4454 = vmax.f32 %v4422, 0.0
    %v4455 = vmax.f32 %v4423, 0.0
    %v4456 = vmax.f32 %v4424, 0.0
    %v4457 = vmax.f32 %v4425, 0.0
    %v4458 = vmax.f32 %v4426, 0.0
    %v4459 = vmax.f32 %v4427, 0.0
    %v4460 = vmax.f32 %v4428, 0.0
    %v4461 = vmax.f32 %v4429, 0.0
    %v4462 = vmax.f32 %v4430, 0.0
    %v4463 = vmax.f32 %v4431, 0.0
    %v4464 = vmax.f32 %v4432, 0.0
    %v4465 = vmax.f32 %v4433, 0.0
    %v4466 = vmax.f32 %v4434, 0.0
    %v4467 = vmax.f32 %v4435, 0.0
    %v4468 = vmax.f32 %v4436, 0.0
    %v4469 = vmax.f32 %v4437, 0.0
    %v4470 = vmax.f32 %v4438, 0.0
    %v4471 = vmax.f32 %v4439, 0.0
    %v4472 = vmax.f32 %v4440, 0.0
    %v4473 = vmax.f32 %v4441, 0.0
    %v4474 = vmax.f32 %v4442, 0.0
    %v4475 = vmax.f32 %v4443, 0.0
    %v4476 = vmax.f32 %v4444, 0.0
    %v4477 = vmax.f32 %v4445, 0.0
    %v4478 = vmax.f32 %v4446, 0.0
    %v4479 = vmax.f32 %v4447, 0.0
    %v4480 = vmax.f32 %v4448, 0.0
    %v4481 = vmax.f32 %v4449, 0.0
    %v4482 = vmax.f32 %v4450, 0.0
    %v4483 = vmax.f32 %v4451, 0.0
    %v4484 = vmax.f32 %v4452, 0.0
    %v4485 = vmax.f32 %v4453, 0.0
    %v4486 = vadd.f32 %v4454, %v293
    %v4487 = vadd.f32 %v4455, %v295
    %v4488 = vadd.f32 %v4456, %v297
    %v4489 = vadd.f32 %v4457, %v299
    %v4490 = vadd.f32 %v4458, %v303
    %v4491 = vadd.f32 %v4459, %v305
    %v4492 = vadd.f32 %v4460, %v307
    %v4493 = vadd.f32 %v4461, %v309
    %v4494 = vadd.f32 %v4462, %v313
    %v4495 = vadd.f32 %v4463, %v315
    %v4496 = vadd.f32 %v4464, %v317
    %v4497 = vadd.f32 %v4465, %v319
    %v4498 = vadd.f32 %v4466, %v323
    %v4499 = vadd.f32 %v4467, %v325
    %v4500 = vadd.f32 %v4468, %v327
    %v4501 = vadd.f32 %v4469, %v329
    %v4502 = vadd.f32 %v4470, %v333
    %v4503 = vadd.f32 %v4471, %v335
    %v4504 = vadd.f32 %v4472, %v337
    %v4505 = vadd.f32 %v4473, %v339
    %v4506 = vadd.f32 %v4474, %v343
    %v4507 = vadd.f32 %v4475, %v345
    %v4508 = vadd.f32 %v4476, %v347
    %v4509 = vadd.f32 %v4477, %v349
    %v4510 = vadd.f32 %v4478, %v353
    %v4511 = vadd.f32 %v4479, %v355
    %v4512 = vadd.f32 %v4480, %v357
    %v4513 = vadd.f32 %v4481, %v359
    %v4514 = vadd.f32 %v4482, %v363
    %v4515 = vadd.f32 %v4483, %v365
    %v4516 = vadd.f32 %v4484, %v367
    %v4517 = vadd.f32 %v4485, %v369
    %v4518 = vmax.f32 %v4486, 0.0
    %v4519 = vmax.f32 %v4487, 0.0
    %v4520 = vmax.f32 %v4488, 0.0
    %v4521 = vmax.f32 %v4489, 0.0
    %v4522 = vmax.f32 %v4490, 0.0
    %v4523 = vmax.f32 %v4491, 0.0
    %v4524 = vmax.f32 %v4492, 0.0
    %v4525 = vmax.f32 %v4493, 0.0
    %v4526 = vmax.f32 %v4494, 0.0
    %v4527 = vmax.f32 %v4495, 0.0
    %v4528 = vmax.f32 %v4496, 0.0
    %v4529 = vmax.f32 %v4497, 0.0
    %v4530 = vmax.f32 %v4498, 0.0
    %v4531 = vmax.f32 %v4499, 0.0
    %v4532 = vmax.f32 %v4500, 0.0
    %v4533 = vmax.f32 %v4501, 0.0
    %v4534 = vmax.f32 %v4502, 0.0
    %v4535 = vmax.f32 %v4503, 0.0
    %v4536 = vmax.f32 %v4504, 0.0
    %v4537 = vmax.f32 %v4505, 0.0
    %v4538 = vmax.f32 %v4506, 0.0
    %v4539 = vmax.f32 %v4507, 0.0
    %v4540 = vmax.f32 %v4508, 0.0
    %v4541 = vmax.f32 %v4509, 0.0
    %v4542 = vmax.f32 %v4510, 0.0
    %v4543 = vmax.f32 %v4511, 0.0
    %v4544 = vmax.f32 %v4512, 0.0
    %v4545 = vmax.f32 %v4513, 0.0
    %v4546 = vmax.f32 %v4514, 0.0
    %v4547 = vmax.f32 %v4515, 0.0
    %v4548 = vmax.f32 %v4516, 0.0
    %v4549 = vmax.f32 %v4517, 0.0
    %v4550 = vpack.c.bf16 %v4520, %v4518
    %v4551 = vpack.c.bf16 %v4521, %v4519
    %v4552 = vpack.c.bf16 %v4524, %v4522
    %v4553 = vpack.c.bf16 %v4525, %v4523
    %v4554 = vpack.c.bf16 %v4528, %v4526
    %v4555 = vpack.c.bf16 %v4529, %v4527
    %v4556 = vpack.c.bf16 %v4532, %v4530
    %v4557 = vpack.c.bf16 %v4533, %v4531
    %v4558 = vpack.c.bf16 %v4536, %v4534
    %v4559 = vpack.c.bf16 %v4537, %v4535
    %v4560 = vpack.c.bf16 %v4540, %v4538
    %v4561 = vpack.c.bf16 %v4541, %v4539
    %v4562 = vpack.c.bf16 %v4544, %v4542
    %v4563 = vpack.c.bf16 %v4545, %v4543
    %v4564 = vpack.c.bf16 %v4548, %v4546
    %v4565 = vpack.c.bf16 %v4549, %v4547
    %v4582 = vunpack.c.l.b16 %v4550
    %v4583 = vunpack.c.l.b16 %v4551
    %v4584 = vunpack.c.h.b16 %v4550
    %v4585 = vunpack.c.h.b16 %v4551
    %v4586 = vunpack.c.l.b16 %v4552
    %v4587 = vunpack.c.l.b16 %v4553
    %v4588 = vunpack.c.h.b16 %v4552
    %v4589 = vunpack.c.h.b16 %v4553
    %v4590 = vunpack.c.l.b16 %v4554
    %v4591 = vunpack.c.l.b16 %v4555
    %v4592 = vunpack.c.h.b16 %v4554
    %v4593 = vunpack.c.h.b16 %v4555
    %v4594 = vunpack.c.l.b16 %v4556
    %v4595 = vunpack.c.l.b16 %v4557
    %v4596 = vunpack.c.h.b16 %v4556
    %v4597 = vunpack.c.h.b16 %v4557
    %v4598 = vunpack.c.l.b16 %v4558
    %v4599 = vunpack.c.l.b16 %v4559
    %v4600 = vunpack.c.h.b16 %v4558
    %v4601 = vunpack.c.h.b16 %v4559
    %v4602 = vunpack.c.l.b16 %v4560
    %v4603 = vunpack.c.l.b16 %v4561
    %v4604 = vunpack.c.h.b16 %v4560
    %v4605 = vunpack.c.h.b16 %v4561
    %v4606 = vunpack.c.l.b16 %v4562
    %v4607 = vunpack.c.l.b16 %v4563
    %v4608 = vunpack.c.h.b16 %v4562
    %v4609 = vunpack.c.h.b16 %v4563
    %v4610 = vunpack.c.l.b16 %v4564
    %v4611 = vunpack.c.l.b16 %v4565
    %v4612 = vunpack.c.h.b16 %v4564
    %v4613 = vunpack.c.h.b16 %v4565
    %v4614 = vpack.c.b16 %v4583, %v4582
    %v4615 = vpack.c.b16 %v4585, %v4584
    %v4616 = vpack.c.b16 %v4587, %v4586
    %v4617 = vpack.c.b16 %v4589, %v4588
    %v4618 = vpack.c.b16 %v4591, %v4590
    %v4619 = vpack.c.b16 %v4593, %v4592
    %v4620 = vpack.c.b16 %v4595, %v4594
    %v4621 = vpack.c.b16 %v4597, %v4596
    %v4622 = vpack.c.b16 %v4599, %v4598
    %v4623 = vpack.c.b16 %v4601, %v4600
    %v4624 = vpack.c.b16 %v4603, %v4602
    %v4625 = vpack.c.b16 %v4605, %v4604
    %v4626 = vpack.c.b16 %v4607, %v4606
    %v4627 = vpack.c.b16 %v4609, %v4608
    %v4628 = vpack.c.b16 %v4611, %v4610
    %v4629 = vpack.c.b16 %v4613, %v4612
    %4646 = vst [vmem:[%s12] sm:$0xff] %v4614
    %4647 = vst [vmem:[%s12 + $0x8] sm:$0xff] %v4615
    %4648 = vst [vmem:[%s12 + $0x10] sm:$0xff] %v4616
    %4649 = vst [vmem:[%s12 + $0x18] sm:$0xff] %v4617
    %4650 = vst [vmem:[%s12 + $0x20] sm:$0xff] %v4618
    %4651 = vst [vmem:[%s12 + $0x28] sm:$0xff] %v4619
    %4652 = vst [vmem:[%s12 + $0x30] sm:$0xff] %v4620
    %4653 = vst [vmem:[%s12 + $0x38] sm:$0xff] %v4621
    %4654 = vst [vmem:[%s12 + $0x40] sm:$0xff] %v4622
    %4655 = vst [vmem:[%s12 + $0x48] sm:$0xff] %v4623
    %4656 = vst [vmem:[%s12 + $0x50] sm:$0xff] %v4624
    %4657 = vst [vmem:[%s12 + $0x58] sm:$0xff] %v4625
    %4658 = vst [vmem:[%s12 + $0x60] sm:$0xff] %v4626
    %4659 = vst [vmem:[%s12 + $0x68] sm:$0xff] %v4627
    %4660 = vst [vmem:[%s12 + $0x70] sm:$0xff] %v4628
    %4661 = vst [vmem:[%s12 + $0x78] sm:$0xff] %v4629
    // Predicated region
    $region70: #{_lambda_.3} parent=1 // pred_check
      _
    $region71: #{_lambda_.3} parent=1 // pred_check_branch
      %4663 = sbr.rel (0) target = $region73
    $region72: #{_lambda_.3} parent=1 // pred_region
      _
    $region73: #{_lambda_.3} parent=1 // pred_fallthru
      _
    // Predicated region
    $region74: #{_lambda_.3} parent=1 // pred_check
      _
    $region75: #{_lambda_.3} parent=1 // pred_check_branch
      %4665 = sbr.rel (0) target = $region77
    $region76: #{_lambda_.3} parent=1 // pred_region
      _
    $region77: #{_lambda_.3} parent=1 // pred_fallthru
      _
    %4666 = vsyncpa [#allocation3], 1
    %4667 = vsyncpa [#allocation5], 1
    %4668 = vsyncpa [#allocation8], 1

// kernel: _lambda_.4
$region0: #{_lambda_.4}
  #allocation0 [shape = 'u32[]', space=smem, size = 0x4, offset = 0x4, fixed_abs, tag = 'smem constant byte address 0x4 - core index']
  #allocation1 [shape = 'u32[144,128]{1,0:T(1,128)}', space=vmem, size = 0x12000, scoped, tag = 'internal scratch']
  %s0 = inlined_call_operand.vmem [shape: bf16[128,256], index: 0, kind: input, shape index: {}]
  %s1 = inlined_call_operand.vmem [shape: s32[128,1], index: 1, kind: input, shape index: {}]
  %s2 = inlined_call_operand.vmem [shape: bf16[768,128], index: 2, kind: input, shape index: {}]
  %s3 = inlined_call_operand.vmem [shape: bf16[1280,128], index: 3, kind: input, shape index: {}]
  %s4 = inlined_call_operand.vmem [shape: f32[1,256], index: 4, kind: input, shape index: {}]
  %s5 = inlined_call_operand.vmem [shape: f32[1,256], index: 5, kind: input, shape index: {}]
  %s6 = inlined_call_operand.vmem [shape: bf16[768,128], index: 6, kind: input, shape index: {}]
  %s7 = inlined_call_operand.vmem [shape: bf16[1280,128], index: 7, kind: input, shape index: {}]
  %s8 = inlined_call_operand.vmem [shape: f32[1,256], index: 8, kind: input, shape index: {}]
  %s9 = inlined_call_operand.vmem [shape: f32[1,256], index: 9, kind: input, shape index: {}]
  %s10 = inlined_call_operand.hbm [shape: bf16[256,256], index: 10, kind: input, shape index: {}]
  %s11 = inlined_call_operand.vmem [shape: f32[1,256], index: 11, kind: input, shape index: {}]
  %s12 = inlined_call_operand.vmem [shape: bf16[128,256], index: 12, kind: output, shape index: {}]
  %s13 = sld [smem:[#allocation0]]
  $region62: #{_lambda_.4} parent=0
    _
  %s15 = ssub.s32 1, %s13
  %s16 = scalar_select 0, %s15, %s13
  $region1: #{_lambda_.4} parent=0
    #allocation2 [shape = 'u8[131072]{0}', space=vmem, size = 0x20000, scoped, tag = 'input window, operand 10, single buffered']
    #allocation3 [shape = 's32[1]{0}', space=sflag, size = 0x4, scoped, tag = 'scoped memory for _lambda_.4']
    %17 = vsyncpa [#allocation3], 0
    // Predicated region
    $region2: #{_lambda_.4} parent=1 // pred_check
      _
    $region3: #{_lambda_.4} parent=1 // pred_check_branch
      %19 = sbr.rel (0) target = $region5
    $region4: #{_lambda_.4} parent=1 // pred_region
      _
    $region5: #{_lambda_.4} parent=1 // pred_fallthru
      _
    // Predicated region
    $region6: #{_lambda_.4} parent=1 // pred_check
      _
    $region7: #{_lambda_.4} parent=1 // pred_check_branch
      %21 = sbr.rel (0) target = $region9
    $region8: #{_lambda_.4} parent=1 // pred_region
      _
    $region9: #{_lambda_.4} parent=1 // pred_fallthru
      _
    // Predicated region
    $region10: #{_lambda_.4} parent=1 // pred_check
      _
    $region11: #{_lambda_.4} parent=1 // pred_check_branch
      %23 = sbr.rel (0) target = $region13
    $region12: #{_lambda_.4} parent=1 // pred_region
      _
    $region13: #{_lambda_.4} parent=1 // pred_fallthru
      _
    // Predicated region
    $region14: #{_lambda_.4} parent=1 // pred_check
      _
    $region15: #{_lambda_.4} parent=1 // pred_check_branch
      %25 = sbr.rel (0) target = $region17
    $region16: #{_lambda_.4} parent=1 // pred_region
      _
    $region17: #{_lambda_.4} parent=1 // pred_fallthru
      _
    // Predicated region
    $region18: #{_lambda_.4} parent=1 // pred_check
      _
    $region19: #{_lambda_.4} parent=1 // pred_check_branch
      %27 = sbr.rel (0) target = $region21
    $region20: #{_lambda_.4} parent=1 // pred_region
      _
    $region21: #{_lambda_.4} parent=1 // pred_fallthru
      _
    // Predicated region
    $region22: #{_lambda_.4} parent=1 // pred_check
      _
    $region23: #{_lambda_.4} parent=1 // pred_check_branch
      %29 = sbr.rel (0) target = $region25
    $region24: #{_lambda_.4} parent=1 // pred_region
      _
    $region25: #{_lambda_.4} parent=1 // pred_fallthru
      _
    // Predicated region
    $region26: #{_lambda_.4} parent=1 // pred_check
      _
    $region27: #{_lambda_.4} parent=1 // pred_check_branch
      %31 = sbr.rel (0) target = $region29
    $region28: #{_lambda_.4} parent=1 // pred_region
      _
    $region29: #{_lambda_.4} parent=1 // pred_fallthru
      _
    // Predicated region
    $region30: #{_lambda_.4} parent=1 // pred_check
      _
    $region31: #{_lambda_.4} parent=1 // pred_check_branch
      %33 = sbr.rel (0) target = $region33
    $region32: #{_lambda_.4} parent=1 // pred_region
      _
    $region33: #{_lambda_.4} parent=1 // pred_fallthru
      _
    // Predicated region
    $region34: #{_lambda_.4} parent=1 // pred_check
      _
    $region35: #{_lambda_.4} parent=1 // pred_check_branch
      %35 = sbr.rel (0) target = $region37
    $region36: #{_lambda_.4} parent=1 // pred_region
      _
    $region37: #{_lambda_.4} parent=1 // pred_fallthru
      _
    // Predicated region
    $region38: #{_lambda_.4} parent=1 // pred_check
      _
    $region39: #{_lambda_.4} parent=1 // pred_check_branch
      %37 = sbr.rel (0) target = $region41
    $region40: #{_lambda_.4} parent=1 // pred_region
      _
    $region41: #{_lambda_.4} parent=1 // pred_fallthru
      _
    // Predicated region
    $region42: #{_lambda_.4} parent=1 // pred_check
      _
    $region43: #{_lambda_.4} parent=1 // pred_check_branch
      %39 = sbr.rel (0) target = $region45
    $region44: #{_lambda_.4} parent=1 // pred_region
      %s41 = ssub.s32 4096, 4096
      %42 = vsyncadd [#allocation3], %s41
      %s43 = sshll.u32 [#allocation2], 4
      %s44 = int_to_ptr.vmem [resolvable:$true] %s43
      %49 = dma.hbm_to_vmem [thread:$0]  %s10, 4096, %s44, [#allocation3], 128, 128, 8
    $region45: #{_lambda_.4} parent=1 // pred_fallthru
      _
    // Predicated region
    $region46: #{_lambda_.4} parent=1 // pred_check
      _
    $region47: #{_lambda_.4} parent=1 // pred_check_branch
      %51 = sbr.rel (0) target = $region49
    $region48: #{_lambda_.4} parent=1 // pred_region
      _
    $region49: #{_lambda_.4} parent=1 // pred_fallthru
      _
    // Predicated region
    $region50: #{_lambda_.4} parent=1 // pred_check
      _
    $region51: #{_lambda_.4} parent=1 // pred_check_branch
      %53 = sbr.rel (0) target = $region53
    $region52: #{_lambda_.4} parent=1 // pred_region
      %54 = dma.done [#allocation3], 4096
    $region53: #{_lambda_.4} parent=1 // pred_fallthru
      _
    %v56 = vld [vmem:[%s0] sm:$0xff]
    %v57 = vld [vmem:[%s0 + $0x8] sm:$0xff]
    %v58 = vld [vmem:[%s0 + $0x10] sm:$0xff]
    %v59 = vld [vmem:[%s0 + $0x18] sm:$0xff]
    %v60 = vld [vmem:[%s0 + $0x20] sm:$0xff]
    %v61 = vld [vmem:[%s0 + $0x28] sm:$0xff]
    %v62 = vld [vmem:[%s0 + $0x30] sm:$0xff]
    %v63 = vld [vmem:[%s0 + $0x38] sm:$0xff]
    %v64 = vld [vmem:[%s0 + $0x40] sm:$0xff]
    %v65 = vld [vmem:[%s0 + $0x48] sm:$0xff]
    %v66 = vld [vmem:[%s0 + $0x50] sm:$0xff]
    %v67 = vld [vmem:[%s0 + $0x58] sm:$0xff]
    %v68 = vld [vmem:[%s0 + $0x60] sm:$0xff]
    %v69 = vld [vmem:[%s0 + $0x68] sm:$0xff]
    %v70 = vld [vmem:[%s0 + $0x70] sm:$0xff]
    %v71 = vld [vmem:[%s0 + $0x78] sm:$0xff]
    %v72 = vunpack.c.l.bf16 %v56
    %v73 = vunpack.c.h.bf16 %v56
    %v74 = vunpack.c.l.bf16 %v57
    %v75 = vunpack.c.h.bf16 %v57
    %v76 = vunpack.c.l.bf16 %v58
    %v77 = vunpack.c.h.bf16 %v58
    %v78 = vunpack.c.l.bf16 %v59
    %v79 = vunpack.c.h.bf16 %v59
    %v80 = vunpack.c.l.bf16 %v60
    %v81 = vunpack.c.h.bf16 %v60
    %v82 = vunpack.c.l.bf16 %v61
    %v83 = vunpack.c.h.bf16 %v61
    %v84 = vunpack.c.l.bf16 %v62
    %v85 = vunpack.c.h.bf16 %v62
    %v86 = vunpack.c.l.bf16 %v63
    %v87 = vunpack.c.h.bf16 %v63
    %v88 = vunpack.c.l.bf16 %v64
    %v89 = vunpack.c.h.bf16 %v64
    %v90 = vunpack.c.l.bf16 %v65
    %v91 = vunpack.c.h.bf16 %v65
    %v92 = vunpack.c.l.bf16 %v66
    %v93 = vunpack.c.h.bf16 %v66
    %v94 = vunpack.c.l.bf16 %v67
    %v95 = vunpack.c.h.bf16 %v67
    %v96 = vunpack.c.l.bf16 %v68
    %v97 = vunpack.c.h.bf16 %v68
    %v98 = vunpack.c.l.bf16 %v69
    %v99 = vunpack.c.h.bf16 %v69
    %v100 = vunpack.c.l.bf16 %v70
    %v101 = vunpack.c.h.bf16 %v70
    %v102 = vunpack.c.l.bf16 %v71
    %v103 = vunpack.c.h.bf16 %v71
    %v104 = vld [vmem:[%s1] sm:$0xff]
    %v105 = vld [vmem:[%s1 + $0x8] sm:$0xff]
    %v106 = vld [vmem:[%s1 + $0x10] sm:$0xff]
    %v107 = vld [vmem:[%s1 + $0x18] sm:$0xff]
    %v108 = vld [vmem:[%s1 + $0x20] sm:$0xff]
    %v109 = vld [vmem:[%s1 + $0x28] sm:$0xff]
    %v110 = vld [vmem:[%s1 + $0x30] sm:$0xff]
    %v111 = vld [vmem:[%s1 + $0x38] sm:$0xff]
    %v112 = vld [vmem:[%s1 + $0x40] sm:$0xff]
    %v113 = vld [vmem:[%s1 + $0x48] sm:$0xff]
    %v114 = vld [vmem:[%s1 + $0x50] sm:$0xff]
    %v115 = vld [vmem:[%s1 + $0x58] sm:$0xff]
    %v116 = vld [vmem:[%s1 + $0x60] sm:$0xff]
    %v117 = vld [vmem:[%s1 + $0x68] sm:$0xff]
    %v118 = vld [vmem:[%s1 + $0x70] sm:$0xff]
    %v119 = vld [vmem:[%s1 + $0x78] sm:$0xff]
    %v120 = vld [vmem:[#allocation2] sm:$0xff]
    %v121 = vld [vmem:[#allocation2 + $0x8] sm:$0xff]
    %v122 = vld [vmem:[#allocation2 + $0x10] sm:$0xff]
    %v123 = vld [vmem:[#allocation2 + $0x18] sm:$0xff]
    %v124 = vld [vmem:[#allocation2 + $0x20] sm:$0xff]
    %v125 = vld [vmem:[#allocation2 + $0x28] sm:$0xff]
    %v126 = vld [vmem:[#allocation2 + $0x30] sm:$0xff]
    %v127 = vld [vmem:[#allocation2 + $0x38] sm:$0xff]
    %v128 = vld [vmem:[#allocation2 + $0x40] sm:$0xff]
    %v129 = vld [vmem:[#allocation2 + $0x48] sm:$0xff]
    %v130 = vld [vmem:[#allocation2 + $0x50] sm:$0xff]
    %v131 = vld [vmem:[#allocation2 + $0x58] sm:$0xff]
    %v132 = vld [vmem:[#allocation2 + $0x60] sm:$0xff]
    %v133 = vld [vmem:[#allocation2 + $0x68] sm:$0xff]
    %v134 = vld [vmem:[#allocation2 + $0x70] sm:$0xff]
    %v135 = vld [vmem:[#allocation2 + $0x78] sm:$0xff]
    %v136 = vld [vmem:[#allocation2 + $0x80] sm:$0xff]
    %v137 = vld [vmem:[#allocation2 + $0x88] sm:$0xff]
    %v138 = vld [vmem:[#allocation2 + $0x90] sm:$0xff]
    %v139 = vld [vmem:[#allocation2 + $0x98] sm:$0xff]
    %v140 = vld [vmem:[#allocation2 + $0xa0] sm:$0xff]
    %v141 = vld [vmem:[#allocation2 + $0xa8] sm:$0xff]
    %v142 = vld [vmem:[#allocation2 + $0xb0] sm:$0xff]
    %v143 = vld [vmem:[#allocation2 + $0xb8] sm:$0xff]
    %v144 = vld [vmem:[#allocation2 + $0xc0] sm:$0xff]
    %v145 = vld [vmem:[#allocation2 + $0xc8] sm:$0xff]
    %v146 = vld [vmem:[#allocation2 + $0xd0] sm:$0xff]
    %v147 = vld [vmem:[#allocation2 + $0xd8] sm:$0xff]
    %v148 = vld [vmem:[#allocation2 + $0xe0] sm:$0xff]
    %v149 = vld [vmem:[#allocation2 + $0xe8] sm:$0xff]
    %v150 = vld [vmem:[#allocation2 + $0xf0] sm:$0xff]
    %v151 = vld [vmem:[#allocation2 + $0xf8] sm:$0xff]
    %v152 = vld [vmem:[%s11] sm:$0x3]
    %v154 = vlaneseq
    %v155 = vshrl.u32 %v154, 7
    %v156 = vsub.s32 0, %v155
    %v157 = vrot.slane %v152, %v156
    %v158 = vlaneseq
    %v159 = vshrl.u32 %v158, 7
    %v160 = vsub.s32 1, %v159
    %v161 = vrot.slane %v152, %v160
    %v180 = vunpack.c.l.b16 %v56
    %v181 = vunpack.c.h.b16 %v56
    %v182 = vunpack.c.l.b16 %v57
    %v183 = vunpack.c.h.b16 %v57
    %v184 = vunpack.c.l.b16 %v58
    %v185 = vunpack.c.h.b16 %v58
    %v186 = vunpack.c.l.b16 %v59
    %v187 = vunpack.c.h.b16 %v59
    %v188 = vunpack.c.l.b16 %v60
    %v189 = vunpack.c.h.b16 %v60
    %v190 = vunpack.c.l.b16 %v61
    %v191 = vunpack.c.h.b16 %v61
    %v192 = vunpack.c.l.b16 %v62
    %v193 = vunpack.c.h.b16 %v62
    %v194 = vunpack.c.l.b16 %v63
    %v195 = vunpack.c.h.b16 %v63
    %v196 = vunpack.c.l.b16 %v64
    %v197 = vunpack.c.h.b16 %v64
    %v198 = vunpack.c.l.b16 %v65
    %v199 = vunpack.c.h.b16 %v65
    %v200 = vunpack.c.l.b16 %v66
    %v201 = vunpack.c.h.b16 %v66
    %v202 = vunpack.c.l.b16 %v67
    %v203 = vunpack.c.h.b16 %v67
    %v204 = vunpack.c.l.b16 %v68
    %v205 = vunpack.c.h.b16 %v68
    %v206 = vunpack.c.l.b16 %v69
    %v207 = vunpack.c.h.b16 %v69
    %v208 = vunpack.c.l.b16 %v70
    %v209 = vunpack.c.h.b16 %v70
    %v210 = vunpack.c.l.b16 %v71
    %v211 = vunpack.c.h.b16 %v71
    %v212 = vpack.c.b16 %v182, %v180
    %v213 = vpack.c.b16 %v183, %v181
    %v214 = vpack.c.b16 %v186, %v184
    %v215 = vpack.c.b16 %v187, %v185
    %v216 = vpack.c.b16 %v190, %v188
    %v217 = vpack.c.b16 %v191, %v189
    %v218 = vpack.c.b16 %v194, %v192
    %v219 = vpack.c.b16 %v195, %v193
    %v220 = vpack.c.b16 %v198, %v196
    %v221 = vpack.c.b16 %v199, %v197
    %v222 = vpack.c.b16 %v202, %v200
    %v223 = vpack.c.b16 %v203, %v201
    %v224 = vpack.c.b16 %v206, %v204
    %v225 = vpack.c.b16 %v207, %v205
    %v226 = vpack.c.b16 %v210, %v208
    %v227 = vpack.c.b16 %v211, %v209
    %v276 = vunpack.c.l.b16 %v120
    %v277 = vunpack.c.h.b16 %v120
    %v278 = vunpack.c.l.b16 %v121
    %v279 = vunpack.c.h.b16 %v121
    %v280 = vunpack.c.l.b16 %v122
    %v281 = vunpack.c.h.b16 %v122
    %v282 = vunpack.c.l.b16 %v123
    %v283 = vunpack.c.h.b16 %v123
    %v284 = vunpack.c.l.b16 %v124
    %v285 = vunpack.c.h.b16 %v124
    %v286 = vunpack.c.l.b16 %v125
    %v287 = vunpack.c.h.b16 %v125
    %v288 = vunpack.c.l.b16 %v126
    %v289 = vunpack.c.h.b16 %v126
    %v290 = vunpack.c.l.b16 %v127
    %v291 = vunpack.c.h.b16 %v127
    %v292 = vunpack.c.l.b16 %v128
    %v293 = vunpack.c.h.b16 %v128
    %v294 = vunpack.c.l.b16 %v129
    %v295 = vunpack.c.h.b16 %v129
    %v296 = vunpack.c.l.b16 %v130
    %v297 = vunpack.c.h.b16 %v130
    %v298 = vunpack.c.l.b16 %v131
    %v299 = vunpack.c.h.b16 %v131
    %v300 = vunpack.c.l.b16 %v132
    %v301 = vunpack.c.h.b16 %v132
    %v302 = vunpack.c.l.b16 %v133
    %v303 = vunpack.c.h.b16 %v133
    %v304 = vunpack.c.l.b16 %v134
    %v305 = vunpack.c.h.b16 %v134
    %v306 = vunpack.c.l.b16 %v135
    %v307 = vunpack.c.h.b16 %v135
    %v308 = vunpack.c.l.b16 %v136
    %v309 = vunpack.c.h.b16 %v136
    %v310 = vunpack.c.l.b16 %v137
    %v311 = vunpack.c.h.b16 %v137
    %v312 = vunpack.c.l.b16 %v138
    %v313 = vunpack.c.h.b16 %v138
    %v314 = vunpack.c.l.b16 %v139
    %v315 = vunpack.c.h.b16 %v139
    %v316 = vunpack.c.l.b16 %v140
    %v317 = vunpack.c.h.b16 %v140
    %v318 = vunpack.c.l.b16 %v141
    %v319 = vunpack.c.h.b16 %v141
    %v320 = vunpack.c.l.b16 %v142
    %v321 = vunpack.c.h.b16 %v142
    %v322 = vunpack.c.l.b16 %v143
    %v323 = vunpack.c.h.b16 %v143
    %v324 = vunpack.c.l.b16 %v144
    %v325 = vunpack.c.h.b16 %v144
    %v326 = vunpack.c.l.b16 %v145
    %v327 = vunpack.c.h.b16 %v145
    %v328 = vunpack.c.l.b16 %v146
    %v329 = vunpack.c.h.b16 %v146
    %v330 = vunpack.c.l.b16 %v147
    %v331 = vunpack.c.h.b16 %v147
    %v332 = vunpack.c.l.b16 %v148
    %v333 = vunpack.c.h.b16 %v148
    %v334 = vunpack.c.l.b16 %v149
    %v335 = vunpack.c.h.b16 %v149
    %v336 = vunpack.c.l.b16 %v150
    %v337 = vunpack.c.h.b16 %v150
    %v338 = vunpack.c.l.b16 %v151
    %v339 = vunpack.c.h.b16 %v151
    %v340 = vpack.c.b16 %v278, %v276
    %v341 = vpack.c.b16 %v279, %v277
    %v342 = vpack.c.b16 %v282, %v280
    %v343 = vpack.c.b16 %v283, %v281
    %v344 = vpack.c.b16 %v286, %v284
    %v345 = vpack.c.b16 %v287, %v285
    %v346 = vpack.c.b16 %v290, %v288
    %v347 = vpack.c.b16 %v291, %v289
    %v348 = vpack.c.b16 %v294, %v292
    %v349 = vpack.c.b16 %v295, %v293
    %v350 = vpack.c.b16 %v298, %v296
    %v351 = vpack.c.b16 %v299, %v297
    %v352 = vpack.c.b16 %v302, %v300
    %v353 = vpack.c.b16 %v303, %v301
    %v354 = vpack.c.b16 %v306, %v304
    %v355 = vpack.c.b16 %v307, %v305
    %v356 = vpack.c.b16 %v310, %v308
    %v357 = vpack.c.b16 %v311, %v309
    %v358 = vpack.c.b16 %v314, %v312
    %v359 = vpack.c.b16 %v315, %v313
    %v360 = vpack.c.b16 %v318, %v316
    %v361 = vpack.c.b16 %v319, %v317
    %v362 = vpack.c.b16 %v322, %v320
    %v363 = vpack.c.b16 %v323, %v321
    %v364 = vpack.c.b16 %v326, %v324
    %v365 = vpack.c.b16 %v327, %v325
    %v366 = vpack.c.b16 %v330, %v328
    %v367 = vpack.c.b16 %v331, %v329
    %v368 = vpack.c.b16 %v334, %v332
    %v369 = vpack.c.b16 %v335, %v333
    %v370 = vpack.c.b16 %v338, %v336
    %v371 = vpack.c.b16 %v339, %v337
    %404 = vmatprep.subr.bf16.mxu0 %v341
    %405 = vmatpush1.bf16.msra.mxu0 %v340
    %406 = vmatprep.subr.bf16.mxu0 %v343
    %407 = vmatpush1.bf16.msra.mxu0 %v342
    %408 = vmatprep.subr.bf16.mxu0 %v345
    %409 = vmatpush1.bf16.msra.mxu0 %v344
    %410 = vmatprep.subr.bf16.mxu0 %v347
    %411 = vmatpush1.bf16.msra.mxu0 %v346
    %412 = vmatprep.subr.bf16.mxu0 %v349
    %413 = vmatpush1.bf16.msra.mxu0 %v348
    %414 = vmatprep.subr.bf16.mxu0 %v351
    %415 = vmatpush1.bf16.msra.mxu0 %v350
    %416 = vmatprep.subr.bf16.mxu0 %v353
    %417 = vmatpush1.bf16.msra.mxu0 %v352
    %418 = vmatprep.subr.bf16.mxu0 %v355
    %419 = vmatpush1.bf16.msra.mxu0 %v354
    %420 = vmatprep.subr.bf16.mxu0 %v357
    %421 = vmatpush1.bf16.msra.mxu0 %v356
    %422 = vmatprep.subr.bf16.mxu0 %v359
    %423 = vmatpush1.bf16.msra.mxu0 %v358
    %424 = vmatprep.subr.bf16.mxu0 %v361
    %425 = vmatpush1.bf16.msra.mxu0 %v360
    %426 = vmatprep.subr.bf16.mxu0 %v363
    %427 = vmatpush1.bf16.msra.mxu0 %v362
    %428 = vmatprep.subr.bf16.mxu0 %v365
    %429 = vmatpush1.bf16.msra.mxu0 %v364
    %430 = vmatprep.subr.bf16.mxu0 %v367
    %431 = vmatpush1.bf16.msra.mxu0 %v366
    %432 = vmatprep.subr.bf16.mxu0 %v369
    %433 = vmatpush1.bf16.msra.mxu0 %v368
    %434 = vmatprep.subr.bf16.mxu0 %v371
    %435 = vmatpush1.bf16.msra.mxu0 %v370
    %436 = vmatprep.mubr.bf16.mxu0 %v213
    %437 = vmatmul.mubr.bf16.gmra.mrb[0].mxu0 %v212
    %v438 = vpop.f32.mrb[0].mxu0
    %v439 = vadd.f32 %v157, %v438
    %v440 = vpop.f32.mrb[0].mxu0
    %v441 = vadd.f32 %v161, %v440
    %v442 = vpop.f32.mrb[0].mxu0
    %v443 = vadd.f32 %v157, %v442
    %v444 = vpop.f32.mrb[0].mxu0
    %v445 = vadd.f32 %v161, %v444
    %446 = vmatprep.mubr.bf16.mxu0 %v215
    %447 = vmatmul.mubr.bf16.gmra.mrb[0].mxu0 %v214
    %v448 = vpop.f32.mrb[0].mxu0
    %v449 = vadd.f32 %v157, %v448
    %v450 = vpop.f32.mrb[0].mxu0
    %v451 = vadd.f32 %v161, %v450
    %v452 = vpop.f32.mrb[0].mxu0
    %v453 = vadd.f32 %v157, %v452
    %v454 = vpop.f32.mrb[0].mxu0
    %v455 = vadd.f32 %v161, %v454
    %456 = vmatprep.mubr.bf16.mxu0 %v217
    %457 = vmatmul.mubr.bf16.gmra.mrb[0].mxu0 %v216
    %v458 = vpop.f32.mrb[0].mxu0
    %v459 = vadd.f32 %v157, %v458
    %v460 = vpop.f32.mrb[0].mxu0
    %v461 = vadd.f32 %v161, %v460
    %v462 = vpop.f32.mrb[0].mxu0
    %v463 = vadd.f32 %v157, %v462
    %v464 = vpop.f32.mrb[0].mxu0
    %v465 = vadd.f32 %v161, %v464
    %466 = vmatprep.mubr.bf16.mxu0 %v219
    %467 = vmatmul.mubr.bf16.gmra.mrb[0].mxu0 %v218
    %v468 = vpop.f32.mrb[0].mxu0
    %v469 = vadd.f32 %v157, %v468
    %v470 = vpop.f32.mrb[0].mxu0
    %v471 = vadd.f32 %v161, %v470
    %v472 = vpop.f32.mrb[0].mxu0
    %v473 = vadd.f32 %v157, %v472
    %v474 = vpop.f32.mrb[0].mxu0
    %v475 = vadd.f32 %v161, %v474
    %476 = vmatprep.mubr.bf16.mxu0 %v221
    %477 = vmatmul.mubr.bf16.gmra.mrb[0].mxu0 %v220
    %v478 = vpop.f32.mrb[0].mxu0
    %v479 = vadd.f32 %v157, %v478
    %v480 = vpop.f32.mrb[0].mxu0
    %v481 = vadd.f32 %v161, %v480
    %v482 = vpop.f32.mrb[0].mxu0
    %v483 = vadd.f32 %v157, %v482
    %v484 = vpop.f32.mrb[0].mxu0
    %v485 = vadd.f32 %v161, %v484
    %486 = vmatprep.mubr.bf16.mxu0 %v223
    %487 = vmatmul.mubr.bf16.gmra.mrb[0].mxu0 %v222
    %v488 = vpop.f32.mrb[0].mxu0
    %v489 = vadd.f32 %v157, %v488
    %v490 = vpop.f32.mrb[0].mxu0
    %v491 = vadd.f32 %v161, %v490
    %v492 = vpop.f32.mrb[0].mxu0
    %v493 = vadd.f32 %v157, %v492
    %v494 = vpop.f32.mrb[0].mxu0
    %v495 = vadd.f32 %v161, %v494
    %496 = vmatprep.mubr.bf16.mxu0 %v225
    %497 = vmatmul.mubr.bf16.gmra.mrb[0].mxu0 %v224
    %v498 = vpop.f32.mrb[0].mxu0
    %v499 = vadd.f32 %v157, %v498
    %v500 = vpop.f32.mrb[0].mxu0
    %v501 = vadd.f32 %v161, %v500
    %v502 = vpop.f32.mrb[0].mxu0
    %v503 = vadd.f32 %v157, %v502
    %v504 = vpop.f32.mrb[0].mxu0
    %v505 = vadd.f32 %v161, %v504
    %506 = vmatprep.mubr.bf16.mxu0 %v227
    %507 = vmatmul.mubr.bf16.gmra.mrb[0].mxu0 %v226
    %v508 = vpop.f32.mrb[0].mxu0
    %v509 = vadd.f32 %v157, %v508
    %v510 = vpop.f32.mrb[0].mxu0
    %v511 = vadd.f32 %v161, %v510
    %v512 = vpop.f32.mrb[0].mxu0
    %v513 = vadd.f32 %v157, %v512
    %v514 = vpop.f32.mrb[0].mxu0
    %v515 = vadd.f32 %v161, %v514
    %516 = vdwg.mxu0
    %vm517 = vcmp.ge.s32.totalorder %v104, 8
    %vm518 = vcmp.ge.s32.totalorder %v105, 8
    %vm519 = vcmp.ge.s32.totalorder %v106, 8
    %vm520 = vcmp.ge.s32.totalorder %v107, 8
    %vm521 = vcmp.ge.s32.totalorder %v108, 8
    %vm522 = vcmp.ge.s32.totalorder %v109, 8
    %vm523 = vcmp.ge.s32.totalorder %v110, 8
    %vm524 = vcmp.ge.s32.totalorder %v111, 8
    %vm525 = vcmp.ge.s32.totalorder %v112, 8
    %vm526 = vcmp.ge.s32.totalorder %v113, 8
    %vm527 = vcmp.ge.s32.totalorder %v114, 8
    %vm528 = vcmp.ge.s32.totalorder %v115, 8
    %vm529 = vcmp.ge.s32.totalorder %v116, 8
    %vm530 = vcmp.ge.s32.totalorder %v117, 8
    %vm531 = vcmp.ge.s32.totalorder %v118, 8
    %vm532 = vcmp.ge.s32.totalorder %v119, 8
    %v533 = vsel %vm517, 1, 0
    %v534 = vsel %vm518, 1, 0
    %v535 = vsel %vm519, 1, 0
    %v536 = vsel %vm520, 1, 0
    %v537 = vsel %vm521, 1, 0
    %v538 = vsel %vm522, 1, 0
    %v539 = vsel %vm523, 1, 0
    %v540 = vsel %vm524, 1, 0
    %v541 = vsel %vm525, 1, 0
    %v542 = vsel %vm526, 1, 0
    %v543 = vsel %vm527, 1, 0
    %v544 = vsel %vm528, 1, 0
    %v545 = vsel %vm529, 1, 0
    %v546 = vsel %vm530, 1, 0
    %v547 = vsel %vm531, 1, 0
    %v548 = vsel %vm532, 1, 0
    %549 = vset.pattern.permute.xlu0 0
    %550 = vperm.xlu0 %549, %v533
    %v551 = vpop.permute.xlu0 %550
    %552 = vset.pattern.permute.xlu0 0
    %553 = vperm.xlu0 %552, %v534
    %v554 = vpop.permute.xlu0 %553
    %555 = vset.pattern.permute.xlu0 0
    %556 = vperm.xlu0 %555, %v535
    %v557 = vpop.permute.xlu0 %556
    %558 = vset.pattern.permute.xlu0 0
    %559 = vperm.xlu0 %558, %v536
    %v560 = vpop.permute.xlu0 %559
    %561 = vset.pattern.permute.xlu0 0
    %562 = vperm.xlu0 %561, %v537
    %v563 = vpop.permute.xlu0 %562
    %564 = vset.pattern.permute.xlu0 0
    %565 = vperm.xlu0 %564, %v538
    %v566 = vpop.permute.xlu0 %565
    %567 = vset.pattern.permute.xlu0 0
    %568 = vperm.xlu0 %567, %v539
    %v569 = vpop.permute.xlu0 %568
    %570 = vset.pattern.permute.xlu0 0
    %571 = vperm.xlu0 %570, %v540
    %v572 = vpop.permute.xlu0 %571
    %573 = vset.pattern.permute.xlu0 0
    %574 = vperm.xlu0 %573, %v541
    %v575 = vpop.permute.xlu0 %574
    %576 = vset.pattern.permute.xlu0 0
    %577 = vperm.xlu0 %576, %v542
    %v578 = vpop.permute.xlu0 %577
    %579 = vset.pattern.permute.xlu0 0
    %580 = vperm.xlu0 %579, %v543
    %v581 = vpop.permute.xlu0 %580
    %582 = vset.pattern.permute.xlu0 0
    %583 = vperm.xlu0 %582, %v544
    %v584 = vpop.permute.xlu0 %583
    %585 = vset.pattern.permute.xlu0 0
    %586 = vperm.xlu0 %585, %v545
    %v587 = vpop.permute.xlu0 %586
    %588 = vset.pattern.permute.xlu0 0
    %589 = vperm.xlu0 %588, %v546
    %v590 = vpop.permute.xlu0 %589
    %591 = vset.pattern.permute.xlu0 0
    %592 = vperm.xlu0 %591, %v547
    %v593 = vpop.permute.xlu0 %592
    %594 = vset.pattern.permute.xlu0 0
    %595 = vperm.xlu0 %594, %v548
    %v596 = vpop.permute.xlu0 %595
    %vm597 = vcmp.eq.s32.totalorder %v551, 1
    %vm598 = vcmp.eq.s32.totalorder %v554, 1
    %vm599 = vcmp.eq.s32.totalorder %v557, 1
    %vm600 = vcmp.eq.s32.totalorder %v560, 1
    %vm601 = vcmp.eq.s32.totalorder %v563, 1
    %vm602 = vcmp.eq.s32.totalorder %v566, 1
    %vm603 = vcmp.eq.s32.totalorder %v569, 1
    %vm604 = vcmp.eq.s32.totalorder %v572, 1
    %vm605 = vcmp.eq.s32.totalorder %v575, 1
    %vm606 = vcmp.eq.s32.totalorder %v578, 1
    %vm607 = vcmp.eq.s32.totalorder %v581, 1
    %vm608 = vcmp.eq.s32.totalorder %v584, 1
    %vm609 = vcmp.eq.s32.totalorder %v587, 1
    %vm610 = vcmp.eq.s32.totalorder %v590, 1
    %vm611 = vcmp.eq.s32.totalorder %v593, 1
    %vm612 = vcmp.eq.s32.totalorder %v596, 1
    %v613 = vsel %vm597, %v102, 0.0
    %v614 = vsel %vm597, %v103, 0.0
    %v615 = vsel %vm598, %v72, 0.0
    %v616 = vsel %vm598, %v73, 0.0
    %v617 = vsel %vm599, %v74, 0.0
    %v618 = vsel %vm599, %v75, 0.0
    %v619 = vsel %vm600, %v76, 0.0
    %v620 = vsel %vm600, %v77, 0.0
    %v621 = vsel %vm601, %v78, 0.0
    %v622 = vsel %vm601, %v79, 0.0
    %v623 = vsel %vm602, %v80, 0.0
    %v624 = vsel %vm602, %v81, 0.0
    %v625 = vsel %vm603, %v82, 0.0
    %v626 = vsel %vm603, %v83, 0.0
    %v627 = vsel %vm604, %v84, 0.0
    %v628 = vsel %vm604, %v85, 0.0
    %v629 = vsel %vm605, %v86, 0.0
    %v630 = vsel %vm605, %v87, 0.0
    %v631 = vsel %vm606, %v88, 0.0
    %v632 = vsel %vm606, %v89, 0.0
    %v633 = vsel %vm607, %v90, 0.0
    %v634 = vsel %vm607, %v91, 0.0
    %v635 = vsel %vm608, %v92, 0.0
    %v636 = vsel %vm608, %v93, 0.0
    %v637 = vsel %vm609, %v94, 0.0
    %v638 = vsel %vm609, %v95, 0.0
    %v639 = vsel %vm610, %v96, 0.0
    %v640 = vsel %vm610, %v97, 0.0
    %v641 = vsel %vm611, %v98, 0.0
    %v642 = vsel %vm611, %v99, 0.0
    %v643 = vsel %vm612, %v100, 0.0
    %v644 = vsel %vm612, %v101, 0.0
    %v645 = vpack.c.bf16 %v615, %v613
    %v646 = vpack.c.bf16 %v616, %v614
    %v647 = vpack.c.bf16 %v619, %v617
    %v648 = vpack.c.bf16 %v620, %v618
    %v649 = vpack.c.bf16 %v623, %v621
    %v650 = vpack.c.bf16 %v624, %v622
    %v651 = vpack.c.bf16 %v627, %v625
    %v652 = vpack.c.bf16 %v628, %v626
    %v653 = vpack.c.bf16 %v631, %v629
    %v654 = vpack.c.bf16 %v632, %v630
    %v655 = vpack.c.bf16 %v635, %v633
    %v656 = vpack.c.bf16 %v636, %v634
    %v657 = vpack.c.bf16 %v639, %v637
    %v658 = vpack.c.bf16 %v640, %v638
    %v659 = vpack.c.bf16 %v643, %v641
    %v660 = vpack.c.bf16 %v644, %v642
    %v661 = vrot.slane %v72, 2
    %v662 = vrot.slane %v73, 2
    %v663 = vrot.slane %v74, 2
    %v664 = vrot.slane %v75, 2
    %v665 = vrot.slane %v76, 2
    %v666 = vrot.slane %v77, 2
    %v667 = vrot.slane %v78, 2
    %v668 = vrot.slane %v79, 2
    %v669 = vrot.slane %v80, 2
    %v670 = vrot.slane %v81, 2
    %v671 = vrot.slane %v82, 2
    %v672 = vrot.slane %v83, 2
    %v673 = vrot.slane %v84, 2
    %v674 = vrot.slane %v85, 2
    %v675 = vrot.slane %v86, 2
    %v676 = vrot.slane %v87, 2
    %v677 = vrot.slane %v88, 2
    %v678 = vrot.slane %v89, 2
    %v679 = vrot.slane %v90, 2
    %v680 = vrot.slane %v91, 2
    %v681 = vrot.slane %v92, 2
    %v682 = vrot.slane %v93, 2
    %v683 = vrot.slane %v94, 2
    %v684 = vrot.slane %v95, 2
    %v685 = vrot.slane %v96, 2
    %v686 = vrot.slane %v97, 2
    %v687 = vrot.slane %v98, 2
    %v688 = vrot.slane %v99, 2
    %v689 = vrot.slane %v100, 2
    %v690 = vrot.slane %v101, 2
    %v691 = vrot.slane %v102, 2
    %v692 = vrot.slane %v103, 2
    %v693 = vlaneseq
    %v694 = vshrl.u32 %v693, 7
    %vm695 = vcmp.lt.s32.totalorder %v694, 6
    %v696 = vsel %vm695, %v689, %v691
    %v697 = vsel %vm695, %v690, %v692
    %v698 = vsel %vm695, %v687, %v689
    %v699 = vsel %vm695, %v688, %v690
    %v700 = vsel %vm695, %v685, %v687
    %v701 = vsel %vm695, %v686, %v688
    %v702 = vsel %vm695, %v683, %v685
    %v703 = vsel %vm695, %v684, %v686
    %v704 = vsel %vm695, %v681, %v683
    %v705 = vsel %vm695, %v682, %v684
    %v706 = vsel %vm695, %v679, %v681
    %v707 = vsel %vm695, %v680, %v682
    %v708 = vsel %vm695, %v677, %v679
    %v709 = vsel %vm695, %v678, %v680
    %v710 = vsel %vm695, %v675, %v677
    %v711 = vsel %vm695, %v676, %v678
    %v712 = vsel %vm695, %v673, %v675
    %v713 = vsel %vm695, %v674, %v676
    %v714 = vsel %vm695, %v671, %v673
    %v715 = vsel %vm695, %v672, %v674
    %v716 = vsel %vm695, %v669, %v671
    %v717 = vsel %vm695, %v670, %v672
    %v718 = vsel %vm695, %v667, %v669
    %v719 = vsel %vm695, %v668, %v670
    %v720 = vsel %vm695, %v665, %v667
    %v721 = vsel %vm695, %v666, %v668
    %v722 = vsel %vm695, %v663, %v665
    %v723 = vsel %vm695, %v664, %v666
    %v724 = vsel %vm695, %v661, %v663
    %v725 = vsel %vm695, %v662, %v664
    %v726 = vsel %vm695, %v691, %v661
    %v727 = vsel %vm695, %v692, %v662
    %vm728 = vcmp.ge.s32.totalorder %v104, 6
    %vm729 = vcmp.ge.s32.totalorder %v105, 6
    %vm730 = vcmp.ge.s32.totalorder %v106, 6
    %vm731 = vcmp.ge.s32.totalorder %v107, 6
    %vm732 = vcmp.ge.s32.totalorder %v108, 6
    %vm733 = vcmp.ge.s32.totalorder %v109, 6
    %vm734 = vcmp.ge.s32.totalorder %v110, 6
    %vm735 = vcmp.ge.s32.totalorder %v111, 6
    %vm736 = vcmp.ge.s32.totalorder %v112, 6
    %vm737 = vcmp.ge.s32.totalorder %v113, 6
    %vm738 = vcmp.ge.s32.totalorder %v114, 6
    %vm739 = vcmp.ge.s32.totalorder %v115, 6
    %vm740 = vcmp.ge.s32.totalorder %v116, 6
    %vm741 = vcmp.ge.s32.totalorder %v117, 6
    %vm742 = vcmp.ge.s32.totalorder %v118, 6
    %vm743 = vcmp.ge.s32.totalorder %v119, 6
    %v744 = vsel %vm728, 1, 0
    %v745 = vsel %vm729, 1, 0
    %v746 = vsel %vm730, 1, 0
    %v747 = vsel %vm731, 1, 0
    %v748 = vsel %vm732, 1, 0
    %v749 = vsel %vm733, 1, 0
    %v750 = vsel %vm734, 1, 0
    %v751 = vsel %vm735, 1, 0
    %v752 = vsel %vm736, 1, 0
    %v753 = vsel %vm737, 1, 0
    %v754 = vsel %vm738, 1, 0
    %v755 = vsel %vm739, 1, 0
    %v756 = vsel %vm740, 1, 0
    %v757 = vsel %vm741, 1, 0
    %v758 = vsel %vm742, 1, 0
    %v759 = vsel %vm743, 1, 0
    %760 = vset.pattern.permute.xlu0 0
    %761 = vperm.xlu0 %760, %v744
    %v762 = vpop.permute.xlu0 %761
    %763 = vset.pattern.permute.xlu0 0
    %764 = vperm.xlu0 %763, %v745
    %v765 = vpop.permute.xlu0 %764
    %766 = vset.pattern.permute.xlu0 0
    %767 = vperm.xlu0 %766, %v746
    %v768 = vpop.permute.xlu0 %767
    %769 = vset.pattern.permute.xlu0 0
    %770 = vperm.xlu0 %769, %v747
    %v771 = vpop.permute.xlu0 %770
    %772 = vset.pattern.permute.xlu0 0
    %773 = vperm.xlu0 %772, %v748
    %v774 = vpop.permute.xlu0 %773
    %775 = vset.pattern.permute.xlu0 0
    %776 = vperm.xlu0 %775, %v749
    %v777 = vpop.permute.xlu0 %776
    %778 = vset.pattern.permute.xlu0 0
    %779 = vperm.xlu0 %778, %v750
    %v780 = vpop.permute.xlu0 %779
    %781 = vset.pattern.permute.xlu0 0
    %782 = vperm.xlu0 %781, %v751
    %v783 = vpop.permute.xlu0 %782
    %784 = vset.pattern.permute.xlu0 0
    %785 = vperm.xlu0 %784, %v752
    %v786 = vpop.permute.xlu0 %785
    %787 = vset.pattern.permute.xlu0 0
    %788 = vperm.xlu0 %787, %v753
    %v789 = vpop.permute.xlu0 %788
    %790 = vset.pattern.permute.xlu0 0
    %791 = vperm.xlu0 %790, %v754
    %v792 = vpop.permute.xlu0 %791
    %793 = vset.pattern.permute.xlu0 0
    %794 = vperm.xlu0 %793, %v755
    %v795 = vpop.permute.xlu0 %794
    %796 = vset.pattern.permute.xlu0 0
    %797 = vperm.xlu0 %796, %v756
    %v798 = vpop.permute.xlu0 %797
    %799 = vset.pattern.permute.xlu0 0
    %800 = vperm.xlu0 %799, %v757
    %v801 = vpop.permute.xlu0 %800
    %802 = vset.pattern.permute.xlu0 0
    %803 = vperm.xlu0 %802, %v758
    %v804 = vpop.permute.xlu0 %803
    %805 = vset.pattern.permute.xlu0 0
    %806 = vperm.xlu0 %805, %v759
    %v807 = vpop.permute.xlu0 %806
    %vm808 = vcmp.eq.s32.totalorder %v762, 1
    %vm809 = vcmp.eq.s32.totalorder %v765, 1
    %vm810 = vcmp.eq.s32.totalorder %v768, 1
    %vm811 = vcmp.eq.s32.totalorder %v771, 1
    %vm812 = vcmp.eq.s32.totalorder %v774, 1
    %vm813 = vcmp.eq.s32.totalorder %v777, 1
    %vm814 = vcmp.eq.s32.totalorder %v780, 1
    %vm815 = vcmp.eq.s32.totalorder %v783, 1
    %vm816 = vcmp.eq.s32.totalorder %v786, 1
    %vm817 = vcmp.eq.s32.totalorder %v789, 1
    %vm818 = vcmp.eq.s32.totalorder %v792, 1
    %vm819 = vcmp.eq.s32.totalorder %v795, 1
    %vm820 = vcmp.eq.s32.totalorder %v798, 1
    %vm821 = vcmp.eq.s32.totalorder %v801, 1
    %vm822 = vcmp.eq.s32.totalorder %v804, 1
    %vm823 = vcmp.eq.s32.totalorder %v807, 1
    %v824 = vsel %vm808, %v726, 0.0
    %v825 = vsel %vm808, %v727, 0.0
    %v826 = vsel %vm809, %v724, 0.0
    %v827 = vsel %vm809, %v725, 0.0
    %v828 = vsel %vm810, %v722, 0.0
    %v829 = vsel %vm810, %v723, 0.0
    %v830 = vsel %vm811, %v720, 0.0
    %v831 = vsel %vm811, %v721, 0.0
    %v832 = vsel %vm812, %v718, 0.0
    %v833 = vsel %vm812, %v719, 0.0
    %v834 = vsel %vm813, %v716, 0.0
    %v835 = vsel %vm813, %v717, 0.0
    %v836 = vsel %vm814, %v714, 0.0
    %v837 = vsel %vm814, %v715, 0.0
    %v838 = vsel %vm815, %v712, 0.0
    %v839 = vsel %vm815, %v713, 0.0
    %v840 = vsel %vm816, %v710, 0.0
    %v841 = vsel %vm816, %v711, 0.0
    %v842 = vsel %vm817, %v708, 0.0
    %v843 = vsel %vm817, %v709, 0.0
    %v844 = vsel %vm818, %v706, 0.0
    %v845 = vsel %vm818, %v707, 0.0
    %v846 = vsel %vm819, %v704, 0.0
    %v847 = vsel %vm819, %v705, 0.0
    %v848 = vsel %vm820, %v702, 0.0
    %v849 = vsel %vm820, %v703, 0.0
    %v850 = vsel %vm821, %v700, 0.0
    %v851 = vsel %vm821, %v701, 0.0
    %v852 = vsel %vm822, %v698, 0.0
    %v853 = vsel %vm822, %v699, 0.0
    %v854 = vsel %vm823, %v696, 0.0
    %v855 = vsel %vm823, %v697, 0.0
    %v856 = vpack.c.bf16 %v826, %v824
    %v857 = vpack.c.bf16 %v827, %v825
    %v858 = vpack.c.bf16 %v830, %v828
    %v859 = vpack.c.bf16 %v831, %v829
    %v860 = vpack.c.bf16 %v834, %v832
    %v861 = vpack.c.bf16 %v835, %v833
    %v862 = vpack.c.bf16 %v838, %v836
    %v863 = vpack.c.bf16 %v839, %v837
    %v864 = vpack.c.bf16 %v842, %v840
    %v865 = vpack.c.bf16 %v843, %v841
    %v866 = vpack.c.bf16 %v846, %v844
    %v867 = vpack.c.bf16 %v847, %v845
    %v868 = vpack.c.bf16 %v850, %v848
    %v869 = vpack.c.bf16 %v851, %v849
    %v870 = vpack.c.bf16 %v854, %v852
    %v871 = vpack.c.bf16 %v855, %v853
    %v872 = vrot.slane %v72, 4
    %v873 = vrot.slane %v73, 4
    %v874 = vrot.slane %v74, 4
    %v875 = vrot.slane %v75, 4
    %v876 = vrot.slane %v76, 4
    %v877 = vrot.slane %v77, 4
    %v878 = vrot.slane %v78, 4
    %v879 = vrot.slane %v79, 4
    %v880 = vrot.slane %v80, 4
    %v881 = vrot.slane %v81, 4
    %v882 = vrot.slane %v82, 4
    %v883 = vrot.slane %v83, 4
    %v884 = vrot.slane %v84, 4
    %v885 = vrot.slane %v85, 4
    %v886 = vrot.slane %v86, 4
    %v887 = vrot.slane %v87, 4
    %v888 = vrot.slane %v88, 4
    %v889 = vrot.slane %v89, 4
    %v890 = vrot.slane %v90, 4
    %v891 = vrot.slane %v91, 4
    %v892 = vrot.slane %v92, 4
    %v893 = vrot.slane %v93, 4
    %v894 = vrot.slane %v94, 4
    %v895 = vrot.slane %v95, 4
    %v896 = vrot.slane %v96, 4
    %v897 = vrot.slane %v97, 4
    %v898 = vrot.slane %v98, 4
    %v899 = vrot.slane %v99, 4
    %v900 = vrot.slane %v100, 4
    %v901 = vrot.slane %v101, 4
    %v902 = vrot.slane %v102, 4
    %v903 = vrot.slane %v103, 4
    %vm904 = vcmp.lt.s32.totalorder %v694, 4
    %v905 = vsel %vm904, %v900, %v902
    %v906 = vsel %vm904, %v901, %v903
    %v907 = vsel %vm904, %v898, %v900
    %v908 = vsel %vm904, %v899, %v901
    %v909 = vsel %vm904, %v896, %v898
    %v910 = vsel %vm904, %v897, %v899
    %v911 = vsel %vm904, %v894, %v896
    %v912 = vsel %vm904, %v895, %v897
    %v913 = vsel %vm904, %v892, %v894
    %v914 = vsel %vm904, %v893, %v895
    %v915 = vsel %vm904, %v890, %v892
    %v916 = vsel %vm904, %v891, %v893
    %v917 = vsel %vm904, %v888, %v890
    %v918 = vsel %vm904, %v889, %v891
    %v919 = vsel %vm904, %v886, %v888
    %v920 = vsel %vm904, %v887, %v889
    %v921 = vsel %vm904, %v884, %v886
    %v922 = vsel %vm904, %v885, %v887
    %v923 = vsel %vm904, %v882, %v884
    %v924 = vsel %vm904, %v883, %v885
    %v925 = vsel %vm904, %v880, %v882
    %v926 = vsel %vm904, %v881, %v883
    %v927 = vsel %vm904, %v878, %v880
    %v928 = vsel %vm904, %v879, %v881
    %v929 = vsel %vm904, %v876, %v878
    %v930 = vsel %vm904, %v877, %v879
    %v931 = vsel %vm904, %v874, %v876
    %v932 = vsel %vm904, %v875, %v877
    %v933 = vsel %vm904, %v872, %v874
    %v934 = vsel %vm904, %v873, %v875
    %v935 = vsel %vm904, %v902, %v872
    %v936 = vsel %vm904, %v903, %v873
    %vm937 = vcmp.ge.s32.totalorder %v104, 4
    %vm938 = vcmp.ge.s32.totalorder %v105, 4
    %vm939 = vcmp.ge.s32.totalorder %v106, 4
    %vm940 = vcmp.ge.s32.totalorder %v107, 4
    %vm941 = vcmp.ge.s32.totalorder %v108, 4
    %vm942 = vcmp.ge.s32.totalorder %v109, 4
    %vm943 = vcmp.ge.s32.totalorder %v110, 4
    %vm944 = vcmp.ge.s32.totalorder %v111, 4
    %vm945 = vcmp.ge.s32.totalorder %v112, 4
    %vm946 = vcmp.ge.s32.totalorder %v113, 4
    %vm947 = vcmp.ge.s32.totalorder %v114, 4
    %vm948 = vcmp.ge.s32.totalorder %v115, 4
    %vm949 = vcmp.ge.s32.totalorder %v116, 4
    %vm950 = vcmp.ge.s32.totalorder %v117, 4
    %vm951 = vcmp.ge.s32.totalorder %v118, 4
    %vm952 = vcmp.ge.s32.totalorder %v119, 4
    %v953 = vsel %vm937, 1, 0
    %v954 = vsel %vm938, 1, 0
    %v955 = vsel %vm939, 1, 0
    %v956 = vsel %vm940, 1, 0
    %v957 = vsel %vm941, 1, 0
    %v958 = vsel %vm942, 1, 0
    %v959 = vsel %vm943, 1, 0
    %v960 = vsel %vm944, 1, 0
    %v961 = vsel %vm945, 1, 0
    %v962 = vsel %vm946, 1, 0
    %v963 = vsel %vm947, 1, 0
    %v964 = vsel %vm948, 1, 0
    %v965 = vsel %vm949, 1, 0
    %v966 = vsel %vm950, 1, 0
    %v967 = vsel %vm951, 1, 0
    %v968 = vsel %vm952, 1, 0
    %969 = vset.pattern.permute.xlu0 0
    %970 = vperm.xlu0 %969, %v953
    %v971 = vpop.permute.xlu0 %970
    %972 = vset.pattern.permute.xlu0 0
    %973 = vperm.xlu0 %972, %v954
    %v974 = vpop.permute.xlu0 %973
    %975 = vset.pattern.permute.xlu0 0
    %976 = vperm.xlu0 %975, %v955
    %v977 = vpop.permute.xlu0 %976
    %978 = vset.pattern.permute.xlu0 0
    %979 = vperm.xlu0 %978, %v956
    %v980 = vpop.permute.xlu0 %979
    %981 = vset.pattern.permute.xlu0 0
    %982 = vperm.xlu0 %981, %v957
    %v983 = vpop.permute.xlu0 %982
    %984 = vset.pattern.permute.xlu0 0
    %985 = vperm.xlu0 %984, %v958
    %v986 = vpop.permute.xlu0 %985
    %987 = vset.pattern.permute.xlu0 0
    %988 = vperm.xlu0 %987, %v959
    %v989 = vpop.permute.xlu0 %988
    %990 = vset.pattern.permute.xlu0 0
    %991 = vperm.xlu0 %990, %v960
    %v992 = vpop.permute.xlu0 %991
    %993 = vset.pattern.permute.xlu0 0
    %994 = vperm.xlu0 %993, %v961
    %v995 = vpop.permute.xlu0 %994
    %996 = vset.pattern.permute.xlu0 0
    %997 = vperm.xlu0 %996, %v962
    %v998 = vpop.permute.xlu0 %997
    %999 = vset.pattern.permute.xlu0 0
    %1000 = vperm.xlu0 %999, %v963
    %v1001 = vpop.permute.xlu0 %1000
    %1002 = vset.pattern.permute.xlu0 0
    %1003 = vperm.xlu0 %1002, %v964
    %v1004 = vpop.permute.xlu0 %1003
    %1005 = vset.pattern.permute.xlu0 0
    %1006 = vperm.xlu0 %1005, %v965
    %v1007 = vpop.permute.xlu0 %1006
    %1008 = vset.pattern.permute.xlu0 0
    %1009 = vperm.xlu0 %1008, %v966
    %v1010 = vpop.permute.xlu0 %1009
    %1011 = vset.pattern.permute.xlu0 0
    %1012 = vperm.xlu0 %1011, %v967
    %v1013 = vpop.permute.xlu0 %1012
    %1014 = vset.pattern.permute.xlu0 0
    %1015 = vperm.xlu0 %1014, %v968
    %v1016 = vpop.permute.xlu0 %1015
    %vm1017 = vcmp.eq.s32.totalorder %v971, 1
    %vm1018 = vcmp.eq.s32.totalorder %v974, 1
    %vm1019 = vcmp.eq.s32.totalorder %v977, 1
    %vm1020 = vcmp.eq.s32.totalorder %v980, 1
    %vm1021 = vcmp.eq.s32.totalorder %v983, 1
    %vm1022 = vcmp.eq.s32.totalorder %v986, 1
    %vm1023 = vcmp.eq.s32.totalorder %v989, 1
    %vm1024 = vcmp.eq.s32.totalorder %v992, 1
    %vm1025 = vcmp.eq.s32.totalorder %v995, 1
    %vm1026 = vcmp.eq.s32.totalorder %v998, 1
    %vm1027 = vcmp.eq.s32.totalorder %v1001, 1
    %vm1028 = vcmp.eq.s32.totalorder %v1004, 1
    %vm1029 = vcmp.eq.s32.totalorder %v1007, 1
    %vm1030 = vcmp.eq.s32.totalorder %v1010, 1
    %vm1031 = vcmp.eq.s32.totalorder %v1013, 1
    %vm1032 = vcmp.eq.s32.totalorder %v1016, 1
    %v1033 = vsel %vm1017, %v935, 0.0
    %v1034 = vsel %vm1017, %v936, 0.0
    %v1035 = vsel %vm1018, %v933, 0.0
    %v1036 = vsel %vm1018, %v934, 0.0
    %v1037 = vsel %vm1019, %v931, 0.0
    %v1038 = vsel %vm1019, %v932, 0.0
    %v1039 = vsel %vm1020, %v929, 0.0
    %v1040 = vsel %vm1020, %v930, 0.0
    %v1041 = vsel %vm1021, %v927, 0.0
    %v1042 = vsel %vm1021, %v928, 0.0
    %v1043 = vsel %vm1022, %v925, 0.0
    %v1044 = vsel %vm1022, %v926, 0.0
    %v1045 = vsel %vm1023, %v923, 0.0
    %v1046 = vsel %vm1023, %v924, 0.0
    %v1047 = vsel %vm1024, %v921, 0.0
    %v1048 = vsel %vm1024, %v922, 0.0
    %v1049 = vsel %vm1025, %v919, 0.0
    %v1050 = vsel %vm1025, %v920, 0.0
    %v1051 = vsel %vm1026, %v917, 0.0
    %v1052 = vsel %vm1026, %v918, 0.0
    %v1053 = vsel %vm1027, %v915, 0.0
    %v1054 = vsel %vm1027, %v916, 0.0
    %v1055 = vsel %vm1028, %v913, 0.0
    %v1056 = vsel %vm1028, %v914, 0.0
    %v1057 = vsel %vm1029, %v911, 0.0
    %v1058 = vsel %vm1029, %v912, 0.0
    %v1059 = vsel %vm1030, %v909, 0.0
    %v1060 = vsel %vm1030, %v910, 0.0
    %v1061 = vsel %vm1031, %v907, 0.0
    %v1062 = vsel %vm1031, %v908, 0.0
    %v1063 = vsel %vm1032, %v905, 0.0
    %v1064 = vsel %vm1032, %v906, 0.0
    %v1065 = vpack.c.bf16 %v1035, %v1033
    %v1066 = vpack.c.bf16 %v1036, %v1034
    %v1067 = vpack.c.bf16 %v1039, %v1037
    %v1068 = vpack.c.bf16 %v1040, %v1038
    %v1069 = vpack.c.bf16 %v1043, %v1041
    %v1070 = vpack.c.bf16 %v1044, %v1042
    %v1071 = vpack.c.bf16 %v1047, %v1045
    %v1072 = vpack.c.bf16 %v1048, %v1046
    %v1073 = vpack.c.bf16 %v1051, %v1049
    %v1074 = vpack.c.bf16 %v1052, %v1050
    %v1075 = vpack.c.bf16 %v1055, %v1053
    %v1076 = vpack.c.bf16 %v1056, %v1054
    %v1077 = vpack.c.bf16 %v1059, %v1057
    %v1078 = vpack.c.bf16 %v1060, %v1058
    %v1079 = vpack.c.bf16 %v1063, %v1061
    %v1080 = vpack.c.bf16 %v1064, %v1062
    %v1081 = vrot.slane %v72, 6
    %v1082 = vrot.slane %v73, 6
    %v1083 = vrot.slane %v74, 6
    %v1084 = vrot.slane %v75, 6
    %v1085 = vrot.slane %v76, 6
    %v1086 = vrot.slane %v77, 6
    %v1087 = vrot.slane %v78, 6
    %v1088 = vrot.slane %v79, 6
    %v1089 = vrot.slane %v80, 6
    %v1090 = vrot.slane %v81, 6
    %v1091 = vrot.slane %v82, 6
    %v1092 = vrot.slane %v83, 6
    %v1093 = vrot.slane %v84, 6
    %v1094 = vrot.slane %v85, 6
    %v1095 = vrot.slane %v86, 6
    %v1096 = vrot.slane %v87, 6
    %v1097 = vrot.slane %v88, 6
    %v1098 = vrot.slane %v89, 6
    %v1099 = vrot.slane %v90, 6
    %v1100 = vrot.slane %v91, 6
    %v1101 = vrot.slane %v92, 6
    %v1102 = vrot.slane %v93, 6
    %v1103 = vrot.slane %v94, 6
    %v1104 = vrot.slane %v95, 6
    %v1105 = vrot.slane %v96, 6
    %v1106 = vrot.slane %v97, 6
    %v1107 = vrot.slane %v98, 6
    %v1108 = vrot.slane %v99, 6
    %v1109 = vrot.slane %v100, 6
    %v1110 = vrot.slane %v101, 6
    %v1111 = vrot.slane %v102, 6
    %v1112 = vrot.slane %v103, 6
    %vm1113 = vcmp.lt.s32.totalorder %v694, 2
    %v1114 = vsel %vm1113, %v1109, %v1111
    %v1115 = vsel %vm1113, %v1110, %v1112
    %v1116 = vsel %vm1113, %v1107, %v1109
    %v1117 = vsel %vm1113, %v1108, %v1110
    %v1118 = vsel %vm1113, %v1105, %v1107
    %v1119 = vsel %vm1113, %v1106, %v1108
    %v1120 = vsel %vm1113, %v1103, %v1105
    %v1121 = vsel %vm1113, %v1104, %v1106
    %v1122 = vsel %vm1113, %v1101, %v1103
    %v1123 = vsel %vm1113, %v1102, %v1104
    %v1124 = vsel %vm1113, %v1099, %v1101
    %v1125 = vsel %vm1113, %v1100, %v1102
    %v1126 = vsel %vm1113, %v1097, %v1099
    %v1127 = vsel %vm1113, %v1098, %v1100
    %v1128 = vsel %vm1113, %v1095, %v1097
    %v1129 = vsel %vm1113, %v1096, %v1098
    %v1130 = vsel %vm1113, %v1093, %v1095
    %v1131 = vsel %vm1113, %v1094, %v1096
    %v1132 = vsel %vm1113, %v1091, %v1093
    %v1133 = vsel %vm1113, %v1092, %v1094
    %v1134 = vsel %vm1113, %v1089, %v1091
    %v1135 = vsel %vm1113, %v1090, %v1092
    %v1136 = vsel %vm1113, %v1087, %v1089
    %v1137 = vsel %vm1113, %v1088, %v1090
    %v1138 = vsel %vm1113, %v1085, %v1087
    %v1139 = vsel %vm1113, %v1086, %v1088
    %v1140 = vsel %vm1113, %v1083, %v1085
    %v1141 = vsel %vm1113, %v1084, %v1086
    %v1142 = vsel %vm1113, %v1081, %v1083
    %v1143 = vsel %vm1113, %v1082, %v1084
    %v1144 = vsel %vm1113, %v1111, %v1081
    %v1145 = vsel %vm1113, %v1112, %v1082
    %vm1146 = vcmp.ge.s32.totalorder %v104, 2
    %vm1147 = vcmp.ge.s32.totalorder %v105, 2
    %vm1148 = vcmp.ge.s32.totalorder %v106, 2
    %vm1149 = vcmp.ge.s32.totalorder %v107, 2
    %vm1150 = vcmp.ge.s32.totalorder %v108, 2
    %vm1151 = vcmp.ge.s32.totalorder %v109, 2
    %vm1152 = vcmp.ge.s32.totalorder %v110, 2
    %vm1153 = vcmp.ge.s32.totalorder %v111, 2
    %vm1154 = vcmp.ge.s32.totalorder %v112, 2
    %vm1155 = vcmp.ge.s32.totalorder %v113, 2
    %vm1156 = vcmp.ge.s32.totalorder %v114, 2
    %vm1157 = vcmp.ge.s32.totalorder %v115, 2
    %vm1158 = vcmp.ge.s32.totalorder %v116, 2
    %vm1159 = vcmp.ge.s32.totalorder %v117, 2
    %vm1160 = vcmp.ge.s32.totalorder %v118, 2
    %vm1161 = vcmp.ge.s32.totalorder %v119, 2
    %v1162 = vsel %vm1146, 1, 0
    %v1163 = vsel %vm1147, 1, 0
    %v1164 = vsel %vm1148, 1, 0
    %v1165 = vsel %vm1149, 1, 0
    %v1166 = vsel %vm1150, 1, 0
    %v1167 = vsel %vm1151, 1, 0
    %v1168 = vsel %vm1152, 1, 0
    %v1169 = vsel %vm1153, 1, 0
    %v1170 = vsel %vm1154, 1, 0
    %v1171 = vsel %vm1155, 1, 0
    %v1172 = vsel %vm1156, 1, 0
    %v1173 = vsel %vm1157, 1, 0
    %v1174 = vsel %vm1158, 1, 0
    %v1175 = vsel %vm1159, 1, 0
    %v1176 = vsel %vm1160, 1, 0
    %v1177 = vsel %vm1161, 1, 0
    %1178 = vset.pattern.permute.xlu0 0
    %1179 = vperm.xlu0 %1178, %v1162
    %v1180 = vpop.permute.xlu0 %1179
    %1181 = vset.pattern.permute.xlu0 0
    %1182 = vperm.xlu0 %1181, %v1163
    %v1183 = vpop.permute.xlu0 %1182
    %1184 = vset.pattern.permute.xlu0 0
    %1185 = vperm.xlu0 %1184, %v1164
    %v1186 = vpop.permute.xlu0 %1185
    %1187 = vset.pattern.permute.xlu0 0
    %1188 = vperm.xlu0 %1187, %v1165
    %v1189 = vpop.permute.xlu0 %1188
    %1190 = vset.pattern.permute.xlu0 0
    %1191 = vperm.xlu0 %1190, %v1166
    %v1192 = vpop.permute.xlu0 %1191
    %1193 = vset.pattern.permute.xlu0 0
    %1194 = vperm.xlu0 %1193, %v1167
    %v1195 = vpop.permute.xlu0 %1194
    %1196 = vset.pattern.permute.xlu0 0
    %1197 = vperm.xlu0 %1196, %v1168
    %v1198 = vpop.permute.xlu0 %1197
    %1199 = vset.pattern.permute.xlu0 0
    %1200 = vperm.xlu0 %1199, %v1169
    %v1201 = vpop.permute.xlu0 %1200
    %1202 = vset.pattern.permute.xlu0 0
    %1203 = vperm.xlu0 %1202, %v1170
    %v1204 = vpop.permute.xlu0 %1203
    %1205 = vset.pattern.permute.xlu0 0
    %1206 = vperm.xlu0 %1205, %v1171
    %v1207 = vpop.permute.xlu0 %1206
    %1208 = vset.pattern.permute.xlu0 0
    %1209 = vperm.xlu0 %1208, %v1172
    %v1210 = vpop.permute.xlu0 %1209
    %1211 = vset.pattern.permute.xlu0 0
    %1212 = vperm.xlu0 %1211, %v1173
    %v1213 = vpop.permute.xlu0 %1212
    %1214 = vset.pattern.permute.xlu0 0
    %1215 = vperm.xlu0 %1214, %v1174
    %v1216 = vpop.permute.xlu0 %1215
    %1217 = vset.pattern.permute.xlu0 0
    %1218 = vperm.xlu0 %1217, %v1175
    %v1219 = vpop.permute.xlu0 %1218
    %1220 = vset.pattern.permute.xlu0 0
    %1221 = vperm.xlu0 %1220, %v1176
    %v1222 = vpop.permute.xlu0 %1221
    %1223 = vset.pattern.permute.xlu0 0
    %1224 = vperm.xlu0 %1223, %v1177
    %v1225 = vpop.permute.xlu0 %1224
    %vm1226 = vcmp.eq.s32.totalorder %v1180, 1
    %vm1227 = vcmp.eq.s32.totalorder %v1183, 1
    %vm1228 = vcmp.eq.s32.totalorder %v1186, 1
    %vm1229 = vcmp.eq.s32.totalorder %v1189, 1
    %vm1230 = vcmp.eq.s32.totalorder %v1192, 1
    %vm1231 = vcmp.eq.s32.totalorder %v1195, 1
    %vm1232 = vcmp.eq.s32.totalorder %v1198, 1
    %vm1233 = vcmp.eq.s32.totalorder %v1201, 1
    %vm1234 = vcmp.eq.s32.totalorder %v1204, 1
    %vm1235 = vcmp.eq.s32.totalorder %v1207, 1
    %vm1236 = vcmp.eq.s32.totalorder %v1210, 1
    %vm1237 = vcmp.eq.s32.totalorder %v1213, 1
    %vm1238 = vcmp.eq.s32.totalorder %v1216, 1
    %vm1239 = vcmp.eq.s32.totalorder %v1219, 1
    %vm1240 = vcmp.eq.s32.totalorder %v1222, 1
    %vm1241 = vcmp.eq.s32.totalorder %v1225, 1
    %v1242 = vsel %vm1226, %v1144, 0.0
    %v1243 = vsel %vm1226, %v1145, 0.0
    %v1244 = vsel %vm1227, %v1142, 0.0
    %v1245 = vsel %vm1227, %v1143, 0.0
    %v1246 = vsel %vm1228, %v1140, 0.0
    %v1247 = vsel %vm1228, %v1141, 0.0
    %v1248 = vsel %vm1229, %v1138, 0.0
    %v1249 = vsel %vm1229, %v1139, 0.0
    %v1250 = vsel %vm1230, %v1136, 0.0
    %v1251 = vsel %vm1230, %v1137, 0.0
    %v1252 = vsel %vm1231, %v1134, 0.0
    %v1253 = vsel %vm1231, %v1135, 0.0
    %v1254 = vsel %vm1232, %v1132, 0.0
    %v1255 = vsel %vm1232, %v1133, 0.0
    %v1256 = vsel %vm1233, %v1130, 0.0
    %v1257 = vsel %vm1233, %v1131, 0.0
    %v1258 = vsel %vm1234, %v1128, 0.0
    %v1259 = vsel %vm1234, %v1129, 0.0
    %v1260 = vsel %vm1235, %v1126, 0.0
    %v1261 = vsel %vm1235, %v1127, 0.0
    %v1262 = vsel %vm1236, %v1124, 0.0
    %v1263 = vsel %vm1236, %v1125, 0.0
    %v1264 = vsel %vm1237, %v1122, 0.0
    %v1265 = vsel %vm1237, %v1123, 0.0
    %v1266 = vsel %vm1238, %v1120, 0.0
    %v1267 = vsel %vm1238, %v1121, 0.0
    %v1268 = vsel %vm1239, %v1118, 0.0
    %v1269 = vsel %vm1239, %v1119, 0.0
    %v1270 = vsel %vm1240, %v1116, 0.0
    %v1271 = vsel %vm1240, %v1117, 0.0
    %v1272 = vsel %vm1241, %v1114, 0.0
    %v1273 = vsel %vm1241, %v1115, 0.0
    %v1274 = vpack.c.bf16 %v1244, %v1242
    %v1275 = vpack.c.bf16 %v1245, %v1243
    %v1276 = vpack.c.bf16 %v1248, %v1246
    %v1277 = vpack.c.bf16 %v1249, %v1247
    %v1278 = vpack.c.bf16 %v1252, %v1250
    %v1279 = vpack.c.bf16 %v1253, %v1251
    %v1280 = vpack.c.bf16 %v1256, %v1254
    %v1281 = vpack.c.bf16 %v1257, %v1255
    %v1282 = vpack.c.bf16 %v1260, %v1258
    %v1283 = vpack.c.bf16 %v1261, %v1259
    %v1284 = vpack.c.bf16 %v1264, %v1262
    %v1285 = vpack.c.bf16 %v1265, %v1263
    %v1286 = vpack.c.bf16 %v1268, %v1266
    %v1287 = vpack.c.bf16 %v1269, %v1267
    %v1288 = vpack.c.bf16 %v1272, %v1270
    %v1289 = vpack.c.bf16 %v1273, %v1271
    %v1290 = vld [vmem:[%s2] sm:$0xf]
    %v1291 = vld [vmem:[%s2 + $0x4] sm:$0xf]
    %v1292 = vld [vmem:[%s2 + $0x8] sm:$0xf]
    %v1293 = vld [vmem:[%s2 + $0xc] sm:$0xf]
    %v1294 = vld [vmem:[%s2 + $0x10] sm:$0xf]
    %v1295 = vld [vmem:[%s2 + $0x14] sm:$0xf]
    %v1296 = vld [vmem:[%s2 + $0x18] sm:$0xf]
    %v1297 = vld [vmem:[%s2 + $0x1c] sm:$0xf]
    %v1298 = vld [vmem:[%s2 + $0x20] sm:$0xf]
    %v1299 = vld [vmem:[%s2 + $0x24] sm:$0xf]
    %v1300 = vld [vmem:[%s2 + $0x28] sm:$0xf]
    %v1301 = vld [vmem:[%s2 + $0x2c] sm:$0xf]
    %v1302 = vld [vmem:[%s2 + $0x30] sm:$0xf]
    %v1303 = vld [vmem:[%s2 + $0x34] sm:$0xf]
    %v1304 = vld [vmem:[%s2 + $0x38] sm:$0xf]
    %v1305 = vld [vmem:[%s2 + $0x3c] sm:$0xf]
    %v1306 = vld [vmem:[%s2 + $0x40] sm:$0xf]
    %v1307 = vld [vmem:[%s2 + $0x44] sm:$0xf]
    %v1308 = vld [vmem:[%s2 + $0x48] sm:$0xf]
    %v1309 = vld [vmem:[%s2 + $0x4c] sm:$0xf]
    %v1310 = vld [vmem:[%s2 + $0x50] sm:$0xf]
    %v1311 = vld [vmem:[%s2 + $0x54] sm:$0xf]
    %v1312 = vld [vmem:[%s2 + $0x58] sm:$0xf]
    %v1313 = vld [vmem:[%s2 + $0x5c] sm:$0xf]
    %v1314 = vld [vmem:[%s2 + $0x60] sm:$0xf]
    %v1315 = vld [vmem:[%s2 + $0x64] sm:$0xf]
    %v1316 = vld [vmem:[%s2 + $0x68] sm:$0xf]
    %v1317 = vld [vmem:[%s2 + $0x6c] sm:$0xf]
    %v1318 = vld [vmem:[%s2 + $0x70] sm:$0xf]
    %v1319 = vld [vmem:[%s2 + $0x74] sm:$0xf]
    %v1320 = vld [vmem:[%s2 + $0x78] sm:$0xf]
    %v1321 = vld [vmem:[%s2 + $0x7c] sm:$0xf]
    %v1322 = vld [vmem:[%s2 + $0x80] sm:$0xf]
    %v1323 = vld [vmem:[%s2 + $0x84] sm:$0xf]
    %v1324 = vld [vmem:[%s2 + $0x88] sm:$0xf]
    %v1325 = vld [vmem:[%s2 + $0x8c] sm:$0xf]
    %v1326 = vld [vmem:[%s2 + $0x90] sm:$0xf]
    %v1327 = vld [vmem:[%s2 + $0x94] sm:$0xf]
    %v1328 = vld [vmem:[%s2 + $0x98] sm:$0xf]
    %v1329 = vld [vmem:[%s2 + $0x9c] sm:$0xf]
    %v1330 = vld [vmem:[%s2 + $0xa0] sm:$0xf]
    %v1331 = vld [vmem:[%s2 + $0xa4] sm:$0xf]
    %v1332 = vld [vmem:[%s2 + $0xa8] sm:$0xf]
    %v1333 = vld [vmem:[%s2 + $0xac] sm:$0xf]
    %v1334 = vld [vmem:[%s2 + $0xb0] sm:$0xf]
    %v1335 = vld [vmem:[%s2 + $0xb4] sm:$0xf]
    %v1336 = vld [vmem:[%s2 + $0xb8] sm:$0xf]
    %v1337 = vld [vmem:[%s2 + $0xbc] sm:$0xf]
    %v1338 = vld [vmem:[%s2 + $0xc0] sm:$0xf]
    %v1339 = vld [vmem:[%s2 + $0xc4] sm:$0xf]
    %v1340 = vld [vmem:[%s2 + $0xc8] sm:$0xf]
    %v1341 = vld [vmem:[%s2 + $0xcc] sm:$0xf]
    %v1342 = vld [vmem:[%s2 + $0xd0] sm:$0xf]
    %v1343 = vld [vmem:[%s2 + $0xd4] sm:$0xf]
    %v1344 = vld [vmem:[%s2 + $0xd8] sm:$0xf]
    %v1345 = vld [vmem:[%s2 + $0xdc] sm:$0xf]
    %v1346 = vld [vmem:[%s2 + $0xe0] sm:$0xf]
    %v1347 = vld [vmem:[%s2 + $0xe4] sm:$0xf]
    %v1348 = vld [vmem:[%s2 + $0xe8] sm:$0xf]
    %v1349 = vld [vmem:[%s2 + $0xec] sm:$0xf]
    %v1350 = vld [vmem:[%s2 + $0xf0] sm:$0xf]
    %v1351 = vld [vmem:[%s2 + $0xf4] sm:$0xf]
    %v1352 = vld [vmem:[%s2 + $0xf8] sm:$0xf]
    %v1353 = vld [vmem:[%s2 + $0xfc] sm:$0xf]
    %v1354 = vld [vmem:[%s2 + $0x100] sm:$0xf]
    %v1355 = vld [vmem:[%s2 + $0x104] sm:$0xf]
    %v1356 = vld [vmem:[%s2 + $0x108] sm:$0xf]
    %v1357 = vld [vmem:[%s2 + $0x10c] sm:$0xf]
    %v1358 = vld [vmem:[%s2 + $0x110] sm:$0xf]
    %v1359 = vld [vmem:[%s2 + $0x114] sm:$0xf]
    %v1360 = vld [vmem:[%s2 + $0x118] sm:$0xf]
    %v1361 = vld [vmem:[%s2 + $0x11c] sm:$0xf]
    %v1362 = vld [vmem:[%s2 + $0x120] sm:$0xf]
    %v1363 = vld [vmem:[%s2 + $0x124] sm:$0xf]
    %v1364 = vld [vmem:[%s2 + $0x128] sm:$0xf]
    %v1365 = vld [vmem:[%s2 + $0x12c] sm:$0xf]
    %v1366 = vld [vmem:[%s2 + $0x130] sm:$0xf]
    %v1367 = vld [vmem:[%s2 + $0x134] sm:$0xf]
    %v1368 = vld [vmem:[%s2 + $0x138] sm:$0xf]
    %v1369 = vld [vmem:[%s2 + $0x13c] sm:$0xf]
    %v1370 = vld [vmem:[%s2 + $0x140] sm:$0xf]
    %v1371 = vld [vmem:[%s2 + $0x144] sm:$0xf]
    %v1372 = vld [vmem:[%s2 + $0x148] sm:$0xf]
    %v1373 = vld [vmem:[%s2 + $0x14c] sm:$0xf]
    %v1374 = vld [vmem:[%s2 + $0x150] sm:$0xf]
    %v1375 = vld [vmem:[%s2 + $0x154] sm:$0xf]
    %v1376 = vld [vmem:[%s2 + $0x158] sm:$0xf]
    %v1377 = vld [vmem:[%s2 + $0x15c] sm:$0xf]
    %v1378 = vld [vmem:[%s2 + $0x160] sm:$0xf]
    %v1379 = vld [vmem:[%s2 + $0x164] sm:$0xf]
    %v1380 = vld [vmem:[%s2 + $0x168] sm:$0xf]
    %v1381 = vld [vmem:[%s2 + $0x16c] sm:$0xf]
    %v1382 = vld [vmem:[%s2 + $0x170] sm:$0xf]
    %v1383 = vld [vmem:[%s2 + $0x174] sm:$0xf]
    %v1384 = vld [vmem:[%s2 + $0x178] sm:$0xf]
    %v1385 = vld [vmem:[%s2 + $0x17c] sm:$0xf]
    %v1482 = vunpack.c.l.b16 %v1290
    %v1483 = vunpack.c.l.b16 %v1291
    %v1484 = vunpack.c.l.b16 %v1292
    %v1485 = vunpack.c.l.b16 %v1293
    %v1486 = vunpack.c.l.b16 %v1294
    %v1487 = vunpack.c.l.b16 %v1295
    %v1488 = vunpack.c.l.b16 %v1296
    %v1489 = vunpack.c.l.b16 %v1297
    %v1490 = vunpack.c.l.b16 %v1298
    %v1491 = vunpack.c.l.b16 %v1299
    %v1492 = vunpack.c.l.b16 %v1300
    %v1493 = vunpack.c.l.b16 %v1301
    %v1494 = vunpack.c.l.b16 %v1302
    %v1495 = vunpack.c.l.b16 %v1303
    %v1496 = vunpack.c.l.b16 %v1304
    %v1497 = vunpack.c.l.b16 %v1305
    %v1498 = vunpack.c.l.b16 %v1306
    %v1499 = vunpack.c.l.b16 %v1307
    %v1500 = vunpack.c.l.b16 %v1308
    %v1501 = vunpack.c.l.b16 %v1309
    %v1502 = vunpack.c.l.b16 %v1310
    %v1503 = vunpack.c.l.b16 %v1311
    %v1504 = vunpack.c.l.b16 %v1312
    %v1505 = vunpack.c.l.b16 %v1313
    %v1506 = vunpack.c.l.b16 %v1314
    %v1507 = vunpack.c.l.b16 %v1315
    %v1508 = vunpack.c.l.b16 %v1316
    %v1509 = vunpack.c.l.b16 %v1317
    %v1510 = vunpack.c.l.b16 %v1318
    %v1511 = vunpack.c.l.b16 %v1319
    %v1512 = vunpack.c.l.b16 %v1320
    %v1513 = vunpack.c.l.b16 %v1321
    %v1514 = vunpack.c.l.b16 %v1322
    %v1515 = vunpack.c.l.b16 %v1323
    %v1516 = vunpack.c.l.b16 %v1324
    %v1517 = vunpack.c.l.b16 %v1325
    %v1518 = vunpack.c.l.b16 %v1326
    %v1519 = vunpack.c.l.b16 %v1327
    %v1520 = vunpack.c.l.b16 %v1328
    %v1521 = vunpack.c.l.b16 %v1329
    %v1522 = vunpack.c.l.b16 %v1330
    %v1523 = vunpack.c.l.b16 %v1331
    %v1524 = vunpack.c.l.b16 %v1332
    %v1525 = vunpack.c.l.b16 %v1333
    %v1526 = vunpack.c.l.b16 %v1334
    %v1527 = vunpack.c.l.b16 %v1335
    %v1528 = vunpack.c.l.b16 %v1336
    %v1529 = vunpack.c.l.b16 %v1337
    %v1530 = vunpack.c.l.b16 %v1338
    %v1531 = vunpack.c.l.b16 %v1339
    %v1532 = vunpack.c.l.b16 %v1340
    %v1533 = vunpack.c.l.b16 %v1341
    %v1534 = vunpack.c.l.b16 %v1342
    %v1535 = vunpack.c.l.b16 %v1343
    %v1536 = vunpack.c.l.b16 %v1344
    %v1537 = vunpack.c.l.b16 %v1345
    %v1538 = vunpack.c.l.b16 %v1346
    %v1539 = vunpack.c.l.b16 %v1347
    %v1540 = vunpack.c.l.b16 %v1348
    %v1541 = vunpack.c.l.b16 %v1349
    %v1542 = vunpack.c.l.b16 %v1350
    %v1543 = vunpack.c.l.b16 %v1351
    %v1544 = vunpack.c.l.b16 %v1352
    %v1545 = vunpack.c.l.b16 %v1353
    %v1546 = vunpack.c.l.b16 %v1354
    %v1547 = vunpack.c.l.b16 %v1355
    %v1548 = vunpack.c.l.b16 %v1356
    %v1549 = vunpack.c.l.b16 %v1357
    %v1550 = vunpack.c.l.b16 %v1358
    %v1551 = vunpack.c.l.b16 %v1359
    %v1552 = vunpack.c.l.b16 %v1360
    %v1553 = vunpack.c.l.b16 %v1361
    %v1554 = vunpack.c.l.b16 %v1362
    %v1555 = vunpack.c.l.b16 %v1363
    %v1556 = vunpack.c.l.b16 %v1364
    %v1557 = vunpack.c.l.b16 %v1365
    %v1558 = vunpack.c.l.b16 %v1366
    %v1559 = vunpack.c.l.b16 %v1367
    %v1560 = vunpack.c.l.b16 %v1368
    %v1561 = vunpack.c.l.b16 %v1369
    %v1562 = vunpack.c.l.b16 %v1370
    %v1563 = vunpack.c.l.b16 %v1371
    %v1564 = vunpack.c.l.b16 %v1372
    %v1565 = vunpack.c.l.b16 %v1373
    %v1566 = vunpack.c.l.b16 %v1374
    %v1567 = vunpack.c.l.b16 %v1375
    %v1568 = vunpack.c.l.b16 %v1376
    %v1569 = vunpack.c.l.b16 %v1377
    %v1570 = vunpack.c.l.b16 %v1378
    %v1571 = vunpack.c.l.b16 %v1379
    %v1572 = vunpack.c.l.b16 %v1380
    %v1573 = vunpack.c.l.b16 %v1381
    %v1574 = vunpack.c.l.b16 %v1382
    %v1575 = vunpack.c.l.b16 %v1383
    %v1576 = vunpack.c.l.b16 %v1384
    %v1577 = vunpack.c.l.b16 %v1385
    %v1578 = vpack.c.b16 %v1483, %v1482
    %v1579 = vpack.c.b16 %v1485, %v1484
    %v1580 = vpack.c.b16 %v1487, %v1486
    %v1581 = vpack.c.b16 %v1489, %v1488
    %v1582 = vpack.c.b16 %v1491, %v1490
    %v1583 = vpack.c.b16 %v1493, %v1492
    %v1584 = vpack.c.b16 %v1495, %v1494
    %v1585 = vpack.c.b16 %v1497, %v1496
    %v1586 = vpack.c.b16 %v1499, %v1498
    %v1587 = vpack.c.b16 %v1501, %v1500
    %v1588 = vpack.c.b16 %v1503, %v1502
    %v1589 = vpack.c.b16 %v1505, %v1504
    %v1590 = vpack.c.b16 %v1507, %v1506
    %v1591 = vpack.c.b16 %v1509, %v1508
    %v1592 = vpack.c.b16 %v1511, %v1510
    %v1593 = vpack.c.b16 %v1513, %v1512
    %v1594 = vpack.c.b16 %v1515, %v1514
    %v1595 = vpack.c.b16 %v1517, %v1516
    %v1596 = vpack.c.b16 %v1519, %v1518
    %v1597 = vpack.c.b16 %v1521, %v1520
    %v1598 = vpack.c.b16 %v1523, %v1522
    %v1599 = vpack.c.b16 %v1525, %v1524
    %v1600 = vpack.c.b16 %v1527, %v1526
    %v1601 = vpack.c.b16 %v1529, %v1528
    %v1602 = vpack.c.b16 %v1531, %v1530
    %v1603 = vpack.c.b16 %v1533, %v1532
    %v1604 = vpack.c.b16 %v1535, %v1534
    %v1605 = vpack.c.b16 %v1537, %v1536
    %v1606 = vpack.c.b16 %v1539, %v1538
    %v1607 = vpack.c.b16 %v1541, %v1540
    %v1608 = vpack.c.b16 %v1543, %v1542
    %v1609 = vpack.c.b16 %v1545, %v1544
    %v1610 = vpack.c.b16 %v1547, %v1546
    %v1611 = vpack.c.b16 %v1549, %v1548
    %v1612 = vpack.c.b16 %v1551, %v1550
    %v1613 = vpack.c.b16 %v1553, %v1552
    %v1614 = vpack.c.b16 %v1555, %v1554
    %v1615 = vpack.c.b16 %v1557, %v1556
    %v1616 = vpack.c.b16 %v1559, %v1558
    %v1617 = vpack.c.b16 %v1561, %v1560
    %v1618 = vpack.c.b16 %v1563, %v1562
    %v1619 = vpack.c.b16 %v1565, %v1564
    %v1620 = vpack.c.b16 %v1567, %v1566
    %v1621 = vpack.c.b16 %v1569, %v1568
    %v1622 = vpack.c.b16 %v1571, %v1570
    %v1623 = vpack.c.b16 %v1573, %v1572
    %v1624 = vpack.c.b16 %v1575, %v1574
    %v1625 = vpack.c.b16 %v1577, %v1576
    %1674 = vmatprep.subr.bf16.mxu0 0
    %1675 = vmatpush1.bf16.msra.mxu0 %v1578
    %1676 = vmatprep.subr.bf16.mxu0 0
    %1677 = vmatpush1.bf16.msra.mxu0 %v1579
    %1678 = vmatprep.subr.bf16.mxu0 0
    %1679 = vmatpush1.bf16.msra.mxu0 %v1580
    %1680 = vmatprep.subr.bf16.mxu0 0
    %1681 = vmatpush1.bf16.msra.mxu0 %v1581
    %1682 = vmatprep.subr.bf16.mxu0 0
    %1683 = vmatpush1.bf16.msra.mxu0 %v1582
    %1684 = vmatprep.subr.bf16.mxu0 0
    %1685 = vmatpush1.bf16.msra.mxu0 %v1583
    %1686 = vmatprep.subr.bf16.mxu0 0
    %1687 = vmatpush1.bf16.msra.mxu0 %v1584
    %1688 = vmatprep.subr.bf16.mxu0 0
    %1689 = vmatpush1.bf16.msra.mxu0 %v1585
    %1690 = vmatprep.subr.bf16.mxu0 0
    %1691 = vmatpush1.bf16.msra.mxu0 %v1586
    %1692 = vmatprep.subr.bf16.mxu0 0
    %1693 = vmatpush1.bf16.msra.mxu0 %v1587
    %1694 = vmatprep.subr.bf16.mxu0 0
    %1695 = vmatpush1.bf16.msra.mxu0 %v1588
    %1696 = vmatprep.subr.bf16.mxu0 0
    %1697 = vmatpush1.bf16.msra.mxu0 %v1589
    %1698 = vmatprep.subr.bf16.mxu0 0
    %1699 = vmatpush1.bf16.msra.mxu0 %v1590
    %1700 = vmatprep.subr.bf16.mxu0 0
    %1701 = vmatpush1.bf16.msra.mxu0 %v1591
    %1702 = vmatprep.subr.bf16.mxu0 0
    %1703 = vmatpush1.bf16.msra.mxu0 %v1592
    %1704 = vmatprep.subr.bf16.mxu0 0
    %1705 = vmatpush1.bf16.msra.mxu0 %v1593
    %1706 = vmatprep.mubr.bf16.mxu0 %v1066
    %1707 = vmatmul.mubr.bf16.gmra.mrb[0].mxu0 %v1065
    %v1708 = vpop.f32.mrb[0].mxu0
    %v1709 = vadd.f32 0.0, %v1708
    %v1710 = vpop.f32.mrb[0].mxu0
    %v1711 = vpop.f32.mrb[0].mxu0
    %v1712 = vadd.f32 0.0, %v1711
    %v1713 = vpop.f32.mrb[0].mxu0
    %1714 = vmatprep.mubr.bf16.mxu0 %v1068
    %1715 = vmatmul.mubr.bf16.gmra.mrb[0].mxu0 %v1067
    %v1716 = vpop.f32.mrb[0].mxu0
    %v1717 = vadd.f32 0.0, %v1716
    %v1718 = vpop.f32.mrb[0].mxu0
    %v1719 = vpop.f32.mrb[0].mxu0
    %v1720 = vadd.f32 0.0, %v1719
    %v1721 = vpop.f32.mrb[0].mxu0
    %1722 = vmatprep.mubr.bf16.mxu0 %v1070
    %1723 = vmatmul.mubr.bf16.gmra.mrb[0].mxu0 %v1069
    %v1724 = vpop.f32.mrb[0].mxu0
    %v1725 = vadd.f32 0.0, %v1724
    %v1726 = vpop.f32.mrb[0].mxu0
    %v1727 = vpop.f32.mrb[0].mxu0
    %v1728 = vadd.f32 0.0, %v1727
    %v1729 = vpop.f32.mrb[0].mxu0
    %1730 = vmatprep.mubr.bf16.mxu0 %v1072
    %1731 = vmatmul.mubr.bf16.gmra.mrb[0].mxu0 %v1071
    %v1732 = vpop.f32.mrb[0].mxu0
    %v1733 = vadd.f32 0.0, %v1732
    %v1734 = vpop.f32.mrb[0].mxu0
    %v1735 = vpop.f32.mrb[0].mxu0
    %v1736 = vadd.f32 0.0, %v1735
    %v1737 = vpop.f32.mrb[0].mxu0
    %1738 = vmatprep.mubr.bf16.mxu0 %v1074
    %1739 = vmatmul.mubr.bf16.gmra.mrb[0].mxu0 %v1073
    %v1740 = vpop.f32.mrb[0].mxu0
    %v1741 = vadd.f32 0.0, %v1740
    %v1742 = vpop.f32.mrb[0].mxu0
    %v1743 = vpop.f32.mrb[0].mxu0
    %v1744 = vadd.f32 0.0, %v1743
    %v1745 = vpop.f32.mrb[0].mxu0
    %1746 = vmatprep.mubr.bf16.mxu0 %v1076
    %1747 = vmatmul.mubr.bf16.gmra.mrb[0].mxu0 %v1075
    %v1748 = vpop.f32.mrb[0].mxu0
    %v1749 = vadd.f32 0.0, %v1748
    %v1750 = vpop.f32.mrb[0].mxu0
    %v1751 = vpop.f32.mrb[0].mxu0
    %v1752 = vadd.f32 0.0, %v1751
    %v1753 = vpop.f32.mrb[0].mxu0
    %1754 = vmatprep.mubr.bf16.mxu0 %v1078
    %1755 = vmatmul.mubr.bf16.gmra.mrb[0].mxu0 %v1077
    %v1756 = vpop.f32.mrb[0].mxu0
    %v1757 = vadd.f32 0.0, %v1756
    %v1758 = vpop.f32.mrb[0].mxu0
    %v1759 = vpop.f32.mrb[0].mxu0
    %v1760 = vadd.f32 0.0, %v1759
    %v1761 = vpop.f32.mrb[0].mxu0
    %1762 = vmatprep.mubr.bf16.mxu0 %v1080
    %1763 = vmatmul.mubr.bf16.gmra.mrb[0].mxu0 %v1079
    %v1764 = vpop.f32.mrb[0].mxu0
    %v1765 = vadd.f32 0.0, %v1764
    %v1766 = vpop.f32.mrb[0].mxu0
    %v1767 = vpop.f32.mrb[0].mxu0
    %v1768 = vadd.f32 0.0, %v1767
    %v1769 = vpop.f32.mrb[0].mxu0
    %1770 = vdwg.mxu0
    %1771 = vmatprep.subr.bf16.mxu0 0
    %1772 = vmatpush1.bf16.msra.mxu0 %v1594
    %1773 = vmatprep.subr.bf16.mxu0 0
    %1774 = vmatpush1.bf16.msra.mxu0 %v1595
    %1775 = vmatprep.subr.bf16.mxu0 0
    %1776 = vmatpush1.bf16.msra.mxu0 %v1596
    %1777 = vmatprep.subr.bf16.mxu0 0
    %1778 = vmatpush1.bf16.msra.mxu0 %v1597
    %1779 = vmatprep.subr.bf16.mxu0 0
    %1780 = vmatpush1.bf16.msra.mxu0 %v1598
    %1781 = vmatprep.subr.bf16.mxu0 0
    %1782 = vmatpush1.bf16.msra.mxu0 %v1599
    %1783 = vmatprep.subr.bf16.mxu0 0
    %1784 = vmatpush1.bf16.msra.mxu0 %v1600
    %1785 = vmatprep.subr.bf16.mxu0 0
    %1786 = vmatpush1.bf16.msra.mxu0 %v1601
    %1787 = vmatprep.subr.bf16.mxu0 0
    %1788 = vmatpush1.bf16.msra.mxu0 %v1602
    %1789 = vmatprep.subr.bf16.mxu0 0
    %1790 = vmatpush1.bf16.msra.mxu0 %v1603
    %1791 = vmatprep.subr.bf16.mxu0 0
    %1792 = vmatpush1.bf16.msra.mxu0 %v1604
    %1793 = vmatprep.subr.bf16.mxu0 0
    %1794 = vmatpush1.bf16.msra.mxu0 %v1605
    %1795 = vmatprep.subr.bf16.mxu0 0
    %1796 = vmatpush1.bf16.msra.mxu0 %v1606
    %1797 = vmatprep.subr.bf16.mxu0 0
    %1798 = vmatpush1.bf16.msra.mxu0 %v1607
    %1799 = vmatprep.subr.bf16.mxu0 0
    %1800 = vmatpush1.bf16.msra.mxu0 %v1608
    %1801 = vmatprep.subr.bf16.mxu0 0
    %1802 = vmatpush1.bf16.msra.mxu0 %v1609
    %1803 = vmatprep.mubr.bf16.mxu0 %v1275
    %1804 = vmatmul.mubr.bf16.gmra.mrb[0].mxu0 %v1274
    %v1805 = vpop.f32.mrb[0].mxu0
    %v1806 = vadd.f32 %v1709, %v1805
    %v1807 = vpop.f32.mrb[0].mxu0
    %v1808 = vpop.f32.mrb[0].mxu0
    %v1809 = vadd.f32 %v1712, %v1808
    %v1810 = vpop.f32.mrb[0].mxu0
    %1811 = vmatprep.mubr.bf16.mxu0 %v1277
    %1812 = vmatmul.mubr.bf16.gmra.mrb[0].mxu0 %v1276
    %v1813 = vpop.f32.mrb[0].mxu0
    %v1814 = vadd.f32 %v1717, %v1813
    %v1815 = vpop.f32.mrb[0].mxu0
    %v1816 = vpop.f32.mrb[0].mxu0
    %v1817 = vadd.f32 %v1720, %v1816
    %v1818 = vpop.f32.mrb[0].mxu0
    %1819 = vmatprep.mubr.bf16.mxu0 %v1279
    %1820 = vmatmul.mubr.bf16.gmra.mrb[0].mxu0 %v1278
    %v1821 = vpop.f32.mrb[0].mxu0
    %v1822 = vadd.f32 %v1725, %v1821
    %v1823 = vpop.f32.mrb[0].mxu0
    %v1824 = vpop.f32.mrb[0].mxu0
    %v1825 = vadd.f32 %v1728, %v1824
    %v1826 = vpop.f32.mrb[0].mxu0
    %1827 = vmatprep.mubr.bf16.mxu0 %v1281
    %1828 = vmatmul.mubr.bf16.gmra.mrb[0].mxu0 %v1280
    %v1829 = vpop.f32.mrb[0].mxu0
    %v1830 = vadd.f32 %v1733, %v1829
    %v1831 = vpop.f32.mrb[0].mxu0
    %v1832 = vpop.f32.mrb[0].mxu0
    %v1833 = vadd.f32 %v1736, %v1832
    %v1834 = vpop.f32.mrb[0].mxu0
    %1835 = vmatprep.mubr.bf16.mxu0 %v1283
    %1836 = vmatmul.mubr.bf16.gmra.mrb[0].mxu0 %v1282
    %v1837 = vpop.f32.mrb[0].mxu0
    %v1838 = vadd.f32 %v1741, %v1837
    %v1839 = vpop.f32.mrb[0].mxu0
    %v1840 = vpop.f32.mrb[0].mxu0
    %v1841 = vadd.f32 %v1744, %v1840
    %v1842 = vpop.f32.mrb[0].mxu0
    %1843 = vmatprep.mubr.bf16.mxu0 %v1285
    %1844 = vmatmul.mubr.bf16.gmra.mrb[0].mxu0 %v1284
    %v1845 = vpop.f32.mrb[0].mxu0
    %v1846 = vadd.f32 %v1749, %v1845
    %v1847 = vpop.f32.mrb[0].mxu0
    %v1848 = vpop.f32.mrb[0].mxu0
    %v1849 = vadd.f32 %v1752, %v1848
    %v1850 = vpop.f32.mrb[0].mxu0
    %1851 = vmatprep.mubr.bf16.mxu0 %v1287
    %1852 = vmatmul.mubr.bf16.gmra.mrb[0].mxu0 %v1286
    %v1853 = vpop.f32.mrb[0].mxu0
    %v1854 = vadd.f32 %v1757, %v1853
    %v1855 = vpop.f32.mrb[0].mxu0
    %v1856 = vpop.f32.mrb[0].mxu0
    %v1857 = vadd.f32 %v1760, %v1856
    %v1858 = vpop.f32.mrb[0].mxu0
    %1859 = vmatprep.mubr.bf16.mxu0 %v1289
    %1860 = vmatmul.mubr.bf16.gmra.mrb[0].mxu0 %v1288
    %v1861 = vpop.f32.mrb[0].mxu0
    %v1862 = vadd.f32 %v1765, %v1861
    %v1863 = vpop.f32.mrb[0].mxu0
    %v1864 = vpop.f32.mrb[0].mxu0
    %v1865 = vadd.f32 %v1768, %v1864
    %v1866 = vpop.f32.mrb[0].mxu0
    %1867 = vdwg.mxu0
    %1868 = vmatprep.subr.bf16.mxu0 0
    %1869 = vmatpush1.bf16.msra.mxu0 %v1610
    %1870 = vmatprep.subr.bf16.mxu0 0
    %1871 = vmatpush1.bf16.msra.mxu0 %v1611
    %1872 = vmatprep.subr.bf16.mxu0 0
    %1873 = vmatpush1.bf16.msra.mxu0 %v1612
    %1874 = vmatprep.subr.bf16.mxu0 0
    %1875 = vmatpush1.bf16.msra.mxu0 %v1613
    %1876 = vmatprep.subr.bf16.mxu0 0
    %1877 = vmatpush1.bf16.msra.mxu0 %v1614
    %1878 = vmatprep.subr.bf16.mxu0 0
    %1879 = vmatpush1.bf16.msra.mxu0 %v1615
    %1880 = vmatprep.subr.bf16.mxu0 0
    %1881 = vmatpush1.bf16.msra.mxu0 %v1616
    %1882 = vmatprep.subr.bf16.mxu0 0
    %1883 = vmatpush1.bf16.msra.mxu0 %v1617
    %1884 = vmatprep.subr.bf16.mxu0 0
    %1885 = vmatpush1.bf16.msra.mxu0 %v1618
    %1886 = vmatprep.subr.bf16.mxu0 0
    %1887 = vmatpush1.bf16.msra.mxu0 %v1619
    %1888 = vmatprep.subr.bf16.mxu0 0
    %1889 = vmatpush1.bf16.msra.mxu0 %v1620
    %1890 = vmatprep.subr.bf16.mxu0 0
    %1891 = vmatpush1.bf16.msra.mxu0 %v1621
    %1892 = vmatprep.subr.bf16.mxu0 0
    %1893 = vmatpush1.bf16.msra.mxu0 %v1622
    %1894 = vmatprep.subr.bf16.mxu0 0
    %1895 = vmatpush1.bf16.msra.mxu0 %v1623
    %1896 = vmatprep.subr.bf16.mxu0 0
    %1897 = vmatpush1.bf16.msra.mxu0 %v1624
    %1898 = vmatprep.subr.bf16.mxu0 0
    %1899 = vmatpush1.bf16.msra.mxu0 %v1625
    %1900 = vmatprep.mubr.bf16.mxu0 %v213
    %1901 = vmatmul.mubr.bf16.gmra.mrb[0].mxu0 %v212
    %v1902 = vpop.f32.mrb[0].mxu0
    %v1903 = vadd.f32 %v1806, %v1902
    %v1904 = vpop.f32.mrb[0].mxu0
    %v1905 = vpop.f32.mrb[0].mxu0
    %v1906 = vadd.f32 %v1809, %v1905
    %v1907 = vpop.f32.mrb[0].mxu0
    %1908 = vmatprep.mubr.bf16.mxu0 %v215
    %1909 = vmatmul.mubr.bf16.gmra.mrb[0].mxu0 %v214
    %v1910 = vpop.f32.mrb[0].mxu0
    %v1911 = vadd.f32 %v1814, %v1910
    %v1912 = vpop.f32.mrb[0].mxu0
    %v1913 = vpop.f32.mrb[0].mxu0
    %v1914 = vadd.f32 %v1817, %v1913
    %v1915 = vpop.f32.mrb[0].mxu0
    %1916 = vmatprep.mubr.bf16.mxu0 %v217
    %1917 = vmatmul.mubr.bf16.gmra.mrb[0].mxu0 %v216
    %v1918 = vpop.f32.mrb[0].mxu0
    %v1919 = vadd.f32 %v1822, %v1918
    %v1920 = vpop.f32.mrb[0].mxu0
    %v1921 = vpop.f32.mrb[0].mxu0
    %v1922 = vadd.f32 %v1825, %v1921
    %v1923 = vpop.f32.mrb[0].mxu0
    %1924 = vmatprep.mubr.bf16.mxu0 %v219
    %1925 = vmatmul.mubr.bf16.gmra.mrb[0].mxu0 %v218
    %v1926 = vpop.f32.mrb[0].mxu0
    %v1927 = vadd.f32 %v1830, %v1926
    %v1928 = vpop.f32.mrb[0].mxu0
    %v1929 = vpop.f32.mrb[0].mxu0
    %v1930 = vadd.f32 %v1833, %v1929
    %v1931 = vpop.f32.mrb[0].mxu0
    %1932 = vmatprep.mubr.bf16.mxu0 %v221
    %1933 = vmatmul.mubr.bf16.gmra.mrb[0].mxu0 %v220
    %v1934 = vpop.f32.mrb[0].mxu0
    %v1935 = vadd.f32 %v1838, %v1934
    %v1936 = vpop.f32.mrb[0].mxu0
    %v1937 = vpop.f32.mrb[0].mxu0
    %v1938 = vadd.f32 %v1841, %v1937
    %v1939 = vpop.f32.mrb[0].mxu0
    %1940 = vmatprep.mubr.bf16.mxu0 %v223
    %1941 = vmatmul.mubr.bf16.gmra.mrb[0].mxu0 %v222
    %v1942 = vpop.f32.mrb[0].mxu0
    %v1943 = vadd.f32 %v1846, %v1942
    %v1944 = vpop.f32.mrb[0].mxu0
    %v1945 = vpop.f32.mrb[0].mxu0
    %v1946 = vadd.f32 %v1849, %v1945
    %v1947 = vpop.f32.mrb[0].mxu0
    %1948 = vmatprep.mubr.bf16.mxu0 %v225
    %1949 = vmatmul.mubr.bf16.gmra.mrb[0].mxu0 %v224
    %v1950 = vpop.f32.mrb[0].mxu0
    %v1951 = vadd.f32 %v1854, %v1950
    %v1952 = vpop.f32.mrb[0].mxu0
    %v1953 = vpop.f32.mrb[0].mxu0
    %v1954 = vadd.f32 %v1857, %v1953
    %v1955 = vpop.f32.mrb[0].mxu0
    %1956 = vmatprep.mubr.bf16.mxu0 %v227
    %1957 = vmatmul.mubr.bf16.gmra.mrb[0].mxu0 %v226
    %v1958 = vpop.f32.mrb[0].mxu0
    %v1959 = vadd.f32 %v1862, %v1958
    %v1960 = vpop.f32.mrb[0].mxu0
    %v1961 = vpop.f32.mrb[0].mxu0
    %v1962 = vadd.f32 %v1865, %v1961
    %v1963 = vpop.f32.mrb[0].mxu0
    %1964 = vdwg.mxu0
    %v1965 = vld [vmem:[%s3] sm:$0xf]
    %v1966 = vld [vmem:[%s3 + $0x4] sm:$0xf]
    %v1967 = vld [vmem:[%s3 + $0x8] sm:$0xf]
    %v1968 = vld [vmem:[%s3 + $0xc] sm:$0xf]
    %v1969 = vld [vmem:[%s3 + $0x10] sm:$0xf]
    %v1970 = vld [vmem:[%s3 + $0x14] sm:$0xf]
    %v1971 = vld [vmem:[%s3 + $0x18] sm:$0xf]
    %v1972 = vld [vmem:[%s3 + $0x1c] sm:$0xf]
    %v1973 = vld [vmem:[%s3 + $0x20] sm:$0xf]
    %v1974 = vld [vmem:[%s3 + $0x24] sm:$0xf]
    %v1975 = vld [vmem:[%s3 + $0x28] sm:$0xf]
    %v1976 = vld [vmem:[%s3 + $0x2c] sm:$0xf]
    %v1977 = vld [vmem:[%s3 + $0x30] sm:$0xf]
    %v1978 = vld [vmem:[%s3 + $0x34] sm:$0xf]
    %v1979 = vld [vmem:[%s3 + $0x38] sm:$0xf]
    %v1980 = vld [vmem:[%s3 + $0x3c] sm:$0xf]
    %v1981 = vld [vmem:[%s3 + $0x40] sm:$0xf]
    %v1982 = vld [vmem:[%s3 + $0x44] sm:$0xf]
    %v1983 = vld [vmem:[%s3 + $0x48] sm:$0xf]
    %v1984 = vld [vmem:[%s3 + $0x4c] sm:$0xf]
    %v1985 = vld [vmem:[%s3 + $0x50] sm:$0xf]
    %v1986 = vld [vmem:[%s3 + $0x54] sm:$0xf]
    %v1987 = vld [vmem:[%s3 + $0x58] sm:$0xf]
    %v1988 = vld [vmem:[%s3 + $0x5c] sm:$0xf]
    %v1989 = vld [vmem:[%s3 + $0x60] sm:$0xf]
    %v1990 = vld [vmem:[%s3 + $0x64] sm:$0xf]
    %v1991 = vld [vmem:[%s3 + $0x68] sm:$0xf]
    %v1992 = vld [vmem:[%s3 + $0x6c] sm:$0xf]
    %v1993 = vld [vmem:[%s3 + $0x70] sm:$0xf]
    %v1994 = vld [vmem:[%s3 + $0x74] sm:$0xf]
    %v1995 = vld [vmem:[%s3 + $0x78] sm:$0xf]
    %v1996 = vld [vmem:[%s3 + $0x7c] sm:$0xf]
    %v1997 = vld [vmem:[%s3 + $0x80] sm:$0xf]
    %v1998 = vld [vmem:[%s3 + $0x84] sm:$0xf]
    %v1999 = vld [vmem:[%s3 + $0x88] sm:$0xf]
    %v2000 = vld [vmem:[%s3 + $0x8c] sm:$0xf]
    %v2001 = vld [vmem:[%s3 + $0x90] sm:$0xf]
    %v2002 = vld [vmem:[%s3 + $0x94] sm:$0xf]
    %v2003 = vld [vmem:[%s3 + $0x98] sm:$0xf]
    %v2004 = vld [vmem:[%s3 + $0x9c] sm:$0xf]
    %v2005 = vld [vmem:[%s3 + $0xa0] sm:$0xf]
    %v2006 = vld [vmem:[%s3 + $0xa4] sm:$0xf]
    %v2007 = vld [vmem:[%s3 + $0xa8] sm:$0xf]
    %v2008 = vld [vmem:[%s3 + $0xac] sm:$0xf]
    %v2009 = vld [vmem:[%s3 + $0xb0] sm:$0xf]
    %v2010 = vld [vmem:[%s3 + $0xb4] sm:$0xf]
    %v2011 = vld [vmem:[%s3 + $0xb8] sm:$0xf]
    %v2012 = vld [vmem:[%s3 + $0xbc] sm:$0xf]
    %v2013 = vld [vmem:[%s3 + $0xc0] sm:$0xf]
    %v2014 = vld [vmem:[%s3 + $0xc4] sm:$0xf]
    %v2015 = vld [vmem:[%s3 + $0xc8] sm:$0xf]
    %v2016 = vld [vmem:[%s3 + $0xcc] sm:$0xf]
    %v2017 = vld [vmem:[%s3 + $0xd0] sm:$0xf]
    %v2018 = vld [vmem:[%s3 + $0xd4] sm:$0xf]
    %v2019 = vld [vmem:[%s3 + $0xd8] sm:$0xf]
    %v2020 = vld [vmem:[%s3 + $0xdc] sm:$0xf]
    %v2021 = vld [vmem:[%s3 + $0xe0] sm:$0xf]
    %v2022 = vld [vmem:[%s3 + $0xe4] sm:$0xf]
    %v2023 = vld [vmem:[%s3 + $0xe8] sm:$0xf]
    %v2024 = vld [vmem:[%s3 + $0xec] sm:$0xf]
    %v2025 = vld [vmem:[%s3 + $0xf0] sm:$0xf]
    %v2026 = vld [vmem:[%s3 + $0xf4] sm:$0xf]
    %v2027 = vld [vmem:[%s3 + $0xf8] sm:$0xf]
    %v2028 = vld [vmem:[%s3 + $0xfc] sm:$0xf]
    %v2029 = vld [vmem:[%s3 + $0x100] sm:$0xf]
    %v2030 = vld [vmem:[%s3 + $0x104] sm:$0xf]
    %v2031 = vld [vmem:[%s3 + $0x108] sm:$0xf]
    %v2032 = vld [vmem:[%s3 + $0x10c] sm:$0xf]
    %v2033 = vld [vmem:[%s3 + $0x110] sm:$0xf]
    %v2034 = vld [vmem:[%s3 + $0x114] sm:$0xf]
    %v2035 = vld [vmem:[%s3 + $0x118] sm:$0xf]
    %v2036 = vld [vmem:[%s3 + $0x11c] sm:$0xf]
    %v2037 = vld [vmem:[%s3 + $0x120] sm:$0xf]
    %v2038 = vld [vmem:[%s3 + $0x124] sm:$0xf]
    %v2039 = vld [vmem:[%s3 + $0x128] sm:$0xf]
    %v2040 = vld [vmem:[%s3 + $0x12c] sm:$0xf]
    %v2041 = vld [vmem:[%s3 + $0x130] sm:$0xf]
    %v2042 = vld [vmem:[%s3 + $0x134] sm:$0xf]
    %v2043 = vld [vmem:[%s3 + $0x138] sm:$0xf]
    %v2044 = vld [vmem:[%s3 + $0x13c] sm:$0xf]
    %v2045 = vld [vmem:[%s3 + $0x140] sm:$0xf]
    %v2046 = vld [vmem:[%s3 + $0x144] sm:$0xf]
    %v2047 = vld [vmem:[%s3 + $0x148] sm:$0xf]
    %v2048 = vld [vmem:[%s3 + $0x14c] sm:$0xf]
    %v2049 = vld [vmem:[%s3 + $0x150] sm:$0xf]
    %v2050 = vld [vmem:[%s3 + $0x154] sm:$0xf]
    %v2051 = vld [vmem:[%s3 + $0x158] sm:$0xf]
    %v2052 = vld [vmem:[%s3 + $0x15c] sm:$0xf]
    %v2053 = vld [vmem:[%s3 + $0x160] sm:$0xf]
    %v2054 = vld [vmem:[%s3 + $0x164] sm:$0xf]
    %v2055 = vld [vmem:[%s3 + $0x168] sm:$0xf]
    %v2056 = vld [vmem:[%s3 + $0x16c] sm:$0xf]
    %v2057 = vld [vmem:[%s3 + $0x170] sm:$0xf]
    %v2058 = vld [vmem:[%s3 + $0x174] sm:$0xf]
    %v2059 = vld [vmem:[%s3 + $0x178] sm:$0xf]
    %v2060 = vld [vmem:[%s3 + $0x17c] sm:$0xf]
    %v2061 = vld [vmem:[%s3 + $0x180] sm:$0xf]
    %v2062 = vld [vmem:[%s3 + $0x184] sm:$0xf]
    %v2063 = vld [vmem:[%s3 + $0x188] sm:$0xf]
    %v2064 = vld [vmem:[%s3 + $0x18c] sm:$0xf]
    %v2065 = vld [vmem:[%s3 + $0x190] sm:$0xf]
    %v2066 = vld [vmem:[%s3 + $0x194] sm:$0xf]
    %v2067 = vld [vmem:[%s3 + $0x198] sm:$0xf]
    %v2068 = vld [vmem:[%s3 + $0x19c] sm:$0xf]
    %v2069 = vld [vmem:[%s3 + $0x1a0] sm:$0xf]
    %v2070 = vld [vmem:[%s3 + $0x1a4] sm:$0xf]
    %v2071 = vld [vmem:[%s3 + $0x1a8] sm:$0xf]
    %v2072 = vld [vmem:[%s3 + $0x1ac] sm:$0xf]
    %v2073 = vld [vmem:[%s3 + $0x1b0] sm:$0xf]
    %v2074 = vld [vmem:[%s3 + $0x1b4] sm:$0xf]
    %v2075 = vld [vmem:[%s3 + $0x1b8] sm:$0xf]
    %v2076 = vld [vmem:[%s3 + $0x1bc] sm:$0xf]
    %v2077 = vld [vmem:[%s3 + $0x1c0] sm:$0xf]
    %v2078 = vld [vmem:[%s3 + $0x1c4] sm:$0xf]
    %v2079 = vld [vmem:[%s3 + $0x1c8] sm:$0xf]
    %v2080 = vld [vmem:[%s3 + $0x1cc] sm:$0xf]
    %v2081 = vld [vmem:[%s3 + $0x1d0] sm:$0xf]
    %v2082 = vld [vmem:[%s3 + $0x1d4] sm:$0xf]
    %v2083 = vld [vmem:[%s3 + $0x1d8] sm:$0xf]
    %v2084 = vld [vmem:[%s3 + $0x1dc] sm:$0xf]
    %v2085 = vld [vmem:[%s3 + $0x1e0] sm:$0xf]
    %v2086 = vld [vmem:[%s3 + $0x1e4] sm:$0xf]
    %v2087 = vld [vmem:[%s3 + $0x1e8] sm:$0xf]
    %v2088 = vld [vmem:[%s3 + $0x1ec] sm:$0xf]
    %v2089 = vld [vmem:[%s3 + $0x1f0] sm:$0xf]
    %v2090 = vld [vmem:[%s3 + $0x1f4] sm:$0xf]
    %v2091 = vld [vmem:[%s3 + $0x1f8] sm:$0xf]
    %v2092 = vld [vmem:[%s3 + $0x1fc] sm:$0xf]
    %v2093 = vld [vmem:[%s3 + $0x200] sm:$0xf]
    %v2094 = vld [vmem:[%s3 + $0x204] sm:$0xf]
    %v2095 = vld [vmem:[%s3 + $0x208] sm:$0xf]
    %v2096 = vld [vmem:[%s3 + $0x20c] sm:$0xf]
    %v2097 = vld [vmem:[%s3 + $0x210] sm:$0xf]
    %v2098 = vld [vmem:[%s3 + $0x214] sm:$0xf]
    %v2099 = vld [vmem:[%s3 + $0x218] sm:$0xf]
    %v2100 = vld [vmem:[%s3 + $0x21c] sm:$0xf]
    %v2101 = vld [vmem:[%s3 + $0x220] sm:$0xf]
    %v2102 = vld [vmem:[%s3 + $0x224] sm:$0xf]
    %v2103 = vld [vmem:[%s3 + $0x228] sm:$0xf]
    %v2104 = vld [vmem:[%s3 + $0x22c] sm:$0xf]
    %v2105 = vld [vmem:[%s3 + $0x230] sm:$0xf]
    %v2106 = vld [vmem:[%s3 + $0x234] sm:$0xf]
    %v2107 = vld [vmem:[%s3 + $0x238] sm:$0xf]
    %v2108 = vld [vmem:[%s3 + $0x23c] sm:$0xf]
    %v2109 = vld [vmem:[%s3 + $0x240] sm:$0xf]
    %v2110 = vld [vmem:[%s3 + $0x244] sm:$0xf]
    %v2111 = vld [vmem:[%s3 + $0x248] sm:$0xf]
    %v2112 = vld [vmem:[%s3 + $0x24c] sm:$0xf]
    %v2113 = vld [vmem:[%s3 + $0x250] sm:$0xf]
    %v2114 = vld [vmem:[%s3 + $0x254] sm:$0xf]
    %v2115 = vld [vmem:[%s3 + $0x258] sm:$0xf]
    %v2116 = vld [vmem:[%s3 + $0x25c] sm:$0xf]
    %v2117 = vld [vmem:[%s3 + $0x260] sm:$0xf]
    %v2118 = vld [vmem:[%s3 + $0x264] sm:$0xf]
    %v2119 = vld [vmem:[%s3 + $0x268] sm:$0xf]
    %v2120 = vld [vmem:[%s3 + $0x26c] sm:$0xf]
    %v2121 = vld [vmem:[%s3 + $0x270] sm:$0xf]
    %v2122 = vld [vmem:[%s3 + $0x274] sm:$0xf]
    %v2123 = vld [vmem:[%s3 + $0x278] sm:$0xf]
    %v2124 = vld [vmem:[%s3 + $0x27c] sm:$0xf]
    %v2285 = vunpack.c.l.b16 %v1965
    %v2286 = vunpack.c.l.b16 %v1966
    %v2287 = vunpack.c.l.b16 %v1967
    %v2288 = vunpack.c.l.b16 %v1968
    %v2289 = vunpack.c.l.b16 %v1969
    %v2290 = vunpack.c.l.b16 %v1970
    %v2291 = vunpack.c.l.b16 %v1971
    %v2292 = vunpack.c.l.b16 %v1972
    %v2293 = vunpack.c.l.b16 %v1973
    %v2294 = vunpack.c.l.b16 %v1974
    %v2295 = vunpack.c.l.b16 %v1975
    %v2296 = vunpack.c.l.b16 %v1976
    %v2297 = vunpack.c.l.b16 %v1977
    %v2298 = vunpack.c.l.b16 %v1978
    %v2299 = vunpack.c.l.b16 %v1979
    %v2300 = vunpack.c.l.b16 %v1980
    %v2301 = vunpack.c.l.b16 %v1981
    %v2302 = vunpack.c.l.b16 %v1982
    %v2303 = vunpack.c.l.b16 %v1983
    %v2304 = vunpack.c.l.b16 %v1984
    %v2305 = vunpack.c.l.b16 %v1985
    %v2306 = vunpack.c.l.b16 %v1986
    %v2307 = vunpack.c.l.b16 %v1987
    %v2308 = vunpack.c.l.b16 %v1988
    %v2309 = vunpack.c.l.b16 %v1989
    %v2310 = vunpack.c.l.b16 %v1990
    %v2311 = vunpack.c.l.b16 %v1991
    %v2312 = vunpack.c.l.b16 %v1992
    %v2313 = vunpack.c.l.b16 %v1993
    %v2314 = vunpack.c.l.b16 %v1994
    %v2315 = vunpack.c.l.b16 %v1995
    %v2316 = vunpack.c.l.b16 %v1996
    %v2317 = vunpack.c.l.b16 %v1997
    %v2318 = vunpack.c.l.b16 %v1998
    %v2319 = vunpack.c.l.b16 %v1999
    %v2320 = vunpack.c.l.b16 %v2000
    %v2321 = vunpack.c.l.b16 %v2001
    %v2322 = vunpack.c.l.b16 %v2002
    %v2323 = vunpack.c.l.b16 %v2003
    %v2324 = vunpack.c.l.b16 %v2004
    %v2325 = vunpack.c.l.b16 %v2005
    %v2326 = vunpack.c.l.b16 %v2006
    %v2327 = vunpack.c.l.b16 %v2007
    %v2328 = vunpack.c.l.b16 %v2008
    %v2329 = vunpack.c.l.b16 %v2009
    %v2330 = vunpack.c.l.b16 %v2010
    %v2331 = vunpack.c.l.b16 %v2011
    %v2332 = vunpack.c.l.b16 %v2012
    %v2333 = vunpack.c.l.b16 %v2013
    %v2334 = vunpack.c.l.b16 %v2014
    %v2335 = vunpack.c.l.b16 %v2015
    %v2336 = vunpack.c.l.b16 %v2016
    %v2337 = vunpack.c.l.b16 %v2017
    %v2338 = vunpack.c.l.b16 %v2018
    %v2339 = vunpack.c.l.b16 %v2019
    %v2340 = vunpack.c.l.b16 %v2020
    %v2341 = vunpack.c.l.b16 %v2021
    %v2342 = vunpack.c.l.b16 %v2022
    %v2343 = vunpack.c.l.b16 %v2023
    %v2344 = vunpack.c.l.b16 %v2024
    %v2345 = vunpack.c.l.b16 %v2025
    %v2346 = vunpack.c.l.b16 %v2026
    %v2347 = vunpack.c.l.b16 %v2027
    %v2348 = vunpack.c.l.b16 %v2028
    %v2349 = vunpack.c.l.b16 %v2029
    %v2350 = vunpack.c.l.b16 %v2030
    %v2351 = vunpack.c.l.b16 %v2031
    %v2352 = vunpack.c.l.b16 %v2032
    %v2353 = vunpack.c.l.b16 %v2033
    %v2354 = vunpack.c.l.b16 %v2034
    %v2355 = vunpack.c.l.b16 %v2035
    %v2356 = vunpack.c.l.b16 %v2036
    %v2357 = vunpack.c.l.b16 %v2037
    %v2358 = vunpack.c.l.b16 %v2038
    %v2359 = vunpack.c.l.b16 %v2039
    %v2360 = vunpack.c.l.b16 %v2040
    %v2361 = vunpack.c.l.b16 %v2041
    %v2362 = vunpack.c.l.b16 %v2042
    %v2363 = vunpack.c.l.b16 %v2043
    %v2364 = vunpack.c.l.b16 %v2044
    %v2365 = vunpack.c.l.b16 %v2045
    %v2366 = vunpack.c.l.b16 %v2046
    %v2367 = vunpack.c.l.b16 %v2047
    %v2368 = vunpack.c.l.b16 %v2048
    %v2369 = vunpack.c.l.b16 %v2049
    %v2370 = vunpack.c.l.b16 %v2050
    %v2371 = vunpack.c.l.b16 %v2051
    %v2372 = vunpack.c.l.b16 %v2052
    %v2373 = vunpack.c.l.b16 %v2053
    %v2374 = vunpack.c.l.b16 %v2054
    %v2375 = vunpack.c.l.b16 %v2055
    %v2376 = vunpack.c.l.b16 %v2056
    %v2377 = vunpack.c.l.b16 %v2057
    %v2378 = vunpack.c.l.b16 %v2058
    %v2379 = vunpack.c.l.b16 %v2059
    %v2380 = vunpack.c.l.b16 %v2060
    %v2381 = vunpack.c.l.b16 %v2061
    %v2382 = vunpack.c.l.b16 %v2062
    %v2383 = vunpack.c.l.b16 %v2063
    %v2384 = vunpack.c.l.b16 %v2064
    %v2385 = vunpack.c.l.b16 %v2065
    %v2386 = vunpack.c.l.b16 %v2066
    %v2387 = vunpack.c.l.b16 %v2067
    %v2388 = vunpack.c.l.b16 %v2068
    %v2389 = vunpack.c.l.b16 %v2069
    %v2390 = vunpack.c.l.b16 %v2070
    %v2391 = vunpack.c.l.b16 %v2071
    %v2392 = vunpack.c.l.b16 %v2072
    %v2393 = vunpack.c.l.b16 %v2073
    %v2394 = vunpack.c.l.b16 %v2074
    %v2395 = vunpack.c.l.b16 %v2075
    %v2396 = vunpack.c.l.b16 %v2076
    %v2397 = vunpack.c.l.b16 %v2077
    %v2398 = vunpack.c.l.b16 %v2078
    %v2399 = vunpack.c.l.b16 %v2079
    %v2400 = vunpack.c.l.b16 %v2080
    %v2401 = vunpack.c.l.b16 %v2081
    %v2402 = vunpack.c.l.b16 %v2082
    %v2403 = vunpack.c.l.b16 %v2083
    %v2404 = vunpack.c.l.b16 %v2084
    %v2405 = vunpack.c.l.b16 %v2085
    %v2406 = vunpack.c.l.b16 %v2086
    %v2407 = vunpack.c.l.b16 %v2087
    %v2408 = vunpack.c.l.b16 %v2088
    %v2409 = vunpack.c.l.b16 %v2089
    %v2410 = vunpack.c.l.b16 %v2090
    %v2411 = vunpack.c.l.b16 %v2091
    %v2412 = vunpack.c.l.b16 %v2092
    %v2413 = vunpack.c.l.b16 %v2093
    %v2414 = vunpack.c.l.b16 %v2094
    %v2415 = vunpack.c.l.b16 %v2095
    %v2416 = vunpack.c.l.b16 %v2096
    %v2417 = vunpack.c.l.b16 %v2097
    %v2418 = vunpack.c.l.b16 %v2098
    %v2419 = vunpack.c.l.b16 %v2099
    %v2420 = vunpack.c.l.b16 %v2100
    %v2421 = vunpack.c.l.b16 %v2101
    %v2422 = vunpack.c.l.b16 %v2102
    %v2423 = vunpack.c.l.b16 %v2103
    %v2424 = vunpack.c.l.b16 %v2104
    %v2425 = vunpack.c.l.b16 %v2105
    %v2426 = vunpack.c.l.b16 %v2106
    %v2427 = vunpack.c.l.b16 %v2107
    %v2428 = vunpack.c.l.b16 %v2108
    %v2429 = vunpack.c.l.b16 %v2109
    %v2430 = vunpack.c.l.b16 %v2110
    %v2431 = vunpack.c.l.b16 %v2111
    %v2432 = vunpack.c.l.b16 %v2112
    %v2433 = vunpack.c.l.b16 %v2113
    %v2434 = vunpack.c.l.b16 %v2114
    %v2435 = vunpack.c.l.b16 %v2115
    %v2436 = vunpack.c.l.b16 %v2116
    %v2437 = vunpack.c.l.b16 %v2117
    %v2438 = vunpack.c.l.b16 %v2118
    %v2439 = vunpack.c.l.b16 %v2119
    %v2440 = vunpack.c.l.b16 %v2120
    %v2441 = vunpack.c.l.b16 %v2121
    %v2442 = vunpack.c.l.b16 %v2122
    %v2443 = vunpack.c.l.b16 %v2123
    %v2444 = vunpack.c.l.b16 %v2124
    %v2445 = vpack.c.b16 %v2286, %v2285
    %v2446 = vpack.c.b16 %v2288, %v2287
    %v2447 = vpack.c.b16 %v2290, %v2289
    %v2448 = vpack.c.b16 %v2292, %v2291
    %v2449 = vpack.c.b16 %v2294, %v2293
    %v2450 = vpack.c.b16 %v2296, %v2295
    %v2451 = vpack.c.b16 %v2298, %v2297
    %v2452 = vpack.c.b16 %v2300, %v2299
    %v2453 = vpack.c.b16 %v2302, %v2301
    %v2454 = vpack.c.b16 %v2304, %v2303
    %v2455 = vpack.c.b16 %v2306, %v2305
    %v2456 = vpack.c.b16 %v2308, %v2307
    %v2457 = vpack.c.b16 %v2310, %v2309
    %v2458 = vpack.c.b16 %v2312, %v2311
    %v2459 = vpack.c.b16 %v2314, %v2313
    %v2460 = vpack.c.b16 %v2316, %v2315
    %v2461 = vpack.c.b16 %v2318, %v2317
    %v2462 = vpack.c.b16 %v2320, %v2319
    %v2463 = vpack.c.b16 %v2322, %v2321
    %v2464 = vpack.c.b16 %v2324, %v2323
    %v2465 = vpack.c.b16 %v2326, %v2325
    %v2466 = vpack.c.b16 %v2328, %v2327
    %v2467 = vpack.c.b16 %v2330, %v2329
    %v2468 = vpack.c.b16 %v2332, %v2331
    %v2469 = vpack.c.b16 %v2334, %v2333
    %v2470 = vpack.c.b16 %v2336, %v2335
    %v2471 = vpack.c.b16 %v2338, %v2337
    %v2472 = vpack.c.b16 %v2340, %v2339
    %v2473 = vpack.c.b16 %v2342, %v2341
    %v2474 = vpack.c.b16 %v2344, %v2343
    %v2475 = vpack.c.b16 %v2346, %v2345
    %v2476 = vpack.c.b16 %v2348, %v2347
    %v2477 = vpack.c.b16 %v2350, %v2349
    %v2478 = vpack.c.b16 %v2352, %v2351
    %v2479 = vpack.c.b16 %v2354, %v2353
    %v2480 = vpack.c.b16 %v2356, %v2355
    %v2481 = vpack.c.b16 %v2358, %v2357
    %v2482 = vpack.c.b16 %v2360, %v2359
    %v2483 = vpack.c.b16 %v2362, %v2361
    %v2484 = vpack.c.b16 %v2364, %v2363
    %v2485 = vpack.c.b16 %v2366, %v2365
    %v2486 = vpack.c.b16 %v2368, %v2367
    %v2487 = vpack.c.b16 %v2370, %v2369
    %v2488 = vpack.c.b16 %v2372, %v2371
    %v2489 = vpack.c.b16 %v2374, %v2373
    %v2490 = vpack.c.b16 %v2376, %v2375
    %v2491 = vpack.c.b16 %v2378, %v2377
    %v2492 = vpack.c.b16 %v2380, %v2379
    %v2493 = vpack.c.b16 %v2382, %v2381
    %v2494 = vpack.c.b16 %v2384, %v2383
    %v2495 = vpack.c.b16 %v2386, %v2385
    %v2496 = vpack.c.b16 %v2388, %v2387
    %v2497 = vpack.c.b16 %v2390, %v2389
    %v2498 = vpack.c.b16 %v2392, %v2391
    %v2499 = vpack.c.b16 %v2394, %v2393
    %v2500 = vpack.c.b16 %v2396, %v2395
    %v2501 = vpack.c.b16 %v2398, %v2397
    %v2502 = vpack.c.b16 %v2400, %v2399
    %v2503 = vpack.c.b16 %v2402, %v2401
    %v2504 = vpack.c.b16 %v2404, %v2403
    %v2505 = vpack.c.b16 %v2406, %v2405
    %v2506 = vpack.c.b16 %v2408, %v2407
    %v2507 = vpack.c.b16 %v2410, %v2409
    %v2508 = vpack.c.b16 %v2412, %v2411
    %v2509 = vpack.c.b16 %v2414, %v2413
    %v2510 = vpack.c.b16 %v2416, %v2415
    %v2511 = vpack.c.b16 %v2418, %v2417
    %v2512 = vpack.c.b16 %v2420, %v2419
    %v2513 = vpack.c.b16 %v2422, %v2421
    %v2514 = vpack.c.b16 %v2424, %v2423
    %v2515 = vpack.c.b16 %v2426, %v2425
    %v2516 = vpack.c.b16 %v2428, %v2427
    %v2517 = vpack.c.b16 %v2430, %v2429
    %v2518 = vpack.c.b16 %v2432, %v2431
    %v2519 = vpack.c.b16 %v2434, %v2433
    %v2520 = vpack.c.b16 %v2436, %v2435
    %v2521 = vpack.c.b16 %v2438, %v2437
    %v2522 = vpack.c.b16 %v2440, %v2439
    %v2523 = vpack.c.b16 %v2442, %v2441
    %v2524 = vpack.c.b16 %v2444, %v2443
    %2605 = vmatprep.subr.bf16.mxu0 0
    %2606 = vmatpush1.bf16.msra.mxu0 %v2445
    %2607 = vmatprep.subr.bf16.mxu0 0
    %2608 = vmatpush1.bf16.msra.mxu0 %v2446
    %2609 = vmatprep.subr.bf16.mxu0 0
    %2610 = vmatpush1.bf16.msra.mxu0 %v2447
    %2611 = vmatprep.subr.bf16.mxu0 0
    %2612 = vmatpush1.bf16.msra.mxu0 %v2448
    %2613 = vmatprep.subr.bf16.mxu0 0
    %2614 = vmatpush1.bf16.msra.mxu0 %v2449
    %2615 = vmatprep.subr.bf16.mxu0 0
    %2616 = vmatpush1.bf16.msra.mxu0 %v2450
    %2617 = vmatprep.subr.bf16.mxu0 0
    %2618 = vmatpush1.bf16.msra.mxu0 %v2451
    %2619 = vmatprep.subr.bf16.mxu0 0
    %2620 = vmatpush1.bf16.msra.mxu0 %v2452
    %2621 = vmatprep.subr.bf16.mxu0 0
    %2622 = vmatpush1.bf16.msra.mxu0 %v2453
    %2623 = vmatprep.subr.bf16.mxu0 0
    %2624 = vmatpush1.bf16.msra.mxu0 %v2454
    %2625 = vmatprep.subr.bf16.mxu0 0
    %2626 = vmatpush1.bf16.msra.mxu0 %v2455
    %2627 = vmatprep.subr.bf16.mxu0 0
    %2628 = vmatpush1.bf16.msra.mxu0 %v2456
    %2629 = vmatprep.subr.bf16.mxu0 0
    %2630 = vmatpush1.bf16.msra.mxu0 %v2457
    %2631 = vmatprep.subr.bf16.mxu0 0
    %2632 = vmatpush1.bf16.msra.mxu0 %v2458
    %2633 = vmatprep.subr.bf16.mxu0 0
    %2634 = vmatpush1.bf16.msra.mxu0 %v2459
    %2635 = vmatprep.subr.bf16.mxu0 0
    %2636 = vmatpush1.bf16.msra.mxu0 %v2460
    %2637 = vmatprep.mubr.bf16.mxu0 %v646
    %2638 = vmatmul.mubr.bf16.gmra.mrb[0].mxu0 %v645
    %v2639 = vpop.f32.mrb[0].mxu0
    %v2640 = vadd.f32 0.0, %v2639
    %v2641 = vpop.f32.mrb[0].mxu0
    %v2642 = vpop.f32.mrb[0].mxu0
    %v2643 = vadd.f32 0.0, %v2642
    %v2644 = vpop.f32.mrb[0].mxu0
    %2645 = vmatprep.mubr.bf16.mxu0 %v648
    %2646 = vmatmul.mubr.bf16.gmra.mrb[0].mxu0 %v647
    %v2647 = vpop.f32.mrb[0].mxu0
    %v2648 = vadd.f32 0.0, %v2647
    %v2649 = vpop.f32.mrb[0].mxu0
    %v2650 = vpop.f32.mrb[0].mxu0
    %v2651 = vadd.f32 0.0, %v2650
    %v2652 = vpop.f32.mrb[0].mxu0
    %2653 = vmatprep.mubr.bf16.mxu0 %v650
    %2654 = vmatmul.mubr.bf16.gmra.mrb[0].mxu0 %v649
    %v2655 = vpop.f32.mrb[0].mxu0
    %v2656 = vadd.f32 0.0, %v2655
    %v2657 = vpop.f32.mrb[0].mxu0
    %v2658 = vpop.f32.mrb[0].mxu0
    %v2659 = vadd.f32 0.0, %v2658
    %v2660 = vpop.f32.mrb[0].mxu0
    %2661 = vmatprep.mubr.bf16.mxu0 %v652
    %2662 = vmatmul.mubr.bf16.gmra.mrb[0].mxu0 %v651
    %v2663 = vpop.f32.mrb[0].mxu0
    %v2664 = vadd.f32 0.0, %v2663
    %v2665 = vpop.f32.mrb[0].mxu0
    %v2666 = vpop.f32.mrb[0].mxu0
    %v2667 = vadd.f32 0.0, %v2666
    %v2668 = vpop.f32.mrb[0].mxu0
    %2669 = vmatprep.mubr.bf16.mxu0 %v654
    %2670 = vmatmul.mubr.bf16.gmra.mrb[0].mxu0 %v653
    %v2671 = vpop.f32.mrb[0].mxu0
    %v2672 = vadd.f32 0.0, %v2671
    %v2673 = vpop.f32.mrb[0].mxu0
    %v2674 = vpop.f32.mrb[0].mxu0
    %v2675 = vadd.f32 0.0, %v2674
    %v2676 = vpop.f32.mrb[0].mxu0
    %2677 = vmatprep.mubr.bf16.mxu0 %v656
    %2678 = vmatmul.mubr.bf16.gmra.mrb[0].mxu0 %v655
    %v2679 = vpop.f32.mrb[0].mxu0
    %v2680 = vadd.f32 0.0, %v2679
    %v2681 = vpop.f32.mrb[0].mxu0
    %v2682 = vpop.f32.mrb[0].mxu0
    %v2683 = vadd.f32 0.0, %v2682
    %v2684 = vpop.f32.mrb[0].mxu0
    %2685 = vmatprep.mubr.bf16.mxu0 %v658
    %2686 = vmatmul.mubr.bf16.gmra.mrb[0].mxu0 %v657
    %v2687 = vpop.f32.mrb[0].mxu0
    %v2688 = vadd.f32 0.0, %v2687
    %v2689 = vpop.f32.mrb[0].mxu0
    %v2690 = vpop.f32.mrb[0].mxu0
    %v2691 = vadd.f32 0.0, %v2690
    %v2692 = vpop.f32.mrb[0].mxu0
    %2693 = vmatprep.mubr.bf16.mxu0 %v660
    %2694 = vmatmul.mubr.bf16.gmra.mrb[0].mxu0 %v659
    %v2695 = vpop.f32.mrb[0].mxu0
    %v2696 = vadd.f32 0.0, %v2695
    %v2697 = vpop.f32.mrb[0].mxu0
    %v2698 = vpop.f32.mrb[0].mxu0
    %v2699 = vadd.f32 0.0, %v2698
    %v2700 = vpop.f32.mrb[0].mxu0
    %2701 = vdwg.mxu0
    %2702 = vmatprep.subr.bf16.mxu0 0
    %2703 = vmatpush1.bf16.msra.mxu0 %v2461
    %2704 = vmatprep.subr.bf16.mxu0 0
    %2705 = vmatpush1.bf16.msra.mxu0 %v2462
    %2706 = vmatprep.subr.bf16.mxu0 0
    %2707 = vmatpush1.bf16.msra.mxu0 %v2463
    %2708 = vmatprep.subr.bf16.mxu0 0
    %2709 = vmatpush1.bf16.msra.mxu0 %v2464
    %2710 = vmatprep.subr.bf16.mxu0 0
    %2711 = vmatpush1.bf16.msra.mxu0 %v2465
    %2712 = vmatprep.subr.bf16.mxu0 0
    %2713 = vmatpush1.bf16.msra.mxu0 %v2466
    %2714 = vmatprep.subr.bf16.mxu0 0
    %2715 = vmatpush1.bf16.msra.mxu0 %v2467
    %2716 = vmatprep.subr.bf16.mxu0 0
    %2717 = vmatpush1.bf16.msra.mxu0 %v2468
    %2718 = vmatprep.subr.bf16.mxu0 0
    %2719 = vmatpush1.bf16.msra.mxu0 %v2469
    %2720 = vmatprep.subr.bf16.mxu0 0
    %2721 = vmatpush1.bf16.msra.mxu0 %v2470
    %2722 = vmatprep.subr.bf16.mxu0 0
    %2723 = vmatpush1.bf16.msra.mxu0 %v2471
    %2724 = vmatprep.subr.bf16.mxu0 0
    %2725 = vmatpush1.bf16.msra.mxu0 %v2472
    %2726 = vmatprep.subr.bf16.mxu0 0
    %2727 = vmatpush1.bf16.msra.mxu0 %v2473
    %2728 = vmatprep.subr.bf16.mxu0 0
    %2729 = vmatpush1.bf16.msra.mxu0 %v2474
    %2730 = vmatprep.subr.bf16.mxu0 0
    %2731 = vmatpush1.bf16.msra.mxu0 %v2475
    %2732 = vmatprep.subr.bf16.mxu0 0
    %2733 = vmatpush1.bf16.msra.mxu0 %v2476
    %2734 = vmatprep.mubr.bf16.mxu0 %v857
    %2735 = vmatmul.mubr.bf16.gmra.mrb[0].mxu0 %v856
    %v2736 = vpop.f32.mrb[0].mxu0
    %v2737 = vadd.f32 %v2640, %v2736
    %v2738 = vpop.f32.mrb[0].mxu0
    %v2739 = vpop.f32.mrb[0].mxu0
    %v2740 = vadd.f32 %v2643, %v2739
    %v2741 = vpop.f32.mrb[0].mxu0
    %2742 = vmatprep.mubr.bf16.mxu0 %v859
    %2743 = vmatmul.mubr.bf16.gmra.mrb[0].mxu0 %v858
    %v2744 = vpop.f32.mrb[0].mxu0
    %v2745 = vadd.f32 %v2648, %v2744
    %v2746 = vpop.f32.mrb[0].mxu0
    %v2747 = vpop.f32.mrb[0].mxu0
    %v2748 = vadd.f32 %v2651, %v2747
    %v2749 = vpop.f32.mrb[0].mxu0
    %2750 = vmatprep.mubr.bf16.mxu0 %v861
    %2751 = vmatmul.mubr.bf16.gmra.mrb[0].mxu0 %v860
    %v2752 = vpop.f32.mrb[0].mxu0
    %v2753 = vadd.f32 %v2656, %v2752
    %v2754 = vpop.f32.mrb[0].mxu0
    %v2755 = vpop.f32.mrb[0].mxu0
    %v2756 = vadd.f32 %v2659, %v2755
    %v2757 = vpop.f32.mrb[0].mxu0
    %2758 = vmatprep.mubr.bf16.mxu0 %v863
    %2759 = vmatmul.mubr.bf16.gmra.mrb[0].mxu0 %v862
    %v2760 = vpop.f32.mrb[0].mxu0
    %v2761 = vadd.f32 %v2664, %v2760
    %v2762 = vpop.f32.mrb[0].mxu0
    %v2763 = vpop.f32.mrb[0].mxu0
    %v2764 = vadd.f32 %v2667, %v2763
    %v2765 = vpop.f32.mrb[0].mxu0
    %2766 = vmatprep.mubr.bf16.mxu0 %v865
    %2767 = vmatmul.mubr.bf16.gmra.mrb[0].mxu0 %v864
    %v2768 = vpop.f32.mrb[0].mxu0
    %v2769 = vadd.f32 %v2672, %v2768
    %v2770 = vpop.f32.mrb[0].mxu0
    %v2771 = vpop.f32.mrb[0].mxu0
    %v2772 = vadd.f32 %v2675, %v2771
    %v2773 = vpop.f32.mrb[0].mxu0
    %2774 = vmatprep.mubr.bf16.mxu0 %v867
    %2775 = vmatmul.mubr.bf16.gmra.mrb[0].mxu0 %v866
    %v2776 = vpop.f32.mrb[0].mxu0
    %v2777 = vadd.f32 %v2680, %v2776
    %v2778 = vpop.f32.mrb[0].mxu0
    %v2779 = vpop.f32.mrb[0].mxu0
    %v2780 = vadd.f32 %v2683, %v2779
    %v2781 = vpop.f32.mrb[0].mxu0
    %2782 = vmatprep.mubr.bf16.mxu0 %v869
    %2783 = vmatmul.mubr.bf16.gmra.mrb[0].mxu0 %v868
    %v2784 = vpop.f32.mrb[0].mxu0
    %v2785 = vadd.f32 %v2688, %v2784
    %v2786 = vpop.f32.mrb[0].mxu0
    %v2787 = vpop.f32.mrb[0].mxu0
    %v2788 = vadd.f32 %v2691, %v2787
    %v2789 = vpop.f32.mrb[0].mxu0
    %2790 = vmatprep.mubr.bf16.mxu0 %v871
    %2791 = vmatmul.mubr.bf16.gmra.mrb[0].mxu0 %v870
    %v2792 = vpop.f32.mrb[0].mxu0
    %v2793 = vadd.f32 %v2696, %v2792
    %v2794 = vpop.f32.mrb[0].mxu0
    %v2795 = vpop.f32.mrb[0].mxu0
    %v2796 = vadd.f32 %v2699, %v2795
    %v2797 = vpop.f32.mrb[0].mxu0
    %2798 = vdwg.mxu0
    %2799 = vmatprep.subr.bf16.mxu0 0
    %2800 = vmatpush1.bf16.msra.mxu0 %v2477
    %2801 = vmatprep.subr.bf16.mxu0 0
    %2802 = vmatpush1.bf16.msra.mxu0 %v2478
    %2803 = vmatprep.subr.bf16.mxu0 0
    %2804 = vmatpush1.bf16.msra.mxu0 %v2479
    %2805 = vmatprep.subr.bf16.mxu0 0
    %2806 = vmatpush1.bf16.msra.mxu0 %v2480
    %2807 = vmatprep.subr.bf16.mxu0 0
    %2808 = vmatpush1.bf16.msra.mxu0 %v2481
    %2809 = vmatprep.subr.bf16.mxu0 0
    %2810 = vmatpush1.bf16.msra.mxu0 %v2482
    %2811 = vmatprep.subr.bf16.mxu0 0
    %2812 = vmatpush1.bf16.msra.mxu0 %v2483
    %2813 = vmatprep.subr.bf16.mxu0 0
    %2814 = vmatpush1.bf16.msra.mxu0 %v2484
    %2815 = vmatprep.subr.bf16.mxu0 0
    %2816 = vmatpush1.bf16.msra.mxu0 %v2485
    %2817 = vmatprep.subr.bf16.mxu0 0
    %2818 = vmatpush1.bf16.msra.mxu0 %v2486
    %2819 = vmatprep.subr.bf16.mxu0 0
    %2820 = vmatpush1.bf16.msra.mxu0 %v2487
    %2821 = vmatprep.subr.bf16.mxu0 0
    %2822 = vmatpush1.bf16.msra.mxu0 %v2488
    %2823 = vmatprep.subr.bf16.mxu0 0
    %2824 = vmatpush1.bf16.msra.mxu0 %v2489
    %2825 = vmatprep.subr.bf16.mxu0 0
    %2826 = vmatpush1.bf16.msra.mxu0 %v2490
    %2827 = vmatprep.subr.bf16.mxu0 0
    %2828 = vmatpush1.bf16.msra.mxu0 %v2491
    %2829 = vmatprep.subr.bf16.mxu0 0
    %2830 = vmatpush1.bf16.msra.mxu0 %v2492
    %2831 = vmatprep.mubr.bf16.mxu0 %v1066
    %2832 = vmatmul.mubr.bf16.gmra.mrb[0].mxu0 %v1065
    %v2833 = vpop.f32.mrb[0].mxu0
    %v2834 = vadd.f32 %v2737, %v2833
    %v2835 = vpop.f32.mrb[0].mxu0
    %v2836 = vpop.f32.mrb[0].mxu0
    %v2837 = vadd.f32 %v2740, %v2836
    %v2838 = vpop.f32.mrb[0].mxu0
    %2839 = vmatprep.mubr.bf16.mxu0 %v1068
    %2840 = vmatmul.mubr.bf16.gmra.mrb[0].mxu0 %v1067
    %v2841 = vpop.f32.mrb[0].mxu0
    %v2842 = vadd.f32 %v2745, %v2841
    %v2843 = vpop.f32.mrb[0].mxu0
    %v2844 = vpop.f32.mrb[0].mxu0
    %v2845 = vadd.f32 %v2748, %v2844
    %v2846 = vpop.f32.mrb[0].mxu0
    %2847 = vmatprep.mubr.bf16.mxu0 %v1070
    %2848 = vmatmul.mubr.bf16.gmra.mrb[0].mxu0 %v1069
    %v2849 = vpop.f32.mrb[0].mxu0
    %v2850 = vadd.f32 %v2753, %v2849
    %v2851 = vpop.f32.mrb[0].mxu0
    %v2852 = vpop.f32.mrb[0].mxu0
    %v2853 = vadd.f32 %v2756, %v2852
    %v2854 = vpop.f32.mrb[0].mxu0
    %2855 = vmatprep.mubr.bf16.mxu0 %v1072
    %2856 = vmatmul.mubr.bf16.gmra.mrb[0].mxu0 %v1071
    %v2857 = vpop.f32.mrb[0].mxu0
    %v2858 = vadd.f32 %v2761, %v2857
    %v2859 = vpop.f32.mrb[0].mxu0
    %v2860 = vpop.f32.mrb[0].mxu0
    %v2861 = vadd.f32 %v2764, %v2860
    %v2862 = vpop.f32.mrb[0].mxu0
    %2863 = vmatprep.mubr.bf16.mxu0 %v1074
    %2864 = vmatmul.mubr.bf16.gmra.mrb[0].mxu0 %v1073
    %v2865 = vpop.f32.mrb[0].mxu0
    %v2866 = vadd.f32 %v2769, %v2865
    %v2867 = vpop.f32.mrb[0].mxu0
    %v2868 = vpop.f32.mrb[0].mxu0
    %v2869 = vadd.f32 %v2772, %v2868
    %v2870 = vpop.f32.mrb[0].mxu0
    %2871 = vmatprep.mubr.bf16.mxu0 %v1076
    %2872 = vmatmul.mubr.bf16.gmra.mrb[0].mxu0 %v1075
    %v2873 = vpop.f32.mrb[0].mxu0
    %v2874 = vadd.f32 %v2777, %v2873
    %v2875 = vpop.f32.mrb[0].mxu0
    %v2876 = vpop.f32.mrb[0].mxu0
    %v2877 = vadd.f32 %v2780, %v2876
    %v2878 = vpop.f32.mrb[0].mxu0
    %2879 = vmatprep.mubr.bf16.mxu0 %v1078
    %2880 = vmatmul.mubr.bf16.gmra.mrb[0].mxu0 %v1077
    %v2881 = vpop.f32.mrb[0].mxu0
    %v2882 = vadd.f32 %v2785, %v2881
    %v2883 = vpop.f32.mrb[0].mxu0
    %v2884 = vpop.f32.mrb[0].mxu0
    %v2885 = vadd.f32 %v2788, %v2884
    %v2886 = vpop.f32.mrb[0].mxu0
    %2887 = vmatprep.mubr.bf16.mxu0 %v1080
    %2888 = vmatmul.mubr.bf16.gmra.mrb[0].mxu0 %v1079
    %v2889 = vpop.f32.mrb[0].mxu0
    %v2890 = vadd.f32 %v2793, %v2889
    %v2891 = vpop.f32.mrb[0].mxu0
    %v2892 = vpop.f32.mrb[0].mxu0
    %v2893 = vadd.f32 %v2796, %v2892
    %v2894 = vpop.f32.mrb[0].mxu0
    %2895 = vdwg.mxu0
    %2896 = vmatprep.subr.bf16.mxu0 0
    %2897 = vmatpush1.bf16.msra.mxu0 %v2493
    %2898 = vmatprep.subr.bf16.mxu0 0
    %2899 = vmatpush1.bf16.msra.mxu0 %v2494
    %2900 = vmatprep.subr.bf16.mxu0 0
    %2901 = vmatpush1.bf16.msra.mxu0 %v2495
    %2902 = vmatprep.subr.bf16.mxu0 0
    %2903 = vmatpush1.bf16.msra.mxu0 %v2496
    %2904 = vmatprep.subr.bf16.mxu0 0
    %2905 = vmatpush1.bf16.msra.mxu0 %v2497
    %2906 = vmatprep.subr.bf16.mxu0 0
    %2907 = vmatpush1.bf16.msra.mxu0 %v2498
    %2908 = vmatprep.subr.bf16.mxu0 0
    %2909 = vmatpush1.bf16.msra.mxu0 %v2499
    %2910 = vmatprep.subr.bf16.mxu0 0
    %2911 = vmatpush1.bf16.msra.mxu0 %v2500
    %2912 = vmatprep.subr.bf16.mxu0 0
    %2913 = vmatpush1.bf16.msra.mxu0 %v2501
    %2914 = vmatprep.subr.bf16.mxu0 0
    %2915 = vmatpush1.bf16.msra.mxu0 %v2502
    %2916 = vmatprep.subr.bf16.mxu0 0
    %2917 = vmatpush1.bf16.msra.mxu0 %v2503
    %2918 = vmatprep.subr.bf16.mxu0 0
    %2919 = vmatpush1.bf16.msra.mxu0 %v2504
    %2920 = vmatprep.subr.bf16.mxu0 0
    %2921 = vmatpush1.bf16.msra.mxu0 %v2505
    %2922 = vmatprep.subr.bf16.mxu0 0
    %2923 = vmatpush1.bf16.msra.mxu0 %v2506
    %2924 = vmatprep.subr.bf16.mxu0 0
    %2925 = vmatpush1.bf16.msra.mxu0 %v2507
    %2926 = vmatprep.subr.bf16.mxu0 0
    %2927 = vmatpush1.bf16.msra.mxu0 %v2508
    %2928 = vmatprep.mubr.bf16.mxu0 %v1275
    %2929 = vmatmul.mubr.bf16.gmra.mrb[0].mxu0 %v1274
    %v2930 = vpop.f32.mrb[0].mxu0
    %v2931 = vadd.f32 %v2834, %v2930
    %v2932 = vpop.f32.mrb[0].mxu0
    %v2933 = vpop.f32.mrb[0].mxu0
    %v2934 = vadd.f32 %v2837, %v2933
    %v2935 = vpop.f32.mrb[0].mxu0
    %2936 = vmatprep.mubr.bf16.mxu0 %v1277
    %2937 = vmatmul.mubr.bf16.gmra.mrb[0].mxu0 %v1276
    %v2938 = vpop.f32.mrb[0].mxu0
    %v2939 = vadd.f32 %v2842, %v2938
    %v2940 = vpop.f32.mrb[0].mxu0
    %v2941 = vpop.f32.mrb[0].mxu0
    %v2942 = vadd.f32 %v2845, %v2941
    %v2943 = vpop.f32.mrb[0].mxu0
    %2944 = vmatprep.mubr.bf16.mxu0 %v1279
    %2945 = vmatmul.mubr.bf16.gmra.mrb[0].mxu0 %v1278
    %v2946 = vpop.f32.mrb[0].mxu0
    %v2947 = vadd.f32 %v2850, %v2946
    %v2948 = vpop.f32.mrb[0].mxu0
    %v2949 = vpop.f32.mrb[0].mxu0
    %v2950 = vadd.f32 %v2853, %v2949
    %v2951 = vpop.f32.mrb[0].mxu0
    %2952 = vmatprep.mubr.bf16.mxu0 %v1281
    %2953 = vmatmul.mubr.bf16.gmra.mrb[0].mxu0 %v1280
    %v2954 = vpop.f32.mrb[0].mxu0
    %v2955 = vadd.f32 %v2858, %v2954
    %v2956 = vpop.f32.mrb[0].mxu0
    %v2957 = vpop.f32.mrb[0].mxu0
    %v2958 = vadd.f32 %v2861, %v2957
    %v2959 = vpop.f32.mrb[0].mxu0
    %2960 = vmatprep.mubr.bf16.mxu0 %v1283
    %2961 = vmatmul.mubr.bf16.gmra.mrb[0].mxu0 %v1282
    %v2962 = vpop.f32.mrb[0].mxu0
    %v2963 = vadd.f32 %v2866, %v2962
    %v2964 = vpop.f32.mrb[0].mxu0
    %v2965 = vpop.f32.mrb[0].mxu0
    %v2966 = vadd.f32 %v2869, %v2965
    %v2967 = vpop.f32.mrb[0].mxu0
    %2968 = vmatprep.mubr.bf16.mxu0 %v1285
    %2969 = vmatmul.mubr.bf16.gmra.mrb[0].mxu0 %v1284
    %v2970 = vpop.f32.mrb[0].mxu0
    %v2971 = vadd.f32 %v2874, %v2970
    %v2972 = vpop.f32.mrb[0].mxu0
    %v2973 = vpop.f32.mrb[0].mxu0
    %v2974 = vadd.f32 %v2877, %v2973
    %v2975 = vpop.f32.mrb[0].mxu0
    %2976 = vmatprep.mubr.bf16.mxu0 %v1287
    %2977 = vmatmul.mubr.bf16.gmra.mrb[0].mxu0 %v1286
    %v2978 = vpop.f32.mrb[0].mxu0
    %v2979 = vadd.f32 %v2882, %v2978
    %v2980 = vpop.f32.mrb[0].mxu0
    %v2981 = vpop.f32.mrb[0].mxu0
    %v2982 = vadd.f32 %v2885, %v2981
    %v2983 = vpop.f32.mrb[0].mxu0
    %2984 = vmatprep.mubr.bf16.mxu0 %v1289
    %2985 = vmatmul.mubr.bf16.gmra.mrb[0].mxu0 %v1288
    %v2986 = vpop.f32.mrb[0].mxu0
    %v2987 = vadd.f32 %v2890, %v2986
    %v2988 = vpop.f32.mrb[0].mxu0
    %v2989 = vpop.f32.mrb[0].mxu0
    %v2990 = vadd.f32 %v2893, %v2989
    %v2991 = vpop.f32.mrb[0].mxu0
    %2992 = vdwg.mxu0
    %2993 = vmatprep.subr.bf16.mxu0 0
    %2994 = vmatpush1.bf16.msra.mxu0 %v2509
    %2995 = vmatprep.subr.bf16.mxu0 0
    %2996 = vmatpush1.bf16.msra.mxu0 %v2510
    %2997 = vmatprep.subr.bf16.mxu0 0
    %2998 = vmatpush1.bf16.msra.mxu0 %v2511
    %2999 = vmatprep.subr.bf16.mxu0 0
    %3000 = vmatpush1.bf16.msra.mxu0 %v2512
    %3001 = vmatprep.subr.bf16.mxu0 0
    %3002 = vmatpush1.bf16.msra.mxu0 %v2513
    %3003 = vmatprep.subr.bf16.mxu0 0
    %3004 = vmatpush1.bf16.msra.mxu0 %v2514
    %3005 = vmatprep.subr.bf16.mxu0 0
    %3006 = vmatpush1.bf16.msra.mxu0 %v2515
    %3007 = vmatprep.subr.bf16.mxu0 0
    %3008 = vmatpush1.bf16.msra.mxu0 %v2516
    %3009 = vmatprep.subr.bf16.mxu0 0
    %3010 = vmatpush1.bf16.msra.mxu0 %v2517
    %3011 = vmatprep.subr.bf16.mxu0 0
    %3012 = vmatpush1.bf16.msra.mxu0 %v2518
    %3013 = vmatprep.subr.bf16.mxu0 0
    %3014 = vmatpush1.bf16.msra.mxu0 %v2519
    %3015 = vmatprep.subr.bf16.mxu0 0
    %3016 = vmatpush1.bf16.msra.mxu0 %v2520
    %3017 = vmatprep.subr.bf16.mxu0 0
    %3018 = vmatpush1.bf16.msra.mxu0 %v2521
    %3019 = vmatprep.subr.bf16.mxu0 0
    %3020 = vmatpush1.bf16.msra.mxu0 %v2522
    %3021 = vmatprep.subr.bf16.mxu0 0
    %3022 = vmatpush1.bf16.msra.mxu0 %v2523
    %3023 = vmatprep.subr.bf16.mxu0 0
    %3024 = vmatpush1.bf16.msra.mxu0 %v2524
    %3025 = vmatprep.mubr.bf16.mxu0 %v213
    %3026 = vmatmul.mubr.bf16.gmra.mrb[0].mxu0 %v212
    %v3027 = vpop.f32.mrb[0].mxu0
    %v3028 = vadd.f32 %v2931, %v3027
    %v3029 = vpop.f32.mrb[0].mxu0
    %v3030 = vpop.f32.mrb[0].mxu0
    %v3031 = vadd.f32 %v2934, %v3030
    %v3032 = vpop.f32.mrb[0].mxu0
    %3033 = vmatprep.mubr.bf16.mxu0 %v215
    %3034 = vmatmul.mubr.bf16.gmra.mrb[0].mxu0 %v214
    %v3035 = vpop.f32.mrb[0].mxu0
    %v3036 = vadd.f32 %v2939, %v3035
    %v3037 = vpop.f32.mrb[0].mxu0
    %v3038 = vpop.f32.mrb[0].mxu0
    %v3039 = vadd.f32 %v2942, %v3038
    %v3040 = vpop.f32.mrb[0].mxu0
    %3041 = vmatprep.mubr.bf16.mxu0 %v217
    %3042 = vmatmul.mubr.bf16.gmra.mrb[0].mxu0 %v216
    %v3043 = vpop.f32.mrb[0].mxu0
    %v3044 = vadd.f32 %v2947, %v3043
    %v3045 = vpop.f32.mrb[0].mxu0
    %v3046 = vpop.f32.mrb[0].mxu0
    %v3047 = vadd.f32 %v2950, %v3046
    %v3048 = vpop.f32.mrb[0].mxu0
    %3049 = vmatprep.mubr.bf16.mxu0 %v219
    %3050 = vmatmul.mubr.bf16.gmra.mrb[0].mxu0 %v218
    %v3051 = vpop.f32.mrb[0].mxu0
    %v3052 = vadd.f32 %v2955, %v3051
    %v3053 = vpop.f32.mrb[0].mxu0
    %v3054 = vpop.f32.mrb[0].mxu0
    %v3055 = vadd.f32 %v2958, %v3054
    %v3056 = vpop.f32.mrb[0].mxu0
    %3057 = vmatprep.mubr.bf16.mxu0 %v221
    %3058 = vmatmul.mubr.bf16.gmra.mrb[0].mxu0 %v220
    %v3059 = vpop.f32.mrb[0].mxu0
    %v3060 = vadd.f32 %v2963, %v3059
    %v3061 = vpop.f32.mrb[0].mxu0
    %v3062 = vpop.f32.mrb[0].mxu0
    %v3063 = vadd.f32 %v2966, %v3062
    %v3064 = vpop.f32.mrb[0].mxu0
    %3065 = vmatprep.mubr.bf16.mxu0 %v223
    %3066 = vmatmul.mubr.bf16.gmra.mrb[0].mxu0 %v222
    %v3067 = vpop.f32.mrb[0].mxu0
    %v3068 = vadd.f32 %v2971, %v3067
    %v3069 = vpop.f32.mrb[0].mxu0
    %v3070 = vpop.f32.mrb[0].mxu0
    %v3071 = vadd.f32 %v2974, %v3070
    %v3072 = vpop.f32.mrb[0].mxu0
    %3073 = vmatprep.mubr.bf16.mxu0 %v225
    %3074 = vmatmul.mubr.bf16.gmra.mrb[0].mxu0 %v224
    %v3075 = vpop.f32.mrb[0].mxu0
    %v3076 = vadd.f32 %v2979, %v3075
    %v3077 = vpop.f32.mrb[0].mxu0
    %v3078 = vpop.f32.mrb[0].mxu0
    %v3079 = vadd.f32 %v2982, %v3078
    %v3080 = vpop.f32.mrb[0].mxu0
    %3081 = vmatprep.mubr.bf16.mxu0 %v227
    %3082 = vmatmul.mubr.bf16.gmra.mrb[0].mxu0 %v226
    %v3083 = vpop.f32.mrb[0].mxu0
    %v3084 = vadd.f32 %v2987, %v3083
    %v3085 = vpop.f32.mrb[0].mxu0
    %v3086 = vpop.f32.mrb[0].mxu0
    %v3087 = vadd.f32 %v2990, %v3086
    %v3088 = vpop.f32.mrb[0].mxu0
    %3089 = vdwg.mxu0
    %v3090 = vld [vmem:[%s4] sm:$0x3]
    %v3092 = vlaneseq
    %v3093 = vshrl.u32 %v3092, 7
    %v3094 = vsub.s32 0, %v3093
    %v3095 = vrot.slane %v3090, %v3094
    %v3096 = vlaneseq
    %v3097 = vshrl.u32 %v3096, 7
    %v3098 = vsub.s32 1, %v3097
    %v3099 = vrot.slane %v3090, %v3098
    %v3102 = vmul.f32 %v1903, %v3095
    %v3103 = vmul.f32 %v3028, %v3099
    %v3104 = vmul.f32 %v1906, %v3095
    %v3105 = vmul.f32 %v3031, %v3099
    %v3106 = vmul.f32 %v1911, %v3095
    %v3107 = vmul.f32 %v3036, %v3099
    %v3108 = vmul.f32 %v1914, %v3095
    %v3109 = vmul.f32 %v3039, %v3099
    %v3110 = vmul.f32 %v1919, %v3095
    %v3111 = vmul.f32 %v3044, %v3099
    %v3112 = vmul.f32 %v1922, %v3095
    %v3113 = vmul.f32 %v3047, %v3099
    %v3114 = vmul.f32 %v1927, %v3095
    %v3115 = vmul.f32 %v3052, %v3099
    %v3116 = vmul.f32 %v1930, %v3095
    %v3117 = vmul.f32 %v3055, %v3099
    %v3118 = vmul.f32 %v1935, %v3095
    %v3119 = vmul.f32 %v3060, %v3099
    %v3120 = vmul.f32 %v1938, %v3095
    %v3121 = vmul.f32 %v3063, %v3099
    %v3122 = vmul.f32 %v1943, %v3095
    %v3123 = vmul.f32 %v3068, %v3099
    %v3124 = vmul.f32 %v1946, %v3095
    %v3125 = vmul.f32 %v3071, %v3099
    %v3126 = vmul.f32 %v1951, %v3095
    %v3127 = vmul.f32 %v3076, %v3099
    %v3128 = vmul.f32 %v1954, %v3095
    %v3129 = vmul.f32 %v3079, %v3099
    %v3130 = vmul.f32 %v1959, %v3095
    %v3131 = vmul.f32 %v3084, %v3099
    %v3132 = vmul.f32 %v1962, %v3095
    %v3133 = vmul.f32 %v3087, %v3099
    %v3134 = vld [vmem:[%s5] sm:$0x3]
    %v3136 = vlaneseq
    %v3137 = vshrl.u32 %v3136, 7
    %v3138 = vsub.s32 0, %v3137
    %v3139 = vrot.slane %v3134, %v3138
    %v3140 = vlaneseq
    %v3141 = vshrl.u32 %v3140, 7
    %v3142 = vsub.s32 1, %v3141
    %v3143 = vrot.slane %v3134, %v3142
    %v3146 = vadd.f32 %v3102, %v3139
    %v3147 = vadd.f32 %v3103, %v3143
    %v3148 = vadd.f32 %v3104, %v3139
    %v3149 = vadd.f32 %v3105, %v3143
    %v3150 = vadd.f32 %v3106, %v3139
    %v3151 = vadd.f32 %v3107, %v3143
    %v3152 = vadd.f32 %v3108, %v3139
    %v3153 = vadd.f32 %v3109, %v3143
    %v3154 = vadd.f32 %v3110, %v3139
    %v3155 = vadd.f32 %v3111, %v3143
    %v3156 = vadd.f32 %v3112, %v3139
    %v3157 = vadd.f32 %v3113, %v3143
    %v3158 = vadd.f32 %v3114, %v3139
    %v3159 = vadd.f32 %v3115, %v3143
    %v3160 = vadd.f32 %v3116, %v3139
    %v3161 = vadd.f32 %v3117, %v3143
    %v3162 = vadd.f32 %v3118, %v3139
    %v3163 = vadd.f32 %v3119, %v3143
    %v3164 = vadd.f32 %v3120, %v3139
    %v3165 = vadd.f32 %v3121, %v3143
    %v3166 = vadd.f32 %v3122, %v3139
    %v3167 = vadd.f32 %v3123, %v3143
    %v3168 = vadd.f32 %v3124, %v3139
    %v3169 = vadd.f32 %v3125, %v3143
    %v3170 = vadd.f32 %v3126, %v3139
    %v3171 = vadd.f32 %v3127, %v3143
    %v3172 = vadd.f32 %v3128, %v3139
    %v3173 = vadd.f32 %v3129, %v3143
    %v3174 = vadd.f32 %v3130, %v3139
    %v3175 = vadd.f32 %v3131, %v3143
    %v3176 = vadd.f32 %v3132, %v3139
    %v3177 = vadd.f32 %v3133, %v3143
    %v3178 = vmax.f32 %v3146, 0.0
    %v3179 = vmax.f32 %v3147, 0.0
    %v3180 = vmax.f32 %v3148, 0.0
    %v3181 = vmax.f32 %v3149, 0.0
    %v3182 = vmax.f32 %v3150, 0.0
    %v3183 = vmax.f32 %v3151, 0.0
    %v3184 = vmax.f32 %v3152, 0.0
    %v3185 = vmax.f32 %v3153, 0.0
    %v3186 = vmax.f32 %v3154, 0.0
    %v3187 = vmax.f32 %v3155, 0.0
    %v3188 = vmax.f32 %v3156, 0.0
    %v3189 = vmax.f32 %v3157, 0.0
    %v3190 = vmax.f32 %v3158, 0.0
    %v3191 = vmax.f32 %v3159, 0.0
    %v3192 = vmax.f32 %v3160, 0.0
    %v3193 = vmax.f32 %v3161, 0.0
    %v3194 = vmax.f32 %v3162, 0.0
    %v3195 = vmax.f32 %v3163, 0.0
    %v3196 = vmax.f32 %v3164, 0.0
    %v3197 = vmax.f32 %v3165, 0.0
    %v3198 = vmax.f32 %v3166, 0.0
    %v3199 = vmax.f32 %v3167, 0.0
    %v3200 = vmax.f32 %v3168, 0.0
    %v3201 = vmax.f32 %v3169, 0.0
    %v3202 = vmax.f32 %v3170, 0.0
    %v3203 = vmax.f32 %v3171, 0.0
    %v3204 = vmax.f32 %v3172, 0.0
    %v3205 = vmax.f32 %v3173, 0.0
    %v3206 = vmax.f32 %v3174, 0.0
    %v3207 = vmax.f32 %v3175, 0.0
    %v3208 = vmax.f32 %v3176, 0.0
    %v3209 = vmax.f32 %v3177, 0.0
    %v3210 = vsel %vm597, %v3208, 0.0
    %v3211 = vsel %vm597, %v3209, 0.0
    %v3212 = vsel %vm598, %v3178, 0.0
    %v3213 = vsel %vm598, %v3179, 0.0
    %v3214 = vsel %vm599, %v3180, 0.0
    %v3215 = vsel %vm599, %v3181, 0.0
    %v3216 = vsel %vm600, %v3182, 0.0
    %v3217 = vsel %vm600, %v3183, 0.0
    %v3218 = vsel %vm601, %v3184, 0.0
    %v3219 = vsel %vm601, %v3185, 0.0
    %v3220 = vsel %vm602, %v3186, 0.0
    %v3221 = vsel %vm602, %v3187, 0.0
    %v3222 = vsel %vm603, %v3188, 0.0
    %v3223 = vsel %vm603, %v3189, 0.0
    %v3224 = vsel %vm604, %v3190, 0.0
    %v3225 = vsel %vm604, %v3191, 0.0
    %v3226 = vsel %vm605, %v3192, 0.0
    %v3227 = vsel %vm605, %v3193, 0.0
    %v3228 = vsel %vm606, %v3194, 0.0
    %v3229 = vsel %vm606, %v3195, 0.0
    %v3230 = vsel %vm607, %v3196, 0.0
    %v3231 = vsel %vm607, %v3197, 0.0
    %v3232 = vsel %vm608, %v3198, 0.0
    %v3233 = vsel %vm608, %v3199, 0.0
    %v3234 = vsel %vm609, %v3200, 0.0
    %v3235 = vsel %vm609, %v3201, 0.0
    %v3236 = vsel %vm610, %v3202, 0.0
    %v3237 = vsel %vm610, %v3203, 0.0
    %v3238 = vsel %vm611, %v3204, 0.0
    %v3239 = vsel %vm611, %v3205, 0.0
    %v3240 = vsel %vm612, %v3206, 0.0
    %v3241 = vsel %vm612, %v3207, 0.0
    %v3242 = vpack.c.bf16 %v3212, %v3210
    %v3243 = vpack.c.bf16 %v3213, %v3211
    %v3244 = vpack.c.bf16 %v3216, %v3214
    %v3245 = vpack.c.bf16 %v3217, %v3215
    %v3246 = vpack.c.bf16 %v3220, %v3218
    %v3247 = vpack.c.bf16 %v3221, %v3219
    %v3248 = vpack.c.bf16 %v3224, %v3222
    %v3249 = vpack.c.bf16 %v3225, %v3223
    %v3250 = vpack.c.bf16 %v3228, %v3226
    %v3251 = vpack.c.bf16 %v3229, %v3227
    %v3252 = vpack.c.bf16 %v3232, %v3230
    %v3253 = vpack.c.bf16 %v3233, %v3231
    %v3254 = vpack.c.bf16 %v3236, %v3234
    %v3255 = vpack.c.bf16 %v3237, %v3235
    %v3256 = vpack.c.bf16 %v3240, %v3238
    %v3257 = vpack.c.bf16 %v3241, %v3239
    %v3258 = vrot.slane %v3178, 2
    %v3259 = vrot.slane %v3179, 2
    %v3260 = vrot.slane %v3180, 2
    %v3261 = vrot.slane %v3181, 2
    %v3262 = vrot.slane %v3182, 2
    %v3263 = vrot.slane %v3183, 2
    %v3264 = vrot.slane %v3184, 2
    %v3265 = vrot.slane %v3185, 2
    %v3266 = vrot.slane %v3186, 2
    %v3267 = vrot.slane %v3187, 2
    %v3268 = vrot.slane %v3188, 2
    %v3269 = vrot.slane %v3189, 2
    %v3270 = vrot.slane %v3190, 2
    %v3271 = vrot.slane %v3191, 2
    %v3272 = vrot.slane %v3192, 2
    %v3273 = vrot.slane %v3193, 2
    %v3274 = vrot.slane %v3194, 2
    %v3275 = vrot.slane %v3195, 2
    %v3276 = vrot.slane %v3196, 2
    %v3277 = vrot.slane %v3197, 2
    %v3278 = vrot.slane %v3198, 2
    %v3279 = vrot.slane %v3199, 2
    %v3280 = vrot.slane %v3200, 2
    %v3281 = vrot.slane %v3201, 2
    %v3282 = vrot.slane %v3202, 2
    %v3283 = vrot.slane %v3203, 2
    %v3284 = vrot.slane %v3204, 2
    %v3285 = vrot.slane %v3205, 2
    %v3286 = vrot.slane %v3206, 2
    %v3287 = vrot.slane %v3207, 2
    %v3288 = vrot.slane %v3208, 2
    %v3289 = vrot.slane %v3209, 2
    %v3290 = vsel %vm695, %v3286, %v3288
    %v3291 = vsel %vm695, %v3287, %v3289
    %v3292 = vsel %vm695, %v3284, %v3286
    %v3293 = vsel %vm695, %v3285, %v3287
    %v3294 = vsel %vm695, %v3282, %v3284
    %v3295 = vsel %vm695, %v3283, %v3285
    %v3296 = vsel %vm695, %v3280, %v3282
    %v3297 = vsel %vm695, %v3281, %v3283
    %v3298 = vsel %vm695, %v3278, %v3280
    %v3299 = vsel %vm695, %v3279, %v3281
    %v3300 = vsel %vm695, %v3276, %v3278
    %v3301 = vsel %vm695, %v3277, %v3279
    %v3302 = vsel %vm695, %v3274, %v3276
    %v3303 = vsel %vm695, %v3275, %v3277
    %v3304 = vsel %vm695, %v3272, %v3274
    %v3305 = vsel %vm695, %v3273, %v3275
    %v3306 = vsel %vm695, %v3270, %v3272
    %v3307 = vsel %vm695, %v3271, %v3273
    %v3308 = vsel %vm695, %v3268, %v3270
    %v3309 = vsel %vm695, %v3269, %v3271
    %v3310 = vsel %vm695, %v3266, %v3268
    %v3311 = vsel %vm695, %v3267, %v3269
    %v3312 = vsel %vm695, %v3264, %v3266
    %v3313 = vsel %vm695, %v3265, %v3267
    %v3314 = vsel %vm695, %v3262, %v3264
    %v3315 = vsel %vm695, %v3263, %v3265
    %v3316 = vsel %vm695, %v3260, %v3262
    %v3317 = vsel %vm695, %v3261, %v3263
    %v3318 = vsel %vm695, %v3258, %v3260
    %v3319 = vsel %vm695, %v3259, %v3261
    %v3320 = vsel %vm695, %v3288, %v3258
    %v3321 = vsel %vm695, %v3289, %v3259
    %v3322 = vsel %vm808, %v3320, 0.0
    %v3323 = vsel %vm808, %v3321, 0.0
    %v3324 = vsel %vm809, %v3318, 0.0
    %v3325 = vsel %vm809, %v3319, 0.0
    %v3326 = vsel %vm810, %v3316, 0.0
    %v3327 = vsel %vm810, %v3317, 0.0
    %v3328 = vsel %vm811, %v3314, 0.0
    %v3329 = vsel %vm811, %v3315, 0.0
    %v3330 = vsel %vm812, %v3312, 0.0
    %v3331 = vsel %vm812, %v3313, 0.0
    %v3332 = vsel %vm813, %v3310, 0.0
    %v3333 = vsel %vm813, %v3311, 0.0
    %v3334 = vsel %vm814, %v3308, 0.0
    %v3335 = vsel %vm814, %v3309, 0.0
    %v3336 = vsel %vm815, %v3306, 0.0
    %v3337 = vsel %vm815, %v3307, 0.0
    %v3338 = vsel %vm816, %v3304, 0.0
    %v3339 = vsel %vm816, %v3305, 0.0
    %v3340 = vsel %vm817, %v3302, 0.0
    %v3341 = vsel %vm817, %v3303, 0.0
    %v3342 = vsel %vm818, %v3300, 0.0
    %v3343 = vsel %vm818, %v3301, 0.0
    %v3344 = vsel %vm819, %v3298, 0.0
    %v3345 = vsel %vm819, %v3299, 0.0
    %v3346 = vsel %vm820, %v3296, 0.0
    %v3347 = vsel %vm820, %v3297, 0.0
    %v3348 = vsel %vm821, %v3294, 0.0
    %v3349 = vsel %vm821, %v3295, 0.0
    %v3350 = vsel %vm822, %v3292, 0.0
    %v3351 = vsel %vm822, %v3293, 0.0
    %v3352 = vsel %vm823, %v3290, 0.0
    %v3353 = vsel %vm823, %v3291, 0.0
    %v3354 = vpack.c.bf16 %v3324, %v3322
    %v3355 = vpack.c.bf16 %v3325, %v3323
    %v3356 = vpack.c.bf16 %v3328, %v3326
    %v3357 = vpack.c.bf16 %v3329, %v3327
    %v3358 = vpack.c.bf16 %v3332, %v3330
    %v3359 = vpack.c.bf16 %v3333, %v3331
    %v3360 = vpack.c.bf16 %v3336, %v3334
    %v3361 = vpack.c.bf16 %v3337, %v3335
    %v3362 = vpack.c.bf16 %v3340, %v3338
    %v3363 = vpack.c.bf16 %v3341, %v3339
    %v3364 = vpack.c.bf16 %v3344, %v3342
    %v3365 = vpack.c.bf16 %v3345, %v3343
    %v3366 = vpack.c.bf16 %v3348, %v3346
    %v3367 = vpack.c.bf16 %v3349, %v3347
    %v3368 = vpack.c.bf16 %v3352, %v3350
    %v3369 = vpack.c.bf16 %v3353, %v3351
    %v3370 = vrot.slane %v3178, 4
    %v3371 = vrot.slane %v3179, 4
    %v3372 = vrot.slane %v3180, 4
    %v3373 = vrot.slane %v3181, 4
    %v3374 = vrot.slane %v3182, 4
    %v3375 = vrot.slane %v3183, 4
    %v3376 = vrot.slane %v3184, 4
    %v3377 = vrot.slane %v3185, 4
    %v3378 = vrot.slane %v3186, 4
    %v3379 = vrot.slane %v3187, 4
    %v3380 = vrot.slane %v3188, 4
    %v3381 = vrot.slane %v3189, 4
    %v3382 = vrot.slane %v3190, 4
    %v3383 = vrot.slane %v3191, 4
    %v3384 = vrot.slane %v3192, 4
    %v3385 = vrot.slane %v3193, 4
    %v3386 = vrot.slane %v3194, 4
    %v3387 = vrot.slane %v3195, 4
    %v3388 = vrot.slane %v3196, 4
    %v3389 = vrot.slane %v3197, 4
    %v3390 = vrot.slane %v3198, 4
    %v3391 = vrot.slane %v3199, 4
    %v3392 = vrot.slane %v3200, 4
    %v3393 = vrot.slane %v3201, 4
    %v3394 = vrot.slane %v3202, 4
    %v3395 = vrot.slane %v3203, 4
    %v3396 = vrot.slane %v3204, 4
    %v3397 = vrot.slane %v3205, 4
    %v3398 = vrot.slane %v3206, 4
    %v3399 = vrot.slane %v3207, 4
    %v3400 = vrot.slane %v3208, 4
    %v3401 = vrot.slane %v3209, 4
    %v3402 = vsel %vm904, %v3398, %v3400
    %v3403 = vsel %vm904, %v3399, %v3401
    %v3404 = vsel %vm904, %v3396, %v3398
    %v3405 = vsel %vm904, %v3397, %v3399
    %v3406 = vsel %vm904, %v3394, %v3396
    %v3407 = vsel %vm904, %v3395, %v3397
    %v3408 = vsel %vm904, %v3392, %v3394
    %v3409 = vsel %vm904, %v3393, %v3395
    %v3410 = vsel %vm904, %v3390, %v3392
    %v3411 = vsel %vm904, %v3391, %v3393
    %v3412 = vsel %vm904, %v3388, %v3390
    %v3413 = vsel %vm904, %v3389, %v3391
    %v3414 = vsel %vm904, %v3386, %v3388
    %v3415 = vsel %vm904, %v3387, %v3389
    %v3416 = vsel %vm904, %v3384, %v3386
    %v3417 = vsel %vm904, %v3385, %v3387
    %v3418 = vsel %vm904, %v3382, %v3384
    %v3419 = vsel %vm904, %v3383, %v3385
    %v3420 = vsel %vm904, %v3380, %v3382
    %v3421 = vsel %vm904, %v3381, %v3383
    %v3422 = vsel %vm904, %v3378, %v3380
    %v3423 = vsel %vm904, %v3379, %v3381
    %v3424 = vsel %vm904, %v3376, %v3378
    %v3425 = vsel %vm904, %v3377, %v3379
    %v3426 = vsel %vm904, %v3374, %v3376
    %v3427 = vsel %vm904, %v3375, %v3377
    %v3428 = vsel %vm904, %v3372, %v3374
    %v3429 = vsel %vm904, %v3373, %v3375
    %v3430 = vsel %vm904, %v3370, %v3372
    %v3431 = vsel %vm904, %v3371, %v3373
    %v3432 = vsel %vm904, %v3400, %v3370
    %v3433 = vsel %vm904, %v3401, %v3371
    %v3434 = vsel %vm1017, %v3432, 0.0
    %v3435 = vsel %vm1017, %v3433, 0.0
    %v3436 = vsel %vm1018, %v3430, 0.0
    %v3437 = vsel %vm1018, %v3431, 0.0
    %v3438 = vsel %vm1019, %v3428, 0.0
    %v3439 = vsel %vm1019, %v3429, 0.0
    %v3440 = vsel %vm1020, %v3426, 0.0
    %v3441 = vsel %vm1020, %v3427, 0.0
    %v3442 = vsel %vm1021, %v3424, 0.0
    %v3443 = vsel %vm1021, %v3425, 0.0
    %v3444 = vsel %vm1022, %v3422, 0.0
    %v3445 = vsel %vm1022, %v3423, 0.0
    %v3446 = vsel %vm1023, %v3420, 0.0
    %v3447 = vsel %vm1023, %v3421, 0.0
    %v3448 = vsel %vm1024, %v3418, 0.0
    %v3449 = vsel %vm1024, %v3419, 0.0
    %v3450 = vsel %vm1025, %v3416, 0.0
    %v3451 = vsel %vm1025, %v3417, 0.0
    %v3452 = vsel %vm1026, %v3414, 0.0
    %v3453 = vsel %vm1026, %v3415, 0.0
    %v3454 = vsel %vm1027, %v3412, 0.0
    %v3455 = vsel %vm1027, %v3413, 0.0
    %v3456 = vsel %vm1028, %v3410, 0.0
    %v3457 = vsel %vm1028, %v3411, 0.0
    %v3458 = vsel %vm1029, %v3408, 0.0
    %v3459 = vsel %vm1029, %v3409, 0.0
    %v3460 = vsel %vm1030, %v3406, 0.0
    %v3461 = vsel %vm1030, %v3407, 0.0
    %v3462 = vsel %vm1031, %v3404, 0.0
    %v3463 = vsel %vm1031, %v3405, 0.0
    %v3464 = vsel %vm1032, %v3402, 0.0
    %v3465 = vsel %vm1032, %v3403, 0.0
    %v3466 = vpack.c.bf16 %v3436, %v3434
    %v3467 = vpack.c.bf16 %v3437, %v3435
    %v3468 = vpack.c.bf16 %v3440, %v3438
    %v3469 = vpack.c.bf16 %v3441, %v3439
    %v3470 = vpack.c.bf16 %v3444, %v3442
    %v3471 = vpack.c.bf16 %v3445, %v3443
    %v3472 = vpack.c.bf16 %v3448, %v3446
    %v3473 = vpack.c.bf16 %v3449, %v3447
    %v3474 = vpack.c.bf16 %v3452, %v3450
    %v3475 = vpack.c.bf16 %v3453, %v3451
    %v3476 = vpack.c.bf16 %v3456, %v3454
    %v3477 = vpack.c.bf16 %v3457, %v3455
    %v3478 = vpack.c.bf16 %v3460, %v3458
    %v3479 = vpack.c.bf16 %v3461, %v3459
    %v3480 = vpack.c.bf16 %v3464, %v3462
    %v3481 = vpack.c.bf16 %v3465, %v3463
    %v3482 = vrot.slane %v3178, 6
    %v3483 = vrot.slane %v3179, 6
    %v3484 = vrot.slane %v3180, 6
    %v3485 = vrot.slane %v3181, 6
    %v3486 = vrot.slane %v3182, 6
    %v3487 = vrot.slane %v3183, 6
    %v3488 = vrot.slane %v3184, 6
    %v3489 = vrot.slane %v3185, 6
    %v3490 = vrot.slane %v3186, 6
    %v3491 = vrot.slane %v3187, 6
    %v3492 = vrot.slane %v3188, 6
    %v3493 = vrot.slane %v3189, 6
    %v3494 = vrot.slane %v3190, 6
    %v3495 = vrot.slane %v3191, 6
    %v3496 = vrot.slane %v3192, 6
    %v3497 = vrot.slane %v3193, 6
    %v3498 = vrot.slane %v3194, 6
    %v3499 = vrot.slane %v3195, 6
    %v3500 = vrot.slane %v3196, 6
    %v3501 = vrot.slane %v3197, 6
    %v3502 = vrot.slane %v3198, 6
    %v3503 = vrot.slane %v3199, 6
    %v3504 = vrot.slane %v3200, 6
    %v3505 = vrot.slane %v3201, 6
    %v3506 = vrot.slane %v3202, 6
    %v3507 = vrot.slane %v3203, 6
    %v3508 = vrot.slane %v3204, 6
    %v3509 = vrot.slane %v3205, 6
    %v3510 = vrot.slane %v3206, 6
    %v3511 = vrot.slane %v3207, 6
    %v3512 = vrot.slane %v3208, 6
    %v3513 = vrot.slane %v3209, 6
    %v3514 = vsel %vm1113, %v3510, %v3512
    %v3515 = vsel %vm1113, %v3511, %v3513
    %v3516 = vsel %vm1113, %v3508, %v3510
    %v3517 = vsel %vm1113, %v3509, %v3511
    %v3518 = vsel %vm1113, %v3506, %v3508
    %v3519 = vsel %vm1113, %v3507, %v3509
    %v3520 = vsel %vm1113, %v3504, %v3506
    %v3521 = vsel %vm1113, %v3505, %v3507
    %v3522 = vsel %vm1113, %v3502, %v3504
    %v3523 = vsel %vm1113, %v3503, %v3505
    %v3524 = vsel %vm1113, %v3500, %v3502
    %v3525 = vsel %vm1113, %v3501, %v3503
    %v3526 = vsel %vm1113, %v3498, %v3500
    %v3527 = vsel %vm1113, %v3499, %v3501
    %v3528 = vsel %vm1113, %v3496, %v3498
    %v3529 = vsel %vm1113, %v3497, %v3499
    %v3530 = vsel %vm1113, %v3494, %v3496
    %v3531 = vsel %vm1113, %v3495, %v3497
    %v3532 = vsel %vm1113, %v3492, %v3494
    %v3533 = vsel %vm1113, %v3493, %v3495
    %v3534 = vsel %vm1113, %v3490, %v3492
    %v3535 = vsel %vm1113, %v3491, %v3493
    %v3536 = vsel %vm1113, %v3488, %v3490
    %v3537 = vsel %vm1113, %v3489, %v3491
    %v3538 = vsel %vm1113, %v3486, %v3488
    %v3539 = vsel %vm1113, %v3487, %v3489
    %v3540 = vsel %vm1113, %v3484, %v3486
    %v3541 = vsel %vm1113, %v3485, %v3487
    %v3542 = vsel %vm1113, %v3482, %v3484
    %v3543 = vsel %vm1113, %v3483, %v3485
    %v3544 = vsel %vm1113, %v3512, %v3482
    %v3545 = vsel %vm1113, %v3513, %v3483
    %v3546 = vsel %vm1226, %v3544, 0.0
    %v3547 = vsel %vm1226, %v3545, 0.0
    %v3548 = vsel %vm1227, %v3542, 0.0
    %v3549 = vsel %vm1227, %v3543, 0.0
    %v3550 = vsel %vm1228, %v3540, 0.0
    %v3551 = vsel %vm1228, %v3541, 0.0
    %v3552 = vsel %vm1229, %v3538, 0.0
    %v3553 = vsel %vm1229, %v3539, 0.0
    %v3554 = vsel %vm1230, %v3536, 0.0
    %v3555 = vsel %vm1230, %v3537, 0.0
    %v3556 = vsel %vm1231, %v3534, 0.0
    %v3557 = vsel %vm1231, %v3535, 0.0
    %v3558 = vsel %vm1232, %v3532, 0.0
    %v3559 = vsel %vm1232, %v3533, 0.0
    %v3560 = vsel %vm1233, %v3530, 0.0
    %v3561 = vsel %vm1233, %v3531, 0.0
    %v3562 = vsel %vm1234, %v3528, 0.0
    %v3563 = vsel %vm1234, %v3529, 0.0
    %v3564 = vsel %vm1235, %v3526, 0.0
    %v3565 = vsel %vm1235, %v3527, 0.0
    %v3566 = vsel %vm1236, %v3524, 0.0
    %v3567 = vsel %vm1236, %v3525, 0.0
    %v3568 = vsel %vm1237, %v3522, 0.0
    %v3569 = vsel %vm1237, %v3523, 0.0
    %v3570 = vsel %vm1238, %v3520, 0.0
    %v3571 = vsel %vm1238, %v3521, 0.0
    %v3572 = vsel %vm1239, %v3518, 0.0
    %v3573 = vsel %vm1239, %v3519, 0.0
    %v3574 = vsel %vm1240, %v3516, 0.0
    %v3575 = vsel %vm1240, %v3517, 0.0
    %v3576 = vsel %vm1241, %v3514, 0.0
    %v3577 = vsel %vm1241, %v3515, 0.0
    %v3578 = vpack.c.bf16 %v3548, %v3546
    %v3579 = vpack.c.bf16 %v3549, %v3547
    %v3580 = vpack.c.bf16 %v3552, %v3550
    %v3581 = vpack.c.bf16 %v3553, %v3551
    %v3582 = vpack.c.bf16 %v3556, %v3554
    %v3583 = vpack.c.bf16 %v3557, %v3555
    %v3584 = vpack.c.bf16 %v3560, %v3558
    %v3585 = vpack.c.bf16 %v3561, %v3559
    %v3586 = vpack.c.bf16 %v3564, %v3562
    %v3587 = vpack.c.bf16 %v3565, %v3563
    %v3588 = vpack.c.bf16 %v3568, %v3566
    %v3589 = vpack.c.bf16 %v3569, %v3567
    %v3590 = vpack.c.bf16 %v3572, %v3570
    %v3591 = vpack.c.bf16 %v3573, %v3571
    %v3592 = vpack.c.bf16 %v3576, %v3574
    %v3593 = vpack.c.bf16 %v3577, %v3575
    %v3594 = vpack.c.bf16 %v3180, %v3178
    %v3595 = vpack.c.bf16 %v3181, %v3179
    %v3596 = vpack.c.bf16 %v3184, %v3182
    %v3597 = vpack.c.bf16 %v3185, %v3183
    %v3598 = vpack.c.bf16 %v3188, %v3186
    %v3599 = vpack.c.bf16 %v3189, %v3187
    %v3600 = vpack.c.bf16 %v3192, %v3190
    %v3601 = vpack.c.bf16 %v3193, %v3191
    %v3602 = vpack.c.bf16 %v3196, %v3194
    %v3603 = vpack.c.bf16 %v3197, %v3195
    %v3604 = vpack.c.bf16 %v3200, %v3198
    %v3605 = vpack.c.bf16 %v3201, %v3199
    %v3606 = vpack.c.bf16 %v3204, %v3202
    %v3607 = vpack.c.bf16 %v3205, %v3203
    %v3608 = vpack.c.bf16 %v3208, %v3206
    %v3609 = vpack.c.bf16 %v3209, %v3207
    %v3610 = vld [vmem:[%s6] sm:$0xf]
    %v3611 = vld [vmem:[%s6 + $0x4] sm:$0xf]
    %v3612 = vld [vmem:[%s6 + $0x8] sm:$0xf]
    %v3613 = vld [vmem:[%s6 + $0xc] sm:$0xf]
    %v3614 = vld [vmem:[%s6 + $0x10] sm:$0xf]
    %v3615 = vld [vmem:[%s6 + $0x14] sm:$0xf]
    %v3616 = vld [vmem:[%s6 + $0x18] sm:$0xf]
    %v3617 = vld [vmem:[%s6 + $0x1c] sm:$0xf]
    %v3618 = vld [vmem:[%s6 + $0x20] sm:$0xf]
    %v3619 = vld [vmem:[%s6 + $0x24] sm:$0xf]
    %v3620 = vld [vmem:[%s6 + $0x28] sm:$0xf]
    %v3621 = vld [vmem:[%s6 + $0x2c] sm:$0xf]
    %v3622 = vld [vmem:[%s6 + $0x30] sm:$0xf]
    %v3623 = vld [vmem:[%s6 + $0x34] sm:$0xf]
    %v3624 = vld [vmem:[%s6 + $0x38] sm:$0xf]
    %v3625 = vld [vmem:[%s6 + $0x3c] sm:$0xf]
    %v3626 = vld [vmem:[%s6 + $0x40] sm:$0xf]
    %v3627 = vld [vmem:[%s6 + $0x44] sm:$0xf]
    %v3628 = vld [vmem:[%s6 + $0x48] sm:$0xf]
    %v3629 = vld [vmem:[%s6 + $0x4c] sm:$0xf]
    %v3630 = vld [vmem:[%s6 + $0x50] sm:$0xf]
    %v3631 = vld [vmem:[%s6 + $0x54] sm:$0xf]
    %v3632 = vld [vmem:[%s6 + $0x58] sm:$0xf]
    %v3633 = vld [vmem:[%s6 + $0x5c] sm:$0xf]
    %v3634 = vld [vmem:[%s6 + $0x60] sm:$0xf]
    %v3635 = vld [vmem:[%s6 + $0x64] sm:$0xf]
    %v3636 = vld [vmem:[%s6 + $0x68] sm:$0xf]
    %v3637 = vld [vmem:[%s6 + $0x6c] sm:$0xf]
    %v3638 = vld [vmem:[%s6 + $0x70] sm:$0xf]
    %v3639 = vld [vmem:[%s6 + $0x74] sm:$0xf]
    %v3640 = vld [vmem:[%s6 + $0x78] sm:$0xf]
    %v3641 = vld [vmem:[%s6 + $0x7c] sm:$0xf]
    %v3642 = vld [vmem:[%s6 + $0x80] sm:$0xf]
    %v3643 = vld [vmem:[%s6 + $0x84] sm:$0xf]
    %v3644 = vld [vmem:[%s6 + $0x88] sm:$0xf]
    %v3645 = vld [vmem:[%s6 + $0x8c] sm:$0xf]
    %v3646 = vld [vmem:[%s6 + $0x90] sm:$0xf]
    %v3647 = vld [vmem:[%s6 + $0x94] sm:$0xf]
    %v3648 = vld [vmem:[%s6 + $0x98] sm:$0xf]
    %v3649 = vld [vmem:[%s6 + $0x9c] sm:$0xf]
    %v3650 = vld [vmem:[%s6 + $0xa0] sm:$0xf]
    %v3651 = vld [vmem:[%s6 + $0xa4] sm:$0xf]
    %v3652 = vld [vmem:[%s6 + $0xa8] sm:$0xf]
    %v3653 = vld [vmem:[%s6 + $0xac] sm:$0xf]
    %v3654 = vld [vmem:[%s6 + $0xb0] sm:$0xf]
    %v3655 = vld [vmem:[%s6 + $0xb4] sm:$0xf]
    %v3656 = vld [vmem:[%s6 + $0xb8] sm:$0xf]
    %v3657 = vld [vmem:[%s6 + $0xbc] sm:$0xf]
    %v3658 = vld [vmem:[%s6 + $0xc0] sm:$0xf]
    %v3659 = vld [vmem:[%s6 + $0xc4] sm:$0xf]
    %v3660 = vld [vmem:[%s6 + $0xc8] sm:$0xf]
    %v3661 = vld [vmem:[%s6 + $0xcc] sm:$0xf]
    %v3662 = vld [vmem:[%s6 + $0xd0] sm:$0xf]
    %v3663 = vld [vmem:[%s6 + $0xd4] sm:$0xf]
    %v3664 = vld [vmem:[%s6 + $0xd8] sm:$0xf]
    %v3665 = vld [vmem:[%s6 + $0xdc] sm:$0xf]
    %v3666 = vld [vmem:[%s6 + $0xe0] sm:$0xf]
    %v3667 = vld [vmem:[%s6 + $0xe4] sm:$0xf]
    %v3668 = vld [vmem:[%s6 + $0xe8] sm:$0xf]
    %v3669 = vld [vmem:[%s6 + $0xec] sm:$0xf]
    %v3670 = vld [vmem:[%s6 + $0xf0] sm:$0xf]
    %v3671 = vld [vmem:[%s6 + $0xf4] sm:$0xf]
    %v3672 = vld [vmem:[%s6 + $0xf8] sm:$0xf]
    %v3673 = vld [vmem:[%s6 + $0xfc] sm:$0xf]
    %v3674 = vld [vmem:[%s6 + $0x100] sm:$0xf]
    %v3675 = vld [vmem:[%s6 + $0x104] sm:$0xf]
    %v3676 = vld [vmem:[%s6 + $0x108] sm:$0xf]
    %v3677 = vld [vmem:[%s6 + $0x10c] sm:$0xf]
    %v3678 = vld [vmem:[%s6 + $0x110] sm:$0xf]
    %v3679 = vld [vmem:[%s6 + $0x114] sm:$0xf]
    %v3680 = vld [vmem:[%s6 + $0x118] sm:$0xf]
    %v3681 = vld [vmem:[%s6 + $0x11c] sm:$0xf]
    %v3682 = vld [vmem:[%s6 + $0x120] sm:$0xf]
    %v3683 = vld [vmem:[%s6 + $0x124] sm:$0xf]
    %v3684 = vld [vmem:[%s6 + $0x128] sm:$0xf]
    %v3685 = vld [vmem:[%s6 + $0x12c] sm:$0xf]
    %v3686 = vld [vmem:[%s6 + $0x130] sm:$0xf]
    %v3687 = vld [vmem:[%s6 + $0x134] sm:$0xf]
    %v3688 = vld [vmem:[%s6 + $0x138] sm:$0xf]
    %v3689 = vld [vmem:[%s6 + $0x13c] sm:$0xf]
    %v3690 = vld [vmem:[%s6 + $0x140] sm:$0xf]
    %v3691 = vld [vmem:[%s6 + $0x144] sm:$0xf]
    %v3692 = vld [vmem:[%s6 + $0x148] sm:$0xf]
    %v3693 = vld [vmem:[%s6 + $0x14c] sm:$0xf]
    %v3694 = vld [vmem:[%s6 + $0x150] sm:$0xf]
    %v3695 = vld [vmem:[%s6 + $0x154] sm:$0xf]
    %v3696 = vld [vmem:[%s6 + $0x158] sm:$0xf]
    %v3697 = vld [vmem:[%s6 + $0x15c] sm:$0xf]
    %v3698 = vld [vmem:[%s6 + $0x160] sm:$0xf]
    %v3699 = vld [vmem:[%s6 + $0x164] sm:$0xf]
    %v3700 = vld [vmem:[%s6 + $0x168] sm:$0xf]
    %v3701 = vld [vmem:[%s6 + $0x16c] sm:$0xf]
    %v3702 = vld [vmem:[%s6 + $0x170] sm:$0xf]
    %v3703 = vld [vmem:[%s6 + $0x174] sm:$0xf]
    %v3704 = vld [vmem:[%s6 + $0x178] sm:$0xf]
    %v3705 = vld [vmem:[%s6 + $0x17c] sm:$0xf]
    %v3802 = vunpack.c.l.b16 %v3610
    %v3803 = vunpack.c.l.b16 %v3611
    %v3804 = vunpack.c.l.b16 %v3612
    %v3805 = vunpack.c.l.b16 %v3613
    %v3806 = vunpack.c.l.b16 %v3614
    %v3807 = vunpack.c.l.b16 %v3615
    %v3808 = vunpack.c.l.b16 %v3616
    %v3809 = vunpack.c.l.b16 %v3617
    %v3810 = vunpack.c.l.b16 %v3618
    %v3811 = vunpack.c.l.b16 %v3619
    %v3812 = vunpack.c.l.b16 %v3620
    %v3813 = vunpack.c.l.b16 %v3621
    %v3814 = vunpack.c.l.b16 %v3622
    %v3815 = vunpack.c.l.b16 %v3623
    %v3816 = vunpack.c.l.b16 %v3624
    %v3817 = vunpack.c.l.b16 %v3625
    %v3818 = vunpack.c.l.b16 %v3626
    %v3819 = vunpack.c.l.b16 %v3627
    %v3820 = vunpack.c.l.b16 %v3628
    %v3821 = vunpack.c.l.b16 %v3629
    %v3822 = vunpack.c.l.b16 %v3630
    %v3823 = vunpack.c.l.b16 %v3631
    %v3824 = vunpack.c.l.b16 %v3632
    %v3825 = vunpack.c.l.b16 %v3633
    %v3826 = vunpack.c.l.b16 %v3634
    %v3827 = vunpack.c.l.b16 %v3635
    %v3828 = vunpack.c.l.b16 %v3636
    %v3829 = vunpack.c.l.b16 %v3637
    %v3830 = vunpack.c.l.b16 %v3638
    %v3831 = vunpack.c.l.b16 %v3639
    %v3832 = vunpack.c.l.b16 %v3640
    %v3833 = vunpack.c.l.b16 %v3641
    %v3834 = vunpack.c.l.b16 %v3642
    %v3835 = vunpack.c.l.b16 %v3643
    %v3836 = vunpack.c.l.b16 %v3644
    %v3837 = vunpack.c.l.b16 %v3645
    %v3838 = vunpack.c.l.b16 %v3646
    %v3839 = vunpack.c.l.b16 %v3647
    %v3840 = vunpack.c.l.b16 %v3648
    %v3841 = vunpack.c.l.b16 %v3649
    %v3842 = vunpack.c.l.b16 %v3650
    %v3843 = vunpack.c.l.b16 %v3651
    %v3844 = vunpack.c.l.b16 %v3652
    %v3845 = vunpack.c.l.b16 %v3653
    %v3846 = vunpack.c.l.b16 %v3654
    %v3847 = vunpack.c.l.b16 %v3655
    %v3848 = vunpack.c.l.b16 %v3656
    %v3849 = vunpack.c.l.b16 %v3657
    %v3850 = vunpack.c.l.b16 %v3658
    %v3851 = vunpack.c.l.b16 %v3659
    %v3852 = vunpack.c.l.b16 %v3660
    %v3853 = vunpack.c.l.b16 %v3661
    %v3854 = vunpack.c.l.b16 %v3662
    %v3855 = vunpack.c.l.b16 %v3663
    %v3856 = vunpack.c.l.b16 %v3664
    %v3857 = vunpack.c.l.b16 %v3665
    %v3858 = vunpack.c.l.b16 %v3666
    %v3859 = vunpack.c.l.b16 %v3667
    %v3860 = vunpack.c.l.b16 %v3668
    %v3861 = vunpack.c.l.b16 %v3669
    %v3862 = vunpack.c.l.b16 %v3670
    %v3863 = vunpack.c.l.b16 %v3671
    %v3864 = vunpack.c.l.b16 %v3672
    %v3865 = vunpack.c.l.b16 %v3673
    %v3866 = vunpack.c.l.b16 %v3674
    %v3867 = vunpack.c.l.b16 %v3675
    %v3868 = vunpack.c.l.b16 %v3676
    %v3869 = vunpack.c.l.b16 %v3677
    %v3870 = vunpack.c.l.b16 %v3678
    %v3871 = vunpack.c.l.b16 %v3679
    %v3872 = vunpack.c.l.b16 %v3680
    %v3873 = vunpack.c.l.b16 %v3681
    %v3874 = vunpack.c.l.b16 %v3682
    %v3875 = vunpack.c.l.b16 %v3683
    %v3876 = vunpack.c.l.b16 %v3684
    %v3877 = vunpack.c.l.b16 %v3685
    %v3878 = vunpack.c.l.b16 %v3686
    %v3879 = vunpack.c.l.b16 %v3687
    %v3880 = vunpack.c.l.b16 %v3688
    %v3881 = vunpack.c.l.b16 %v3689
    %v3882 = vunpack.c.l.b16 %v3690
    %v3883 = vunpack.c.l.b16 %v3691
    %v3884 = vunpack.c.l.b16 %v3692
    %v3885 = vunpack.c.l.b16 %v3693
    %v3886 = vunpack.c.l.b16 %v3694
    %v3887 = vunpack.c.l.b16 %v3695
    %v3888 = vunpack.c.l.b16 %v3696
    %v3889 = vunpack.c.l.b16 %v3697
    %v3890 = vunpack.c.l.b16 %v3698
    %v3891 = vunpack.c.l.b16 %v3699
    %v3892 = vunpack.c.l.b16 %v3700
    %v3893 = vunpack.c.l.b16 %v3701
    %v3894 = vunpack.c.l.b16 %v3702
    %v3895 = vunpack.c.l.b16 %v3703
    %v3896 = vunpack.c.l.b16 %v3704
    %v3897 = vunpack.c.l.b16 %v3705
    %v3898 = vpack.c.b16 %v3803, %v3802
    %v3899 = vpack.c.b16 %v3805, %v3804
    %v3900 = vpack.c.b16 %v3807, %v3806
    %v3901 = vpack.c.b16 %v3809, %v3808
    %v3902 = vpack.c.b16 %v3811, %v3810
    %v3903 = vpack.c.b16 %v3813, %v3812
    %v3904 = vpack.c.b16 %v3815, %v3814
    %v3905 = vpack.c.b16 %v3817, %v3816
    %v3906 = vpack.c.b16 %v3819, %v3818
    %v3907 = vpack.c.b16 %v3821, %v3820
    %v3908 = vpack.c.b16 %v3823, %v3822
    %v3909 = vpack.c.b16 %v3825, %v3824
    %v3910 = vpack.c.b16 %v3827, %v3826
    %v3911 = vpack.c.b16 %v3829, %v3828
    %v3912 = vpack.c.b16 %v3831, %v3830
    %v3913 = vpack.c.b16 %v3833, %v3832
    %v3914 = vpack.c.b16 %v3835, %v3834
    %v3915 = vpack.c.b16 %v3837, %v3836
    %v3916 = vpack.c.b16 %v3839, %v3838
    %v3917 = vpack.c.b16 %v3841, %v3840
    %v3918 = vpack.c.b16 %v3843, %v3842
    %v3919 = vpack.c.b16 %v3845, %v3844
    %v3920 = vpack.c.b16 %v3847, %v3846
    %v3921 = vpack.c.b16 %v3849, %v3848
    %v3922 = vpack.c.b16 %v3851, %v3850
    %v3923 = vpack.c.b16 %v3853, %v3852
    %v3924 = vpack.c.b16 %v3855, %v3854
    %v3925 = vpack.c.b16 %v3857, %v3856
    %v3926 = vpack.c.b16 %v3859, %v3858
    %v3927 = vpack.c.b16 %v3861, %v3860
    %v3928 = vpack.c.b16 %v3863, %v3862
    %v3929 = vpack.c.b16 %v3865, %v3864
    %v3930 = vpack.c.b16 %v3867, %v3866
    %v3931 = vpack.c.b16 %v3869, %v3868
    %v3932 = vpack.c.b16 %v3871, %v3870
    %v3933 = vpack.c.b16 %v3873, %v3872
    %v3934 = vpack.c.b16 %v3875, %v3874
    %v3935 = vpack.c.b16 %v3877, %v3876
    %v3936 = vpack.c.b16 %v3879, %v3878
    %v3937 = vpack.c.b16 %v3881, %v3880
    %v3938 = vpack.c.b16 %v3883, %v3882
    %v3939 = vpack.c.b16 %v3885, %v3884
    %v3940 = vpack.c.b16 %v3887, %v3886
    %v3941 = vpack.c.b16 %v3889, %v3888
    %v3942 = vpack.c.b16 %v3891, %v3890
    %v3943 = vpack.c.b16 %v3893, %v3892
    %v3944 = vpack.c.b16 %v3895, %v3894
    %v3945 = vpack.c.b16 %v3897, %v3896
    %3994 = vmatprep.subr.bf16.mxu0 0
    %3995 = vmatpush1.bf16.msra.mxu0 %v3898
    %3996 = vmatprep.subr.bf16.mxu0 0
    %3997 = vmatpush1.bf16.msra.mxu0 %v3899
    %3998 = vmatprep.subr.bf16.mxu0 0
    %3999 = vmatpush1.bf16.msra.mxu0 %v3900
    %4000 = vmatprep.subr.bf16.mxu0 0
    %4001 = vmatpush1.bf16.msra.mxu0 %v3901
    %4002 = vmatprep.subr.bf16.mxu0 0
    %4003 = vmatpush1.bf16.msra.mxu0 %v3902
    %4004 = vmatprep.subr.bf16.mxu0 0
    %4005 = vmatpush1.bf16.msra.mxu0 %v3903
    %4006 = vmatprep.subr.bf16.mxu0 0
    %4007 = vmatpush1.bf16.msra.mxu0 %v3904
    %4008 = vmatprep.subr.bf16.mxu0 0
    %4009 = vmatpush1.bf16.msra.mxu0 %v3905
    %4010 = vmatprep.subr.bf16.mxu0 0
    %4011 = vmatpush1.bf16.msra.mxu0 %v3906
    %4012 = vmatprep.subr.bf16.mxu0 0
    %4013 = vmatpush1.bf16.msra.mxu0 %v3907
    %4014 = vmatprep.subr.bf16.mxu0 0
    %4015 = vmatpush1.bf16.msra.mxu0 %v3908
    %4016 = vmatprep.subr.bf16.mxu0 0
    %4017 = vmatpush1.bf16.msra.mxu0 %v3909
    %4018 = vmatprep.subr.bf16.mxu0 0
    %4019 = vmatpush1.bf16.msra.mxu0 %v3910
    %4020 = vmatprep.subr.bf16.mxu0 0
    %4021 = vmatpush1.bf16.msra.mxu0 %v3911
    %4022 = vmatprep.subr.bf16.mxu0 0
    %4023 = vmatpush1.bf16.msra.mxu0 %v3912
    %4024 = vmatprep.subr.bf16.mxu0 0
    %4025 = vmatpush1.bf16.msra.mxu0 %v3913
    %4026 = vmatprep.mubr.bf16.mxu0 %v3467
    %4027 = vmatmul.mubr.bf16.gmra.mrb[0].mxu0 %v3466
    %v4028 = vpop.f32.mrb[0].mxu0
    %v4029 = vadd.f32 0.0, %v4028
    %v4030 = vpop.f32.mrb[0].mxu0
    %v4031 = vpop.f32.mrb[0].mxu0
    %v4032 = vadd.f32 0.0, %v4031
    %v4033 = vpop.f32.mrb[0].mxu0
    %4034 = vmatprep.mubr.bf16.mxu0 %v3469
    %4035 = vmatmul.mubr.bf16.gmra.mrb[0].mxu0 %v3468
    %v4036 = vpop.f32.mrb[0].mxu0
    %v4037 = vadd.f32 0.0, %v4036
    %v4038 = vpop.f32.mrb[0].mxu0
    %v4039 = vpop.f32.mrb[0].mxu0
    %v4040 = vadd.f32 0.0, %v4039
    %v4041 = vpop.f32.mrb[0].mxu0
    %4042 = vmatprep.mubr.bf16.mxu0 %v3471
    %4043 = vmatmul.mubr.bf16.gmra.mrb[0].mxu0 %v3470
    %v4044 = vpop.f32.mrb[0].mxu0
    %v4045 = vadd.f32 0.0, %v4044
    %v4046 = vpop.f32.mrb[0].mxu0
    %v4047 = vpop.f32.mrb[0].mxu0
    %v4048 = vadd.f32 0.0, %v4047
    %v4049 = vpop.f32.mrb[0].mxu0
    %4050 = vmatprep.mubr.bf16.mxu0 %v3473
    %4051 = vmatmul.mubr.bf16.gmra.mrb[0].mxu0 %v3472
    %v4052 = vpop.f32.mrb[0].mxu0
    %v4053 = vadd.f32 0.0, %v4052
    %v4054 = vpop.f32.mrb[0].mxu0
    %v4055 = vpop.f32.mrb[0].mxu0
    %v4056 = vadd.f32 0.0, %v4055
    %v4057 = vpop.f32.mrb[0].mxu0
    %4058 = vmatprep.mubr.bf16.mxu0 %v3475
    %4059 = vmatmul.mubr.bf16.gmra.mrb[0].mxu0 %v3474
    %v4060 = vpop.f32.mrb[0].mxu0
    %v4061 = vadd.f32 0.0, %v4060
    %v4062 = vpop.f32.mrb[0].mxu0
    %v4063 = vpop.f32.mrb[0].mxu0
    %v4064 = vadd.f32 0.0, %v4063
    %v4065 = vpop.f32.mrb[0].mxu0
    %4066 = vmatprep.mubr.bf16.mxu0 %v3477
    %4067 = vmatmul.mubr.bf16.gmra.mrb[0].mxu0 %v3476
    %v4068 = vpop.f32.mrb[0].mxu0
    %v4069 = vadd.f32 0.0, %v4068
    %v4070 = vpop.f32.mrb[0].mxu0
    %v4071 = vpop.f32.mrb[0].mxu0
    %v4072 = vadd.f32 0.0, %v4071
    %v4073 = vpop.f32.mrb[0].mxu0
    %4074 = vmatprep.mubr.bf16.mxu0 %v3479
    %4075 = vmatmul.mubr.bf16.gmra.mrb[0].mxu0 %v3478
    %v4076 = vpop.f32.mrb[0].mxu0
    %v4077 = vadd.f32 0.0, %v4076
    %v4078 = vpop.f32.mrb[0].mxu0
    %v4079 = vpop.f32.mrb[0].mxu0
    %v4080 = vadd.f32 0.0, %v4079
    %v4081 = vpop.f32.mrb[0].mxu0
    %4082 = vmatprep.mubr.bf16.mxu0 %v3481
    %4083 = vmatmul.mubr.bf16.gmra.mrb[0].mxu0 %v3480
    %v4084 = vpop.f32.mrb[0].mxu0
    %v4085 = vadd.f32 0.0, %v4084
    %v4086 = vpop.f32.mrb[0].mxu0
    %v4087 = vpop.f32.mrb[0].mxu0
    %v4088 = vadd.f32 0.0, %v4087
    %v4089 = vpop.f32.mrb[0].mxu0
    %4090 = vdwg.mxu0
    %4091 = vmatprep.subr.bf16.mxu0 0
    %4092 = vmatpush1.bf16.msra.mxu0 %v3914
    %4093 = vmatprep.subr.bf16.mxu0 0
    %4094 = vmatpush1.bf16.msra.mxu0 %v3915
    %4095 = vmatprep.subr.bf16.mxu0 0
    %4096 = vmatpush1.bf16.msra.mxu0 %v3916
    %4097 = vmatprep.subr.bf16.mxu0 0
    %4098 = vmatpush1.bf16.msra.mxu0 %v3917
    %4099 = vmatprep.subr.bf16.mxu0 0
    %4100 = vmatpush1.bf16.msra.mxu0 %v3918
    %4101 = vmatprep.subr.bf16.mxu0 0
    %4102 = vmatpush1.bf16.msra.mxu0 %v3919
    %4103 = vmatprep.subr.bf16.mxu0 0
    %4104 = vmatpush1.bf16.msra.mxu0 %v3920
    %4105 = vmatprep.subr.bf16.mxu0 0
    %4106 = vmatpush1.bf16.msra.mxu0 %v3921
    %4107 = vmatprep.subr.bf16.mxu0 0
    %4108 = vmatpush1.bf16.msra.mxu0 %v3922
    %4109 = vmatprep.subr.bf16.mxu0 0
    %4110 = vmatpush1.bf16.msra.mxu0 %v3923
    %4111 = vmatprep.subr.bf16.mxu0 0
    %4112 = vmatpush1.bf16.msra.mxu0 %v3924
    %4113 = vmatprep.subr.bf16.mxu0 0
    %4114 = vmatpush1.bf16.msra.mxu0 %v3925
    %4115 = vmatprep.subr.bf16.mxu0 0
    %4116 = vmatpush1.bf16.msra.mxu0 %v3926
    %4117 = vmatprep.subr.bf16.mxu0 0
    %4118 = vmatpush1.bf16.msra.mxu0 %v3927
    %4119 = vmatprep.subr.bf16.mxu0 0
    %4120 = vmatpush1.bf16.msra.mxu0 %v3928
    %4121 = vmatprep.subr.bf16.mxu0 0
    %4122 = vmatpush1.bf16.msra.mxu0 %v3929
    %4123 = vmatprep.mubr.bf16.mxu0 %v3579
    %4124 = vmatmul.mubr.bf16.gmra.mrb[0].mxu0 %v3578
    %v4125 = vpop.f32.mrb[0].mxu0
    %v4126 = vadd.f32 %v4029, %v4125
    %v4127 = vpop.f32.mrb[0].mxu0
    %v4128 = vpop.f32.mrb[0].mxu0
    %v4129 = vadd.f32 %v4032, %v4128
    %v4130 = vpop.f32.mrb[0].mxu0
    %4131 = vmatprep.mubr.bf16.mxu0 %v3581
    %4132 = vmatmul.mubr.bf16.gmra.mrb[0].mxu0 %v3580
    %v4133 = vpop.f32.mrb[0].mxu0
    %v4134 = vadd.f32 %v4037, %v4133
    %v4135 = vpop.f32.mrb[0].mxu0
    %v4136 = vpop.f32.mrb[0].mxu0
    %v4137 = vadd.f32 %v4040, %v4136
    %v4138 = vpop.f32.mrb[0].mxu0
    %4139 = vmatprep.mubr.bf16.mxu0 %v3583
    %4140 = vmatmul.mubr.bf16.gmra.mrb[0].mxu0 %v3582
    %v4141 = vpop.f32.mrb[0].mxu0
    %v4142 = vadd.f32 %v4045, %v4141
    %v4143 = vpop.f32.mrb[0].mxu0
    %v4144 = vpop.f32.mrb[0].mxu0
    %v4145 = vadd.f32 %v4048, %v4144
    %v4146 = vpop.f32.mrb[0].mxu0
    %4147 = vmatprep.mubr.bf16.mxu0 %v3585
    %4148 = vmatmul.mubr.bf16.gmra.mrb[0].mxu0 %v3584
    %v4149 = vpop.f32.mrb[0].mxu0
    %v4150 = vadd.f32 %v4053, %v4149
    %v4151 = vpop.f32.mrb[0].mxu0
    %v4152 = vpop.f32.mrb[0].mxu0
    %v4153 = vadd.f32 %v4056, %v4152
    %v4154 = vpop.f32.mrb[0].mxu0
    %4155 = vmatprep.mubr.bf16.mxu0 %v3587
    %4156 = vmatmul.mubr.bf16.gmra.mrb[0].mxu0 %v3586
    %v4157 = vpop.f32.mrb[0].mxu0
    %v4158 = vadd.f32 %v4061, %v4157
    %v4159 = vpop.f32.mrb[0].mxu0
    %v4160 = vpop.f32.mrb[0].mxu0
    %v4161 = vadd.f32 %v4064, %v4160
    %v4162 = vpop.f32.mrb[0].mxu0
    %4163 = vmatprep.mubr.bf16.mxu0 %v3589
    %4164 = vmatmul.mubr.bf16.gmra.mrb[0].mxu0 %v3588
    %v4165 = vpop.f32.mrb[0].mxu0
    %v4166 = vadd.f32 %v4069, %v4165
    %v4167 = vpop.f32.mrb[0].mxu0
    %v4168 = vpop.f32.mrb[0].mxu0
    %v4169 = vadd.f32 %v4072, %v4168
    %v4170 = vpop.f32.mrb[0].mxu0
    %4171 = vmatprep.mubr.bf16.mxu0 %v3591
    %4172 = vmatmul.mubr.bf16.gmra.mrb[0].mxu0 %v3590
    %v4173 = vpop.f32.mrb[0].mxu0
    %v4174 = vadd.f32 %v4077, %v4173
    %v4175 = vpop.f32.mrb[0].mxu0
    %v4176 = vpop.f32.mrb[0].mxu0
    %v4177 = vadd.f32 %v4080, %v4176
    %v4178 = vpop.f32.mrb[0].mxu0
    %4179 = vmatprep.mubr.bf16.mxu0 %v3593
    %4180 = vmatmul.mubr.bf16.gmra.mrb[0].mxu0 %v3592
    %v4181 = vpop.f32.mrb[0].mxu0
    %v4182 = vadd.f32 %v4085, %v4181
    %v4183 = vpop.f32.mrb[0].mxu0
    %v4184 = vpop.f32.mrb[0].mxu0
    %v4185 = vadd.f32 %v4088, %v4184
    %v4186 = vpop.f32.mrb[0].mxu0
    %4187 = vdwg.mxu0
    %4188 = vmatprep.subr.bf16.mxu0 0
    %4189 = vmatpush1.bf16.msra.mxu0 %v3930
    %4190 = vmatprep.subr.bf16.mxu0 0
    %4191 = vmatpush1.bf16.msra.mxu0 %v3931
    %4192 = vmatprep.subr.bf16.mxu0 0
    %4193 = vmatpush1.bf16.msra.mxu0 %v3932
    %4194 = vmatprep.subr.bf16.mxu0 0
    %4195 = vmatpush1.bf16.msra.mxu0 %v3933
    %4196 = vmatprep.subr.bf16.mxu0 0
    %4197 = vmatpush1.bf16.msra.mxu0 %v3934
    %4198 = vmatprep.subr.bf16.mxu0 0
    %4199 = vmatpush1.bf16.msra.mxu0 %v3935
    %4200 = vmatprep.subr.bf16.mxu0 0
    %4201 = vmatpush1.bf16.msra.mxu0 %v3936
    %4202 = vmatprep.subr.bf16.mxu0 0
    %4203 = vmatpush1.bf16.msra.mxu0 %v3937
    %4204 = vmatprep.subr.bf16.mxu0 0
    %4205 = vmatpush1.bf16.msra.mxu0 %v3938
    %4206 = vmatprep.subr.bf16.mxu0 0
    %4207 = vmatpush1.bf16.msra.mxu0 %v3939
    %4208 = vmatprep.subr.bf16.mxu0 0
    %4209 = vmatpush1.bf16.msra.mxu0 %v3940
    %4210 = vmatprep.subr.bf16.mxu0 0
    %4211 = vmatpush1.bf16.msra.mxu0 %v3941
    %4212 = vmatprep.subr.bf16.mxu0 0
    %4213 = vmatpush1.bf16.msra.mxu0 %v3942
    %4214 = vmatprep.subr.bf16.mxu0 0
    %4215 = vmatpush1.bf16.msra.mxu0 %v3943
    %4216 = vmatprep.subr.bf16.mxu0 0
    %4217 = vmatpush1.bf16.msra.mxu0 %v3944
    %4218 = vmatprep.subr.bf16.mxu0 0
    %4219 = vmatpush1.bf16.msra.mxu0 %v3945
    %4220 = vmatprep.mubr.bf16.mxu0 %v3595
    %4221 = vmatmul.mubr.bf16.gmra.mrb[0].mxu0 %v3594
    %v4222 = vpop.f32.mrb[0].mxu0
    %v4223 = vadd.f32 %v4126, %v4222
    %v4224 = vpop.f32.mrb[0].mxu0
    %v4225 = vpop.f32.mrb[0].mxu0
    %v4226 = vadd.f32 %v4129, %v4225
    %v4227 = vpop.f32.mrb[0].mxu0
    %4228 = vmatprep.mubr.bf16.mxu0 %v3597
    %4229 = vmatmul.mubr.bf16.gmra.mrb[0].mxu0 %v3596
    %v4230 = vpop.f32.mrb[0].mxu0
    %v4231 = vadd.f32 %v4134, %v4230
    %v4232 = vpop.f32.mrb[0].mxu0
    %v4233 = vpop.f32.mrb[0].mxu0
    %v4234 = vadd.f32 %v4137, %v4233
    %v4235 = vpop.f32.mrb[0].mxu0
    %4236 = vmatprep.mubr.bf16.mxu0 %v3599
    %4237 = vmatmul.mubr.bf16.gmra.mrb[0].mxu0 %v3598
    %v4238 = vpop.f32.mrb[0].mxu0
    %v4239 = vadd.f32 %v4142, %v4238
    %v4240 = vpop.f32.mrb[0].mxu0
    %v4241 = vpop.f32.mrb[0].mxu0
    %v4242 = vadd.f32 %v4145, %v4241
    %v4243 = vpop.f32.mrb[0].mxu0
    %4244 = vmatprep.mubr.bf16.mxu0 %v3601
    %4245 = vmatmul.mubr.bf16.gmra.mrb[0].mxu0 %v3600
    %v4246 = vpop.f32.mrb[0].mxu0
    %v4247 = vadd.f32 %v4150, %v4246
    %v4248 = vpop.f32.mrb[0].mxu0
    %v4249 = vpop.f32.mrb[0].mxu0
    %v4250 = vadd.f32 %v4153, %v4249
    %v4251 = vpop.f32.mrb[0].mxu0
    %4252 = vmatprep.mubr.bf16.mxu0 %v3603
    %4253 = vmatmul.mubr.bf16.gmra.mrb[0].mxu0 %v3602
    %v4254 = vpop.f32.mrb[0].mxu0
    %v4255 = vadd.f32 %v4158, %v4254
    %v4256 = vpop.f32.mrb[0].mxu0
    %v4257 = vpop.f32.mrb[0].mxu0
    %v4258 = vadd.f32 %v4161, %v4257
    %v4259 = vpop.f32.mrb[0].mxu0
    %4260 = vmatprep.mubr.bf16.mxu0 %v3605
    %4261 = vmatmul.mubr.bf16.gmra.mrb[0].mxu0 %v3604
    %v4262 = vpop.f32.mrb[0].mxu0
    %v4263 = vadd.f32 %v4166, %v4262
    %v4264 = vpop.f32.mrb[0].mxu0
    %v4265 = vpop.f32.mrb[0].mxu0
    %v4266 = vadd.f32 %v4169, %v4265
    %v4267 = vpop.f32.mrb[0].mxu0
    %4268 = vmatprep.mubr.bf16.mxu0 %v3607
    %4269 = vmatmul.mubr.bf16.gmra.mrb[0].mxu0 %v3606
    %v4270 = vpop.f32.mrb[0].mxu0
    %v4271 = vadd.f32 %v4174, %v4270
    %v4272 = vpop.f32.mrb[0].mxu0
    %v4273 = vpop.f32.mrb[0].mxu0
    %v4274 = vadd.f32 %v4177, %v4273
    %v4275 = vpop.f32.mrb[0].mxu0
    %4276 = vmatprep.mubr.bf16.mxu0 %v3609
    %4277 = vmatmul.mubr.bf16.gmra.mrb[0].mxu0 %v3608
    %v4278 = vpop.f32.mrb[0].mxu0
    %v4279 = vadd.f32 %v4182, %v4278
    %v4280 = vpop.f32.mrb[0].mxu0
    %v4281 = vpop.f32.mrb[0].mxu0
    %v4282 = vadd.f32 %v4185, %v4281
    %v4283 = vpop.f32.mrb[0].mxu0
    %4284 = vdwg.mxu0
    %v4285 = vld [vmem:[%s7] sm:$0xf]
    %v4286 = vld [vmem:[%s7 + $0x4] sm:$0xf]
    %v4287 = vld [vmem:[%s7 + $0x8] sm:$0xf]
    %v4288 = vld [vmem:[%s7 + $0xc] sm:$0xf]
    %v4289 = vld [vmem:[%s7 + $0x10] sm:$0xf]
    %v4290 = vld [vmem:[%s7 + $0x14] sm:$0xf]
    %v4291 = vld [vmem:[%s7 + $0x18] sm:$0xf]
    %v4292 = vld [vmem:[%s7 + $0x1c] sm:$0xf]
    %v4293 = vld [vmem:[%s7 + $0x20] sm:$0xf]
    %v4294 = vld [vmem:[%s7 + $0x24] sm:$0xf]
    %v4295 = vld [vmem:[%s7 + $0x28] sm:$0xf]
    %v4296 = vld [vmem:[%s7 + $0x2c] sm:$0xf]
    %v4297 = vld [vmem:[%s7 + $0x30] sm:$0xf]
    %v4298 = vld [vmem:[%s7 + $0x34] sm:$0xf]
    %v4299 = vld [vmem:[%s7 + $0x38] sm:$0xf]
    %v4300 = vld [vmem:[%s7 + $0x3c] sm:$0xf]
    %v4301 = vld [vmem:[%s7 + $0x40] sm:$0xf]
    %v4302 = vld [vmem:[%s7 + $0x44] sm:$0xf]
    %v4303 = vld [vmem:[%s7 + $0x48] sm:$0xf]
    %v4304 = vld [vmem:[%s7 + $0x4c] sm:$0xf]
    %v4305 = vld [vmem:[%s7 + $0x50] sm:$0xf]
    %v4306 = vld [vmem:[%s7 + $0x54] sm:$0xf]
    %v4307 = vld [vmem:[%s7 + $0x58] sm:$0xf]
    %v4308 = vld [vmem:[%s7 + $0x5c] sm:$0xf]
    %v4309 = vld [vmem:[%s7 + $0x60] sm:$0xf]
    %v4310 = vld [vmem:[%s7 + $0x64] sm:$0xf]
    %v4311 = vld [vmem:[%s7 + $0x68] sm:$0xf]
    %v4312 = vld [vmem:[%s7 + $0x6c] sm:$0xf]
    %v4313 = vld [vmem:[%s7 + $0x70] sm:$0xf]
    %v4314 = vld [vmem:[%s7 + $0x74] sm:$0xf]
    %v4315 = vld [vmem:[%s7 + $0x78] sm:$0xf]
    %v4316 = vld [vmem:[%s7 + $0x7c] sm:$0xf]
    %v4317 = vld [vmem:[%s7 + $0x80] sm:$0xf]
    %v4318 = vld [vmem:[%s7 + $0x84] sm:$0xf]
    %v4319 = vld [vmem:[%s7 + $0x88] sm:$0xf]
    %v4320 = vld [vmem:[%s7 + $0x8c] sm:$0xf]
    %v4321 = vld [vmem:[%s7 + $0x90] sm:$0xf]
    %v4322 = vld [vmem:[%s7 + $0x94] sm:$0xf]
    %v4323 = vld [vmem:[%s7 + $0x98] sm:$0xf]
    %v4324 = vld [vmem:[%s7 + $0x9c] sm:$0xf]
    %v4325 = vld [vmem:[%s7 + $0xa0] sm:$0xf]
    %v4326 = vld [vmem:[%s7 + $0xa4] sm:$0xf]
    %v4327 = vld [vmem:[%s7 + $0xa8] sm:$0xf]
    %v4328 = vld [vmem:[%s7 + $0xac] sm:$0xf]
    %v4329 = vld [vmem:[%s7 + $0xb0] sm:$0xf]
    %v4330 = vld [vmem:[%s7 + $0xb4] sm:$0xf]
    %v4331 = vld [vmem:[%s7 + $0xb8] sm:$0xf]
    %v4332 = vld [vmem:[%s7 + $0xbc] sm:$0xf]
    %v4333 = vld [vmem:[%s7 + $0xc0] sm:$0xf]
    %v4334 = vld [vmem:[%s7 + $0xc4] sm:$0xf]
    %v4335 = vld [vmem:[%s7 + $0xc8] sm:$0xf]
    %v4336 = vld [vmem:[%s7 + $0xcc] sm:$0xf]
    %v4337 = vld [vmem:[%s7 + $0xd0] sm:$0xf]
    %v4338 = vld [vmem:[%s7 + $0xd4] sm:$0xf]
    %v4339 = vld [vmem:[%s7 + $0xd8] sm:$0xf]
    %v4340 = vld [vmem:[%s7 + $0xdc] sm:$0xf]
    %v4341 = vld [vmem:[%s7 + $0xe0] sm:$0xf]
    %v4342 = vld [vmem:[%s7 + $0xe4] sm:$0xf]
    %v4343 = vld [vmem:[%s7 + $0xe8] sm:$0xf]
    %v4344 = vld [vmem:[%s7 + $0xec] sm:$0xf]
    %v4345 = vld [vmem:[%s7 + $0xf0] sm:$0xf]
    %v4346 = vld [vmem:[%s7 + $0xf4] sm:$0xf]
    %v4347 = vld [vmem:[%s7 + $0xf8] sm:$0xf]
    %v4348 = vld [vmem:[%s7 + $0xfc] sm:$0xf]
    %v4349 = vld [vmem:[%s7 + $0x100] sm:$0xf]
    %v4350 = vld [vmem:[%s7 + $0x104] sm:$0xf]
    %v4351 = vld [vmem:[%s7 + $0x108] sm:$0xf]
    %v4352 = vld [vmem:[%s7 + $0x10c] sm:$0xf]
    %v4353 = vld [vmem:[%s7 + $0x110] sm:$0xf]
    %v4354 = vld [vmem:[%s7 + $0x114] sm:$0xf]
    %v4355 = vld [vmem:[%s7 + $0x118] sm:$0xf]
    %v4356 = vld [vmem:[%s7 + $0x11c] sm:$0xf]
    %v4357 = vld [vmem:[%s7 + $0x120] sm:$0xf]
    %v4358 = vld [vmem:[%s7 + $0x124] sm:$0xf]
    %v4359 = vld [vmem:[%s7 + $0x128] sm:$0xf]
    %v4360 = vld [vmem:[%s7 + $0x12c] sm:$0xf]
    %v4361 = vld [vmem:[%s7 + $0x130] sm:$0xf]
    %v4362 = vld [vmem:[%s7 + $0x134] sm:$0xf]
    %v4363 = vld [vmem:[%s7 + $0x138] sm:$0xf]
    %v4364 = vld [vmem:[%s7 + $0x13c] sm:$0xf]
    %v4365 = vld [vmem:[%s7 + $0x140] sm:$0xf]
    %v4366 = vld [vmem:[%s7 + $0x144] sm:$0xf]
    %v4367 = vld [vmem:[%s7 + $0x148] sm:$0xf]
    %v4368 = vld [vmem:[%s7 + $0x14c] sm:$0xf]
    %v4369 = vld [vmem:[%s7 + $0x150] sm:$0xf]
    %v4370 = vld [vmem:[%s7 + $0x154] sm:$0xf]
    %v4371 = vld [vmem:[%s7 + $0x158] sm:$0xf]
    %v4372 = vld [vmem:[%s7 + $0x15c] sm:$0xf]
    %v4373 = vld [vmem:[%s7 + $0x160] sm:$0xf]
    %v4374 = vld [vmem:[%s7 + $0x164] sm:$0xf]
    %v4375 = vld [vmem:[%s7 + $0x168] sm:$0xf]
    %v4376 = vld [vmem:[%s7 + $0x16c] sm:$0xf]
    %v4377 = vld [vmem:[%s7 + $0x170] sm:$0xf]
    %v4378 = vld [vmem:[%s7 + $0x174] sm:$0xf]
    %v4379 = vld [vmem:[%s7 + $0x178] sm:$0xf]
    %v4380 = vld [vmem:[%s7 + $0x17c] sm:$0xf]
    %v4381 = vld [vmem:[%s7 + $0x180] sm:$0xf]
    %v4382 = vld [vmem:[%s7 + $0x184] sm:$0xf]
    %v4383 = vld [vmem:[%s7 + $0x188] sm:$0xf]
    %v4384 = vld [vmem:[%s7 + $0x18c] sm:$0xf]
    %v4385 = vld [vmem:[%s7 + $0x190] sm:$0xf]
    %v4386 = vld [vmem:[%s7 + $0x194] sm:$0xf]
    %v4387 = vld [vmem:[%s7 + $0x198] sm:$0xf]
    %v4388 = vld [vmem:[%s7 + $0x19c] sm:$0xf]
    %v4389 = vld [vmem:[%s7 + $0x1a0] sm:$0xf]
    %v4390 = vld [vmem:[%s7 + $0x1a4] sm:$0xf]
    %v4391 = vld [vmem:[%s7 + $0x1a8] sm:$0xf]
    %v4392 = vld [vmem:[%s7 + $0x1ac] sm:$0xf]
    %v4393 = vld [vmem:[%s7 + $0x1b0] sm:$0xf]
    %v4394 = vld [vmem:[%s7 + $0x1b4] sm:$0xf]
    %v4395 = vld [vmem:[%s7 + $0x1b8] sm:$0xf]
    %v4396 = vld [vmem:[%s7 + $0x1bc] sm:$0xf]
    %v4397 = vld [vmem:[%s7 + $0x1c0] sm:$0xf]
    %v4398 = vld [vmem:[%s7 + $0x1c4] sm:$0xf]
    %v4399 = vld [vmem:[%s7 + $0x1c8] sm:$0xf]
    %v4400 = vld [vmem:[%s7 + $0x1cc] sm:$0xf]
    %v4401 = vld [vmem:[%s7 + $0x1d0] sm:$0xf]
    %v4402 = vld [vmem:[%s7 + $0x1d4] sm:$0xf]
    %v4403 = vld [vmem:[%s7 + $0x1d8] sm:$0xf]
    %v4404 = vld [vmem:[%s7 + $0x1dc] sm:$0xf]
    %v4405 = vld [vmem:[%s7 + $0x1e0] sm:$0xf]
    %v4406 = vld [vmem:[%s7 + $0x1e4] sm:$0xf]
    %v4407 = vld [vmem:[%s7 + $0x1e8] sm:$0xf]
    %v4408 = vld [vmem:[%s7 + $0x1ec] sm:$0xf]
    %v4409 = vld [vmem:[%s7 + $0x1f0] sm:$0xf]
    %v4410 = vld [vmem:[%s7 + $0x1f4] sm:$0xf]
    %v4411 = vld [vmem:[%s7 + $0x1f8] sm:$0xf]
    %v4412 = vld [vmem:[%s7 + $0x1fc] sm:$0xf]
    %v4413 = vld [vmem:[%s7 + $0x200] sm:$0xf]
    %v4414 = vld [vmem:[%s7 + $0x204] sm:$0xf]
    %v4415 = vld [vmem:[%s7 + $0x208] sm:$0xf]
    %v4416 = vld [vmem:[%s7 + $0x20c] sm:$0xf]
    %v4417 = vld [vmem:[%s7 + $0x210] sm:$0xf]
    %v4418 = vld [vmem:[%s7 + $0x214] sm:$0xf]
    %v4419 = vld [vmem:[%s7 + $0x218] sm:$0xf]
    %v4420 = vld [vmem:[%s7 + $0x21c] sm:$0xf]
    %v4421 = vld [vmem:[%s7 + $0x220] sm:$0xf]
    %v4422 = vld [vmem:[%s7 + $0x224] sm:$0xf]
    %v4423 = vld [vmem:[%s7 + $0x228] sm:$0xf]
    %v4424 = vld [vmem:[%s7 + $0x22c] sm:$0xf]
    %v4425 = vld [vmem:[%s7 + $0x230] sm:$0xf]
    %v4426 = vld [vmem:[%s7 + $0x234] sm:$0xf]
    %v4427 = vld [vmem:[%s7 + $0x238] sm:$0xf]
    %v4428 = vld [vmem:[%s7 + $0x23c] sm:$0xf]
    %v4429 = vld [vmem:[%s7 + $0x240] sm:$0xf]
    %v4430 = vld [vmem:[%s7 + $0x244] sm:$0xf]
    %v4431 = vld [vmem:[%s7 + $0x248] sm:$0xf]
    %v4432 = vld [vmem:[%s7 + $0x24c] sm:$0xf]
    %v4433 = vld [vmem:[%s7 + $0x250] sm:$0xf]
    %v4434 = vld [vmem:[%s7 + $0x254] sm:$0xf]
    %v4435 = vld [vmem:[%s7 + $0x258] sm:$0xf]
    %v4436 = vld [vmem:[%s7 + $0x25c] sm:$0xf]
    %v4437 = vld [vmem:[%s7 + $0x260] sm:$0xf]
    %v4438 = vld [vmem:[%s7 + $0x264] sm:$0xf]
    %v4439 = vld [vmem:[%s7 + $0x268] sm:$0xf]
    %v4440 = vld [vmem:[%s7 + $0x26c] sm:$0xf]
    %v4441 = vld [vmem:[%s7 + $0x270] sm:$0xf]
    %v4442 = vld [vmem:[%s7 + $0x274] sm:$0xf]
    %v4443 = vld [vmem:[%s7 + $0x278] sm:$0xf]
    %v4444 = vld [vmem:[%s7 + $0x27c] sm:$0xf]
    %v4605 = vunpack.c.l.b16 %v4285
    %v4606 = vunpack.c.l.b16 %v4286
    %v4607 = vunpack.c.l.b16 %v4287
    %v4608 = vunpack.c.l.b16 %v4288
    %v4609 = vunpack.c.l.b16 %v4289
    %v4610 = vunpack.c.l.b16 %v4290
    %v4611 = vunpack.c.l.b16 %v4291
    %v4612 = vunpack.c.l.b16 %v4292
    %v4613 = vunpack.c.l.b16 %v4293
    %v4614 = vunpack.c.l.b16 %v4294
    %v4615 = vunpack.c.l.b16 %v4295
    %v4616 = vunpack.c.l.b16 %v4296
    %v4617 = vunpack.c.l.b16 %v4297
    %v4618 = vunpack.c.l.b16 %v4298
    %v4619 = vunpack.c.l.b16 %v4299
    %v4620 = vunpack.c.l.b16 %v4300
    %v4621 = vunpack.c.l.b16 %v4301
    %v4622 = vunpack.c.l.b16 %v4302
    %v4623 = vunpack.c.l.b16 %v4303
    %v4624 = vunpack.c.l.b16 %v4304
    %v4625 = vunpack.c.l.b16 %v4305
    %v4626 = vunpack.c.l.b16 %v4306
    %v4627 = vunpack.c.l.b16 %v4307
    %v4628 = vunpack.c.l.b16 %v4308
    %v4629 = vunpack.c.l.b16 %v4309
    %v4630 = vunpack.c.l.b16 %v4310
    %v4631 = vunpack.c.l.b16 %v4311
    %v4632 = vunpack.c.l.b16 %v4312
    %v4633 = vunpack.c.l.b16 %v4313
    %v4634 = vunpack.c.l.b16 %v4314
    %v4635 = vunpack.c.l.b16 %v4315
    %v4636 = vunpack.c.l.b16 %v4316
    %v4637 = vunpack.c.l.b16 %v4317
    %v4638 = vunpack.c.l.b16 %v4318
    %v4639 = vunpack.c.l.b16 %v4319
    %v4640 = vunpack.c.l.b16 %v4320
    %v4641 = vunpack.c.l.b16 %v4321
    %v4642 = vunpack.c.l.b16 %v4322
    %v4643 = vunpack.c.l.b16 %v4323
    %v4644 = vunpack.c.l.b16 %v4324
    %v4645 = vunpack.c.l.b16 %v4325
    %v4646 = vunpack.c.l.b16 %v4326
    %v4647 = vunpack.c.l.b16 %v4327
    %v4648 = vunpack.c.l.b16 %v4328
    %v4649 = vunpack.c.l.b16 %v4329
    %v4650 = vunpack.c.l.b16 %v4330
    %v4651 = vunpack.c.l.b16 %v4331
    %v4652 = vunpack.c.l.b16 %v4332
    %v4653 = vunpack.c.l.b16 %v4333
    %v4654 = vunpack.c.l.b16 %v4334
    %v4655 = vunpack.c.l.b16 %v4335
    %v4656 = vunpack.c.l.b16 %v4336
    %v4657 = vunpack.c.l.b16 %v4337
    %v4658 = vunpack.c.l.b16 %v4338
    %v4659 = vunpack.c.l.b16 %v4339
    %v4660 = vunpack.c.l.b16 %v4340
    %v4661 = vunpack.c.l.b16 %v4341
    %v4662 = vunpack.c.l.b16 %v4342
    %v4663 = vunpack.c.l.b16 %v4343
    %v4664 = vunpack.c.l.b16 %v4344
    %v4665 = vunpack.c.l.b16 %v4345
    %v4666 = vunpack.c.l.b16 %v4346
    %v4667 = vunpack.c.l.b16 %v4347
    %v4668 = vunpack.c.l.b16 %v4348
    %v4669 = vunpack.c.l.b16 %v4349
    %v4670 = vunpack.c.l.b16 %v4350
    %v4671 = vunpack.c.l.b16 %v4351
    %v4672 = vunpack.c.l.b16 %v4352
    %v4673 = vunpack.c.l.b16 %v4353
    %v4674 = vunpack.c.l.b16 %v4354
    %v4675 = vunpack.c.l.b16 %v4355
    %v4676 = vunpack.c.l.b16 %v4356
    %v4677 = vunpack.c.l.b16 %v4357
    %v4678 = vunpack.c.l.b16 %v4358
    %v4679 = vunpack.c.l.b16 %v4359
    %v4680 = vunpack.c.l.b16 %v4360
    %v4681 = vunpack.c.l.b16 %v4361
    %v4682 = vunpack.c.l.b16 %v4362
    %v4683 = vunpack.c.l.b16 %v4363
    %v4684 = vunpack.c.l.b16 %v4364
    %v4685 = vunpack.c.l.b16 %v4365
    %v4686 = vunpack.c.l.b16 %v4366
    %v4687 = vunpack.c.l.b16 %v4367
    %v4688 = vunpack.c.l.b16 %v4368
    %v4689 = vunpack.c.l.b16 %v4369
    %v4690 = vunpack.c.l.b16 %v4370
    %v4691 = vunpack.c.l.b16 %v4371
    %v4692 = vunpack.c.l.b16 %v4372
    %v4693 = vunpack.c.l.b16 %v4373
    %v4694 = vunpack.c.l.b16 %v4374
    %v4695 = vunpack.c.l.b16 %v4375
    %v4696 = vunpack.c.l.b16 %v4376
    %v4697 = vunpack.c.l.b16 %v4377
    %v4698 = vunpack.c.l.b16 %v4378
    %v4699 = vunpack.c.l.b16 %v4379
    %v4700 = vunpack.c.l.b16 %v4380
    %v4701 = vunpack.c.l.b16 %v4381
    %v4702 = vunpack.c.l.b16 %v4382
    %v4703 = vunpack.c.l.b16 %v4383
    %v4704 = vunpack.c.l.b16 %v4384
    %v4705 = vunpack.c.l.b16 %v4385
    %v4706 = vunpack.c.l.b16 %v4386
    %v4707 = vunpack.c.l.b16 %v4387
    %v4708 = vunpack.c.l.b16 %v4388
    %v4709 = vunpack.c.l.b16 %v4389
    %v4710 = vunpack.c.l.b16 %v4390
    %v4711 = vunpack.c.l.b16 %v4391
    %v4712 = vunpack.c.l.b16 %v4392
    %v4713 = vunpack.c.l.b16 %v4393
    %v4714 = vunpack.c.l.b16 %v4394
    %v4715 = vunpack.c.l.b16 %v4395
    %v4716 = vunpack.c.l.b16 %v4396
    %v4717 = vunpack.c.l.b16 %v4397
    %v4718 = vunpack.c.l.b16 %v4398
    %v4719 = vunpack.c.l.b16 %v4399
    %v4720 = vunpack.c.l.b16 %v4400
    %v4721 = vunpack.c.l.b16 %v4401
    %v4722 = vunpack.c.l.b16 %v4402
    %v4723 = vunpack.c.l.b16 %v4403
    %v4724 = vunpack.c.l.b16 %v4404
    %v4725 = vunpack.c.l.b16 %v4405
    %v4726 = vunpack.c.l.b16 %v4406
    %v4727 = vunpack.c.l.b16 %v4407
    %v4728 = vunpack.c.l.b16 %v4408
    %v4729 = vunpack.c.l.b16 %v4409
    %v4730 = vunpack.c.l.b16 %v4410
    %v4731 = vunpack.c.l.b16 %v4411
    %v4732 = vunpack.c.l.b16 %v4412
    %v4733 = vunpack.c.l.b16 %v4413
    %v4734 = vunpack.c.l.b16 %v4414
    %v4735 = vunpack.c.l.b16 %v4415
    %v4736 = vunpack.c.l.b16 %v4416
    %v4737 = vunpack.c.l.b16 %v4417
    %v4738 = vunpack.c.l.b16 %v4418
    %v4739 = vunpack.c.l.b16 %v4419
    %v4740 = vunpack.c.l.b16 %v4420
    %v4741 = vunpack.c.l.b16 %v4421
    %v4742 = vunpack.c.l.b16 %v4422
    %v4743 = vunpack.c.l.b16 %v4423
    %v4744 = vunpack.c.l.b16 %v4424
    %v4745 = vunpack.c.l.b16 %v4425
    %v4746 = vunpack.c.l.b16 %v4426
    %v4747 = vunpack.c.l.b16 %v4427
    %v4748 = vunpack.c.l.b16 %v4428
    %v4749 = vunpack.c.l.b16 %v4429
    %v4750 = vunpack.c.l.b16 %v4430
    %v4751 = vunpack.c.l.b16 %v4431
    %v4752 = vunpack.c.l.b16 %v4432
    %v4753 = vunpack.c.l.b16 %v4433
    %v4754 = vunpack.c.l.b16 %v4434
    %v4755 = vunpack.c.l.b16 %v4435
    %v4756 = vunpack.c.l.b16 %v4436
    %v4757 = vunpack.c.l.b16 %v4437
    %v4758 = vunpack.c.l.b16 %v4438
    %v4759 = vunpack.c.l.b16 %v4439
    %v4760 = vunpack.c.l.b16 %v4440
    %v4761 = vunpack.c.l.b16 %v4441
    %v4762 = vunpack.c.l.b16 %v4442
    %v4763 = vunpack.c.l.b16 %v4443
    %v4764 = vunpack.c.l.b16 %v4444
    %v4765 = vpack.c.b16 %v4606, %v4605
    %v4766 = vpack.c.b16 %v4608, %v4607
    %v4767 = vpack.c.b16 %v4610, %v4609
    %v4768 = vpack.c.b16 %v4612, %v4611
    %v4769 = vpack.c.b16 %v4614, %v4613
    %v4770 = vpack.c.b16 %v4616, %v4615
    %v4771 = vpack.c.b16 %v4618, %v4617
    %v4772 = vpack.c.b16 %v4620, %v4619
    %v4773 = vpack.c.b16 %v4622, %v4621
    %v4774 = vpack.c.b16 %v4624, %v4623
    %v4775 = vpack.c.b16 %v4626, %v4625
    %v4776 = vpack.c.b16 %v4628, %v4627
    %v4777 = vpack.c.b16 %v4630, %v4629
    %v4778 = vpack.c.b16 %v4632, %v4631
    %v4779 = vpack.c.b16 %v4634, %v4633
    %v4780 = vpack.c.b16 %v4636, %v4635
    %v4781 = vpack.c.b16 %v4638, %v4637
    %v4782 = vpack.c.b16 %v4640, %v4639
    %v4783 = vpack.c.b16 %v4642, %v4641
    %v4784 = vpack.c.b16 %v4644, %v4643
    %v4785 = vpack.c.b16 %v4646, %v4645
    %v4786 = vpack.c.b16 %v4648, %v4647
    %v4787 = vpack.c.b16 %v4650, %v4649
    %v4788 = vpack.c.b16 %v4652, %v4651
    %v4789 = vpack.c.b16 %v4654, %v4653
    %v4790 = vpack.c.b16 %v4656, %v4655
    %v4791 = vpack.c.b16 %v4658, %v4657
    %v4792 = vpack.c.b16 %v4660, %v4659
    %v4793 = vpack.c.b16 %v4662, %v4661
    %v4794 = vpack.c.b16 %v4664, %v4663
    %v4795 = vpack.c.b16 %v4666, %v4665
    %v4796 = vpack.c.b16 %v4668, %v4667
    %v4797 = vpack.c.b16 %v4670, %v4669
    %v4798 = vpack.c.b16 %v4672, %v4671
    %v4799 = vpack.c.b16 %v4674, %v4673
    %v4800 = vpack.c.b16 %v4676, %v4675
    %v4801 = vpack.c.b16 %v4678, %v4677
    %v4802 = vpack.c.b16 %v4680, %v4679
    %v4803 = vpack.c.b16 %v4682, %v4681
    %v4804 = vpack.c.b16 %v4684, %v4683
    %v4805 = vpack.c.b16 %v4686, %v4685
    %v4806 = vpack.c.b16 %v4688, %v4687
    %v4807 = vpack.c.b16 %v4690, %v4689
    %v4808 = vpack.c.b16 %v4692, %v4691
    %v4809 = vpack.c.b16 %v4694, %v4693
    %v4810 = vpack.c.b16 %v4696, %v4695
    %v4811 = vpack.c.b16 %v4698, %v4697
    %v4812 = vpack.c.b16 %v4700, %v4699
    %v4813 = vpack.c.b16 %v4702, %v4701
    %v4814 = vpack.c.b16 %v4704, %v4703
    %v4815 = vpack.c.b16 %v4706, %v4705
    %v4816 = vpack.c.b16 %v4708, %v4707
    %v4817 = vpack.c.b16 %v4710, %v4709
    %v4818 = vpack.c.b16 %v4712, %v4711
    %v4819 = vpack.c.b16 %v4714, %v4713
    %v4820 = vpack.c.b16 %v4716, %v4715
    %v4821 = vpack.c.b16 %v4718, %v4717
    %v4822 = vpack.c.b16 %v4720, %v4719
    %v4823 = vpack.c.b16 %v4722, %v4721
    %v4824 = vpack.c.b16 %v4724, %v4723
    %v4825 = vpack.c.b16 %v4726, %v4725
    %v4826 = vpack.c.b16 %v4728, %v4727
    %v4827 = vpack.c.b16 %v4730, %v4729
    %v4828 = vpack.c.b16 %v4732, %v4731
    %v4829 = vpack.c.b16 %v4734, %v4733
    %v4830 = vpack.c.b16 %v4736, %v4735
    %v4831 = vpack.c.b16 %v4738, %v4737
    %v4832 = vpack.c.b16 %v4740, %v4739
    %v4833 = vpack.c.b16 %v4742, %v4741
    %v4834 = vpack.c.b16 %v4744, %v4743
    %v4835 = vpack.c.b16 %v4746, %v4745
    %v4836 = vpack.c.b16 %v4748, %v4747
    %v4837 = vpack.c.b16 %v4750, %v4749
    %v4838 = vpack.c.b16 %v4752, %v4751
    %v4839 = vpack.c.b16 %v4754, %v4753
    %v4840 = vpack.c.b16 %v4756, %v4755
    %v4841 = vpack.c.b16 %v4758, %v4757
    %v4842 = vpack.c.b16 %v4760, %v4759
    %v4843 = vpack.c.b16 %v4762, %v4761
    %v4844 = vpack.c.b16 %v4764, %v4763
    %4925 = vmatprep.subr.bf16.mxu0 0
    %4926 = vmatpush1.bf16.msra.mxu0 %v4765
    %4927 = vmatprep.subr.bf16.mxu0 0
    %4928 = vmatpush1.bf16.msra.mxu0 %v4766
    %4929 = vmatprep.subr.bf16.mxu0 0
    %4930 = vmatpush1.bf16.msra.mxu0 %v4767
    %4931 = vmatprep.subr.bf16.mxu0 0
    %4932 = vmatpush1.bf16.msra.mxu0 %v4768
    %4933 = vmatprep.subr.bf16.mxu0 0
    %4934 = vmatpush1.bf16.msra.mxu0 %v4769
    %4935 = vmatprep.subr.bf16.mxu0 0
    %4936 = vmatpush1.bf16.msra.mxu0 %v4770
    %4937 = vmatprep.subr.bf16.mxu0 0
    %4938 = vmatpush1.bf16.msra.mxu0 %v4771
    %4939 = vmatprep.subr.bf16.mxu0 0
    %4940 = vmatpush1.bf16.msra.mxu0 %v4772
    %4941 = vmatprep.subr.bf16.mxu0 0
    %4942 = vmatpush1.bf16.msra.mxu0 %v4773
    %4943 = vmatprep.subr.bf16.mxu0 0
    %4944 = vmatpush1.bf16.msra.mxu0 %v4774
    %4945 = vmatprep.subr.bf16.mxu0 0
    %4946 = vmatpush1.bf16.msra.mxu0 %v4775
    %4947 = vmatprep.subr.bf16.mxu0 0
    %4948 = vmatpush1.bf16.msra.mxu0 %v4776
    %4949 = vmatprep.subr.bf16.mxu0 0
    %4950 = vmatpush1.bf16.msra.mxu0 %v4777
    %4951 = vmatprep.subr.bf16.mxu0 0
    %4952 = vmatpush1.bf16.msra.mxu0 %v4778
    %4953 = vmatprep.subr.bf16.mxu0 0
    %4954 = vmatpush1.bf16.msra.mxu0 %v4779
    %4955 = vmatprep.subr.bf16.mxu0 0
    %4956 = vmatpush1.bf16.msra.mxu0 %v4780
    %4957 = vmatprep.mubr.bf16.mxu0 %v3243
    %4958 = vmatmul.mubr.bf16.gmra.mrb[0].mxu0 %v3242
    %v4959 = vpop.f32.mrb[0].mxu0
    %v4960 = vadd.f32 0.0, %v4959
    %v4961 = vpop.f32.mrb[0].mxu0
    %v4962 = vpop.f32.mrb[0].mxu0
    %v4963 = vadd.f32 0.0, %v4962
    %v4964 = vpop.f32.mrb[0].mxu0
    %4965 = vmatprep.mubr.bf16.mxu0 %v3245
    %4966 = vmatmul.mubr.bf16.gmra.mrb[0].mxu0 %v3244
    %v4967 = vpop.f32.mrb[0].mxu0
    %v4968 = vadd.f32 0.0, %v4967
    %v4969 = vpop.f32.mrb[0].mxu0
    %v4970 = vpop.f32.mrb[0].mxu0
    %v4971 = vadd.f32 0.0, %v4970
    %v4972 = vpop.f32.mrb[0].mxu0
    %4973 = vmatprep.mubr.bf16.mxu0 %v3247
    %4974 = vmatmul.mubr.bf16.gmra.mrb[0].mxu0 %v3246
    %v4975 = vpop.f32.mrb[0].mxu0
    %v4976 = vadd.f32 0.0, %v4975
    %v4977 = vpop.f32.mrb[0].mxu0
    %v4978 = vpop.f32.mrb[0].mxu0
    %v4979 = vadd.f32 0.0, %v4978
    %v4980 = vpop.f32.mrb[0].mxu0
    %4981 = vmatprep.mubr.bf16.mxu0 %v3249
    %4982 = vmatmul.mubr.bf16.gmra.mrb[0].mxu0 %v3248
    %v4983 = vpop.f32.mrb[0].mxu0
    %v4984 = vadd.f32 0.0, %v4983
    %v4985 = vpop.f32.mrb[0].mxu0
    %v4986 = vpop.f32.mrb[0].mxu0
    %v4987 = vadd.f32 0.0, %v4986
    %v4988 = vpop.f32.mrb[0].mxu0
    %4989 = vmatprep.mubr.bf16.mxu0 %v3251
    %4990 = vmatmul.mubr.bf16.gmra.mrb[0].mxu0 %v3250
    %v4991 = vpop.f32.mrb[0].mxu0
    %v4992 = vadd.f32 0.0, %v4991
    %v4993 = vpop.f32.mrb[0].mxu0
    %v4994 = vpop.f32.mrb[0].mxu0
    %v4995 = vadd.f32 0.0, %v4994
    %v4996 = vpop.f32.mrb[0].mxu0
    %4997 = vmatprep.mubr.bf16.mxu0 %v3253
    %4998 = vmatmul.mubr.bf16.gmra.mrb[0].mxu0 %v3252
    %v4999 = vpop.f32.mrb[0].mxu0
    %v5000 = vadd.f32 0.0, %v4999
    %v5001 = vpop.f32.mrb[0].mxu0
    %v5002 = vpop.f32.mrb[0].mxu0
    %v5003 = vadd.f32 0.0, %v5002
    %v5004 = vpop.f32.mrb[0].mxu0
    %5005 = vmatprep.mubr.bf16.mxu0 %v3255
    %5006 = vmatmul.mubr.bf16.gmra.mrb[0].mxu0 %v3254
    %v5007 = vpop.f32.mrb[0].mxu0
    %v5008 = vadd.f32 0.0, %v5007
    %v5009 = vpop.f32.mrb[0].mxu0
    %v5010 = vpop.f32.mrb[0].mxu0
    %v5011 = vadd.f32 0.0, %v5010
    %v5012 = vpop.f32.mrb[0].mxu0
    %5013 = vmatprep.mubr.bf16.mxu0 %v3257
    %5014 = vmatmul.mubr.bf16.gmra.mrb[0].mxu0 %v3256
    %v5015 = vpop.f32.mrb[0].mxu0
    %v5016 = vadd.f32 0.0, %v5015
    %v5017 = vpop.f32.mrb[0].mxu0
    %v5018 = vpop.f32.mrb[0].mxu0
    %v5019 = vadd.f32 0.0, %v5018
    %v5020 = vpop.f32.mrb[0].mxu0
    %5021 = vdwg.mxu0
    %5022 = vmatprep.subr.bf16.mxu0 0
    %5023 = vmatpush1.bf16.msra.mxu0 %v4781
    %5024 = vmatprep.subr.bf16.mxu0 0
    %5025 = vmatpush1.bf16.msra.mxu0 %v4782
    %5026 = vmatprep.subr.bf16.mxu0 0
    %5027 = vmatpush1.bf16.msra.mxu0 %v4783
    %5028 = vmatprep.subr.bf16.mxu0 0
    %5029 = vmatpush1.bf16.msra.mxu0 %v4784
    %5030 = vmatprep.subr.bf16.mxu0 0
    %5031 = vmatpush1.bf16.msra.mxu0 %v4785
    %5032 = vmatprep.subr.bf16.mxu0 0
    %5033 = vmatpush1.bf16.msra.mxu0 %v4786
    %5034 = vmatprep.subr.bf16.mxu0 0
    %5035 = vmatpush1.bf16.msra.mxu0 %v4787
    %5036 = vmatprep.subr.bf16.mxu0 0
    %5037 = vmatpush1.bf16.msra.mxu0 %v4788
    %5038 = vmatprep.subr.bf16.mxu0 0
    %5039 = vmatpush1.bf16.msra.mxu0 %v4789
    %5040 = vmatprep.subr.bf16.mxu0 0
    %5041 = vmatpush1.bf16.msra.mxu0 %v4790
    %5042 = vmatprep.subr.bf16.mxu0 0
    %5043 = vmatpush1.bf16.msra.mxu0 %v4791
    %5044 = vmatprep.subr.bf16.mxu0 0
    %5045 = vmatpush1.bf16.msra.mxu0 %v4792
    %5046 = vmatprep.subr.bf16.mxu0 0
    %5047 = vmatpush1.bf16.msra.mxu0 %v4793
    %5048 = vmatprep.subr.bf16.mxu0 0
    %5049 = vmatpush1.bf16.msra.mxu0 %v4794
    %5050 = vmatprep.subr.bf16.mxu0 0
    %5051 = vmatpush1.bf16.msra.mxu0 %v4795
    %5052 = vmatprep.subr.bf16.mxu0 0
    %5053 = vmatpush1.bf16.msra.mxu0 %v4796
    %5054 = vmatprep.mubr.bf16.mxu0 %v3355
    %5055 = vmatmul.mubr.bf16.gmra.mrb[0].mxu0 %v3354
    %v5056 = vpop.f32.mrb[0].mxu0
    %v5057 = vadd.f32 %v4960, %v5056
    %v5058 = vpop.f32.mrb[0].mxu0
    %v5059 = vpop.f32.mrb[0].mxu0
    %v5060 = vadd.f32 %v4963, %v5059
    %v5061 = vpop.f32.mrb[0].mxu0
    %5062 = vmatprep.mubr.bf16.mxu0 %v3357
    %5063 = vmatmul.mubr.bf16.gmra.mrb[0].mxu0 %v3356
    %v5064 = vpop.f32.mrb[0].mxu0
    %v5065 = vadd.f32 %v4968, %v5064
    %v5066 = vpop.f32.mrb[0].mxu0
    %v5067 = vpop.f32.mrb[0].mxu0
    %v5068 = vadd.f32 %v4971, %v5067
    %v5069 = vpop.f32.mrb[0].mxu0
    %5070 = vmatprep.mubr.bf16.mxu0 %v3359
    %5071 = vmatmul.mubr.bf16.gmra.mrb[0].mxu0 %v3358
    %v5072 = vpop.f32.mrb[0].mxu0
    %v5073 = vadd.f32 %v4976, %v5072
    %v5074 = vpop.f32.mrb[0].mxu0
    %v5075 = vpop.f32.mrb[0].mxu0
    %v5076 = vadd.f32 %v4979, %v5075
    %v5077 = vpop.f32.mrb[0].mxu0
    %5078 = vmatprep.mubr.bf16.mxu0 %v3361
    %5079 = vmatmul.mubr.bf16.gmra.mrb[0].mxu0 %v3360
    %v5080 = vpop.f32.mrb[0].mxu0
    %v5081 = vadd.f32 %v4984, %v5080
    %v5082 = vpop.f32.mrb[0].mxu0
    %v5083 = vpop.f32.mrb[0].mxu0
    %v5084 = vadd.f32 %v4987, %v5083
    %v5085 = vpop.f32.mrb[0].mxu0
    %5086 = vmatprep.mubr.bf16.mxu0 %v3363
    %5087 = vmatmul.mubr.bf16.gmra.mrb[0].mxu0 %v3362
    %v5088 = vpop.f32.mrb[0].mxu0
    %v5089 = vadd.f32 %v4992, %v5088
    %v5090 = vpop.f32.mrb[0].mxu0
    %v5091 = vpop.f32.mrb[0].mxu0
    %v5092 = vadd.f32 %v4995, %v5091
    %v5093 = vpop.f32.mrb[0].mxu0
    %5094 = vmatprep.mubr.bf16.mxu0 %v3365
    %5095 = vmatmul.mubr.bf16.gmra.mrb[0].mxu0 %v3364
    %v5096 = vpop.f32.mrb[0].mxu0
    %v5097 = vadd.f32 %v5000, %v5096
    %v5098 = vpop.f32.mrb[0].mxu0
    %v5099 = vpop.f32.mrb[0].mxu0
    %v5100 = vadd.f32 %v5003, %v5099
    %v5101 = vpop.f32.mrb[0].mxu0
    %5102 = vmatprep.mubr.bf16.mxu0 %v3367
    %5103 = vmatmul.mubr.bf16.gmra.mrb[0].mxu0 %v3366
    %v5104 = vpop.f32.mrb[0].mxu0
    %v5105 = vadd.f32 %v5008, %v5104
    %v5106 = vpop.f32.mrb[0].mxu0
    %v5107 = vpop.f32.mrb[0].mxu0
    %v5108 = vadd.f32 %v5011, %v5107
    %v5109 = vpop.f32.mrb[0].mxu0
    %5110 = vmatprep.mubr.bf16.mxu0 %v3369
    %5111 = vmatmul.mubr.bf16.gmra.mrb[0].mxu0 %v3368
    %v5112 = vpop.f32.mrb[0].mxu0
    %v5113 = vadd.f32 %v5016, %v5112
    %v5114 = vpop.f32.mrb[0].mxu0
    %v5115 = vpop.f32.mrb[0].mxu0
    %v5116 = vadd.f32 %v5019, %v5115
    %v5117 = vpop.f32.mrb[0].mxu0
    %5118 = vdwg.mxu0
    %5119 = vmatprep.subr.bf16.mxu0 0
    %5120 = vmatpush1.bf16.msra.mxu0 %v4797
    %5121 = vmatprep.subr.bf16.mxu0 0
    %5122 = vmatpush1.bf16.msra.mxu0 %v4798
    %5123 = vmatprep.subr.bf16.mxu0 0
    %5124 = vmatpush1.bf16.msra.mxu0 %v4799
    %5125 = vmatprep.subr.bf16.mxu0 0
    %5126 = vmatpush1.bf16.msra.mxu0 %v4800
    %5127 = vmatprep.subr.bf16.mxu0 0
    %5128 = vmatpush1.bf16.msra.mxu0 %v4801
    %5129 = vmatprep.subr.bf16.mxu0 0
    %5130 = vmatpush1.bf16.msra.mxu0 %v4802
    %5131 = vmatprep.subr.bf16.mxu0 0
    %5132 = vmatpush1.bf16.msra.mxu0 %v4803
    %5133 = vmatprep.subr.bf16.mxu0 0
    %5134 = vmatpush1.bf16.msra.mxu0 %v4804
    %5135 = vmatprep.subr.bf16.mxu0 0
    %5136 = vmatpush1.bf16.msra.mxu0 %v4805
    %5137 = vmatprep.subr.bf16.mxu0 0
    %5138 = vmatpush1.bf16.msra.mxu0 %v4806
    %5139 = vmatprep.subr.bf16.mxu0 0
    %5140 = vmatpush1.bf16.msra.mxu0 %v4807
    %5141 = vmatprep.subr.bf16.mxu0 0
    %5142 = vmatpush1.bf16.msra.mxu0 %v4808
    %5143 = vmatprep.subr.bf16.mxu0 0
    %5144 = vmatpush1.bf16.msra.mxu0 %v4809
    %5145 = vmatprep.subr.bf16.mxu0 0
    %5146 = vmatpush1.bf16.msra.mxu0 %v4810
    %5147 = vmatprep.subr.bf16.mxu0 0
    %5148 = vmatpush1.bf16.msra.mxu0 %v4811
    %5149 = vmatprep.subr.bf16.mxu0 0
    %5150 = vmatpush1.bf16.msra.mxu0 %v4812
    %5151 = vmatprep.mubr.bf16.mxu0 %v3467
    %5152 = vmatmul.mubr.bf16.gmra.mrb[0].mxu0 %v3466
    %v5153 = vpop.f32.mrb[0].mxu0
    %v5154 = vadd.f32 %v5057, %v5153
    %v5155 = vpop.f32.mrb[0].mxu0
    %v5156 = vpop.f32.mrb[0].mxu0
    %v5157 = vadd.f32 %v5060, %v5156
    %v5158 = vpop.f32.mrb[0].mxu0
    %5159 = vmatprep.mubr.bf16.mxu0 %v3469
    %5160 = vmatmul.mubr.bf16.gmra.mrb[0].mxu0 %v3468
    %v5161 = vpop.f32.mrb[0].mxu0
    %v5162 = vadd.f32 %v5065, %v5161
    %v5163 = vpop.f32.mrb[0].mxu0
    %v5164 = vpop.f32.mrb[0].mxu0
    %v5165 = vadd.f32 %v5068, %v5164
    %v5166 = vpop.f32.mrb[0].mxu0
    %5167 = vmatprep.mubr.bf16.mxu0 %v3471
    %5168 = vmatmul.mubr.bf16.gmra.mrb[0].mxu0 %v3470
    %v5169 = vpop.f32.mrb[0].mxu0
    %v5170 = vadd.f32 %v5073, %v5169
    %v5171 = vpop.f32.mrb[0].mxu0
    %v5172 = vpop.f32.mrb[0].mxu0
    %v5173 = vadd.f32 %v5076, %v5172
    %v5174 = vpop.f32.mrb[0].mxu0
    %5175 = vmatprep.mubr.bf16.mxu0 %v3473
    %5176 = vmatmul.mubr.bf16.gmra.mrb[0].mxu0 %v3472
    %v5177 = vpop.f32.mrb[0].mxu0
    %v5178 = vadd.f32 %v5081, %v5177
    %v5179 = vpop.f32.mrb[0].mxu0
    %v5180 = vpop.f32.mrb[0].mxu0
    %v5181 = vadd.f32 %v5084, %v5180
    %v5182 = vpop.f32.mrb[0].mxu0
    %5183 = vmatprep.mubr.bf16.mxu0 %v3475
    %5184 = vmatmul.mubr.bf16.gmra.mrb[0].mxu0 %v3474
    %v5185 = vpop.f32.mrb[0].mxu0
    %v5186 = vadd.f32 %v5089, %v5185
    %v5187 = vpop.f32.mrb[0].mxu0
    %v5188 = vpop.f32.mrb[0].mxu0
    %v5189 = vadd.f32 %v5092, %v5188
    %v5190 = vpop.f32.mrb[0].mxu0
    %5191 = vmatprep.mubr.bf16.mxu0 %v3477
    %5192 = vmatmul.mubr.bf16.gmra.mrb[0].mxu0 %v3476
    %v5193 = vpop.f32.mrb[0].mxu0
    %v5194 = vadd.f32 %v5097, %v5193
    %v5195 = vpop.f32.mrb[0].mxu0
    %v5196 = vpop.f32.mrb[0].mxu0
    %v5197 = vadd.f32 %v5100, %v5196
    %v5198 = vpop.f32.mrb[0].mxu0
    %5199 = vmatprep.mubr.bf16.mxu0 %v3479
    %5200 = vmatmul.mubr.bf16.gmra.mrb[0].mxu0 %v3478
    %v5201 = vpop.f32.mrb[0].mxu0
    %v5202 = vadd.f32 %v5105, %v5201
    %v5203 = vpop.f32.mrb[0].mxu0
    %v5204 = vpop.f32.mrb[0].mxu0
    %v5205 = vadd.f32 %v5108, %v5204
    %v5206 = vpop.f32.mrb[0].mxu0
    %5207 = vmatprep.mubr.bf16.mxu0 %v3481
    %5208 = vmatmul.mubr.bf16.gmra.mrb[0].mxu0 %v3480
    %v5209 = vpop.f32.mrb[0].mxu0
    %v5210 = vadd.f32 %v5113, %v5209
    %v5211 = vpop.f32.mrb[0].mxu0
    %v5212 = vpop.f32.mrb[0].mxu0
    %v5213 = vadd.f32 %v5116, %v5212
    %v5214 = vpop.f32.mrb[0].mxu0
    %5215 = vdwg.mxu0
    %5216 = vmatprep.subr.bf16.mxu0 0
    %5217 = vmatpush1.bf16.msra.mxu0 %v4813
    %5218 = vmatprep.subr.bf16.mxu0 0
    %5219 = vmatpush1.bf16.msra.mxu0 %v4814
    %5220 = vmatprep.subr.bf16.mxu0 0
    %5221 = vmatpush1.bf16.msra.mxu0 %v4815
    %5222 = vmatprep.subr.bf16.mxu0 0
    %5223 = vmatpush1.bf16.msra.mxu0 %v4816
    %5224 = vmatprep.subr.bf16.mxu0 0
    %5225 = vmatpush1.bf16.msra.mxu0 %v4817
    %5226 = vmatprep.subr.bf16.mxu0 0
    %5227 = vmatpush1.bf16.msra.mxu0 %v4818
    %5228 = vmatprep.subr.bf16.mxu0 0
    %5229 = vmatpush1.bf16.msra.mxu0 %v4819
    %5230 = vmatprep.subr.bf16.mxu0 0
    %5231 = vmatpush1.bf16.msra.mxu0 %v4820
    %5232 = vmatprep.subr.bf16.mxu0 0
    %5233 = vmatpush1.bf16.msra.mxu0 %v4821
    %5234 = vmatprep.subr.bf16.mxu0 0
    %5235 = vmatpush1.bf16.msra.mxu0 %v4822
    %5236 = vmatprep.subr.bf16.mxu0 0
    %5237 = vmatpush1.bf16.msra.mxu0 %v4823
    %5238 = vmatprep.subr.bf16.mxu0 0
    %5239 = vmatpush1.bf16.msra.mxu0 %v4824
    %5240 = vmatprep.subr.bf16.mxu0 0
    %5241 = vmatpush1.bf16.msra.mxu0 %v4825
    %5242 = vmatprep.subr.bf16.mxu0 0
    %5243 = vmatpush1.bf16.msra.mxu0 %v4826
    %5244 = vmatprep.subr.bf16.mxu0 0
    %5245 = vmatpush1.bf16.msra.mxu0 %v4827
    %5246 = vmatprep.subr.bf16.mxu0 0
    %5247 = vmatpush1.bf16.msra.mxu0 %v4828
    %5248 = vmatprep.mubr.bf16.mxu0 %v3579
    %5249 = vmatmul.mubr.bf16.gmra.mrb[0].mxu0 %v3578
    %v5250 = vpop.f32.mrb[0].mxu0
    %v5251 = vadd.f32 %v5154, %v5250
    %v5252 = vpop.f32.mrb[0].mxu0
    %v5253 = vpop.f32.mrb[0].mxu0
    %v5254 = vadd.f32 %v5157, %v5253
    %v5255 = vpop.f32.mrb[0].mxu0
    %5256 = vmatprep.mubr.bf16.mxu0 %v3581
    %5257 = vmatmul.mubr.bf16.gmra.mrb[0].mxu0 %v3580
    %v5258 = vpop.f32.mrb[0].mxu0
    %v5259 = vadd.f32 %v5162, %v5258
    %v5260 = vpop.f32.mrb[0].mxu0
    %v5261 = vpop.f32.mrb[0].mxu0
    %v5262 = vadd.f32 %v5165, %v5261
    %v5263 = vpop.f32.mrb[0].mxu0
    %5264 = vmatprep.mubr.bf16.mxu0 %v3583
    %5265 = vmatmul.mubr.bf16.gmra.mrb[0].mxu0 %v3582
    %v5266 = vpop.f32.mrb[0].mxu0
    %v5267 = vadd.f32 %v5170, %v5266
    %v5268 = vpop.f32.mrb[0].mxu0
    %v5269 = vpop.f32.mrb[0].mxu0
    %v5270 = vadd.f32 %v5173, %v5269
    %v5271 = vpop.f32.mrb[0].mxu0
    %5272 = vmatprep.mubr.bf16.mxu0 %v3585
    %5273 = vmatmul.mubr.bf16.gmra.mrb[0].mxu0 %v3584
    %v5274 = vpop.f32.mrb[0].mxu0
    %v5275 = vadd.f32 %v5178, %v5274
    %v5276 = vpop.f32.mrb[0].mxu0
    %v5277 = vpop.f32.mrb[0].mxu0
    %v5278 = vadd.f32 %v5181, %v5277
    %v5279 = vpop.f32.mrb[0].mxu0
    %5280 = vmatprep.mubr.bf16.mxu0 %v3587
    %5281 = vmatmul.mubr.bf16.gmra.mrb[0].mxu0 %v3586
    %v5282 = vpop.f32.mrb[0].mxu0
    %v5283 = vadd.f32 %v5186, %v5282
    %v5284 = vpop.f32.mrb[0].mxu0
    %v5285 = vpop.f32.mrb[0].mxu0
    %v5286 = vadd.f32 %v5189, %v5285
    %v5287 = vpop.f32.mrb[0].mxu0
    %5288 = vmatprep.mubr.bf16.mxu0 %v3589
    %5289 = vmatmul.mubr.bf16.gmra.mrb[0].mxu0 %v3588
    %v5290 = vpop.f32.mrb[0].mxu0
    %v5291 = vadd.f32 %v5194, %v5290
    %v5292 = vpop.f32.mrb[0].mxu0
    %v5293 = vpop.f32.mrb[0].mxu0
    %v5294 = vadd.f32 %v5197, %v5293
    %v5295 = vpop.f32.mrb[0].mxu0
    %5296 = vmatprep.mubr.bf16.mxu0 %v3591
    %5297 = vmatmul.mubr.bf16.gmra.mrb[0].mxu0 %v3590
    %v5298 = vpop.f32.mrb[0].mxu0
    %v5299 = vadd.f32 %v5202, %v5298
    %v5300 = vpop.f32.mrb[0].mxu0
    %v5301 = vpop.f32.mrb[0].mxu0
    %v5302 = vadd.f32 %v5205, %v5301
    %v5303 = vpop.f32.mrb[0].mxu0
    %5304 = vmatprep.mubr.bf16.mxu0 %v3593
    %5305 = vmatmul.mubr.bf16.gmra.mrb[0].mxu0 %v3592
    %v5306 = vpop.f32.mrb[0].mxu0
    %v5307 = vadd.f32 %v5210, %v5306
    %v5308 = vpop.f32.mrb[0].mxu0
    %v5309 = vpop.f32.mrb[0].mxu0
    %v5310 = vadd.f32 %v5213, %v5309
    %v5311 = vpop.f32.mrb[0].mxu0
    %5312 = vdwg.mxu0
    %5313 = vmatprep.subr.bf16.mxu0 0
    %5314 = vmatpush1.bf16.msra.mxu0 %v4829
    %5315 = vmatprep.subr.bf16.mxu0 0
    %5316 = vmatpush1.bf16.msra.mxu0 %v4830
    %5317 = vmatprep.subr.bf16.mxu0 0
    %5318 = vmatpush1.bf16.msra.mxu0 %v4831
    %5319 = vmatprep.subr.bf16.mxu0 0
    %5320 = vmatpush1.bf16.msra.mxu0 %v4832
    %5321 = vmatprep.subr.bf16.mxu0 0
    %5322 = vmatpush1.bf16.msra.mxu0 %v4833
    %5323 = vmatprep.subr.bf16.mxu0 0
    %5324 = vmatpush1.bf16.msra.mxu0 %v4834
    %5325 = vmatprep.subr.bf16.mxu0 0
    %5326 = vmatpush1.bf16.msra.mxu0 %v4835
    %5327 = vmatprep.subr.bf16.mxu0 0
    %5328 = vmatpush1.bf16.msra.mxu0 %v4836
    %5329 = vmatprep.subr.bf16.mxu0 0
    %5330 = vmatpush1.bf16.msra.mxu0 %v4837
    %5331 = vmatprep.subr.bf16.mxu0 0
    %5332 = vmatpush1.bf16.msra.mxu0 %v4838
    %5333 = vmatprep.subr.bf16.mxu0 0
    %5334 = vmatpush1.bf16.msra.mxu0 %v4839
    %5335 = vmatprep.subr.bf16.mxu0 0
    %5336 = vmatpush1.bf16.msra.mxu0 %v4840
    %5337 = vmatprep.subr.bf16.mxu0 0
    %5338 = vmatpush1.bf16.msra.mxu0 %v4841
    %5339 = vmatprep.subr.bf16.mxu0 0
    %5340 = vmatpush1.bf16.msra.mxu0 %v4842
    %5341 = vmatprep.subr.bf16.mxu0 0
    %5342 = vmatpush1.bf16.msra.mxu0 %v4843
    %5343 = vmatprep.subr.bf16.mxu0 0
    %5344 = vmatpush1.bf16.msra.mxu0 %v4844
    %5345 = vmatprep.mubr.bf16.mxu0 %v3595
    %5346 = vmatmul.mubr.bf16.gmra.mrb[0].mxu0 %v3594
    %v5347 = vpop.f32.mrb[0].mxu0
    %v5348 = vadd.f32 %v5251, %v5347
    %v5349 = vpop.f32.mrb[0].mxu0
    %v5350 = vpop.f32.mrb[0].mxu0
    %v5351 = vadd.f32 %v5254, %v5350
    %v5352 = vpop.f32.mrb[0].mxu0
    %5353 = vmatprep.mubr.bf16.mxu0 %v3597
    %5354 = vmatmul.mubr.bf16.gmra.mrb[0].mxu0 %v3596
    %v5355 = vpop.f32.mrb[0].mxu0
    %v5356 = vadd.f32 %v5259, %v5355
    %v5357 = vpop.f32.mrb[0].mxu0
    %v5358 = vpop.f32.mrb[0].mxu0
    %v5359 = vadd.f32 %v5262, %v5358
    %v5360 = vpop.f32.mrb[0].mxu0
    %5361 = vmatprep.mubr.bf16.mxu0 %v3599
    %5362 = vmatmul.mubr.bf16.gmra.mrb[0].mxu0 %v3598
    %v5363 = vpop.f32.mrb[0].mxu0
    %v5364 = vadd.f32 %v5267, %v5363
    %v5365 = vpop.f32.mrb[0].mxu0
    %v5366 = vpop.f32.mrb[0].mxu0
    %v5367 = vadd.f32 %v5270, %v5366
    %v5368 = vpop.f32.mrb[0].mxu0
    %5369 = vmatprep.mubr.bf16.mxu0 %v3601
    %5370 = vmatmul.mubr.bf16.gmra.mrb[0].mxu0 %v3600
    %v5371 = vpop.f32.mrb[0].mxu0
    %v5372 = vadd.f32 %v5275, %v5371
    %v5373 = vpop.f32.mrb[0].mxu0
    %v5374 = vpop.f32.mrb[0].mxu0
    %v5375 = vadd.f32 %v5278, %v5374
    %v5376 = vpop.f32.mrb[0].mxu0
    %5377 = vmatprep.mubr.bf16.mxu0 %v3603
    %5378 = vmatmul.mubr.bf16.gmra.mrb[0].mxu0 %v3602
    %v5379 = vpop.f32.mrb[0].mxu0
    %v5380 = vadd.f32 %v5283, %v5379
    %v5381 = vpop.f32.mrb[0].mxu0
    %v5382 = vpop.f32.mrb[0].mxu0
    %v5383 = vadd.f32 %v5286, %v5382
    %v5384 = vpop.f32.mrb[0].mxu0
    %5385 = vmatprep.mubr.bf16.mxu0 %v3605
    %5386 = vmatmul.mubr.bf16.gmra.mrb[0].mxu0 %v3604
    %v5387 = vpop.f32.mrb[0].mxu0
    %v5388 = vadd.f32 %v5291, %v5387
    %v5389 = vpop.f32.mrb[0].mxu0
    %v5390 = vpop.f32.mrb[0].mxu0
    %v5391 = vadd.f32 %v5294, %v5390
    %v5392 = vpop.f32.mrb[0].mxu0
    %5393 = vmatprep.mubr.bf16.mxu0 %v3607
    %5394 = vmatmul.mubr.bf16.gmra.mrb[0].mxu0 %v3606
    %v5395 = vpop.f32.mrb[0].mxu0
    %v5396 = vadd.f32 %v5299, %v5395
    %v5397 = vpop.f32.mrb[0].mxu0
    %v5398 = vpop.f32.mrb[0].mxu0
    %v5399 = vadd.f32 %v5302, %v5398
    %v5400 = vpop.f32.mrb[0].mxu0
    %5401 = vmatprep.mubr.bf16.mxu0 %v3609
    %5402 = vmatmul.mubr.bf16.gmra.mrb[0].mxu0 %v3608
    %v5403 = vpop.f32.mrb[0].mxu0
    %v5404 = vadd.f32 %v5307, %v5403
    %v5405 = vpop.f32.mrb[0].mxu0
    %v5406 = vpop.f32.mrb[0].mxu0
    %v5407 = vadd.f32 %v5310, %v5406
    %v5408 = vpop.f32.mrb[0].mxu0
    %5409 = vdwg.mxu0
    %v5410 = vld [vmem:[%s8] sm:$0x3]
    %v5412 = vlaneseq
    %v5413 = vshrl.u32 %v5412, 7
    %v5414 = vsub.s32 0, %v5413
    %v5415 = vrot.slane %v5410, %v5414
    %v5416 = vlaneseq
    %v5417 = vshrl.u32 %v5416, 7
    %v5418 = vsub.s32 1, %v5417
    %v5419 = vrot.slane %v5410, %v5418
    %v5422 = vmul.f32 %v4223, %v5415
    %v5423 = vmul.f32 %v5348, %v5419
    %v5424 = vmul.f32 %v4226, %v5415
    %v5425 = vmul.f32 %v5351, %v5419
    %v5426 = vmul.f32 %v4231, %v5415
    %v5427 = vmul.f32 %v5356, %v5419
    %v5428 = vmul.f32 %v4234, %v5415
    %v5429 = vmul.f32 %v5359, %v5419
    %v5430 = vmul.f32 %v4239, %v5415
    %v5431 = vmul.f32 %v5364, %v5419
    %v5432 = vmul.f32 %v4242, %v5415
    %v5433 = vmul.f32 %v5367, %v5419
    %v5434 = vmul.f32 %v4247, %v5415
    %v5435 = vmul.f32 %v5372, %v5419
    %v5436 = vmul.f32 %v4250, %v5415
    %v5437 = vmul.f32 %v5375, %v5419
    %v5438 = vmul.f32 %v4255, %v5415
    %v5439 = vmul.f32 %v5380, %v5419
    %v5440 = vmul.f32 %v4258, %v5415
    %v5441 = vmul.f32 %v5383, %v5419
    %v5442 = vmul.f32 %v4263, %v5415
    %v5443 = vmul.f32 %v5388, %v5419
    %v5444 = vmul.f32 %v4266, %v5415
    %v5445 = vmul.f32 %v5391, %v5419
    %v5446 = vmul.f32 %v4271, %v5415
    %v5447 = vmul.f32 %v5396, %v5419
    %v5448 = vmul.f32 %v4274, %v5415
    %v5449 = vmul.f32 %v5399, %v5419
    %v5450 = vmul.f32 %v4279, %v5415
    %v5451 = vmul.f32 %v5404, %v5419
    %v5452 = vmul.f32 %v4282, %v5415
    %v5453 = vmul.f32 %v5407, %v5419
    %v5454 = vld [vmem:[%s9] sm:$0x3]
    %v5456 = vlaneseq
    %v5457 = vshrl.u32 %v5456, 7
    %v5458 = vsub.s32 0, %v5457
    %v5459 = vrot.slane %v5454, %v5458
    %v5460 = vlaneseq
    %v5461 = vshrl.u32 %v5460, 7
    %v5462 = vsub.s32 1, %v5461
    %v5463 = vrot.slane %v5454, %v5462
    %v5466 = vadd.f32 %v5422, %v5459
    %v5467 = vadd.f32 %v5423, %v5463
    %v5468 = vadd.f32 %v5424, %v5459
    %v5469 = vadd.f32 %v5425, %v5463
    %v5470 = vadd.f32 %v5426, %v5459
    %v5471 = vadd.f32 %v5427, %v5463
    %v5472 = vadd.f32 %v5428, %v5459
    %v5473 = vadd.f32 %v5429, %v5463
    %v5474 = vadd.f32 %v5430, %v5459
    %v5475 = vadd.f32 %v5431, %v5463
    %v5476 = vadd.f32 %v5432, %v5459
    %v5477 = vadd.f32 %v5433, %v5463
    %v5478 = vadd.f32 %v5434, %v5459
    %v5479 = vadd.f32 %v5435, %v5463
    %v5480 = vadd.f32 %v5436, %v5459
    %v5481 = vadd.f32 %v5437, %v5463
    %v5482 = vadd.f32 %v5438, %v5459
    %v5483 = vadd.f32 %v5439, %v5463
    %v5484 = vadd.f32 %v5440, %v5459
    %v5485 = vadd.f32 %v5441, %v5463
    %v5486 = vadd.f32 %v5442, %v5459
    %v5487 = vadd.f32 %v5443, %v5463
    %v5488 = vadd.f32 %v5444, %v5459
    %v5489 = vadd.f32 %v5445, %v5463
    %v5490 = vadd.f32 %v5446, %v5459
    %v5491 = vadd.f32 %v5447, %v5463
    %v5492 = vadd.f32 %v5448, %v5459
    %v5493 = vadd.f32 %v5449, %v5463
    %v5494 = vadd.f32 %v5450, %v5459
    %v5495 = vadd.f32 %v5451, %v5463
    %v5496 = vadd.f32 %v5452, %v5459
    %v5497 = vadd.f32 %v5453, %v5463
    %v5498 = vmax.f32 %v5466, 0.0
    %v5499 = vmax.f32 %v5467, 0.0
    %v5500 = vmax.f32 %v5468, 0.0
    %v5501 = vmax.f32 %v5469, 0.0
    %v5502 = vmax.f32 %v5470, 0.0
    %v5503 = vmax.f32 %v5471, 0.0
    %v5504 = vmax.f32 %v5472, 0.0
    %v5505 = vmax.f32 %v5473, 0.0
    %v5506 = vmax.f32 %v5474, 0.0
    %v5507 = vmax.f32 %v5475, 0.0
    %v5508 = vmax.f32 %v5476, 0.0
    %v5509 = vmax.f32 %v5477, 0.0
    %v5510 = vmax.f32 %v5478, 0.0
    %v5511 = vmax.f32 %v5479, 0.0
    %v5512 = vmax.f32 %v5480, 0.0
    %v5513 = vmax.f32 %v5481, 0.0
    %v5514 = vmax.f32 %v5482, 0.0
    %v5515 = vmax.f32 %v5483, 0.0
    %v5516 = vmax.f32 %v5484, 0.0
    %v5517 = vmax.f32 %v5485, 0.0
    %v5518 = vmax.f32 %v5486, 0.0
    %v5519 = vmax.f32 %v5487, 0.0
    %v5520 = vmax.f32 %v5488, 0.0
    %v5521 = vmax.f32 %v5489, 0.0
    %v5522 = vmax.f32 %v5490, 0.0
    %v5523 = vmax.f32 %v5491, 0.0
    %v5524 = vmax.f32 %v5492, 0.0
    %v5525 = vmax.f32 %v5493, 0.0
    %v5526 = vmax.f32 %v5494, 0.0
    %v5527 = vmax.f32 %v5495, 0.0
    %v5528 = vmax.f32 %v5496, 0.0
    %v5529 = vmax.f32 %v5497, 0.0
    %v5530 = vadd.f32 %v5498, %v439
    %v5531 = vadd.f32 %v5499, %v441
    %v5532 = vadd.f32 %v5500, %v443
    %v5533 = vadd.f32 %v5501, %v445
    %v5534 = vadd.f32 %v5502, %v449
    %v5535 = vadd.f32 %v5503, %v451
    %v5536 = vadd.f32 %v5504, %v453
    %v5537 = vadd.f32 %v5505, %v455
    %v5538 = vadd.f32 %v5506, %v459
    %v5539 = vadd.f32 %v5507, %v461
    %v5540 = vadd.f32 %v5508, %v463
    %v5541 = vadd.f32 %v5509, %v465
    %v5542 = vadd.f32 %v5510, %v469
    %v5543 = vadd.f32 %v5511, %v471
    %v5544 = vadd.f32 %v5512, %v473
    %v5545 = vadd.f32 %v5513, %v475
    %v5546 = vadd.f32 %v5514, %v479
    %v5547 = vadd.f32 %v5515, %v481
    %v5548 = vadd.f32 %v5516, %v483
    %v5549 = vadd.f32 %v5517, %v485
    %v5550 = vadd.f32 %v5518, %v489
    %v5551 = vadd.f32 %v5519, %v491
    %v5552 = vadd.f32 %v5520, %v493
    %v5553 = vadd.f32 %v5521, %v495
    %v5554 = vadd.f32 %v5522, %v499
    %v5555 = vadd.f32 %v5523, %v501
    %v5556 = vadd.f32 %v5524, %v503
    %v5557 = vadd.f32 %v5525, %v505
    %v5558 = vadd.f32 %v5526, %v509
    %v5559 = vadd.f32 %v5527, %v511
    %v5560 = vadd.f32 %v5528, %v513
    %v5561 = vadd.f32 %v5529, %v515
    %v5562 = vmax.f32 %v5530, 0.0
    %v5563 = vmax.f32 %v5531, 0.0
    %v5564 = vmax.f32 %v5532, 0.0
    %v5565 = vmax.f32 %v5533, 0.0
    %v5566 = vmax.f32 %v5534, 0.0
    %v5567 = vmax.f32 %v5535, 0.0
    %v5568 = vmax.f32 %v5536, 0.0
    %v5569 = vmax.f32 %v5537, 0.0
    %v5570 = vmax.f32 %v5538, 0.0
    %v5571 = vmax.f32 %v5539, 0.0
    %v5572 = vmax.f32 %v5540, 0.0
    %v5573 = vmax.f32 %v5541, 0.0
    %v5574 = vmax.f32 %v5542, 0.0
    %v5575 = vmax.f32 %v5543, 0.0
    %v5576 = vmax.f32 %v5544, 0.0
    %v5577 = vmax.f32 %v5545, 0.0
    %v5578 = vmax.f32 %v5546, 0.0
    %v5579 = vmax.f32 %v5547, 0.0
    %v5580 = vmax.f32 %v5548, 0.0
    %v5581 = vmax.f32 %v5549, 0.0
    %v5582 = vmax.f32 %v5550, 0.0
    %v5583 = vmax.f32 %v5551, 0.0
    %v5584 = vmax.f32 %v5552, 0.0
    %v5585 = vmax.f32 %v5553, 0.0
    %v5586 = vmax.f32 %v5554, 0.0
    %v5587 = vmax.f32 %v5555, 0.0
    %v5588 = vmax.f32 %v5556, 0.0
    %v5589 = vmax.f32 %v5557, 0.0
    %v5590 = vmax.f32 %v5558, 0.0
    %v5591 = vmax.f32 %v5559, 0.0
    %v5592 = vmax.f32 %v5560, 0.0
    %v5593 = vmax.f32 %v5561, 0.0
    %v5594 = vpack.c.bf16 %v5564, %v5562
    %v5595 = vpack.c.bf16 %v5565, %v5563
    %v5596 = vpack.c.bf16 %v5568, %v5566
    %v5597 = vpack.c.bf16 %v5569, %v5567
    %v5598 = vpack.c.bf16 %v5572, %v5570
    %v5599 = vpack.c.bf16 %v5573, %v5571
    %v5600 = vpack.c.bf16 %v5576, %v5574
    %v5601 = vpack.c.bf16 %v5577, %v5575
    %v5602 = vpack.c.bf16 %v5580, %v5578
    %v5603 = vpack.c.bf16 %v5581, %v5579
    %v5604 = vpack.c.bf16 %v5584, %v5582
    %v5605 = vpack.c.bf16 %v5585, %v5583
    %v5606 = vpack.c.bf16 %v5588, %v5586
    %v5607 = vpack.c.bf16 %v5589, %v5587
    %v5608 = vpack.c.bf16 %v5592, %v5590
    %v5609 = vpack.c.bf16 %v5593, %v5591
    %v5626 = vunpack.c.l.b16 %v5594
    %v5627 = vunpack.c.l.b16 %v5595
    %v5628 = vunpack.c.h.b16 %v5594
    %v5629 = vunpack.c.h.b16 %v5595
    %v5630 = vunpack.c.l.b16 %v5596
    %v5631 = vunpack.c.l.b16 %v5597
    %v5632 = vunpack.c.h.b16 %v5596
    %v5633 = vunpack.c.h.b16 %v5597
    %v5634 = vunpack.c.l.b16 %v5598
    %v5635 = vunpack.c.l.b16 %v5599
    %v5636 = vunpack.c.h.b16 %v5598
    %v5637 = vunpack.c.h.b16 %v5599
    %v5638 = vunpack.c.l.b16 %v5600
    %v5639 = vunpack.c.l.b16 %v5601
    %v5640 = vunpack.c.h.b16 %v5600
    %v5641 = vunpack.c.h.b16 %v5601
    %v5642 = vunpack.c.l.b16 %v5602
    %v5643 = vunpack.c.l.b16 %v5603
    %v5644 = vunpack.c.h.b16 %v5602
    %v5645 = vunpack.c.h.b16 %v5603
    %v5646 = vunpack.c.l.b16 %v5604
    %v5647 = vunpack.c.l.b16 %v5605
    %v5648 = vunpack.c.h.b16 %v5604
    %v5649 = vunpack.c.h.b16 %v5605
    %v5650 = vunpack.c.l.b16 %v5606
    %v5651 = vunpack.c.l.b16 %v5607
    %v5652 = vunpack.c.h.b16 %v5606
    %v5653 = vunpack.c.h.b16 %v5607
    %v5654 = vunpack.c.l.b16 %v5608
    %v5655 = vunpack.c.l.b16 %v5609
    %v5656 = vunpack.c.h.b16 %v5608
    %v5657 = vunpack.c.h.b16 %v5609
    %v5658 = vpack.c.b16 %v5627, %v5626
    %v5659 = vpack.c.b16 %v5629, %v5628
    %v5660 = vpack.c.b16 %v5631, %v5630
    %v5661 = vpack.c.b16 %v5633, %v5632
    %v5662 = vpack.c.b16 %v5635, %v5634
    %v5663 = vpack.c.b16 %v5637, %v5636
    %v5664 = vpack.c.b16 %v5639, %v5638
    %v5665 = vpack.c.b16 %v5641, %v5640
    %v5666 = vpack.c.b16 %v5643, %v5642
    %v5667 = vpack.c.b16 %v5645, %v5644
    %v5668 = vpack.c.b16 %v5647, %v5646
    %v5669 = vpack.c.b16 %v5649, %v5648
    %v5670 = vpack.c.b16 %v5651, %v5650
    %v5671 = vpack.c.b16 %v5653, %v5652
    %v5672 = vpack.c.b16 %v5655, %v5654
    %v5673 = vpack.c.b16 %v5657, %v5656
    %5690 = vst [vmem:[%s12] sm:$0xff] %v5658
    %5691 = vst [vmem:[%s12 + $0x8] sm:$0xff] %v5659
    %5692 = vst [vmem:[%s12 + $0x10] sm:$0xff] %v5660
    %5693 = vst [vmem:[%s12 + $0x18] sm:$0xff] %v5661
    %5694 = vst [vmem:[%s12 + $0x20] sm:$0xff] %v5662
    %5695 = vst [vmem:[%s12 + $0x28] sm:$0xff] %v5663
    %5696 = vst [vmem:[%s12 + $0x30] sm:$0xff] %v5664
    %5697 = vst [vmem:[%s12 + $0x38] sm:$0xff] %v5665
    %5698 = vst [vmem:[%s12 + $0x40] sm:$0xff] %v5666
    %5699 = vst [vmem:[%s12 + $0x48] sm:$0xff] %v5667
    %5700 = vst [vmem:[%s12 + $0x50] sm:$0xff] %v5668
    %5701 = vst [vmem:[%s12 + $0x58] sm:$0xff] %v5669
    %5702 = vst [vmem:[%s12 + $0x60] sm:$0xff] %v5670
    %5703 = vst [vmem:[%s12 + $0x68] sm:$0xff] %v5671
    %5704 = vst [vmem:[%s12 + $0x70] sm:$0xff] %v5672
    %5705 = vst [vmem:[%s12 + $0x78] sm:$0xff] %v5673
    // Predicated region
    $region54: #{_lambda_.4} parent=1 // pred_check
      _
    $region55: #{_lambda_.4} parent=1 // pred_check_branch
      %5707 = sbr.rel (0) target = $region57
    $region56: #{_lambda_.4} parent=1 // pred_region
      _
    $region57: #{_lambda_.4} parent=1 // pred_fallthru
      _
    // Predicated region
    $region58: #{_lambda_.4} parent=1 // pred_check
      _
    $region59: #{_lambda_.4} parent=1 // pred_check_branch
      %5709 = sbr.rel (0) target = $region61
    $region60: #{_lambda_.4} parent=1 // pred_region
      _
    $region61: #{_lambda_.4} parent=1 // pred_fallthru
      _
    %5710 = vsyncpa [#allocation3], 1

</llo_original>
